<compile_context>
chip_gen: v7x
topology: tpu7x:2x2x1
jax: 0.10.0
libtpu: 0.0.40
codegen_flags: <defaults>
</compile_context>

<pallas_src>
import functools

import numpy as np
import jax
import jax.numpy as jnp
from jax.experimental import pallas as pl
from jax.experimental.pallas import tpu as pltpu


def _wmsa_kernel(x_ref, wqkv_ref, bqkv_ref, bias_ref, wproj_ref, bproj_ref,
                 o_ref, *, wb, n, d, n_heads):
    """One grid step = `wb` windows = (wb*n, d) token rows."""
    hd = d // n_heads

    # x arrives in its native dtype; cast to bf16 in-kernel (avoids a separate
    # wrapper-side XLA cast pass over the whole token matrix).
    x = x_ref[...].astype(jnp.bfloat16)                       # (wb*n, d)

    # --- fused QKV projection (single MXU matmul, qk scale pre-folded in Q) ---
    qkv = jnp.dot(x, wqkv_ref[...], preferred_element_type=jnp.float32)
    qkv = (qkv + bqkv_ref[0]).astype(jnp.bfloat16)            # single bf16 cast
    qkv = qkv.reshape(wb, n, 3 * d)                           # trailing dim kept

    # Static loop over heads (H small); per-window attention is a batched
    # einsum over the window axis (no per-window loop).
    heads = []
    for h in range(n_heads):
        qh = qkv[:, :, h * hd:(h + 1) * hd]                   # (wb, n, hd) bf16
        kh = qkv[:, :, d + h * hd:d + (h + 1) * hd]
        vh = qkv[:, :, 2 * d + h * hd:2 * d + (h + 1) * hd]

        # scores: (wb, n, n) f32, scale already folded into q
        s = jnp.einsum("wqc,wkc->wqk", qh, kh,
                       preferred_element_type=jnp.float32)
        s = s + bias_ref[h]                                   # (n, n) bias bcast

        # numerically stable softmax (f32), denominator on the EUP
        s = s - jnp.max(s, axis=-1, keepdims=True)
        p = jnp.exp(s)
        p = p * pl.reciprocal(jnp.sum(p, axis=-1, keepdims=True), approx=True)

        # attention @ V : (wb, n, hd) f32
        heads.append(jnp.einsum("wqk,wkc->wqc", p.astype(jnp.bfloat16), vh,
                                preferred_element_type=jnp.float32))

    # Pack heads along the lane axis (d=32 <= 128 lanes -> cheap lane selects)
    # and run ONE (wb*n, d) @ (d, d) output-projection matmul.
    o = jnp.concatenate(heads, axis=-1).reshape(wb * n, d).astype(jnp.bfloat16)
    out = jnp.dot(o, wproj_ref[...], preferred_element_type=jnp.float32)
    o_ref[...] = (out + bproj_ref[0]).astype(o_ref.dtype)
    # TODO(synk): optional block-diagonal (wb*n x wb*n) attention variant
    # (128-wide on v5e, 256-wide on v6e/v7x) and a lane-dense (.., 4*d) output
    # fold were left out pending measurement of the extra exp / XLU cost.


_WB_TARGET = 64  # target windows per grid step (wb*n token rows per block)


def _choose_wb(B_):
    """Pick windows-per-step.

    Prefer the largest wb <= target that divides B_ (no zero-pad HBM pass) and
    leaves >= 2 grid steps (so the 'parallel' axis can split across the two
    TensorCores on v7x and DMAs pipeline). Pad only when B_ has no usable
    divisor (e.g. prime B_)."""
    target = max(1, min(_WB_TARGET, B_))
    best_div = 1
    for cand in range(target, 0, -1):
        if B_ % cand == 0 and (B_ // cand >= 2 or B_ == 1):
            best_div = cand
            break
    if 2 * best_div >= target:
        return best_div, False
    wb = max(best_div, min(target, -(-B_ // 2)))   # keep >= 2 grid steps
    return wb, (B_ % wb != 0)


@functools.lru_cache(maxsize=None)
def _relative_position_index(window_size):
    """Compile-time numpy constant; identical to the PyTorch buffer."""
    Wh, Ww = window_size
    coords = np.stack(np.meshgrid(np.arange(Wh), np.arange(Ww), indexing="ij"))
    cf = coords.reshape(2, -1)
    rel = (cf[:, :, None] - cf[:, None, :]).transpose(1, 2, 0)
    idx = (rel[..., 0] + Wh - 1) * (2 * Ww - 1) + (rel[..., 1] + Ww - 1)
    return np.asarray(idx.reshape(-1), dtype=np.int32)


def fc_window_self_attention(x, params, *, window_size, n_heads, qk_scale=None):
    """x: (B_, n, d) with n == Wh*Ww, B_ = num_windows * batch.  mask is None.

    params:
      'w_qkv' (d, 3d), 'b_qkv' (3d,), 'w_proj' (d, d), 'b_proj' (d,),
      'rel_bias_table' ((2Wh-1)*(2Ww-1), n_heads)
    Weights are (in, out), i.e. x @ W + b (== PyTorch x @ W.T).
    """
    B_, n, d = x.shape
    Wh, Ww = window_size
    assert n == Wh * Ww and d % n_heads == 0
    hd = d // n_heads
    scale = float(qk_scale) if qk_scale is not None else hd ** (-0.5)

    # ---- one-time parameter prep (amortized over all windows) ----
    idx = jnp.asarray(_relative_position_index(window_size))            # (n*n,)
    bias = params["rel_bias_table"].astype(jnp.float32)[idx]            # (n*n, H)
    bias = bias.reshape(n, n, n_heads).transpose(2, 0, 1)               # (H, n, n)

    # fold qk scale into the Q columns of the QKV projection
    w_qkv = params["w_qkv"].astype(jnp.float32)
    w_qkv = jnp.concatenate([w_qkv[:, :d] * scale, w_qkv[:, d:]], axis=1)
    w_qkv = w_qkv.astype(jnp.bfloat16)                                  # (d, 3d)
    b_qkv = params["b_qkv"].astype(jnp.float32)
    b_qkv = jnp.concatenate([b_qkv[:d] * scale, b_qkv[d:]]).reshape(1, 3 * d)

    w_proj = params["w_proj"].astype(jnp.bfloat16)                      # (d, d)
    b_proj = params["b_proj"].astype(jnp.float32).reshape(1, d)

    # ---- window batching: wb windows per grid step ----
    wb, need_pad = _choose_wb(B_)
    if need_pad:
        B_pad = pl.cdiv(B_, wb) * wb
        x_in = jnp.concatenate(
            [x, jnp.zeros((B_pad - B_, n, d), x.dtype)], axis=0)
    else:
        B_pad, x_in = B_, x
    x_tok = x_in.reshape(B_pad * n, d)            # native dtype; cast in-kernel

    kernel = functools.partial(_wmsa_kernel, wb=wb, n=n, d=d, n_heads=n_heads)

    out_tok = pl.pallas_call(
        kernel,
        out_shape=jax.ShapeDtypeStruct((B_pad * n, d), x.dtype),
        grid_spec=pltpu.PrefetchScalarGridSpec(
            num_scalar_prefetch=0,
            grid=(B_pad // wb,),
            in_specs=[
                pl.BlockSpec((wb * n, d), lambda b: (b, 0)),             # x tokens
                pl.BlockSpec((d, 3 * d), lambda b: (0, 0)),              # w_qkv (bf16)
                pl.BlockSpec((1, 3 * d), lambda b: (0, 0)),              # b_qkv (f32)
                pl.BlockSpec((n_heads, n, n), lambda b: (0, 0, 0)),      # rel bias (f32)
                pl.BlockSpec((d, d), lambda b: (0, 0)),                  # w_proj (bf16)
                pl.BlockSpec((1, d), lambda b: (0, 0)),                  # b_proj (f32)
            ],
            out_specs=pl.BlockSpec((wb * n, d), lambda b: (b, 0)),
        ),
        compiler_params=pltpu.CompilerParams(
            dimension_semantics=("parallel",)),
    )(x_tok, w_qkv, b_qkv, bias, w_proj, b_proj)

    if B_pad != B_:
        out_tok = out_tok[:B_ * n]
    return out_tok.reshape(B_, n, d)
    # TODO(synk): shifted-window attention mask (mask != None), dropout
    # (train mode), and the ratio!=None reduced-q/k variant are not wired;
    # the mask only adds a per-window (n, n) bias and can reuse this kernel.


def _reference(x, params, *, window_size, n_heads, qk_scale=None):
    """Pure-JAX f32 reference replicating the PyTorch forward (mask=None, eval)."""
    B_, n, d = x.shape
    hd = d // n_heads
    scale = qk_scale if qk_scale is not None else hd ** (-0.5)

    qkv = x @ params["w_qkv"] + params["b_qkv"]
    q, k, v = qkv[..., :d], qkv[..., d:2 * d], qkv[..., 2 * d:]
    q = q.reshape(B_, n, n_heads, hd).transpose(0, 2, 1, 3)
    k = k.reshape(B_, n, n_heads, hd).transpose(0, 2, 1, 3)
    v = v.reshape(B_, n, n_heads, hd).transpose(0, 2, 1, 3)

    attn = jnp.einsum("bhqd,bhkd->bhqk", q, k) * scale

    idx = jnp.asarray(_relative_position_index(window_size))
    bias = params["rel_bias_table"][idx].reshape(n, n, n_heads).transpose(2, 0, 1)

    attn = attn + bias[None]
    attn = jax.nn.softmax(attn, axis=-1)
    out = jnp.einsum("bhqk,bhkd->bhqd", attn, v)
    out = out.transpose(0, 2, 1, 3).reshape(B_, n, d)
    return out @ params["w_proj"] + params["b_proj"]


if __name__ == "__main__":
    # 4x4 windows -> n=16 tokens, d=32 channels, 4 heads,
    # B_ = num_windows*batch = 32  ->  wb=16, grid of 2 steps.
    window_size = (4, 4)
    n = window_size[0] * window_size[1]
    d = 32
    n_heads = 4
    B_ = 32

    key = jax.random.PRNGKey(0)
    kx, k1, k2, k3, k4, k5 = jax.random.split(key, 6)

    x = jax.random.normal(kx, (B_, n, d), dtype=jnp.float32)

    table_size = (2 * window_size[0] - 1) * (2 * window_size[1] - 1)
    params = {
        "w_qkv": jax.random.normal(k1, (d, 3 * d), dtype=jnp.float32) * 0.05,
        "b_qkv": jax.random.normal(k2, (3 * d,), dtype=jnp.float32) * 0.05,
        "w_proj": jax.random.normal(k3, (d, d), dtype=jnp.float32) * 0.05,
        "b_proj": jax.random.normal(k4, (d,), dtype=jnp.float32) * 0.05,
        # trunc_normal_(std=0.02) analogue: clipped normal, deterministic
        "rel_bias_table": jnp.clip(
            jax.random.normal(k5, (table_size, n_heads), dtype=jnp.float32) * 0.02,
            -0.04, 0.04),
    }

    out = fc_window_self_attention(x, params, window_size=window_size,
                                   n_heads=n_heads)
    out = jax.block_until_ready(out)

    ref = _reference(x, params, window_size=window_size, n_heads=n_heads)
    assert out.shape == (B_, n, d)
    max_err = float(jnp.max(jnp.abs(out - ref)))
    # bf16 MXU inputs + approx reciprocal => slightly looser tolerance than f32
    assert jnp.allclose(out, ref, atol=1e-2, rtol=1e-2), max_err

    print("KERNEL_OK")
</pallas_src>

<mosaic_0001>
module attributes {stable_mosaic.version = 11 : i64} {
  func.func @_wmsa_kernel(%arg0: i32, %arg1: memref<256x32xf32, #tpu.memory_space<vmem>>, %arg2: memref<32x96xbf16, #tpu.memory_space<vmem>>, %arg3: memref<1x96xf32, #tpu.memory_space<vmem>>, %arg4: memref<4x16x16xf32, #tpu.memory_space<vmem>>, %arg5: memref<32x32xbf16, #tpu.memory_space<vmem>>, %arg6: memref<1x32xf32, #tpu.memory_space<vmem>>, %arg7: memref<256x32xf32, #tpu.memory_space<vmem>>) attributes {dimension_semantics = [#tpu.dimension_semantics<parallel>], iteration_bounds = array<i64: 2>, scalar_prefetch = 0 : i64, scratch_operands = 0 : i64, tpu.core_type = #tpu.core_type<tc>, window_params = [{transform_indices = @transform_0, window_bounds = array<i64: 256, 32>}, {pipeline_mode = #tpu.pipeline_mode<synchronous>, transform_indices = @transform_1, window_bounds = array<i64: 32, 96>}, {pipeline_mode = #tpu.pipeline_mode<synchronous>, transform_indices = @transform_2, window_bounds = array<i64: 1, 96>}, {pipeline_mode = #tpu.pipeline_mode<synchronous>, transform_indices = @transform_3, window_bounds = array<i64: 4, 16, 16>}, {pipeline_mode = #tpu.pipeline_mode<synchronous>, transform_indices = @transform_4, window_bounds = array<i64: 32, 32>}, {pipeline_mode = #tpu.pipeline_mode<synchronous>, transform_indices = @transform_5, window_bounds = array<i64: 1, 32>}, {transform_indices = @transform_6, window_bounds = array<i64: 256, 32>}]} {
    %c0 = arith.constant 0 : index
    %c0_0 = arith.constant 0 : index
    %0 = vector.load %arg1[%c0, %c0_0] : memref<256x32xf32, #tpu.memory_space<vmem>>, vector<256x32xf32>
    %1 = arith.truncf %0 : vector<256x32xf32> to vector<256x32xbf16>
    %c0_1 = arith.constant 0 : index
    %c0_2 = arith.constant 0 : index
    %2 = vector.load %arg2[%c0_1, %c0_2] : memref<32x96xbf16, #tpu.memory_space<vmem>>, vector<32x96xbf16>
    %cst = arith.constant dense<0.000000e+00> : vector<256x96xf32>
    %3 = tpu.matmul %1, %2, %cst {dimension_numbers = #tpu.dot_dimension_numbers<[1], [0], [0], [1], [0, 0, 1, 1], [], []>} : vector<256x32xbf16>, vector<32x96xbf16>, vector<256x96xf32> -> vector<256x96xf32>
    %c0_3 = arith.constant 0 : index
    %c0_4 = arith.constant 0 : index
    %4 = vector.load %arg3[%c0_3, %c0_4] : memref<1x96xf32, #tpu.memory_space<vmem>>, vector<1x96xf32>
    %5 = vector.shape_cast %4 : vector<1x96xf32> to vector<96xf32>
    %6 = vector.shape_cast %5 : vector<96xf32> to vector<1x96xf32>
    %7 = vector.broadcast %6 : vector<1x96xf32> to vector<256x96xf32>
    %8 = arith.addf %3, %7 : vector<256x96xf32>
    %9 = arith.truncf %8 : vector<256x96xf32> to vector<256x96xbf16>
    %10 = vector.shape_cast %9 : vector<256x96xbf16> to vector<16x16x96xbf16>
    %11 = vector.extract_strided_slice %10 {offsets = [0, 0, 0], sizes = [16, 16, 8], strides = [1, 1, 1]} : vector<16x16x96xbf16> to vector<16x16x8xbf16>
    %12 = vector.extract_strided_slice %10 {offsets = [0, 0, 32], sizes = [16, 16, 8], strides = [1, 1, 1]} : vector<16x16x96xbf16> to vector<16x16x8xbf16>
    %13 = vector.extract_strided_slice %10 {offsets = [0, 0, 64], sizes = [16, 16, 8], strides = [1, 1, 1]} : vector<16x16x96xbf16> to vector<16x16x8xbf16>
    "tpu.trace_start"() <{level = 10 : i32, message = "wqc,wkc->wqk"}> : () -> ()
    %cst_5 = arith.constant dense<0.000000e+00> : vector<16x16x16xf32>
    %14 = tpu.matmul %11, %12, %cst_5 {dimension_numbers = #tpu.dot_dimension_numbers<[2], [2], [1], [1], [0, 0, 0, 1, 1, 1], [0], [0]>} : vector<16x16x8xbf16>, vector<16x16x8xbf16>, vector<16x16x16xf32> -> vector<16x16x16xf32>
    "tpu.trace_stop"() : () -> ()
    %c0_6 = arith.constant 0 : index
    %c0_7 = arith.constant 0 : index
    %c0_8 = arith.constant 0 : index
    %15 = vector.load %arg4[%c0_6, %c0_7, %c0_8] : memref<4x16x16xf32, #tpu.memory_space<vmem>>, vector<1x16x16xf32>
    %16 = vector.shape_cast %15 : vector<1x16x16xf32> to vector<16x16xf32>
    %17 = vector.shape_cast %16 : vector<16x16xf32> to vector<1x16x16xf32>
    %18 = vector.broadcast %17 : vector<1x16x16xf32> to vector<16x16x16xf32>
    %19 = arith.addf %14, %18 : vector<16x16x16xf32>
    %cst_9 = arith.constant dense<0xFF800000> : vector<16x16xf32>
    %20 = vector.multi_reduction <maximumf>, %19, %cst_9 [2] : vector<16x16x16xf32> to vector<16x16xf32>
    %21 = vector.shape_cast %20 : vector<16x16xf32> to vector<16x16x1xf32>
    %22 = vector.broadcast %21 : vector<16x16x1xf32> to vector<16x16x16xf32>
    %23 = arith.subf %19, %22 : vector<16x16x16xf32>
    %24 = math.exp %23 : vector<16x16x16xf32>
    %cst_10 = arith.constant dense<0.000000e+00> : vector<16x16xf32>
    %25 = vector.multi_reduction <add>, %24, %cst_10 [2] : vector<16x16x16xf32> to vector<16x16xf32>
    %26 = vector.shape_cast %25 : vector<16x16xf32> to vector<16x16x1xf32>
    %27 = tpu.reciprocal %26 {approx = true} : vector<16x16x1xf32> -> vector<16x16x1xf32>
    %28 = vector.broadcast %27 : vector<16x16x1xf32> to vector<16x16x16xf32>
    %29 = arith.mulf %24, %28 : vector<16x16x16xf32>
    %30 = arith.truncf %29 : vector<16x16x16xf32> to vector<16x16x16xbf16>
    "tpu.trace_start"() <{level = 10 : i32, message = "wqk,wkc->wqc"}> : () -> ()
    %cst_11 = arith.constant dense<0.000000e+00> : vector<16x16x8xf32>
    %31 = tpu.matmul %30, %13, %cst_11 {dimension_numbers = #tpu.dot_dimension_numbers<[2], [1], [1], [2], [0, 0, 0, 1, 1, 2], [0], [0]>} : vector<16x16x16xbf16>, vector<16x16x8xbf16>, vector<16x16x8xf32> -> vector<16x16x8xf32>
    "tpu.trace_stop"() : () -> ()
    %32 = vector.extract_strided_slice %10 {offsets = [0, 0, 8], sizes = [16, 16, 8], strides = [1, 1, 1]} : vector<16x16x96xbf16> to vector<16x16x8xbf16>
    %33 = vector.extract_strided_slice %10 {offsets = [0, 0, 40], sizes = [16, 16, 8], strides = [1, 1, 1]} : vector<16x16x96xbf16> to vector<16x16x8xbf16>
    %34 = vector.extract_strided_slice %10 {offsets = [0, 0, 72], sizes = [16, 16, 8], strides = [1, 1, 1]} : vector<16x16x96xbf16> to vector<16x16x8xbf16>
    "tpu.trace_start"() <{level = 10 : i32, message = "wqc,wkc->wqk"}> : () -> ()
    %cst_12 = arith.constant dense<0.000000e+00> : vector<16x16x16xf32>
    %35 = tpu.matmul %32, %33, %cst_12 {dimension_numbers = #tpu.dot_dimension_numbers<[2], [2], [1], [1], [0, 0, 0, 1, 1, 1], [0], [0]>} : vector<16x16x8xbf16>, vector<16x16x8xbf16>, vector<16x16x16xf32> -> vector<16x16x16xf32>
    "tpu.trace_stop"() : () -> ()
    %c1 = arith.constant 1 : index
    %c0_13 = arith.constant 0 : index
    %c0_14 = arith.constant 0 : index
    %36 = vector.load %arg4[%c1, %c0_13, %c0_14] : memref<4x16x16xf32, #tpu.memory_space<vmem>>, vector<1x16x16xf32>
    %37 = vector.shape_cast %36 : vector<1x16x16xf32> to vector<16x16xf32>
    %38 = vector.shape_cast %37 : vector<16x16xf32> to vector<1x16x16xf32>
    %39 = vector.broadcast %38 : vector<1x16x16xf32> to vector<16x16x16xf32>
    %40 = arith.addf %35, %39 : vector<16x16x16xf32>
    %cst_15 = arith.constant dense<0xFF800000> : vector<16x16xf32>
    %41 = vector.multi_reduction <maximumf>, %40, %cst_15 [2] : vector<16x16x16xf32> to vector<16x16xf32>
    %42 = vector.shape_cast %41 : vector<16x16xf32> to vector<16x16x1xf32>
    %43 = vector.broadcast %42 : vector<16x16x1xf32> to vector<16x16x16xf32>
    %44 = arith.subf %40, %43 : vector<16x16x16xf32>
    %45 = math.exp %44 : vector<16x16x16xf32>
    %cst_16 = arith.constant dense<0.000000e+00> : vector<16x16xf32>
    %46 = vector.multi_reduction <add>, %45, %cst_16 [2] : vector<16x16x16xf32> to vector<16x16xf32>
    %47 = vector.shape_cast %46 : vector<16x16xf32> to vector<16x16x1xf32>
    %48 = tpu.reciprocal %47 {approx = true} : vector<16x16x1xf32> -> vector<16x16x1xf32>
    %49 = vector.broadcast %48 : vector<16x16x1xf32> to vector<16x16x16xf32>
    %50 = arith.mulf %45, %49 : vector<16x16x16xf32>
    %51 = arith.truncf %50 : vector<16x16x16xf32> to vector<16x16x16xbf16>
    "tpu.trace_start"() <{level = 10 : i32, message = "wqk,wkc->wqc"}> : () -> ()
    %cst_17 = arith.constant dense<0.000000e+00> : vector<16x16x8xf32>
    %52 = tpu.matmul %51, %34, %cst_17 {dimension_numbers = #tpu.dot_dimension_numbers<[2], [1], [1], [2], [0, 0, 0, 1, 1, 2], [0], [0]>} : vector<16x16x16xbf16>, vector<16x16x8xbf16>, vector<16x16x8xf32> -> vector<16x16x8xf32>
    "tpu.trace_stop"() : () -> ()
    %53 = vector.extract_strided_slice %10 {offsets = [0, 0, 16], sizes = [16, 16, 8], strides = [1, 1, 1]} : vector<16x16x96xbf16> to vector<16x16x8xbf16>
    %54 = vector.extract_strided_slice %10 {offsets = [0, 0, 48], sizes = [16, 16, 8], strides = [1, 1, 1]} : vector<16x16x96xbf16> to vector<16x16x8xbf16>
    %55 = vector.extract_strided_slice %10 {offsets = [0, 0, 80], sizes = [16, 16, 8], strides = [1, 1, 1]} : vector<16x16x96xbf16> to vector<16x16x8xbf16>
    "tpu.trace_start"() <{level = 10 : i32, message = "wqc,wkc->wqk"}> : () -> ()
    %cst_18 = arith.constant dense<0.000000e+00> : vector<16x16x16xf32>
    %56 = tpu.matmul %53, %54, %cst_18 {dimension_numbers = #tpu.dot_dimension_numbers<[2], [2], [1], [1], [0, 0, 0, 1, 1, 1], [0], [0]>} : vector<16x16x8xbf16>, vector<16x16x8xbf16>, vector<16x16x16xf32> -> vector<16x16x16xf32>
    "tpu.trace_stop"() : () -> ()
    %c2 = arith.constant 2 : index
    %c0_19 = arith.constant 0 : index
    %c0_20 = arith.constant 0 : index
    %57 = vector.load %arg4[%c2, %c0_19, %c0_20] : memref<4x16x16xf32, #tpu.memory_space<vmem>>, vector<1x16x16xf32>
    %58 = vector.shape_cast %57 : vector<1x16x16xf32> to vector<16x16xf32>
    %59 = vector.shape_cast %58 : vector<16x16xf32> to vector<1x16x16xf32>
    %60 = vector.broadcast %59 : vector<1x16x16xf32> to vector<16x16x16xf32>
    %61 = arith.addf %56, %60 : vector<16x16x16xf32>
    %cst_21 = arith.constant dense<0xFF800000> : vector<16x16xf32>
    %62 = vector.multi_reduction <maximumf>, %61, %cst_21 [2] : vector<16x16x16xf32> to vector<16x16xf32>
    %63 = vector.shape_cast %62 : vector<16x16xf32> to vector<16x16x1xf32>
    %64 = vector.broadcast %63 : vector<16x16x1xf32> to vector<16x16x16xf32>
    %65 = arith.subf %61, %64 : vector<16x16x16xf32>
    %66 = math.exp %65 : vector<16x16x16xf32>
    %cst_22 = arith.constant dense<0.000000e+00> : vector<16x16xf32>
    %67 = vector.multi_reduction <add>, %66, %cst_22 [2] : vector<16x16x16xf32> to vector<16x16xf32>
    %68 = vector.shape_cast %67 : vector<16x16xf32> to vector<16x16x1xf32>
    %69 = tpu.reciprocal %68 {approx = true} : vector<16x16x1xf32> -> vector<16x16x1xf32>
    %70 = vector.broadcast %69 : vector<16x16x1xf32> to vector<16x16x16xf32>
    %71 = arith.mulf %66, %70 : vector<16x16x16xf32>
    %72 = arith.truncf %71 : vector<16x16x16xf32> to vector<16x16x16xbf16>
    "tpu.trace_start"() <{level = 10 : i32, message = "wqk,wkc->wqc"}> : () -> ()
    %cst_23 = arith.constant dense<0.000000e+00> : vector<16x16x8xf32>
    %73 = tpu.matmul %72, %55, %cst_23 {dimension_numbers = #tpu.dot_dimension_numbers<[2], [1], [1], [2], [0, 0, 0, 1, 1, 2], [0], [0]>} : vector<16x16x16xbf16>, vector<16x16x8xbf16>, vector<16x16x8xf32> -> vector<16x16x8xf32>
    "tpu.trace_stop"() : () -> ()
    %74 = vector.extract_strided_slice %10 {offsets = [0, 0, 24], sizes = [16, 16, 8], strides = [1, 1, 1]} : vector<16x16x96xbf16> to vector<16x16x8xbf16>
    %75 = vector.extract_strided_slice %10 {offsets = [0, 0, 56], sizes = [16, 16, 8], strides = [1, 1, 1]} : vector<16x16x96xbf16> to vector<16x16x8xbf16>
    %76 = vector.extract_strided_slice %10 {offsets = [0, 0, 88], sizes = [16, 16, 8], strides = [1, 1, 1]} : vector<16x16x96xbf16> to vector<16x16x8xbf16>
    "tpu.trace_start"() <{level = 10 : i32, message = "wqc,wkc->wqk"}> : () -> ()
    %cst_24 = arith.constant dense<0.000000e+00> : vector<16x16x16xf32>
    %77 = tpu.matmul %74, %75, %cst_24 {dimension_numbers = #tpu.dot_dimension_numbers<[2], [2], [1], [1], [0, 0, 0, 1, 1, 1], [0], [0]>} : vector<16x16x8xbf16>, vector<16x16x8xbf16>, vector<16x16x16xf32> -> vector<16x16x16xf32>
    "tpu.trace_stop"() : () -> ()
    %c3 = arith.constant 3 : index
    %c0_25 = arith.constant 0 : index
    %c0_26 = arith.constant 0 : index
    %78 = vector.load %arg4[%c3, %c0_25, %c0_26] : memref<4x16x16xf32, #tpu.memory_space<vmem>>, vector<1x16x16xf32>
    %79 = vector.shape_cast %78 : vector<1x16x16xf32> to vector<16x16xf32>
    %80 = vector.shape_cast %79 : vector<16x16xf32> to vector<1x16x16xf32>
    %81 = vector.broadcast %80 : vector<1x16x16xf32> to vector<16x16x16xf32>
    %82 = arith.addf %77, %81 : vector<16x16x16xf32>
    %cst_27 = arith.constant dense<0xFF800000> : vector<16x16xf32>
    %83 = vector.multi_reduction <maximumf>, %82, %cst_27 [2] : vector<16x16x16xf32> to vector<16x16xf32>
    %84 = vector.shape_cast %83 : vector<16x16xf32> to vector<16x16x1xf32>
    %85 = vector.broadcast %84 : vector<16x16x1xf32> to vector<16x16x16xf32>
    %86 = arith.subf %82, %85 : vector<16x16x16xf32>
    %87 = math.exp %86 : vector<16x16x16xf32>
    %cst_28 = arith.constant dense<0.000000e+00> : vector<16x16xf32>
    %88 = vector.multi_reduction <add>, %87, %cst_28 [2] : vector<16x16x16xf32> to vector<16x16xf32>
    %89 = vector.shape_cast %88 : vector<16x16xf32> to vector<16x16x1xf32>
    %90 = tpu.reciprocal %89 {approx = true} : vector<16x16x1xf32> -> vector<16x16x1xf32>
    %91 = vector.broadcast %90 : vector<16x16x1xf32> to vector<16x16x16xf32>
    %92 = arith.mulf %87, %91 : vector<16x16x16xf32>
    %93 = arith.truncf %92 : vector<16x16x16xf32> to vector<16x16x16xbf16>
    "tpu.trace_start"() <{level = 10 : i32, message = "wqk,wkc->wqc"}> : () -> ()
    %cst_29 = arith.constant dense<0.000000e+00> : vector<16x16x8xf32>
    %94 = tpu.matmul %93, %76, %cst_29 {dimension_numbers = #tpu.dot_dimension_numbers<[2], [1], [1], [2], [0, 0, 0, 1, 1, 2], [0], [0]>} : vector<16x16x16xbf16>, vector<16x16x8xbf16>, vector<16x16x8xf32> -> vector<16x16x8xf32>
    "tpu.trace_stop"() : () -> ()
    %95 = tpu.concatenate %31, %52, %73, %94 in 2 : vector<16x16x8xf32>, vector<16x16x8xf32>, vector<16x16x8xf32>, vector<16x16x8xf32> -> vector<16x16x32xf32>
    %96 = vector.shape_cast %95 : vector<16x16x32xf32> to vector<256x32xf32>
    %97 = arith.truncf %96 : vector<256x32xf32> to vector<256x32xbf16>
    %c0_30 = arith.constant 0 : index
    %c0_31 = arith.constant 0 : index
    %98 = vector.load %arg5[%c0_30, %c0_31] : memref<32x32xbf16, #tpu.memory_space<vmem>>, vector<32x32xbf16>
    %cst_32 = arith.constant dense<0.000000e+00> : vector<256x32xf32>
    %99 = tpu.matmul %97, %98, %cst_32 {dimension_numbers = #tpu.dot_dimension_numbers<[1], [0], [0], [1], [0, 0, 1, 1], [], []>} : vector<256x32xbf16>, vector<32x32xbf16>, vector<256x32xf32> -> vector<256x32xf32>
    %c0_33 = arith.constant 0 : index
    %c0_34 = arith.constant 0 : index
    %100 = vector.load %arg6[%c0_33, %c0_34] : memref<1x32xf32, #tpu.memory_space<vmem>>, vector<1x32xf32>
    %101 = vector.shape_cast %100 : vector<1x32xf32> to vector<32xf32>
    %102 = vector.shape_cast %101 : vector<32xf32> to vector<1x32xf32>
    %103 = vector.broadcast %102 : vector<1x32xf32> to vector<256x32xf32>
    %104 = arith.addf %99, %103 : vector<256x32xf32>
    %c0_35 = arith.constant 0 : index
    %c0_36 = arith.constant 0 : index
    %105 = vector.load %arg7[%c0_35, %c0_36] : memref<256x32xf32, #tpu.memory_space<vmem>>, vector<256x32xf32>
    tpu.vector_store %arg7[%c0_35, %c0_36], %104 {strides = array<i32>} : memref<256x32xf32, #tpu.memory_space<vmem>>, vector<256x32xf32>,
    return
  }
  func.func @transform_0(%arg0: i32) -> (i32, i32) {
    %c0_i32 = arith.constant 0 : i32
    %c0_i32_0 = arith.constant 0 : i32
    return %arg0, %c0_i32 : i32, i32
  }
  func.func @transform_1(%arg0: i32) -> (i32, i32) {
    %c0_i32 = arith.constant 0 : i32
    %c0_i32_0 = arith.constant 0 : i32
    %c0_i32_1 = arith.constant 0 : i32
    return %c0_i32, %c0_i32_0 : i32, i32
  }
  func.func @transform_2(%arg0: i32) -> (i32, i32) {
    %c0_i32 = arith.constant 0 : i32
    %c0_i32_0 = arith.constant 0 : i32
    %c0_i32_1 = arith.constant 0 : i32
    return %c0_i32, %c0_i32_0 : i32, i32
  }
  func.func @transform_3(%arg0: i32) -> (i32, i32, i32) {
    %c0_i32 = arith.constant 0 : i32
    %c0_i32_0 = arith.constant 0 : i32
    %c0_i32_1 = arith.constant 0 : i32
    %c0_i32_2 = arith.constant 0 : i32
    return %c0_i32, %c0_i32_0, %c0_i32_1 : i32, i32, i32
  }
  func.func @transform_4(%arg0: i32) -> (i32, i32) {
    %c0_i32 = arith.constant 0 : i32
    %c0_i32_0 = arith.constant 0 : i32
    %c0_i32_1 = arith.constant 0 : i32
    return %c0_i32, %c0_i32_0 : i32, i32
  }
  func.func @transform_5(%arg0: i32) -> (i32, i32) {
    %c0_i32 = arith.constant 0 : i32
    %c0_i32_0 = arith.constant 0 : i32
    %c0_i32_1 = arith.constant 0 : i32
    return %c0_i32, %c0_i32_0 : i32, i32
  }
  func.func @transform_6(%arg0: i32) -> (i32, i32) {
    %c0_i32 = arith.constant 0 : i32
    %c0_i32_0 = arith.constant 0 : i32
    return %arg0, %c0_i32 : i32, i32
  }
}

</mosaic_0001>

<llo_original>
// kernel: tpu_custom_call.1
$region0: #{tpu_custom_call.1}
  #allocation0 [shape = 'u32[]', space=smem, size = 0x4, offset = 0x4, fixed_abs, tag = 'smem constant byte address 0x4 - core index']
  #allocation1 [shape = 'u32[144,128]{1,0:T(1,128)}', space=vmem, size = 0x12000, scoped, tag = 'internal scratch']
  %s0 = inlined_call_operand.vmem [shape: f32[512,32], index: 0, kind: input, shape index: {}]
  %s1 = inlined_call_operand.vmem [shape: bf16[32,96], index: 1, kind: input, shape index: {}]
  %s2 = inlined_call_operand.vmem [shape: f32[1,96], index: 2, kind: input, shape index: {}]
  %s3 = inlined_call_operand.vmem [shape: f32[4,16,16], index: 3, kind: input, shape index: {}]
  %s4 = inlined_call_operand.vmem [shape: bf16[32,32], index: 4, kind: input, shape index: {}]
  %s5 = inlined_call_operand.vmem [shape: f32[1,32], index: 5, kind: input, shape index: {}]
  %s6 = inlined_call_operand.vmem [shape: f32[512,32], index: 6, kind: output, shape index: {}]
  %s7 = sld [smem:[#allocation0]]
  $region57: #{tpu_custom_call.1} parent=0
    _
  %s9 = ssub.s32 1, %s7
  %s10 = scalar_select 0, %s9, %s7
  loop: start=0, step=1, limit=4
  $region2: #{tpu_custom_call.1} parent=0 // loop_pre_header
    _
  $region3: #{tpu_custom_call.1} parent=0 // loop_header
    %s12 = sphi 0, %s16
    %p13 = scmp.ge.s32.totalorder %s12, 4
    %s22 = sphi 0, %s24
    %s25 = sphi 0, %s22
    %s26 = sphi 0, %s25
    %s42 = sphi 0, %s26
    %s46 = sphi 0, %s46
    %s48 = sphi 0, %s46
    %s49 = sphi 0, %s48
    %s63 = sphi 0, %s49
    %s67 = sphi 0, %s67
    %s69 = sphi 0, %s67
    %s70 = sphi 0, %s69
    %s84 = sphi 0, %s70
    %s88 = sphi 0, %s88
    %s90 = sphi 0, %s88
    %s91 = sphi 0, %s90
    %s105 = sphi 0, %s91
    %s109 = sphi 0, %s109
    %s111 = sphi 0, %s109
    %s112 = sphi 0, %s111
    %s126 = sphi 0, %s112
    %s130 = sphi 0, %s130
    %s132 = sphi 0, %s130
    %s133 = sphi 0, %s132
    %s147 = sphi 0, %s133
    %s153 = sphi 0, %s155
    %s156 = sphi 0, %s153
    %s157 = sphi 0, %s156
    %s173 = sphi 0, %s157
  $region4: #{tpu_custom_call.1} parent=0 // loop_header_branch
    %15 = sbr.rel (%p13) target = $region8
  $region5: #{tpu_custom_call.1} parent=0 // loop_body
    %s17 = ssub.s32 %s12, 1
    %s18 = ssub.s32 %s12, 2
    %s19 = sadd.s32 %s12, 1
    %s20 = ssub.s32 %s12, %s19
    %p21 = scmp.eq.s32.totalorder %s20, 0
    %s23 = sadd.s32 %s22, 1
    %s24 = scalar_select %p21, %s22, %s23
    %p27 = pneg %p21
    %p28 = scmp.eq.s32.totalorder %s12, 1
    %p29 = por %p27, %p28
    %p30 = scmp.ne.s32.totalorder %s22, %s25
    %p31 = scmp.eq.s32.totalorder %s12, 0
    %p32 = por %p30, %p31
    %p33 = scmp.ne.s32.totalorder %s22, %s25
    %p34 = scmp.eq.s32.totalorder %s17, 1
    %p35 = por %p33, %p34
    %p36 = scmp.ne.s32.totalorder %s25, %s26
    %p37 = scmp.eq.s32.totalorder %s17, 0
    %p38 = por %p36, %p37
    %p39 = scmp.ne.s32.totalorder %s25, %s26
    %p40 = scmp.eq.s32.totalorder %s18, 1
    %p41 = por %p39, %p40
    %p43 = scmp.ne.s32.totalorder %s26, %s42
    %p44 = scmp.eq.s32.totalorder %s18, 0
    %p45 = por %p43, %p44
    %s47 = sadd.s32 %s46, 1
    %p50 = scmp.eq.s32.totalorder %s12, 1
    %p51 = scmp.ne.s32.totalorder %s46, %s48
    %p52 = scmp.eq.s32.totalorder %s12, 0
    %p53 = por %p51, %p52
    %p54 = scmp.ne.s32.totalorder %s46, %s48
    %p55 = scmp.eq.s32.totalorder %s17, 1
    %p56 = por %p54, %p55
    %p57 = scmp.ne.s32.totalorder %s48, %s49
    %p58 = scmp.eq.s32.totalorder %s17, 0
    %p59 = por %p57, %p58
    %p60 = scmp.ne.s32.totalorder %s48, %s49
    %p61 = scmp.eq.s32.totalorder %s18, 1
    %p62 = por %p60, %p61
    %p64 = scmp.ne.s32.totalorder %s49, %s63
    %p65 = scmp.eq.s32.totalorder %s18, 0
    %p66 = por %p64, %p65
    %s68 = sadd.s32 %s67, 1
    %p71 = scmp.eq.s32.totalorder %s12, 1
    %p72 = scmp.ne.s32.totalorder %s67, %s69
    %p73 = scmp.eq.s32.totalorder %s12, 0
    %p74 = por %p72, %p73
    %p75 = scmp.ne.s32.totalorder %s67, %s69
    %p76 = scmp.eq.s32.totalorder %s17, 1
    %p77 = por %p75, %p76
    %p78 = scmp.ne.s32.totalorder %s69, %s70
    %p79 = scmp.eq.s32.totalorder %s17, 0
    %p80 = por %p78, %p79
    %p81 = scmp.ne.s32.totalorder %s69, %s70
    %p82 = scmp.eq.s32.totalorder %s18, 1
    %p83 = por %p81, %p82
    %p85 = scmp.ne.s32.totalorder %s70, %s84
    %p86 = scmp.eq.s32.totalorder %s18, 0
    %p87 = por %p85, %p86
    %s89 = sadd.s32 %s88, 1
    %p92 = scmp.eq.s32.totalorder %s12, 1
    %p93 = scmp.ne.s32.totalorder %s88, %s90
    %p94 = scmp.eq.s32.totalorder %s12, 0
    %p95 = por %p93, %p94
    %p96 = scmp.ne.s32.totalorder %s88, %s90
    %p97 = scmp.eq.s32.totalorder %s17, 1
    %p98 = por %p96, %p97
    %p99 = scmp.ne.s32.totalorder %s90, %s91
    %p100 = scmp.eq.s32.totalorder %s17, 0
    %p101 = por %p99, %p100
    %p102 = scmp.ne.s32.totalorder %s90, %s91
    %p103 = scmp.eq.s32.totalorder %s18, 1
    %p104 = por %p102, %p103
    %p106 = scmp.ne.s32.totalorder %s91, %s105
    %p107 = scmp.eq.s32.totalorder %s18, 0
    %p108 = por %p106, %p107
    %s110 = sadd.s32 %s109, 1
    %p113 = scmp.eq.s32.totalorder %s12, 1
    %p114 = scmp.ne.s32.totalorder %s109, %s111
    %p115 = scmp.eq.s32.totalorder %s12, 0
    %p116 = por %p114, %p115
    %p117 = scmp.ne.s32.totalorder %s109, %s111
    %p118 = scmp.eq.s32.totalorder %s17, 1
    %p119 = por %p117, %p118
    %p120 = scmp.ne.s32.totalorder %s111, %s112
    %p121 = scmp.eq.s32.totalorder %s17, 0
    %p122 = por %p120, %p121
    %p123 = scmp.ne.s32.totalorder %s111, %s112
    %p124 = scmp.eq.s32.totalorder %s18, 1
    %p125 = por %p123, %p124
    %p127 = scmp.ne.s32.totalorder %s112, %s126
    %p128 = scmp.eq.s32.totalorder %s18, 0
    %p129 = por %p127, %p128
    %s131 = sadd.s32 %s130, 1
    %p134 = scmp.eq.s32.totalorder %s12, 1
    %p135 = scmp.ne.s32.totalorder %s130, %s132
    %p136 = scmp.eq.s32.totalorder %s12, 0
    %p137 = por %p135, %p136
    %p138 = scmp.ne.s32.totalorder %s130, %s132
    %p139 = scmp.eq.s32.totalorder %s17, 1
    %p140 = por %p138, %p139
    %p141 = scmp.ne.s32.totalorder %s132, %s133
    %p142 = scmp.eq.s32.totalorder %s17, 0
    %p143 = por %p141, %p142
    %p144 = scmp.ne.s32.totalorder %s132, %s133
    %p145 = scmp.eq.s32.totalorder %s18, 1
    %p146 = por %p144, %p145
    %p148 = scmp.ne.s32.totalorder %s133, %s147
    %p149 = scmp.eq.s32.totalorder %s18, 0
    %p150 = por %p148, %p149
    %s151 = ssub.s32 %s12, %s19
    %p152 = scmp.eq.s32.totalorder %s151, 0
    %s154 = sadd.s32 %s153, 1
    %s155 = scalar_select %p152, %s153, %s154
    %p158 = pneg %p152
    %p159 = scmp.eq.s32.totalorder %s12, 1
    %p160 = por %p158, %p159
    %p161 = scmp.ne.s32.totalorder %s153, %s156
    %p162 = scmp.eq.s32.totalorder %s12, 0
    %p163 = por %p161, %p162
    %p164 = scmp.ne.s32.totalorder %s153, %s156
    %p165 = scmp.eq.s32.totalorder %s17, 1
    %p166 = por %p164, %p165
    %p167 = scmp.ne.s32.totalorder %s156, %s157
    %p168 = scmp.eq.s32.totalorder %s17, 0
    %p169 = por %p167, %p168
    %p170 = scmp.ne.s32.totalorder %s156, %s157
    %p171 = scmp.eq.s32.totalorder %s18, 1
    %p172 = por %p170, %p171
    %p174 = scmp.ne.s32.totalorder %s157, %s173
    %p175 = scmp.eq.s32.totalorder %s18, 0
    %p176 = por %p174, %p175
    %p177 = scmp.le.s32.totalorder 1, %s12
    %p178 = scmp.lt.s32.totalorder %s12, 3
    %p179 = pnand %p177, %p178
    %p180 = pneg %p179
    // Predicated region
    $region9: #{tpu_custom_call.1} parent=5 // pred_check
      _
    $region10: #{tpu_custom_call.1} parent=5 // pred_check_branch
      %182 = sbr.rel (%p179) target = $region12
    $region11: #{tpu_custom_call.1} parent=5 // pred_region
      %s183 = ssub.s32 %s12, 1
      // Predicated region
      $region13: #{tpu_custom_call.1} parent=11 // pred_check
        %p184 = pneg %p59
      $region14: #{tpu_custom_call.1} parent=11 // pred_check_branch
        %186 = sbr.rel (%p184) target = $region16
      $region15: #{tpu_custom_call.1} parent=11 // pred_region
        _
      $region16: #{tpu_custom_call.1} parent=11 // pred_fallthru
        _
      // Predicated region
      $region17: #{tpu_custom_call.1} parent=11 // pred_check
        %p187 = pneg %p80
      $region18: #{tpu_custom_call.1} parent=11 // pred_check_branch
        %189 = sbr.rel (%p187) target = $region20
      $region19: #{tpu_custom_call.1} parent=11 // pred_region
        _
      $region20: #{tpu_custom_call.1} parent=11 // pred_fallthru
        _
      // Predicated region
      $region21: #{tpu_custom_call.1} parent=11 // pred_check
        %p190 = pneg %p101
      $region22: #{tpu_custom_call.1} parent=11 // pred_check_branch
        %192 = sbr.rel (%p190) target = $region24
      $region23: #{tpu_custom_call.1} parent=11 // pred_region
        _
      $region24: #{tpu_custom_call.1} parent=11 // pred_fallthru
        _
      // Predicated region
      $region25: #{tpu_custom_call.1} parent=11 // pred_check
        %p193 = pneg %p122
      $region26: #{tpu_custom_call.1} parent=11 // pred_check_branch
        %195 = sbr.rel (%p193) target = $region28
      $region27: #{tpu_custom_call.1} parent=11 // pred_region
        _
      $region28: #{tpu_custom_call.1} parent=11 // pred_fallthru
        _
      // Predicated region
      $region29: #{tpu_custom_call.1} parent=11 // pred_check
        %p196 = pneg %p143
      $region30: #{tpu_custom_call.1} parent=11 // pred_check_branch
        %198 = sbr.rel (%p196) target = $region32
      $region31: #{tpu_custom_call.1} parent=11 // pred_region
        _
      $region32: #{tpu_custom_call.1} parent=11 // pred_fallthru
        _
    $region12: #{tpu_custom_call.1} parent=5 // pred_fallthru
      _
    %p199 = scmp.lt.s32.totalorder %s12, 2
    // Predicated region
    $region33: #{tpu_custom_call.1} parent=5 // pred_check
      %p200 = pneg %p199
    $region34: #{tpu_custom_call.1} parent=5 // pred_check_branch
      %202 = sbr.rel (%p200) target = $region36
    $region35: #{tpu_custom_call.1} parent=5 // pred_region
      // Predicated region
      $region37: #{tpu_custom_call.1} parent=35 // pred_check
        %p203 = pneg %p32
      $region38: #{tpu_custom_call.1} parent=35 // pred_check_branch
        %205 = sbr.rel (%p203) target = $region40
      $region39: #{tpu_custom_call.1} parent=35 // pred_region
        %s206 = smul.u32 32, %s12
        %p207 = scmp.lt.s32.totalorder %s206, 63
        %s208 = scalar_select %p207, %s206, 63
        %s209 = smul.addr %s208, 8
        %s210 = scalar_lea.vmem %s0, %s209
        %s211 = smul.u32 32, %s12
      $region40: #{tpu_custom_call.1} parent=35 // pred_fallthru
        _
    $region36: #{tpu_custom_call.1} parent=5 // pred_fallthru
      _
    %p212 = scmp.le.s32.totalorder 1, %s12
    %p213 = scmp.lt.s32.totalorder %s12, 3
    %p214 = pnand %p212, %p213
    %p215 = pneg %p214
    // Predicated region
    $region41: #{tpu_custom_call.1} parent=5 // pred_check
      _
    $region42: #{tpu_custom_call.1} parent=5 // pred_check_branch
      %217 = sbr.rel (%p214) target = $region44
    $region43: #{tpu_custom_call.1} parent=5 // pred_region
      %s218 = ssub.s32 %s12, 1
      %s219 = smul.u32 32, %s17
      %p220 = scmp.lt.s32.totalorder %s219, 63
      %s221 = scalar_select %p220, %s219, 63
      %s222 = smul.addr %s221, 8
      %s223 = scalar_lea.vmem %s0, %s222
      %p224 = pneg %p38
      %p225 = pneg %p35
      %p226 = pneg %p59
      %p227 = pneg %p56
      %p228 = pneg %p80
      %p229 = pneg %p77
      %p230 = pneg %p101
      %p231 = pneg %p98
      %p232 = pneg %p122
      %p233 = pneg %p119
      %p234 = pneg %p143
      %p235 = pneg %p140
      %p236 = pneg %p169
      %p237 = pneg %p166
      %s238 = smul.u32 32, %s17
      %p239 = scmp.lt.s32.totalorder %s238, 63
      %s240 = scalar_select %p239, %s238, 63
      %s241 = smul.addr %s240, 8
      %s242 = scalar_lea.vmem %s6, %s241
      %s243 = smul.u32 32, %s17
      %p244 = scmp.lt.s32.totalorder %s243, 63
      %s245 = scalar_select %p244, %s243, 63
      %s246 = smul.addr %s245, 8
      %s247 = scalar_lea.vmem %s0, %s246
      %s248 = smul.u32 32, %s17
      %s249 = smul.u32 32, %s17
      %p250 = scmp.lt.s32.totalorder %s249, 63
      %s251 = scalar_select %p250, %s249, 63
      %s252 = smul.addr %s251, 8
      %s253 = scalar_lea.vmem %s6, %s252
      %s254 = smul.u32 32, %s17
      %v256 = vld [vmem:[%s247] sm:$0xff]
      %v257 = vld [vmem:[%s247 + $0x8] sm:$0xff]
      %v258 = vld [vmem:[%s247 + $0x10] sm:$0xff]
      %v259 = vld [vmem:[%s247 + $0x18] sm:$0xff]
      %v260 = vld [vmem:[%s247 + $0x20] sm:$0xff]
      %v261 = vld [vmem:[%s247 + $0x28] sm:$0xff]
      %v262 = vld [vmem:[%s247 + $0x30] sm:$0xff]
      %v263 = vld [vmem:[%s247 + $0x38] sm:$0xff]
      %v264 = vld [vmem:[%s247 + $0x40] sm:$0xff]
      %v265 = vld [vmem:[%s247 + $0x48] sm:$0xff]
      %v266 = vld [vmem:[%s247 + $0x50] sm:$0xff]
      %v267 = vld [vmem:[%s247 + $0x58] sm:$0xff]
      %v268 = vld [vmem:[%s247 + $0x60] sm:$0xff]
      %v269 = vld [vmem:[%s247 + $0x68] sm:$0xff]
      %v270 = vld [vmem:[%s247 + $0x70] sm:$0xff]
      %v271 = vld [vmem:[%s247 + $0x78] sm:$0xff]
      %v272 = vld [vmem:[%s247 + $0x80] sm:$0xff]
      %v273 = vld [vmem:[%s247 + $0x88] sm:$0xff]
      %v274 = vld [vmem:[%s247 + $0x90] sm:$0xff]
      %v275 = vld [vmem:[%s247 + $0x98] sm:$0xff]
      %v276 = vld [vmem:[%s247 + $0xa0] sm:$0xff]
      %v277 = vld [vmem:[%s247 + $0xa8] sm:$0xff]
      %v278 = vld [vmem:[%s247 + $0xb0] sm:$0xff]
      %v279 = vld [vmem:[%s247 + $0xb8] sm:$0xff]
      %v280 = vld [vmem:[%s247 + $0xc0] sm:$0xff]
      %v281 = vld [vmem:[%s247 + $0xc8] sm:$0xff]
      %v282 = vld [vmem:[%s247 + $0xd0] sm:$0xff]
      %v283 = vld [vmem:[%s247 + $0xd8] sm:$0xff]
      %v284 = vld [vmem:[%s247 + $0xe0] sm:$0xff]
      %v285 = vld [vmem:[%s247 + $0xe8] sm:$0xff]
      %v286 = vld [vmem:[%s247 + $0xf0] sm:$0xff]
      %v287 = vld [vmem:[%s247 + $0xf8] sm:$0xff]
      %v288 = vpack.c.bf16 %v257, %v256
      %v289 = vpack.c.bf16 %v259, %v258
      %v290 = vpack.c.bf16 %v261, %v260
      %v291 = vpack.c.bf16 %v263, %v262
      %v292 = vpack.c.bf16 %v265, %v264
      %v293 = vpack.c.bf16 %v267, %v266
      %v294 = vpack.c.bf16 %v269, %v268
      %v295 = vpack.c.bf16 %v271, %v270
      %v296 = vpack.c.bf16 %v273, %v272
      %v297 = vpack.c.bf16 %v275, %v274
      %v298 = vpack.c.bf16 %v277, %v276
      %v299 = vpack.c.bf16 %v279, %v278
      %v300 = vpack.c.bf16 %v281, %v280
      %v301 = vpack.c.bf16 %v283, %v282
      %v302 = vpack.c.bf16 %v285, %v284
      %v303 = vpack.c.bf16 %v287, %v286
      %v304 = vld [vmem:[%s1] sm:$0xf]
      %v305 = vld [vmem:[%s1 + $0x4] sm:$0xf]
      %v306 = vld [vmem:[%s1 + $0x8] sm:$0xf]
      %v307 = vld [vmem:[%s1 + $0xc] sm:$0xf]
      %v308 = vld [vmem:[%s2] sm:$0x1]
      %v310 = vlaneseq
      %v311 = vshrl.u32 %v310, 7
      %v312 = vsub.s32 0, %v311
      %v313 = vrot.slane %v308, %v312
      %v319 = vunpack.c.l.b16 %v304
      %v320 = vunpack.c.l.b16 %v305
      %v321 = vunpack.c.l.b16 %v306
      %v322 = vunpack.c.l.b16 %v307
      %v323 = vpack.c.b16 %v320, %v319
      %v324 = vpack.c.b16 %v322, %v321
      %vm327 = vcmask 261120
      %v329 = vsel %vm327, %v288, 0
      %v332 = vsel %vm327, %v289, 0
      %v335 = vsel %vm327, %v290, 0
      %v338 = vsel %vm327, %v291, 0
      %v341 = vsel %vm327, %v292, 0
      %v344 = vsel %vm327, %v293, 0
      %v347 = vsel %vm327, %v294, 0
      %v350 = vsel %vm327, %v295, 0
      %v353 = vsel %vm327, %v296, 0
      %v356 = vsel %vm327, %v297, 0
      %v359 = vsel %vm327, %v298, 0
      %v362 = vsel %vm327, %v299, 0
      %v365 = vsel %vm327, %v300, 0
      %v368 = vsel %vm327, %v301, 0
      %v371 = vsel %vm327, %v302, 0
      %v374 = vsel %vm327, %v303, 0
      %376 = vmatprep.subr.bf16.mxu0 0
      %377 = vmatpush1.bf16.msra.mxu0 %v323
      %378 = vmatprep.subr.bf16.mxu0 0
      %379 = vmatpush1.bf16.msra.mxu0 %v324
      %380 = vmatprep.subr.bf16.mxu0 0
      %381 = vmatpush1.bf16.msra.mxu0 0
      %382 = vmatprep.subr.bf16.mxu0 0
      %383 = vmatpush1.bf16.msra.mxu0 0
      %384 = vmatprep.subr.bf16.mxu0 0
      %385 = vmatpush1.bf16.msra.mxu0 0
      %386 = vmatprep.subr.bf16.mxu0 0
      %387 = vmatpush1.bf16.msra.mxu0 0
      %388 = vmatprep.subr.bf16.mxu0 0
      %389 = vmatpush1.bf16.msra.mxu0 0
      %390 = vmatprep.subr.bf16.mxu0 0
      %391 = vmatpush1.bf16.msra.mxu0 0
      %392 = vmatprep.subr.bf16.mxu0 0
      %393 = vmatpush1.bf16.msra.mxu0 0
      %394 = vmatprep.subr.bf16.mxu0 0
      %395 = vmatpush1.bf16.msra.mxu0 0
      %396 = vmatprep.subr.bf16.mxu0 0
      %397 = vmatpush1.bf16.msra.mxu0 0
      %398 = vmatprep.subr.bf16.mxu0 0
      %399 = vmatpush1.bf16.msra.mxu0 0
      %400 = vmatprep.subr.bf16.mxu0 0
      %401 = vmatpush1.bf16.msra.mxu0 0
      %402 = vmatprep.subr.bf16.mxu0 0
      %403 = vmatpush1.bf16.msra.mxu0 0
      %404 = vmatprep.subr.bf16.mxu0 0
      %405 = vmatpush1.bf16.msra.mxu0 0
      %406 = vmatprep.subr.bf16.mxu0 0
      %407 = vmatpush1.bf16.msra.mxu0 0
      %408 = vmatprep.mubr.bf16.mxu0 0
      %409 = vmatmul.mubr.bf16.gmra.mrb[0].mxu0 %v329
      %v410 = vpop.f32.mrb[0].mxu0
      %v411 = vadd.f32 %v313, %v410
      %v412 = vpop.f32.mrb[0].mxu0
      %v413 = vpop.f32.mrb[0].mxu0
      %v414 = vadd.f32 %v313, %v413
      %v415 = vpop.f32.mrb[0].mxu0
      %416 = vmatprep.mubr.bf16.mxu0 0
      %417 = vmatmul.mubr.bf16.gmra.mrb[0].mxu0 %v332
      %v418 = vpop.f32.mrb[0].mxu0
      %v419 = vadd.f32 %v313, %v418
      %v420 = vpop.f32.mrb[0].mxu0
      %v421 = vpop.f32.mrb[0].mxu0
      %v422 = vadd.f32 %v313, %v421
      %v423 = vpop.f32.mrb[0].mxu0
      %424 = vmatprep.mubr.bf16.mxu0 0
      %425 = vmatmul.mubr.bf16.gmra.mrb[0].mxu0 %v335
      %v426 = vpop.f32.mrb[0].mxu0
      %v427 = vadd.f32 %v313, %v426
      %v428 = vpop.f32.mrb[0].mxu0
      %v429 = vpop.f32.mrb[0].mxu0
      %v430 = vadd.f32 %v313, %v429
      %v431 = vpop.f32.mrb[0].mxu0
      %432 = vmatprep.mubr.bf16.mxu0 0
      %433 = vmatmul.mubr.bf16.gmra.mrb[0].mxu0 %v338
      %v434 = vpop.f32.mrb[0].mxu0
      %v435 = vadd.f32 %v313, %v434
      %v436 = vpop.f32.mrb[0].mxu0
      %v437 = vpop.f32.mrb[0].mxu0
      %v438 = vadd.f32 %v313, %v437
      %v439 = vpop.f32.mrb[0].mxu0
      %440 = vmatprep.mubr.bf16.mxu0 0
      %441 = vmatmul.mubr.bf16.gmra.mrb[0].mxu0 %v341
      %v442 = vpop.f32.mrb[0].mxu0
      %v443 = vadd.f32 %v313, %v442
      %v444 = vpop.f32.mrb[0].mxu0
      %v445 = vpop.f32.mrb[0].mxu0
      %v446 = vadd.f32 %v313, %v445
      %v447 = vpop.f32.mrb[0].mxu0
      %448 = vmatprep.mubr.bf16.mxu0 0
      %449 = vmatmul.mubr.bf16.gmra.mrb[0].mxu0 %v344
      %v450 = vpop.f32.mrb[0].mxu0
      %v451 = vadd.f32 %v313, %v450
      %v452 = vpop.f32.mrb[0].mxu0
      %v453 = vpop.f32.mrb[0].mxu0
      %v454 = vadd.f32 %v313, %v453
      %v455 = vpop.f32.mrb[0].mxu0
      %456 = vmatprep.mubr.bf16.mxu0 0
      %457 = vmatmul.mubr.bf16.gmra.mrb[0].mxu0 %v347
      %v458 = vpop.f32.mrb[0].mxu0
      %v459 = vadd.f32 %v313, %v458
      %v460 = vpop.f32.mrb[0].mxu0
      %v461 = vpop.f32.mrb[0].mxu0
      %v462 = vadd.f32 %v313, %v461
      %v463 = vpop.f32.mrb[0].mxu0
      %464 = vmatprep.mubr.bf16.mxu0 0
      %465 = vmatmul.mubr.bf16.gmra.mrb[0].mxu0 %v350
      %v466 = vpop.f32.mrb[0].mxu0
      %v467 = vadd.f32 %v313, %v466
      %v468 = vpop.f32.mrb[0].mxu0
      %v469 = vpop.f32.mrb[0].mxu0
      %v470 = vadd.f32 %v313, %v469
      %v471 = vpop.f32.mrb[0].mxu0
      %472 = vmatprep.mubr.bf16.mxu0 0
      %473 = vmatmul.mubr.bf16.gmra.mrb[0].mxu0 %v353
      %v474 = vpop.f32.mrb[0].mxu0
      %v475 = vadd.f32 %v313, %v474
      %v476 = vpop.f32.mrb[0].mxu0
      %v477 = vpop.f32.mrb[0].mxu0
      %v478 = vadd.f32 %v313, %v477
      %v479 = vpop.f32.mrb[0].mxu0
      %480 = vmatprep.mubr.bf16.mxu0 0
      %481 = vmatmul.mubr.bf16.gmra.mrb[0].mxu0 %v356
      %v482 = vpop.f32.mrb[0].mxu0
      %v483 = vadd.f32 %v313, %v482
      %v484 = vpop.f32.mrb[0].mxu0
      %v485 = vpop.f32.mrb[0].mxu0
      %v486 = vadd.f32 %v313, %v485
      %v487 = vpop.f32.mrb[0].mxu0
      %488 = vmatprep.mubr.bf16.mxu0 0
      %489 = vmatmul.mubr.bf16.gmra.mrb[0].mxu0 %v359
      %v490 = vpop.f32.mrb[0].mxu0
      %v491 = vadd.f32 %v313, %v490
      %v492 = vpop.f32.mrb[0].mxu0
      %v493 = vpop.f32.mrb[0].mxu0
      %v494 = vadd.f32 %v313, %v493
      %v495 = vpop.f32.mrb[0].mxu0
      %496 = vmatprep.mubr.bf16.mxu0 0
      %497 = vmatmul.mubr.bf16.gmra.mrb[0].mxu0 %v362
      %v498 = vpop.f32.mrb[0].mxu0
      %v499 = vadd.f32 %v313, %v498
      %v500 = vpop.f32.mrb[0].mxu0
      %v501 = vpop.f32.mrb[0].mxu0
      %v502 = vadd.f32 %v313, %v501
      %v503 = vpop.f32.mrb[0].mxu0
      %504 = vmatprep.mubr.bf16.mxu0 0
      %505 = vmatmul.mubr.bf16.gmra.mrb[0].mxu0 %v365
      %v506 = vpop.f32.mrb[0].mxu0
      %v507 = vadd.f32 %v313, %v506
      %v508 = vpop.f32.mrb[0].mxu0
      %v509 = vpop.f32.mrb[0].mxu0
      %v510 = vadd.f32 %v313, %v509
      %v511 = vpop.f32.mrb[0].mxu0
      %512 = vmatprep.mubr.bf16.mxu0 0
      %513 = vmatmul.mubr.bf16.gmra.mrb[0].mxu0 %v368
      %v514 = vpop.f32.mrb[0].mxu0
      %v515 = vadd.f32 %v313, %v514
      %v516 = vpop.f32.mrb[0].mxu0
      %v517 = vpop.f32.mrb[0].mxu0
      %v518 = vadd.f32 %v313, %v517
      %v519 = vpop.f32.mrb[0].mxu0
      %520 = vmatprep.mubr.bf16.mxu0 0
      %521 = vmatmul.mubr.bf16.gmra.mrb[0].mxu0 %v371
      %v522 = vpop.f32.mrb[0].mxu0
      %v523 = vadd.f32 %v313, %v522
      %v524 = vpop.f32.mrb[0].mxu0
      %v525 = vpop.f32.mrb[0].mxu0
      %v526 = vadd.f32 %v313, %v525
      %v527 = vpop.f32.mrb[0].mxu0
      %528 = vmatprep.mubr.bf16.mxu0 0
      %529 = vmatmul.mubr.bf16.gmra.mrb[0].mxu0 %v374
      %v530 = vpop.f32.mrb[0].mxu0
      %v531 = vadd.f32 %v313, %v530
      %v532 = vpop.f32.mrb[0].mxu0
      %v533 = vpop.f32.mrb[0].mxu0
      %v534 = vadd.f32 %v313, %v533
      %v535 = vpop.f32.mrb[0].mxu0
      %536 = vdwg.mxu0
      %v537 = vpack.c.bf16 %v414, %v411
      %v538 = vpack.c.bf16 %v422, %v419
      %v539 = vpack.c.bf16 %v430, %v427
      %v540 = vpack.c.bf16 %v438, %v435
      %v541 = vpack.c.bf16 %v446, %v443
      %v542 = vpack.c.bf16 %v454, %v451
      %v543 = vpack.c.bf16 %v462, %v459
      %v544 = vpack.c.bf16 %v470, %v467
      %v545 = vpack.c.bf16 %v478, %v475
      %v546 = vpack.c.bf16 %v486, %v483
      %v547 = vpack.c.bf16 %v494, %v491
      %v548 = vpack.c.bf16 %v502, %v499
      %v549 = vpack.c.bf16 %v510, %v507
      %v550 = vpack.c.bf16 %v518, %v515
      %v551 = vpack.c.bf16 %v526, %v523
      %v552 = vpack.c.bf16 %v534, %v531
      %v553 = vld [vmem:[%s3] sm:$0xff]
      %v554 = vld [vmem:[%s3 + $0x8] sm:$0xff]
      %556 = vrot.lane.b32.xlu0 %v537, 96
      %v557 = vpop.permute.xlu0 %556
      %vm558 = vcmask 64512
      %v560 = vsel %vm558, %v537, 0
      %v563 = vsel %vm558, %v557, 0
      %565 = vmatprep.subr.bf16.mxu0 0
      %566 = vmatpush1.bf16.xpose.msra.mxu0 %v563
      %567 = vmatprep.subr.bf16.mxu0 0
      %568 = vmatpush1.bf16.xpose.msra.mxu0 0
      %569 = vmatprep.subr.bf16.mxu0 0
      %570 = vmatpush1.bf16.xpose.msra.mxu0 0
      %571 = vmatprep.subr.bf16.mxu0 0
      %572 = vmatpush1.bf16.xpose.msra.mxu0 0
      %573 = vmatprep.subr.bf16.mxu0 0
      %574 = vmatpush1.bf16.xpose.msra.mxu0 0
      %575 = vmatprep.subr.bf16.mxu0 0
      %576 = vmatpush1.bf16.xpose.msra.mxu0 0
      %577 = vmatprep.subr.bf16.mxu0 0
      %578 = vmatpush1.bf16.xpose.msra.mxu0 0
      %579 = vmatprep.subr.bf16.mxu0 0
      %580 = vmatpush1.bf16.xpose.msra.mxu0 0
      %581 = vmatprep.subr.bf16.mxu0 0
      %582 = vmatpush1.bf16.xpose.msra.mxu0 0
      %583 = vmatprep.subr.bf16.mxu0 0
      %584 = vmatpush1.bf16.xpose.msra.mxu0 0
      %585 = vmatprep.subr.bf16.mxu0 0
      %586 = vmatpush1.bf16.xpose.msra.mxu0 0
      %587 = vmatprep.subr.bf16.mxu0 0
      %588 = vmatpush1.bf16.xpose.msra.mxu0 0
      %589 = vmatprep.subr.bf16.mxu0 0
      %590 = vmatpush1.bf16.xpose.msra.mxu0 0
      %591 = vmatprep.subr.bf16.mxu0 0
      %592 = vmatpush1.bf16.xpose.msra.mxu0 0
      %593 = vmatprep.subr.bf16.mxu0 0
      %594 = vmatpush1.bf16.xpose.msra.mxu0 0
      %595 = vmatprep.subr.bf16.mxu0 0
      %596 = vmatpush1.bf16.xpose.msra.mxu0 0
      %597 = vmatprep.mubr.bf16.mxu0 0
      %598 = vmatmul.mubr.bf16.gmra.mrb[0].mxu0 %v560
      %v599 = vpop.f32.mrb[0].mxu0
      %v600 = vadd.f32 %v553, %v599
      %v601 = vpop.f32.mrb[0].mxu0
      %v602 = vpop.f32.mrb[0].mxu0
      %v603 = vadd.f32 %v554, %v602
      %v604 = vpop.f32.mrb[0].mxu0
      %605 = vdwg.mxu0
      %607 = vrot.lane.b32.xlu0 %v538, 96
      %v608 = vpop.permute.xlu0 %607
      %v610 = vsel %vm558, %v538, 0
      %v613 = vsel %vm558, %v608, 0
      %615 = vmatprep.subr.bf16.mxu0 0
      %616 = vmatpush1.bf16.xpose.msra.mxu0 %v613
      %617 = vmatprep.subr.bf16.mxu0 0
      %618 = vmatpush1.bf16.xpose.msra.mxu0 0
      %619 = vmatprep.subr.bf16.mxu0 0
      %620 = vmatpush1.bf16.xpose.msra.mxu0 0
      %621 = vmatprep.subr.bf16.mxu0 0
      %622 = vmatpush1.bf16.xpose.msra.mxu0 0
      %623 = vmatprep.subr.bf16.mxu0 0
      %624 = vmatpush1.bf16.xpose.msra.mxu0 0
      %625 = vmatprep.subr.bf16.mxu0 0
      %626 = vmatpush1.bf16.xpose.msra.mxu0 0
      %627 = vmatprep.subr.bf16.mxu0 0
      %628 = vmatpush1.bf16.xpose.msra.mxu0 0
      %629 = vmatprep.subr.bf16.mxu0 0
      %630 = vmatpush1.bf16.xpose.msra.mxu0 0
      %631 = vmatprep.subr.bf16.mxu0 0
      %632 = vmatpush1.bf16.xpose.msra.mxu0 0
      %633 = vmatprep.subr.bf16.mxu0 0
      %634 = vmatpush1.bf16.xpose.msra.mxu0 0
      %635 = vmatprep.subr.bf16.mxu0 0
      %636 = vmatpush1.bf16.xpose.msra.mxu0 0
      %637 = vmatprep.subr.bf16.mxu0 0
      %638 = vmatpush1.bf16.xpose.msra.mxu0 0
      %639 = vmatprep.subr.bf16.mxu0 0
      %640 = vmatpush1.bf16.xpose.msra.mxu0 0
      %641 = vmatprep.subr.bf16.mxu0 0
      %642 = vmatpush1.bf16.xpose.msra.mxu0 0
      %643 = vmatprep.subr.bf16.mxu0 0
      %644 = vmatpush1.bf16.xpose.msra.mxu0 0
      %645 = vmatprep.subr.bf16.mxu0 0
      %646 = vmatpush1.bf16.xpose.msra.mxu0 0
      %647 = vmatprep.mubr.bf16.mxu0 0
      %648 = vmatmul.mubr.bf16.gmra.mrb[0].mxu0 %v610
      %v649 = vpop.f32.mrb[0].mxu0
      %v650 = vadd.f32 %v553, %v649
      %v651 = vpop.f32.mrb[0].mxu0
      %v652 = vpop.f32.mrb[0].mxu0
      %v653 = vadd.f32 %v554, %v652
      %v654 = vpop.f32.mrb[0].mxu0
      %655 = vdwg.mxu0
      %657 = vrot.lane.b32.xlu0 %v539, 96
      %v658 = vpop.permute.xlu0 %657
      %v660 = vsel %vm558, %v539, 0
      %v663 = vsel %vm558, %v658, 0
      %665 = vmatprep.subr.bf16.mxu0 0
      %666 = vmatpush1.bf16.xpose.msra.mxu0 %v663
      %667 = vmatprep.subr.bf16.mxu0 0
      %668 = vmatpush1.bf16.xpose.msra.mxu0 0
      %669 = vmatprep.subr.bf16.mxu0 0
      %670 = vmatpush1.bf16.xpose.msra.mxu0 0
      %671 = vmatprep.subr.bf16.mxu0 0
      %672 = vmatpush1.bf16.xpose.msra.mxu0 0
      %673 = vmatprep.subr.bf16.mxu0 0
      %674 = vmatpush1.bf16.xpose.msra.mxu0 0
      %675 = vmatprep.subr.bf16.mxu0 0
      %676 = vmatpush1.bf16.xpose.msra.mxu0 0
      %677 = vmatprep.subr.bf16.mxu0 0
      %678 = vmatpush1.bf16.xpose.msra.mxu0 0
      %679 = vmatprep.subr.bf16.mxu0 0
      %680 = vmatpush1.bf16.xpose.msra.mxu0 0
      %681 = vmatprep.subr.bf16.mxu0 0
      %682 = vmatpush1.bf16.xpose.msra.mxu0 0
      %683 = vmatprep.subr.bf16.mxu0 0
      %684 = vmatpush1.bf16.xpose.msra.mxu0 0
      %685 = vmatprep.subr.bf16.mxu0 0
      %686 = vmatpush1.bf16.xpose.msra.mxu0 0
      %687 = vmatprep.subr.bf16.mxu0 0
      %688 = vmatpush1.bf16.xpose.msra.mxu0 0
      %689 = vmatprep.subr.bf16.mxu0 0
      %690 = vmatpush1.bf16.xpose.msra.mxu0 0
      %691 = vmatprep.subr.bf16.mxu0 0
      %692 = vmatpush1.bf16.xpose.msra.mxu0 0
      %693 = vmatprep.subr.bf16.mxu0 0
      %694 = vmatpush1.bf16.xpose.msra.mxu0 0
      %695 = vmatprep.subr.bf16.mxu0 0
      %696 = vmatpush1.bf16.xpose.msra.mxu0 0
      %697 = vmatprep.mubr.bf16.mxu0 0
      %698 = vmatmul.mubr.bf16.gmra.mrb[0].mxu0 %v660
      %v699 = vpop.f32.mrb[0].mxu0
      %v700 = vadd.f32 %v553, %v699
      %v701 = vpop.f32.mrb[0].mxu0
      %v702 = vpop.f32.mrb[0].mxu0
      %v703 = vadd.f32 %v554, %v702
      %v704 = vpop.f32.mrb[0].mxu0
      %705 = vdwg.mxu0
      %707 = vrot.lane.b32.xlu0 %v540, 96
      %v708 = vpop.permute.xlu0 %707
      %v710 = vsel %vm558, %v540, 0
      %v713 = vsel %vm558, %v708, 0
      %715 = vmatprep.subr.bf16.mxu0 0
      %716 = vmatpush1.bf16.xpose.msra.mxu0 %v713
      %717 = vmatprep.subr.bf16.mxu0 0
      %718 = vmatpush1.bf16.xpose.msra.mxu0 0
      %719 = vmatprep.subr.bf16.mxu0 0
      %720 = vmatpush1.bf16.xpose.msra.mxu0 0
      %721 = vmatprep.subr.bf16.mxu0 0
      %722 = vmatpush1.bf16.xpose.msra.mxu0 0
      %723 = vmatprep.subr.bf16.mxu0 0
      %724 = vmatpush1.bf16.xpose.msra.mxu0 0
      %725 = vmatprep.subr.bf16.mxu0 0
      %726 = vmatpush1.bf16.xpose.msra.mxu0 0
      %727 = vmatprep.subr.bf16.mxu0 0
      %728 = vmatpush1.bf16.xpose.msra.mxu0 0
      %729 = vmatprep.subr.bf16.mxu0 0
      %730 = vmatpush1.bf16.xpose.msra.mxu0 0
      %731 = vmatprep.subr.bf16.mxu0 0
      %732 = vmatpush1.bf16.xpose.msra.mxu0 0
      %733 = vmatprep.subr.bf16.mxu0 0
      %734 = vmatpush1.bf16.xpose.msra.mxu0 0
      %735 = vmatprep.subr.bf16.mxu0 0
      %736 = vmatpush1.bf16.xpose.msra.mxu0 0
      %737 = vmatprep.subr.bf16.mxu0 0
      %738 = vmatpush1.bf16.xpose.msra.mxu0 0
      %739 = vmatprep.subr.bf16.mxu0 0
      %740 = vmatpush1.bf16.xpose.msra.mxu0 0
      %741 = vmatprep.subr.bf16.mxu0 0
      %742 = vmatpush1.bf16.xpose.msra.mxu0 0
      %743 = vmatprep.subr.bf16.mxu0 0
      %744 = vmatpush1.bf16.xpose.msra.mxu0 0
      %745 = vmatprep.subr.bf16.mxu0 0
      %746 = vmatpush1.bf16.xpose.msra.mxu0 0
      %747 = vmatprep.mubr.bf16.mxu0 0
      %748 = vmatmul.mubr.bf16.gmra.mrb[0].mxu0 %v710
      %v749 = vpop.f32.mrb[0].mxu0
      %v750 = vadd.f32 %v553, %v749
      %v751 = vpop.f32.mrb[0].mxu0
      %v752 = vpop.f32.mrb[0].mxu0
      %v753 = vadd.f32 %v554, %v752
      %v754 = vpop.f32.mrb[0].mxu0
      %755 = vdwg.mxu0
      %757 = vrot.lane.b32.xlu0 %v541, 96
      %v758 = vpop.permute.xlu0 %757
      %v760 = vsel %vm558, %v541, 0
      %v763 = vsel %vm558, %v758, 0
      %765 = vmatprep.subr.bf16.mxu0 0
      %766 = vmatpush1.bf16.xpose.msra.mxu0 %v763
      %767 = vmatprep.subr.bf16.mxu0 0
      %768 = vmatpush1.bf16.xpose.msra.mxu0 0
      %769 = vmatprep.subr.bf16.mxu0 0
      %770 = vmatpush1.bf16.xpose.msra.mxu0 0
      %771 = vmatprep.subr.bf16.mxu0 0
      %772 = vmatpush1.bf16.xpose.msra.mxu0 0
      %773 = vmatprep.subr.bf16.mxu0 0
      %774 = vmatpush1.bf16.xpose.msra.mxu0 0
      %775 = vmatprep.subr.bf16.mxu0 0
      %776 = vmatpush1.bf16.xpose.msra.mxu0 0
      %777 = vmatprep.subr.bf16.mxu0 0
      %778 = vmatpush1.bf16.xpose.msra.mxu0 0
      %779 = vmatprep.subr.bf16.mxu0 0
      %780 = vmatpush1.bf16.xpose.msra.mxu0 0
      %781 = vmatprep.subr.bf16.mxu0 0
      %782 = vmatpush1.bf16.xpose.msra.mxu0 0
      %783 = vmatprep.subr.bf16.mxu0 0
      %784 = vmatpush1.bf16.xpose.msra.mxu0 0
      %785 = vmatprep.subr.bf16.mxu0 0
      %786 = vmatpush1.bf16.xpose.msra.mxu0 0
      %787 = vmatprep.subr.bf16.mxu0 0
      %788 = vmatpush1.bf16.xpose.msra.mxu0 0
      %789 = vmatprep.subr.bf16.mxu0 0
      %790 = vmatpush1.bf16.xpose.msra.mxu0 0
      %791 = vmatprep.subr.bf16.mxu0 0
      %792 = vmatpush1.bf16.xpose.msra.mxu0 0
      %793 = vmatprep.subr.bf16.mxu0 0
      %794 = vmatpush1.bf16.xpose.msra.mxu0 0
      %795 = vmatprep.subr.bf16.mxu0 0
      %796 = vmatpush1.bf16.xpose.msra.mxu0 0
      %797 = vmatprep.mubr.bf16.mxu0 0
      %798 = vmatmul.mubr.bf16.gmra.mrb[0].mxu0 %v760
      %v799 = vpop.f32.mrb[0].mxu0
      %v800 = vadd.f32 %v553, %v799
      %v801 = vpop.f32.mrb[0].mxu0
      %v802 = vpop.f32.mrb[0].mxu0
      %v803 = vadd.f32 %v554, %v802
      %v804 = vpop.f32.mrb[0].mxu0
      %805 = vdwg.mxu0
      %807 = vrot.lane.b32.xlu0 %v542, 96
      %v808 = vpop.permute.xlu0 %807
      %v810 = vsel %vm558, %v542, 0
      %v813 = vsel %vm558, %v808, 0
      %815 = vmatprep.subr.bf16.mxu0 0
      %816 = vmatpush1.bf16.xpose.msra.mxu0 %v813
      %817 = vmatprep.subr.bf16.mxu0 0
      %818 = vmatpush1.bf16.xpose.msra.mxu0 0
      %819 = vmatprep.subr.bf16.mxu0 0
      %820 = vmatpush1.bf16.xpose.msra.mxu0 0
      %821 = vmatprep.subr.bf16.mxu0 0
      %822 = vmatpush1.bf16.xpose.msra.mxu0 0
      %823 = vmatprep.subr.bf16.mxu0 0
      %824 = vmatpush1.bf16.xpose.msra.mxu0 0
      %825 = vmatprep.subr.bf16.mxu0 0
      %826 = vmatpush1.bf16.xpose.msra.mxu0 0
      %827 = vmatprep.subr.bf16.mxu0 0
      %828 = vmatpush1.bf16.xpose.msra.mxu0 0
      %829 = vmatprep.subr.bf16.mxu0 0
      %830 = vmatpush1.bf16.xpose.msra.mxu0 0
      %831 = vmatprep.subr.bf16.mxu0 0
      %832 = vmatpush1.bf16.xpose.msra.mxu0 0
      %833 = vmatprep.subr.bf16.mxu0 0
      %834 = vmatpush1.bf16.xpose.msra.mxu0 0
      %835 = vmatprep.subr.bf16.mxu0 0
      %836 = vmatpush1.bf16.xpose.msra.mxu0 0
      %837 = vmatprep.subr.bf16.mxu0 0
      %838 = vmatpush1.bf16.xpose.msra.mxu0 0
      %839 = vmatprep.subr.bf16.mxu0 0
      %840 = vmatpush1.bf16.xpose.msra.mxu0 0
      %841 = vmatprep.subr.bf16.mxu0 0
      %842 = vmatpush1.bf16.xpose.msra.mxu0 0
      %843 = vmatprep.subr.bf16.mxu0 0
      %844 = vmatpush1.bf16.xpose.msra.mxu0 0
      %845 = vmatprep.subr.bf16.mxu0 0
      %846 = vmatpush1.bf16.xpose.msra.mxu0 0
      %847 = vmatprep.mubr.bf16.mxu0 0
      %848 = vmatmul.mubr.bf16.gmra.mrb[0].mxu0 %v810
      %v849 = vpop.f32.mrb[0].mxu0
      %v850 = vadd.f32 %v553, %v849
      %v851 = vpop.f32.mrb[0].mxu0
      %v852 = vpop.f32.mrb[0].mxu0
      %v853 = vadd.f32 %v554, %v852
      %v854 = vpop.f32.mrb[0].mxu0
      %855 = vdwg.mxu0
      %857 = vrot.lane.b32.xlu0 %v543, 96
      %v858 = vpop.permute.xlu0 %857
      %v860 = vsel %vm558, %v543, 0
      %v863 = vsel %vm558, %v858, 0
      %865 = vmatprep.subr.bf16.mxu0 0
      %866 = vmatpush1.bf16.xpose.msra.mxu0 %v863
      %867 = vmatprep.subr.bf16.mxu0 0
      %868 = vmatpush1.bf16.xpose.msra.mxu0 0
      %869 = vmatprep.subr.bf16.mxu0 0
      %870 = vmatpush1.bf16.xpose.msra.mxu0 0
      %871 = vmatprep.subr.bf16.mxu0 0
      %872 = vmatpush1.bf16.xpose.msra.mxu0 0
      %873 = vmatprep.subr.bf16.mxu0 0
      %874 = vmatpush1.bf16.xpose.msra.mxu0 0
      %875 = vmatprep.subr.bf16.mxu0 0
      %876 = vmatpush1.bf16.xpose.msra.mxu0 0
      %877 = vmatprep.subr.bf16.mxu0 0
      %878 = vmatpush1.bf16.xpose.msra.mxu0 0
      %879 = vmatprep.subr.bf16.mxu0 0
      %880 = vmatpush1.bf16.xpose.msra.mxu0 0
      %881 = vmatprep.subr.bf16.mxu0 0
      %882 = vmatpush1.bf16.xpose.msra.mxu0 0
      %883 = vmatprep.subr.bf16.mxu0 0
      %884 = vmatpush1.bf16.xpose.msra.mxu0 0
      %885 = vmatprep.subr.bf16.mxu0 0
      %886 = vmatpush1.bf16.xpose.msra.mxu0 0
      %887 = vmatprep.subr.bf16.mxu0 0
      %888 = vmatpush1.bf16.xpose.msra.mxu0 0
      %889 = vmatprep.subr.bf16.mxu0 0
      %890 = vmatpush1.bf16.xpose.msra.mxu0 0
      %891 = vmatprep.subr.bf16.mxu0 0
      %892 = vmatpush1.bf16.xpose.msra.mxu0 0
      %893 = vmatprep.subr.bf16.mxu0 0
      %894 = vmatpush1.bf16.xpose.msra.mxu0 0
      %895 = vmatprep.subr.bf16.mxu0 0
      %896 = vmatpush1.bf16.xpose.msra.mxu0 0
      %897 = vmatprep.mubr.bf16.mxu0 0
      %898 = vmatmul.mubr.bf16.gmra.mrb[0].mxu0 %v860
      %v899 = vpop.f32.mrb[0].mxu0
      %v900 = vadd.f32 %v553, %v899
      %v901 = vpop.f32.mrb[0].mxu0
      %v902 = vpop.f32.mrb[0].mxu0
      %v903 = vadd.f32 %v554, %v902
      %v904 = vpop.f32.mrb[0].mxu0
      %905 = vdwg.mxu0
      %907 = vrot.lane.b32.xlu0 %v544, 96
      %v908 = vpop.permute.xlu0 %907
      %v910 = vsel %vm558, %v544, 0
      %v913 = vsel %vm558, %v908, 0
      %915 = vmatprep.subr.bf16.mxu0 0
      %916 = vmatpush1.bf16.xpose.msra.mxu0 %v913
      %917 = vmatprep.subr.bf16.mxu0 0
      %918 = vmatpush1.bf16.xpose.msra.mxu0 0
      %919 = vmatprep.subr.bf16.mxu0 0
      %920 = vmatpush1.bf16.xpose.msra.mxu0 0
      %921 = vmatprep.subr.bf16.mxu0 0
      %922 = vmatpush1.bf16.xpose.msra.mxu0 0
      %923 = vmatprep.subr.bf16.mxu0 0
      %924 = vmatpush1.bf16.xpose.msra.mxu0 0
      %925 = vmatprep.subr.bf16.mxu0 0
      %926 = vmatpush1.bf16.xpose.msra.mxu0 0
      %927 = vmatprep.subr.bf16.mxu0 0
      %928 = vmatpush1.bf16.xpose.msra.mxu0 0
      %929 = vmatprep.subr.bf16.mxu0 0
      %930 = vmatpush1.bf16.xpose.msra.mxu0 0
      %931 = vmatprep.subr.bf16.mxu0 0
      %932 = vmatpush1.bf16.xpose.msra.mxu0 0
      %933 = vmatprep.subr.bf16.mxu0 0
      %934 = vmatpush1.bf16.xpose.msra.mxu0 0
      %935 = vmatprep.subr.bf16.mxu0 0
      %936 = vmatpush1.bf16.xpose.msra.mxu0 0
      %937 = vmatprep.subr.bf16.mxu0 0
      %938 = vmatpush1.bf16.xpose.msra.mxu0 0
      %939 = vmatprep.subr.bf16.mxu0 0
      %940 = vmatpush1.bf16.xpose.msra.mxu0 0
      %941 = vmatprep.subr.bf16.mxu0 0
      %942 = vmatpush1.bf16.xpose.msra.mxu0 0
      %943 = vmatprep.subr.bf16.mxu0 0
      %944 = vmatpush1.bf16.xpose.msra.mxu0 0
      %945 = vmatprep.subr.bf16.mxu0 0
      %946 = vmatpush1.bf16.xpose.msra.mxu0 0
      %947 = vmatprep.mubr.bf16.mxu0 0
      %948 = vmatmul.mubr.bf16.gmra.mrb[0].mxu0 %v910
      %v949 = vpop.f32.mrb[0].mxu0
      %v950 = vadd.f32 %v553, %v949
      %v951 = vpop.f32.mrb[0].mxu0
      %v952 = vpop.f32.mrb[0].mxu0
      %v953 = vadd.f32 %v554, %v952
      %v954 = vpop.f32.mrb[0].mxu0
      %955 = vdwg.mxu0
      %957 = vrot.lane.b32.xlu0 %v545, 96
      %v958 = vpop.permute.xlu0 %957
      %v960 = vsel %vm558, %v545, 0
      %v963 = vsel %vm558, %v958, 0
      %965 = vmatprep.subr.bf16.mxu0 0
      %966 = vmatpush1.bf16.xpose.msra.mxu0 %v963
      %967 = vmatprep.subr.bf16.mxu0 0
      %968 = vmatpush1.bf16.xpose.msra.mxu0 0
      %969 = vmatprep.subr.bf16.mxu0 0
      %970 = vmatpush1.bf16.xpose.msra.mxu0 0
      %971 = vmatprep.subr.bf16.mxu0 0
      %972 = vmatpush1.bf16.xpose.msra.mxu0 0
      %973 = vmatprep.subr.bf16.mxu0 0
      %974 = vmatpush1.bf16.xpose.msra.mxu0 0
      %975 = vmatprep.subr.bf16.mxu0 0
      %976 = vmatpush1.bf16.xpose.msra.mxu0 0
      %977 = vmatprep.subr.bf16.mxu0 0
      %978 = vmatpush1.bf16.xpose.msra.mxu0 0
      %979 = vmatprep.subr.bf16.mxu0 0
      %980 = vmatpush1.bf16.xpose.msra.mxu0 0
      %981 = vmatprep.subr.bf16.mxu0 0
      %982 = vmatpush1.bf16.xpose.msra.mxu0 0
      %983 = vmatprep.subr.bf16.mxu0 0
      %984 = vmatpush1.bf16.xpose.msra.mxu0 0
      %985 = vmatprep.subr.bf16.mxu0 0
      %986 = vmatpush1.bf16.xpose.msra.mxu0 0
      %987 = vmatprep.subr.bf16.mxu0 0
      %988 = vmatpush1.bf16.xpose.msra.mxu0 0
      %989 = vmatprep.subr.bf16.mxu0 0
      %990 = vmatpush1.bf16.xpose.msra.mxu0 0
      %991 = vmatprep.subr.bf16.mxu0 0
      %992 = vmatpush1.bf16.xpose.msra.mxu0 0
      %993 = vmatprep.subr.bf16.mxu0 0
      %994 = vmatpush1.bf16.xpose.msra.mxu0 0
      %995 = vmatprep.subr.bf16.mxu0 0
      %996 = vmatpush1.bf16.xpose.msra.mxu0 0
      %997 = vmatprep.mubr.bf16.mxu0 0
      %998 = vmatmul.mubr.bf16.gmra.mrb[0].mxu0 %v960
      %v999 = vpop.f32.mrb[0].mxu0
      %v1000 = vadd.f32 %v553, %v999
      %v1001 = vpop.f32.mrb[0].mxu0
      %v1002 = vpop.f32.mrb[0].mxu0
      %v1003 = vadd.f32 %v554, %v1002
      %v1004 = vpop.f32.mrb[0].mxu0
      %1005 = vdwg.mxu0
      %1007 = vrot.lane.b32.xlu0 %v546, 96
      %v1008 = vpop.permute.xlu0 %1007
      %v1010 = vsel %vm558, %v546, 0
      %v1013 = vsel %vm558, %v1008, 0
      %1015 = vmatprep.subr.bf16.mxu0 0
      %1016 = vmatpush1.bf16.xpose.msra.mxu0 %v1013
      %1017 = vmatprep.subr.bf16.mxu0 0
      %1018 = vmatpush1.bf16.xpose.msra.mxu0 0
      %1019 = vmatprep.subr.bf16.mxu0 0
      %1020 = vmatpush1.bf16.xpose.msra.mxu0 0
      %1021 = vmatprep.subr.bf16.mxu0 0
      %1022 = vmatpush1.bf16.xpose.msra.mxu0 0
      %1023 = vmatprep.subr.bf16.mxu0 0
      %1024 = vmatpush1.bf16.xpose.msra.mxu0 0
      %1025 = vmatprep.subr.bf16.mxu0 0
      %1026 = vmatpush1.bf16.xpose.msra.mxu0 0
      %1027 = vmatprep.subr.bf16.mxu0 0
      %1028 = vmatpush1.bf16.xpose.msra.mxu0 0
      %1029 = vmatprep.subr.bf16.mxu0 0
      %1030 = vmatpush1.bf16.xpose.msra.mxu0 0
      %1031 = vmatprep.subr.bf16.mxu0 0
      %1032 = vmatpush1.bf16.xpose.msra.mxu0 0
      %1033 = vmatprep.subr.bf16.mxu0 0
      %1034 = vmatpush1.bf16.xpose.msra.mxu0 0
      %1035 = vmatprep.subr.bf16.mxu0 0
      %1036 = vmatpush1.bf16.xpose.msra.mxu0 0
      %1037 = vmatprep.subr.bf16.mxu0 0
      %1038 = vmatpush1.bf16.xpose.msra.mxu0 0
      %1039 = vmatprep.subr.bf16.mxu0 0
      %1040 = vmatpush1.bf16.xpose.msra.mxu0 0
      %1041 = vmatprep.subr.bf16.mxu0 0
      %1042 = vmatpush1.bf16.xpose.msra.mxu0 0
      %1043 = vmatprep.subr.bf16.mxu0 0
      %1044 = vmatpush1.bf16.xpose.msra.mxu0 0
      %1045 = vmatprep.subr.bf16.mxu0 0
      %1046 = vmatpush1.bf16.xpose.msra.mxu0 0
      %1047 = vmatprep.mubr.bf16.mxu0 0
      %1048 = vmatmul.mubr.bf16.gmra.mrb[0].mxu0 %v1010
      %v1049 = vpop.f32.mrb[0].mxu0
      %v1050 = vadd.f32 %v553, %v1049
      %v1051 = vpop.f32.mrb[0].mxu0
      %v1052 = vpop.f32.mrb[0].mxu0
      %v1053 = vadd.f32 %v554, %v1052
      %v1054 = vpop.f32.mrb[0].mxu0
      %1055 = vdwg.mxu0
      %1057 = vrot.lane.b32.xlu0 %v547, 96
      %v1058 = vpop.permute.xlu0 %1057
      %v1060 = vsel %vm558, %v547, 0
      %v1063 = vsel %vm558, %v1058, 0
      %1065 = vmatprep.subr.bf16.mxu0 0
      %1066 = vmatpush1.bf16.xpose.msra.mxu0 %v1063
      %1067 = vmatprep.subr.bf16.mxu0 0
      %1068 = vmatpush1.bf16.xpose.msra.mxu0 0
      %1069 = vmatprep.subr.bf16.mxu0 0
      %1070 = vmatpush1.bf16.xpose.msra.mxu0 0
      %1071 = vmatprep.subr.bf16.mxu0 0
      %1072 = vmatpush1.bf16.xpose.msra.mxu0 0
      %1073 = vmatprep.subr.bf16.mxu0 0
      %1074 = vmatpush1.bf16.xpose.msra.mxu0 0
      %1075 = vmatprep.subr.bf16.mxu0 0
      %1076 = vmatpush1.bf16.xpose.msra.mxu0 0
      %1077 = vmatprep.subr.bf16.mxu0 0
      %1078 = vmatpush1.bf16.xpose.msra.mxu0 0
      %1079 = vmatprep.subr.bf16.mxu0 0
      %1080 = vmatpush1.bf16.xpose.msra.mxu0 0
      %1081 = vmatprep.subr.bf16.mxu0 0
      %1082 = vmatpush1.bf16.xpose.msra.mxu0 0
      %1083 = vmatprep.subr.bf16.mxu0 0
      %1084 = vmatpush1.bf16.xpose.msra.mxu0 0
      %1085 = vmatprep.subr.bf16.mxu0 0
      %1086 = vmatpush1.bf16.xpose.msra.mxu0 0
      %1087 = vmatprep.subr.bf16.mxu0 0
      %1088 = vmatpush1.bf16.xpose.msra.mxu0 0
      %1089 = vmatprep.subr.bf16.mxu0 0
      %1090 = vmatpush1.bf16.xpose.msra.mxu0 0
      %1091 = vmatprep.subr.bf16.mxu0 0
      %1092 = vmatpush1.bf16.xpose.msra.mxu0 0
      %1093 = vmatprep.subr.bf16.mxu0 0
      %1094 = vmatpush1.bf16.xpose.msra.mxu0 0
      %1095 = vmatprep.subr.bf16.mxu0 0
      %1096 = vmatpush1.bf16.xpose.msra.mxu0 0
      %1097 = vmatprep.mubr.bf16.mxu0 0
      %1098 = vmatmul.mubr.bf16.gmra.mrb[0].mxu0 %v1060
      %v1099 = vpop.f32.mrb[0].mxu0
      %v1100 = vadd.f32 %v553, %v1099
      %v1101 = vpop.f32.mrb[0].mxu0
      %v1102 = vpop.f32.mrb[0].mxu0
      %v1103 = vadd.f32 %v554, %v1102
      %v1104 = vpop.f32.mrb[0].mxu0
      %1105 = vdwg.mxu0
      %1107 = vrot.lane.b32.xlu0 %v548, 96
      %v1108 = vpop.permute.xlu0 %1107
      %v1110 = vsel %vm558, %v548, 0
      %v1113 = vsel %vm558, %v1108, 0
      %1115 = vmatprep.subr.bf16.mxu0 0
      %1116 = vmatpush1.bf16.xpose.msra.mxu0 %v1113
      %1117 = vmatprep.subr.bf16.mxu0 0
      %1118 = vmatpush1.bf16.xpose.msra.mxu0 0
      %1119 = vmatprep.subr.bf16.mxu0 0
      %1120 = vmatpush1.bf16.xpose.msra.mxu0 0
      %1121 = vmatprep.subr.bf16.mxu0 0
      %1122 = vmatpush1.bf16.xpose.msra.mxu0 0
      %1123 = vmatprep.subr.bf16.mxu0 0
      %1124 = vmatpush1.bf16.xpose.msra.mxu0 0
      %1125 = vmatprep.subr.bf16.mxu0 0
      %1126 = vmatpush1.bf16.xpose.msra.mxu0 0
      %1127 = vmatprep.subr.bf16.mxu0 0
      %1128 = vmatpush1.bf16.xpose.msra.mxu0 0
      %1129 = vmatprep.subr.bf16.mxu0 0
      %1130 = vmatpush1.bf16.xpose.msra.mxu0 0
      %1131 = vmatprep.subr.bf16.mxu0 0
      %1132 = vmatpush1.bf16.xpose.msra.mxu0 0
      %1133 = vmatprep.subr.bf16.mxu0 0
      %1134 = vmatpush1.bf16.xpose.msra.mxu0 0
      %1135 = vmatprep.subr.bf16.mxu0 0
      %1136 = vmatpush1.bf16.xpose.msra.mxu0 0
      %1137 = vmatprep.subr.bf16.mxu0 0
      %1138 = vmatpush1.bf16.xpose.msra.mxu0 0
      %1139 = vmatprep.subr.bf16.mxu0 0
      %1140 = vmatpush1.bf16.xpose.msra.mxu0 0
      %1141 = vmatprep.subr.bf16.mxu0 0
      %1142 = vmatpush1.bf16.xpose.msra.mxu0 0
      %1143 = vmatprep.subr.bf16.mxu0 0
      %1144 = vmatpush1.bf16.xpose.msra.mxu0 0
      %1145 = vmatprep.subr.bf16.mxu0 0
      %1146 = vmatpush1.bf16.xpose.msra.mxu0 0
      %1147 = vmatprep.mubr.bf16.mxu0 0
      %1148 = vmatmul.mubr.bf16.gmra.mrb[0].mxu0 %v1110
      %v1149 = vpop.f32.mrb[0].mxu0
      %v1150 = vadd.f32 %v553, %v1149
      %v1151 = vpop.f32.mrb[0].mxu0
      %v1152 = vpop.f32.mrb[0].mxu0
      %v1153 = vadd.f32 %v554, %v1152
      %v1154 = vpop.f32.mrb[0].mxu0
      %1155 = vdwg.mxu0
      %1157 = vrot.lane.b32.xlu0 %v549, 96
      %v1158 = vpop.permute.xlu0 %1157
      %v1160 = vsel %vm558, %v549, 0
      %v1163 = vsel %vm558, %v1158, 0
      %1165 = vmatprep.subr.bf16.mxu0 0
      %1166 = vmatpush1.bf16.xpose.msra.mxu0 %v1163
      %1167 = vmatprep.subr.bf16.mxu0 0
      %1168 = vmatpush1.bf16.xpose.msra.mxu0 0
      %1169 = vmatprep.subr.bf16.mxu0 0
      %1170 = vmatpush1.bf16.xpose.msra.mxu0 0
      %1171 = vmatprep.subr.bf16.mxu0 0
      %1172 = vmatpush1.bf16.xpose.msra.mxu0 0
      %1173 = vmatprep.subr.bf16.mxu0 0
      %1174 = vmatpush1.bf16.xpose.msra.mxu0 0
      %1175 = vmatprep.subr.bf16.mxu0 0
      %1176 = vmatpush1.bf16.xpose.msra.mxu0 0
      %1177 = vmatprep.subr.bf16.mxu0 0
      %1178 = vmatpush1.bf16.xpose.msra.mxu0 0
      %1179 = vmatprep.subr.bf16.mxu0 0
      %1180 = vmatpush1.bf16.xpose.msra.mxu0 0
      %1181 = vmatprep.subr.bf16.mxu0 0
      %1182 = vmatpush1.bf16.xpose.msra.mxu0 0
      %1183 = vmatprep.subr.bf16.mxu0 0
      %1184 = vmatpush1.bf16.xpose.msra.mxu0 0
      %1185 = vmatprep.subr.bf16.mxu0 0
      %1186 = vmatpush1.bf16.xpose.msra.mxu0 0
      %1187 = vmatprep.subr.bf16.mxu0 0
      %1188 = vmatpush1.bf16.xpose.msra.mxu0 0
      %1189 = vmatprep.subr.bf16.mxu0 0
      %1190 = vmatpush1.bf16.xpose.msra.mxu0 0
      %1191 = vmatprep.subr.bf16.mxu0 0
      %1192 = vmatpush1.bf16.xpose.msra.mxu0 0
      %1193 = vmatprep.subr.bf16.mxu0 0
      %1194 = vmatpush1.bf16.xpose.msra.mxu0 0
      %1195 = vmatprep.subr.bf16.mxu0 0
      %1196 = vmatpush1.bf16.xpose.msra.mxu0 0
      %1197 = vmatprep.mubr.bf16.mxu0 0
      %1198 = vmatmul.mubr.bf16.gmra.mrb[0].mxu0 %v1160
      %v1199 = vpop.f32.mrb[0].mxu0
      %v1200 = vadd.f32 %v553, %v1199
      %v1201 = vpop.f32.mrb[0].mxu0
      %v1202 = vpop.f32.mrb[0].mxu0
      %v1203 = vadd.f32 %v554, %v1202
      %v1204 = vpop.f32.mrb[0].mxu0
      %1205 = vdwg.mxu0
      %1207 = vrot.lane.b32.xlu0 %v550, 96
      %v1208 = vpop.permute.xlu0 %1207
      %v1210 = vsel %vm558, %v550, 0
      %v1213 = vsel %vm558, %v1208, 0
      %1215 = vmatprep.subr.bf16.mxu0 0
      %1216 = vmatpush1.bf16.xpose.msra.mxu0 %v1213
      %1217 = vmatprep.subr.bf16.mxu0 0
      %1218 = vmatpush1.bf16.xpose.msra.mxu0 0
      %1219 = vmatprep.subr.bf16.mxu0 0
      %1220 = vmatpush1.bf16.xpose.msra.mxu0 0
      %1221 = vmatprep.subr.bf16.mxu0 0
      %1222 = vmatpush1.bf16.xpose.msra.mxu0 0
      %1223 = vmatprep.subr.bf16.mxu0 0
      %1224 = vmatpush1.bf16.xpose.msra.mxu0 0
      %1225 = vmatprep.subr.bf16.mxu0 0
      %1226 = vmatpush1.bf16.xpose.msra.mxu0 0
      %1227 = vmatprep.subr.bf16.mxu0 0
      %1228 = vmatpush1.bf16.xpose.msra.mxu0 0
      %1229 = vmatprep.subr.bf16.mxu0 0
      %1230 = vmatpush1.bf16.xpose.msra.mxu0 0
      %1231 = vmatprep.subr.bf16.mxu0 0
      %1232 = vmatpush1.bf16.xpose.msra.mxu0 0
      %1233 = vmatprep.subr.bf16.mxu0 0
      %1234 = vmatpush1.bf16.xpose.msra.mxu0 0
      %1235 = vmatprep.subr.bf16.mxu0 0
      %1236 = vmatpush1.bf16.xpose.msra.mxu0 0
      %1237 = vmatprep.subr.bf16.mxu0 0
      %1238 = vmatpush1.bf16.xpose.msra.mxu0 0
      %1239 = vmatprep.subr.bf16.mxu0 0
      %1240 = vmatpush1.bf16.xpose.msra.mxu0 0
      %1241 = vmatprep.subr.bf16.mxu0 0
      %1242 = vmatpush1.bf16.xpose.msra.mxu0 0
      %1243 = vmatprep.subr.bf16.mxu0 0
      %1244 = vmatpush1.bf16.xpose.msra.mxu0 0
      %1245 = vmatprep.subr.bf16.mxu0 0
      %1246 = vmatpush1.bf16.xpose.msra.mxu0 0
      %1247 = vmatprep.mubr.bf16.mxu0 0
      %1248 = vmatmul.mubr.bf16.gmra.mrb[0].mxu0 %v1210
      %v1249 = vpop.f32.mrb[0].mxu0
      %v1250 = vadd.f32 %v553, %v1249
      %v1251 = vpop.f32.mrb[0].mxu0
      %v1252 = vpop.f32.mrb[0].mxu0
      %v1253 = vadd.f32 %v554, %v1252
      %v1254 = vpop.f32.mrb[0].mxu0
      %1255 = vdwg.mxu0
      %1257 = vrot.lane.b32.xlu0 %v551, 96
      %v1258 = vpop.permute.xlu0 %1257
      %v1260 = vsel %vm558, %v551, 0
      %v1263 = vsel %vm558, %v1258, 0
      %1265 = vmatprep.subr.bf16.mxu0 0
      %1266 = vmatpush1.bf16.xpose.msra.mxu0 %v1263
      %1267 = vmatprep.subr.bf16.mxu0 0
      %1268 = vmatpush1.bf16.xpose.msra.mxu0 0
      %1269 = vmatprep.subr.bf16.mxu0 0
      %1270 = vmatpush1.bf16.xpose.msra.mxu0 0
      %1271 = vmatprep.subr.bf16.mxu0 0
      %1272 = vmatpush1.bf16.xpose.msra.mxu0 0
      %1273 = vmatprep.subr.bf16.mxu0 0
      %1274 = vmatpush1.bf16.xpose.msra.mxu0 0
      %1275 = vmatprep.subr.bf16.mxu0 0
      %1276 = vmatpush1.bf16.xpose.msra.mxu0 0
      %1277 = vmatprep.subr.bf16.mxu0 0
      %1278 = vmatpush1.bf16.xpose.msra.mxu0 0
      %1279 = vmatprep.subr.bf16.mxu0 0
      %1280 = vmatpush1.bf16.xpose.msra.mxu0 0
      %1281 = vmatprep.subr.bf16.mxu0 0
      %1282 = vmatpush1.bf16.xpose.msra.mxu0 0
      %1283 = vmatprep.subr.bf16.mxu0 0
      %1284 = vmatpush1.bf16.xpose.msra.mxu0 0
      %1285 = vmatprep.subr.bf16.mxu0 0
      %1286 = vmatpush1.bf16.xpose.msra.mxu0 0
      %1287 = vmatprep.subr.bf16.mxu0 0
      %1288 = vmatpush1.bf16.xpose.msra.mxu0 0
      %1289 = vmatprep.subr.bf16.mxu0 0
      %1290 = vmatpush1.bf16.xpose.msra.mxu0 0
      %1291 = vmatprep.subr.bf16.mxu0 0
      %1292 = vmatpush1.bf16.xpose.msra.mxu0 0
      %1293 = vmatprep.subr.bf16.mxu0 0
      %1294 = vmatpush1.bf16.xpose.msra.mxu0 0
      %1295 = vmatprep.subr.bf16.mxu0 0
      %1296 = vmatpush1.bf16.xpose.msra.mxu0 0
      %1297 = vmatprep.mubr.bf16.mxu0 0
      %1298 = vmatmul.mubr.bf16.gmra.mrb[0].mxu0 %v1260
      %v1299 = vpop.f32.mrb[0].mxu0
      %v1300 = vadd.f32 %v553, %v1299
      %v1301 = vpop.f32.mrb[0].mxu0
      %v1302 = vpop.f32.mrb[0].mxu0
      %v1303 = vadd.f32 %v554, %v1302
      %v1304 = vpop.f32.mrb[0].mxu0
      %1305 = vdwg.mxu0
      %1307 = vrot.lane.b32.xlu0 %v552, 96
      %v1308 = vpop.permute.xlu0 %1307
      %v1310 = vsel %vm558, %v552, 0
      %v1313 = vsel %vm558, %v1308, 0
      %1315 = vmatprep.subr.bf16.mxu0 0
      %1316 = vmatpush1.bf16.xpose.msra.mxu0 %v1313
      %1317 = vmatprep.subr.bf16.mxu0 0
      %1318 = vmatpush1.bf16.xpose.msra.mxu0 0
      %1319 = vmatprep.subr.bf16.mxu0 0
      %1320 = vmatpush1.bf16.xpose.msra.mxu0 0
      %1321 = vmatprep.subr.bf16.mxu0 0
      %1322 = vmatpush1.bf16.xpose.msra.mxu0 0
      %1323 = vmatprep.subr.bf16.mxu0 0
      %1324 = vmatpush1.bf16.xpose.msra.mxu0 0
      %1325 = vmatprep.subr.bf16.mxu0 0
      %1326 = vmatpush1.bf16.xpose.msra.mxu0 0
      %1327 = vmatprep.subr.bf16.mxu0 0
      %1328 = vmatpush1.bf16.xpose.msra.mxu0 0
      %1329 = vmatprep.subr.bf16.mxu0 0
      %1330 = vmatpush1.bf16.xpose.msra.mxu0 0
      %1331 = vmatprep.subr.bf16.mxu0 0
      %1332 = vmatpush1.bf16.xpose.msra.mxu0 0
      %1333 = vmatprep.subr.bf16.mxu0 0
      %1334 = vmatpush1.bf16.xpose.msra.mxu0 0
      %1335 = vmatprep.subr.bf16.mxu0 0
      %1336 = vmatpush1.bf16.xpose.msra.mxu0 0
      %1337 = vmatprep.subr.bf16.mxu0 0
      %1338 = vmatpush1.bf16.xpose.msra.mxu0 0
      %1339 = vmatprep.subr.bf16.mxu0 0
      %1340 = vmatpush1.bf16.xpose.msra.mxu0 0
      %1341 = vmatprep.subr.bf16.mxu0 0
      %1342 = vmatpush1.bf16.xpose.msra.mxu0 0
      %1343 = vmatprep.subr.bf16.mxu0 0
      %1344 = vmatpush1.bf16.xpose.msra.mxu0 0
      %1345 = vmatprep.subr.bf16.mxu0 0
      %1346 = vmatpush1.bf16.xpose.msra.mxu0 0
      %1347 = vmatprep.mubr.bf16.mxu0 0
      %1348 = vmatmul.mubr.bf16.gmra.mrb[0].mxu0 %v1310
      %v1349 = vpop.f32.mrb[0].mxu0
      %v1350 = vadd.f32 %v553, %v1349
      %v1351 = vpop.f32.mrb[0].mxu0
      %v1352 = vpop.f32.mrb[0].mxu0
      %v1353 = vadd.f32 %v554, %v1352
      %v1354 = vpop.f32.mrb[0].mxu0
      %1355 = vdwg.mxu0
      %vm1356 = vcmask 130048
      %v1357 = vsel %vm1356, %v600, -inf
      %1358 = vmax.xlane.f32.xlu0 %v1357
      %v1359 = vpop.xlane.xlu0 %1358
      %v1360 = vsel %vm1356, %v603, -inf
      %1361 = vmax.xlane.f32.xlu0 %v1360
      %v1362 = vpop.xlane.xlu0 %1361
      %v1363 = vsel %vm1356, %v650, -inf
      %1364 = vmax.xlane.f32.xlu0 %v1363
      %v1365 = vpop.xlane.xlu0 %1364
      %v1366 = vsel %vm1356, %v653, -inf
      %1367 = vmax.xlane.f32.xlu0 %v1366
      %v1368 = vpop.xlane.xlu0 %1367
      %v1369 = vsel %vm1356, %v700, -inf
      %1370 = vmax.xlane.f32.xlu0 %v1369
      %v1371 = vpop.xlane.xlu0 %1370
      %v1372 = vsel %vm1356, %v703, -inf
      %1373 = vmax.xlane.f32.xlu0 %v1372
      %v1374 = vpop.xlane.xlu0 %1373
      %v1375 = vsel %vm1356, %v750, -inf
      %1376 = vmax.xlane.f32.xlu0 %v1375
      %v1377 = vpop.xlane.xlu0 %1376
      %v1378 = vsel %vm1356, %v753, -inf
      %1379 = vmax.xlane.f32.xlu0 %v1378
      %v1380 = vpop.xlane.xlu0 %1379
      %v1381 = vsel %vm1356, %v800, -inf
      %1382 = vmax.xlane.f32.xlu0 %v1381
      %v1383 = vpop.xlane.xlu0 %1382
      %v1384 = vsel %vm1356, %v803, -inf
      %1385 = vmax.xlane.f32.xlu0 %v1384
      %v1386 = vpop.xlane.xlu0 %1385
      %v1387 = vsel %vm1356, %v850, -inf
      %1388 = vmax.xlane.f32.xlu0 %v1387
      %v1389 = vpop.xlane.xlu0 %1388
      %v1390 = vsel %vm1356, %v853, -inf
      %1391 = vmax.xlane.f32.xlu0 %v1390
      %v1392 = vpop.xlane.xlu0 %1391
      %v1393 = vsel %vm1356, %v900, -inf
      %1394 = vmax.xlane.f32.xlu0 %v1393
      %v1395 = vpop.xlane.xlu0 %1394
      %v1396 = vsel %vm1356, %v903, -inf
      %1397 = vmax.xlane.f32.xlu0 %v1396
      %v1398 = vpop.xlane.xlu0 %1397
      %v1399 = vsel %vm1356, %v950, -inf
      %1400 = vmax.xlane.f32.xlu0 %v1399
      %v1401 = vpop.xlane.xlu0 %1400
      %v1402 = vsel %vm1356, %v953, -inf
      %1403 = vmax.xlane.f32.xlu0 %v1402
      %v1404 = vpop.xlane.xlu0 %1403
      %v1405 = vsel %vm1356, %v1000, -inf
      %1406 = vmax.xlane.f32.xlu0 %v1405
      %v1407 = vpop.xlane.xlu0 %1406
      %v1408 = vsel %vm1356, %v1003, -inf
      %1409 = vmax.xlane.f32.xlu0 %v1408
      %v1410 = vpop.xlane.xlu0 %1409
      %v1411 = vsel %vm1356, %v1050, -inf
      %1412 = vmax.xlane.f32.xlu0 %v1411
      %v1413 = vpop.xlane.xlu0 %1412
      %v1414 = vsel %vm1356, %v1053, -inf
      %1415 = vmax.xlane.f32.xlu0 %v1414
      %v1416 = vpop.xlane.xlu0 %1415
      %v1417 = vsel %vm1356, %v1100, -inf
      %1418 = vmax.xlane.f32.xlu0 %v1417
      %v1419 = vpop.xlane.xlu0 %1418
      %v1420 = vsel %vm1356, %v1103, -inf
      %1421 = vmax.xlane.f32.xlu0 %v1420
      %v1422 = vpop.xlane.xlu0 %1421
      %v1423 = vsel %vm1356, %v1150, -inf
      %1424 = vmax.xlane.f32.xlu0 %v1423
      %v1425 = vpop.xlane.xlu0 %1424
      %v1426 = vsel %vm1356, %v1153, -inf
      %1427 = vmax.xlane.f32.xlu0 %v1426
      %v1428 = vpop.xlane.xlu0 %1427
      %v1429 = vsel %vm1356, %v1200, -inf
      %1430 = vmax.xlane.f32.xlu0 %v1429
      %v1431 = vpop.xlane.xlu0 %1430
      %v1432 = vsel %vm1356, %v1203, -inf
      %1433 = vmax.xlane.f32.xlu0 %v1432
      %v1434 = vpop.xlane.xlu0 %1433
      %v1435 = vsel %vm1356, %v1250, -inf
      %1436 = vmax.xlane.f32.xlu0 %v1435
      %v1437 = vpop.xlane.xlu0 %1436
      %v1438 = vsel %vm1356, %v1253, -inf
      %1439 = vmax.xlane.f32.xlu0 %v1438
      %v1440 = vpop.xlane.xlu0 %1439
      %v1441 = vsel %vm1356, %v1300, -inf
      %1442 = vmax.xlane.f32.xlu0 %v1441
      %v1443 = vpop.xlane.xlu0 %1442
      %v1444 = vsel %vm1356, %v1303, -inf
      %1445 = vmax.xlane.f32.xlu0 %v1444
      %v1446 = vpop.xlane.xlu0 %1445
      %v1447 = vsel %vm1356, %v1350, -inf
      %1448 = vmax.xlane.f32.xlu0 %v1447
      %v1449 = vpop.xlane.xlu0 %1448
      %v1450 = vsel %vm1356, %v1353, -inf
      %1451 = vmax.xlane.f32.xlu0 %v1450
      %v1452 = vpop.xlane.xlu0 %1451
      %v1453 = vsub.f32 %v600, %v1359
      %v1454 = vsub.f32 %v603, %v1362
      %v1455 = vsub.f32 %v650, %v1365
      %v1456 = vsub.f32 %v653, %v1368
      %v1457 = vsub.f32 %v700, %v1371
      %v1458 = vsub.f32 %v703, %v1374
      %v1459 = vsub.f32 %v750, %v1377
      %v1460 = vsub.f32 %v753, %v1380
      %v1461 = vsub.f32 %v800, %v1383
      %v1462 = vsub.f32 %v803, %v1386
      %v1463 = vsub.f32 %v850, %v1389
      %v1464 = vsub.f32 %v853, %v1392
      %v1465 = vsub.f32 %v900, %v1395
      %v1466 = vsub.f32 %v903, %v1398
      %v1467 = vsub.f32 %v950, %v1401
      %v1468 = vsub.f32 %v953, %v1404
      %v1469 = vsub.f32 %v1000, %v1407
      %v1470 = vsub.f32 %v1003, %v1410
      %v1471 = vsub.f32 %v1050, %v1413
      %v1472 = vsub.f32 %v1053, %v1416
      %v1473 = vsub.f32 %v1100, %v1419
      %v1474 = vsub.f32 %v1103, %v1422
      %v1475 = vsub.f32 %v1150, %v1425
      %v1476 = vsub.f32 %v1153, %v1428
      %v1477 = vsub.f32 %v1200, %v1431
      %v1478 = vsub.f32 %v1203, %v1434
      %v1479 = vsub.f32 %v1250, %v1437
      %v1480 = vsub.f32 %v1253, %v1440
      %v1481 = vsub.f32 %v1300, %v1443
      %v1482 = vsub.f32 %v1303, %v1446
      %v1483 = vsub.f32 %v1350, %v1449
      %v1484 = vsub.f32 %v1353, %v1452
      %v1485 = vmul.f32 %v1453, 1.442695
      %v1486 = vpow.pop %v1485
      %v1487 = vmul.f32 %v1454, 1.442695
      %v1488 = vpow.pop %v1487
      %v1489 = vmul.f32 %v1455, 1.442695
      %v1490 = vpow.pop %v1489
      %v1491 = vmul.f32 %v1456, 1.442695
      %v1492 = vpow.pop %v1491
      %v1493 = vmul.f32 %v1457, 1.442695
      %v1494 = vpow.pop %v1493
      %v1495 = vmul.f32 %v1458, 1.442695
      %v1496 = vpow.pop %v1495
      %v1497 = vmul.f32 %v1459, 1.442695
      %v1498 = vpow.pop %v1497
      %v1499 = vmul.f32 %v1460, 1.442695
      %v1500 = vpow.pop %v1499
      %v1501 = vmul.f32 %v1461, 1.442695
      %v1502 = vpow.pop %v1501
      %v1503 = vmul.f32 %v1462, 1.442695
      %v1504 = vpow.pop %v1503
      %v1505 = vmul.f32 %v1463, 1.442695
      %v1506 = vpow.pop %v1505
      %v1507 = vmul.f32 %v1464, 1.442695
      %v1508 = vpow.pop %v1507
      %v1509 = vmul.f32 %v1465, 1.442695
      %v1510 = vpow.pop %v1509
      %v1511 = vmul.f32 %v1466, 1.442695
      %v1512 = vpow.pop %v1511
      %v1513 = vmul.f32 %v1467, 1.442695
      %v1514 = vpow.pop %v1513
      %v1515 = vmul.f32 %v1468, 1.442695
      %v1516 = vpow.pop %v1515
      %v1517 = vmul.f32 %v1469, 1.442695
      %v1518 = vpow.pop %v1517
      %v1519 = vmul.f32 %v1470, 1.442695
      %v1520 = vpow.pop %v1519
      %v1521 = vmul.f32 %v1471, 1.442695
      %v1522 = vpow.pop %v1521
      %v1523 = vmul.f32 %v1472, 1.442695
      %v1524 = vpow.pop %v1523
      %v1525 = vmul.f32 %v1473, 1.442695
      %v1526 = vpow.pop %v1525
      %v1527 = vmul.f32 %v1474, 1.442695
      %v1528 = vpow.pop %v1527
      %v1529 = vmul.f32 %v1475, 1.442695
      %v1530 = vpow.pop %v1529
      %v1531 = vmul.f32 %v1476, 1.442695
      %v1532 = vpow.pop %v1531
      %v1533 = vmul.f32 %v1477, 1.442695
      %v1534 = vpow.pop %v1533
      %v1535 = vmul.f32 %v1478, 1.442695
      %v1536 = vpow.pop %v1535
      %v1537 = vmul.f32 %v1479, 1.442695
      %v1538 = vpow.pop %v1537
      %v1539 = vmul.f32 %v1480, 1.442695
      %v1540 = vpow.pop %v1539
      %v1541 = vmul.f32 %v1481, 1.442695
      %v1542 = vpow.pop %v1541
      %v1543 = vmul.f32 %v1482, 1.442695
      %v1544 = vpow.pop %v1543
      %v1545 = vmul.f32 %v1483, 1.442695
      %v1546 = vpow.pop %v1545
      %v1547 = vmul.f32 %v1484, 1.442695
      %v1548 = vpow.pop %v1547
      %v1549 = vsel %vm1356, %v1486, 0.0
      %1550 = vadd.xlane.f32.xlu0 %v1549
      %v1551 = vpop.xlane.xlu0 %1550
      %v1552 = vsel %vm1356, %v1488, 0.0
      %1553 = vadd.xlane.f32.xlu0 %v1552
      %v1554 = vpop.xlane.xlu0 %1553
      %v1555 = vsel %vm1356, %v1490, 0.0
      %1556 = vadd.xlane.f32.xlu0 %v1555
      %v1557 = vpop.xlane.xlu0 %1556
      %v1558 = vsel %vm1356, %v1492, 0.0
      %1559 = vadd.xlane.f32.xlu0 %v1558
      %v1560 = vpop.xlane.xlu0 %1559
      %v1561 = vsel %vm1356, %v1494, 0.0
      %1562 = vadd.xlane.f32.xlu0 %v1561
      %v1563 = vpop.xlane.xlu0 %1562
      %v1564 = vsel %vm1356, %v1496, 0.0
      %1565 = vadd.xlane.f32.xlu0 %v1564
      %v1566 = vpop.xlane.xlu0 %1565
      %v1567 = vsel %vm1356, %v1498, 0.0
      %1568 = vadd.xlane.f32.xlu0 %v1567
      %v1569 = vpop.xlane.xlu0 %1568
      %v1570 = vsel %vm1356, %v1500, 0.0
      %1571 = vadd.xlane.f32.xlu0 %v1570
      %v1572 = vpop.xlane.xlu0 %1571
      %v1573 = vsel %vm1356, %v1502, 0.0
      %1574 = vadd.xlane.f32.xlu0 %v1573
      %v1575 = vpop.xlane.xlu0 %1574
      %v1576 = vsel %vm1356, %v1504, 0.0
      %1577 = vadd.xlane.f32.xlu0 %v1576
      %v1578 = vpop.xlane.xlu0 %1577
      %v1579 = vsel %vm1356, %v1506, 0.0
      %1580 = vadd.xlane.f32.xlu0 %v1579
      %v1581 = vpop.xlane.xlu0 %1580
      %v1582 = vsel %vm1356, %v1508, 0.0
      %1583 = vadd.xlane.f32.xlu0 %v1582
      %v1584 = vpop.xlane.xlu0 %1583
      %v1585 = vsel %vm1356, %v1510, 0.0
      %1586 = vadd.xlane.f32.xlu0 %v1585
      %v1587 = vpop.xlane.xlu0 %1586
      %v1588 = vsel %vm1356, %v1512, 0.0
      %1589 = vadd.xlane.f32.xlu0 %v1588
      %v1590 = vpop.xlane.xlu0 %1589
      %v1591 = vsel %vm1356, %v1514, 0.0
      %1592 = vadd.xlane.f32.xlu0 %v1591
      %v1593 = vpop.xlane.xlu0 %1592
      %v1594 = vsel %vm1356, %v1516, 0.0
      %1595 = vadd.xlane.f32.xlu0 %v1594
      %v1596 = vpop.xlane.xlu0 %1595
      %v1597 = vsel %vm1356, %v1518, 0.0
      %1598 = vadd.xlane.f32.xlu0 %v1597
      %v1599 = vpop.xlane.xlu0 %1598
      %v1600 = vsel %vm1356, %v1520, 0.0
      %1601 = vadd.xlane.f32.xlu0 %v1600
      %v1602 = vpop.xlane.xlu0 %1601
      %v1603 = vsel %vm1356, %v1522, 0.0
      %1604 = vadd.xlane.f32.xlu0 %v1603
      %v1605 = vpop.xlane.xlu0 %1604
      %v1606 = vsel %vm1356, %v1524, 0.0
      %1607 = vadd.xlane.f32.xlu0 %v1606
      %v1608 = vpop.xlane.xlu0 %1607
      %v1609 = vsel %vm1356, %v1526, 0.0
      %1610 = vadd.xlane.f32.xlu0 %v1609
      %v1611 = vpop.xlane.xlu0 %1610
      %v1612 = vsel %vm1356, %v1528, 0.0
      %1613 = vadd.xlane.f32.xlu0 %v1612
      %v1614 = vpop.xlane.xlu0 %1613
      %v1615 = vsel %vm1356, %v1530, 0.0
      %1616 = vadd.xlane.f32.xlu0 %v1615
      %v1617 = vpop.xlane.xlu0 %1616
      %v1618 = vsel %vm1356, %v1532, 0.0
      %1619 = vadd.xlane.f32.xlu0 %v1618
      %v1620 = vpop.xlane.xlu0 %1619
      %v1621 = vsel %vm1356, %v1534, 0.0
      %1622 = vadd.xlane.f32.xlu0 %v1621
      %v1623 = vpop.xlane.xlu0 %1622
      %v1624 = vsel %vm1356, %v1536, 0.0
      %1625 = vadd.xlane.f32.xlu0 %v1624
      %v1626 = vpop.xlane.xlu0 %1625
      %v1627 = vsel %vm1356, %v1538, 0.0
      %1628 = vadd.xlane.f32.xlu0 %v1627
      %v1629 = vpop.xlane.xlu0 %1628
      %v1630 = vsel %vm1356, %v1540, 0.0
      %1631 = vadd.xlane.f32.xlu0 %v1630
      %v1632 = vpop.xlane.xlu0 %1631
      %v1633 = vsel %vm1356, %v1542, 0.0
      %1634 = vadd.xlane.f32.xlu0 %v1633
      %v1635 = vpop.xlane.xlu0 %1634
      %v1636 = vsel %vm1356, %v1544, 0.0
      %1637 = vadd.xlane.f32.xlu0 %v1636
      %v1638 = vpop.xlane.xlu0 %1637
      %v1639 = vsel %vm1356, %v1546, 0.0
      %1640 = vadd.xlane.f32.xlu0 %v1639
      %v1641 = vpop.xlane.xlu0 %1640
      %v1642 = vsel %vm1356, %v1548, 0.0
      %1643 = vadd.xlane.f32.xlu0 %v1642
      %v1644 = vpop.xlane.xlu0 %1643
      %v1645 = vrcp.pop %v1551
      %v1646 = vrcp.pop %v1554
      %v1647 = vrcp.pop %v1557
      %v1648 = vrcp.pop %v1560
      %v1649 = vrcp.pop %v1563
      %v1650 = vrcp.pop %v1566
      %v1651 = vrcp.pop %v1569
      %v1652 = vrcp.pop %v1572
      %v1653 = vrcp.pop %v1575
      %v1654 = vrcp.pop %v1578
      %v1655 = vrcp.pop %v1581
      %v1656 = vrcp.pop %v1584
      %v1657 = vrcp.pop %v1587
      %v1658 = vrcp.pop %v1590
      %v1659 = vrcp.pop %v1593
      %v1660 = vrcp.pop %v1596
      %v1661 = vrcp.pop %v1599
      %v1662 = vrcp.pop %v1602
      %v1663 = vrcp.pop %v1605
      %v1664 = vrcp.pop %v1608
      %v1665 = vrcp.pop %v1611
      %v1666 = vrcp.pop %v1614
      %v1667 = vrcp.pop %v1617
      %v1668 = vrcp.pop %v1620
      %v1669 = vrcp.pop %v1623
      %v1670 = vrcp.pop %v1626
      %v1671 = vrcp.pop %v1629
      %v1672 = vrcp.pop %v1632
      %v1673 = vrcp.pop %v1635
      %v1674 = vrcp.pop %v1638
      %v1675 = vrcp.pop %v1641
      %v1676 = vrcp.pop %v1644
      %v1677 = vmul.f32 %v1486, %v1645
      %v1678 = vmul.f32 %v1488, %v1646
      %v1679 = vmul.f32 %v1490, %v1647
      %v1680 = vmul.f32 %v1492, %v1648
      %v1681 = vmul.f32 %v1494, %v1649
      %v1682 = vmul.f32 %v1496, %v1650
      %v1683 = vmul.f32 %v1498, %v1651
      %v1684 = vmul.f32 %v1500, %v1652
      %v1685 = vmul.f32 %v1502, %v1653
      %v1686 = vmul.f32 %v1504, %v1654
      %v1687 = vmul.f32 %v1506, %v1655
      %v1688 = vmul.f32 %v1508, %v1656
      %v1689 = vmul.f32 %v1510, %v1657
      %v1690 = vmul.f32 %v1512, %v1658
      %v1691 = vmul.f32 %v1514, %v1659
      %v1692 = vmul.f32 %v1516, %v1660
      %v1693 = vmul.f32 %v1518, %v1661
      %v1694 = vmul.f32 %v1520, %v1662
      %v1695 = vmul.f32 %v1522, %v1663
      %v1696 = vmul.f32 %v1524, %v1664
      %v1697 = vmul.f32 %v1526, %v1665
      %v1698 = vmul.f32 %v1528, %v1666
      %v1699 = vmul.f32 %v1530, %v1667
      %v1700 = vmul.f32 %v1532, %v1668
      %v1701 = vmul.f32 %v1534, %v1669
      %v1702 = vmul.f32 %v1536, %v1670
      %v1703 = vmul.f32 %v1538, %v1671
      %v1704 = vmul.f32 %v1540, %v1672
      %v1705 = vmul.f32 %v1542, %v1673
      %v1706 = vmul.f32 %v1544, %v1674
      %v1707 = vmul.f32 %v1546, %v1675
      %v1708 = vmul.f32 %v1548, %v1676
      %v1709 = vpack.c.bf16 %v1678, %v1677
      %v1710 = vpack.c.bf16 %v1680, %v1679
      %v1711 = vpack.c.bf16 %v1682, %v1681
      %v1712 = vpack.c.bf16 %v1684, %v1683
      %v1713 = vpack.c.bf16 %v1686, %v1685
      %v1714 = vpack.c.bf16 %v1688, %v1687
      %v1715 = vpack.c.bf16 %v1690, %v1689
      %v1716 = vpack.c.bf16 %v1692, %v1691
      %v1717 = vpack.c.bf16 %v1694, %v1693
      %v1718 = vpack.c.bf16 %v1696, %v1695
      %v1719 = vpack.c.bf16 %v1698, %v1697
      %v1720 = vpack.c.bf16 %v1700, %v1699
      %v1721 = vpack.c.bf16 %v1702, %v1701
      %v1722 = vpack.c.bf16 %v1704, %v1703
      %v1723 = vpack.c.bf16 %v1706, %v1705
      %v1724 = vpack.c.bf16 %v1708, %v1707
      %1725 = vrot.lane.b32.xlu0 %v537, 64
      %v1726 = vpop.permute.xlu0 %1725
      %v1729 = vsel %vm1356, %v1709, 0
      %1731 = vmatprep.subr.bf16.mxu0 0
      %1732 = vmatpush1.bf16.msra.mxu0 %v1726
      %1733 = vmatprep.subr.bf16.mxu0 0
      %1734 = vmatpush1.bf16.msra.mxu0 0
      %1735 = vmatprep.subr.bf16.mxu0 0
      %1736 = vmatpush1.bf16.msra.mxu0 0
      %1737 = vmatprep.subr.bf16.mxu0 0
      %1738 = vmatpush1.bf16.msra.mxu0 0
      %1739 = vmatprep.subr.bf16.mxu0 0
      %1740 = vmatpush1.bf16.msra.mxu0 0
      %1741 = vmatprep.subr.bf16.mxu0 0
      %1742 = vmatpush1.bf16.msra.mxu0 0
      %1743 = vmatprep.subr.bf16.mxu0 0
      %1744 = vmatpush1.bf16.msra.mxu0 0
      %1745 = vmatprep.subr.bf16.mxu0 0
      %1746 = vmatpush1.bf16.msra.mxu0 0
      %1747 = vmatprep.subr.bf16.mxu0 0
      %1748 = vmatpush1.bf16.msra.mxu0 0
      %1749 = vmatprep.subr.bf16.mxu0 0
      %1750 = vmatpush1.bf16.msra.mxu0 0
      %1751 = vmatprep.subr.bf16.mxu0 0
      %1752 = vmatpush1.bf16.msra.mxu0 0
      %1753 = vmatprep.subr.bf16.mxu0 0
      %1754 = vmatpush1.bf16.msra.mxu0 0
      %1755 = vmatprep.subr.bf16.mxu0 0
      %1756 = vmatpush1.bf16.msra.mxu0 0
      %1757 = vmatprep.subr.bf16.mxu0 0
      %1758 = vmatpush1.bf16.msra.mxu0 0
      %1759 = vmatprep.subr.bf16.mxu0 0
      %1760 = vmatpush1.bf16.msra.mxu0 0
      %1761 = vmatprep.subr.bf16.mxu0 0
      %1762 = vmatpush1.bf16.msra.mxu0 0
      %1763 = vmatprep.mubr.bf16.mxu0 0
      %1764 = vmatmul.mubr.bf16.gmra.mrb[0].mxu0 %v1729
      %v1765 = vpop.f32.mrb[0].mxu0
      %v1766 = vadd.f32 0.0, %v1765
      %v1767 = vpop.f32.mrb[0].mxu0
      %v1768 = vpop.f32.mrb[0].mxu0
      %v1769 = vadd.f32 0.0, %v1768
      %v1770 = vpop.f32.mrb[0].mxu0
      %1771 = vdwg.mxu0
      %1772 = vrot.lane.b32.xlu0 %v538, 64
      %v1773 = vpop.permute.xlu0 %1772
      %v1776 = vsel %vm1356, %v1710, 0
      %1778 = vmatprep.subr.bf16.mxu0 0
      %1779 = vmatpush1.bf16.msra.mxu0 %v1773
      %1780 = vmatprep.subr.bf16.mxu0 0
      %1781 = vmatpush1.bf16.msra.mxu0 0
      %1782 = vmatprep.subr.bf16.mxu0 0
      %1783 = vmatpush1.bf16.msra.mxu0 0
      %1784 = vmatprep.subr.bf16.mxu0 0
      %1785 = vmatpush1.bf16.msra.mxu0 0
      %1786 = vmatprep.subr.bf16.mxu0 0
      %1787 = vmatpush1.bf16.msra.mxu0 0
      %1788 = vmatprep.subr.bf16.mxu0 0
      %1789 = vmatpush1.bf16.msra.mxu0 0
      %1790 = vmatprep.subr.bf16.mxu0 0
      %1791 = vmatpush1.bf16.msra.mxu0 0
      %1792 = vmatprep.subr.bf16.mxu0 0
      %1793 = vmatpush1.bf16.msra.mxu0 0
      %1794 = vmatprep.subr.bf16.mxu0 0
      %1795 = vmatpush1.bf16.msra.mxu0 0
      %1796 = vmatprep.subr.bf16.mxu0 0
      %1797 = vmatpush1.bf16.msra.mxu0 0
      %1798 = vmatprep.subr.bf16.mxu0 0
      %1799 = vmatpush1.bf16.msra.mxu0 0
      %1800 = vmatprep.subr.bf16.mxu0 0
      %1801 = vmatpush1.bf16.msra.mxu0 0
      %1802 = vmatprep.subr.bf16.mxu0 0
      %1803 = vmatpush1.bf16.msra.mxu0 0
      %1804 = vmatprep.subr.bf16.mxu0 0
      %1805 = vmatpush1.bf16.msra.mxu0 0
      %1806 = vmatprep.subr.bf16.mxu0 0
      %1807 = vmatpush1.bf16.msra.mxu0 0
      %1808 = vmatprep.subr.bf16.mxu0 0
      %1809 = vmatpush1.bf16.msra.mxu0 0
      %1810 = vmatprep.mubr.bf16.mxu0 0
      %1811 = vmatmul.mubr.bf16.gmra.mrb[0].mxu0 %v1776
      %v1812 = vpop.f32.mrb[0].mxu0
      %v1813 = vadd.f32 0.0, %v1812
      %v1814 = vpop.f32.mrb[0].mxu0
      %v1815 = vpop.f32.mrb[0].mxu0
      %v1816 = vadd.f32 0.0, %v1815
      %v1817 = vpop.f32.mrb[0].mxu0
      %1818 = vdwg.mxu0
      %1819 = vrot.lane.b32.xlu0 %v539, 64
      %v1820 = vpop.permute.xlu0 %1819
      %v1823 = vsel %vm1356, %v1711, 0
      %1825 = vmatprep.subr.bf16.mxu0 0
      %1826 = vmatpush1.bf16.msra.mxu0 %v1820
      %1827 = vmatprep.subr.bf16.mxu0 0
      %1828 = vmatpush1.bf16.msra.mxu0 0
      %1829 = vmatprep.subr.bf16.mxu0 0
      %1830 = vmatpush1.bf16.msra.mxu0 0
      %1831 = vmatprep.subr.bf16.mxu0 0
      %1832 = vmatpush1.bf16.msra.mxu0 0
      %1833 = vmatprep.subr.bf16.mxu0 0
      %1834 = vmatpush1.bf16.msra.mxu0 0
      %1835 = vmatprep.subr.bf16.mxu0 0
      %1836 = vmatpush1.bf16.msra.mxu0 0
      %1837 = vmatprep.subr.bf16.mxu0 0
      %1838 = vmatpush1.bf16.msra.mxu0 0
      %1839 = vmatprep.subr.bf16.mxu0 0
      %1840 = vmatpush1.bf16.msra.mxu0 0
      %1841 = vmatprep.subr.bf16.mxu0 0
      %1842 = vmatpush1.bf16.msra.mxu0 0
      %1843 = vmatprep.subr.bf16.mxu0 0
      %1844 = vmatpush1.bf16.msra.mxu0 0
      %1845 = vmatprep.subr.bf16.mxu0 0
      %1846 = vmatpush1.bf16.msra.mxu0 0
      %1847 = vmatprep.subr.bf16.mxu0 0
      %1848 = vmatpush1.bf16.msra.mxu0 0
      %1849 = vmatprep.subr.bf16.mxu0 0
      %1850 = vmatpush1.bf16.msra.mxu0 0
      %1851 = vmatprep.subr.bf16.mxu0 0
      %1852 = vmatpush1.bf16.msra.mxu0 0
      %1853 = vmatprep.subr.bf16.mxu0 0
      %1854 = vmatpush1.bf16.msra.mxu0 0
      %1855 = vmatprep.subr.bf16.mxu0 0
      %1856 = vmatpush1.bf16.msra.mxu0 0
      %1857 = vmatprep.mubr.bf16.mxu0 0
      %1858 = vmatmul.mubr.bf16.gmra.mrb[0].mxu0 %v1823
      %v1859 = vpop.f32.mrb[0].mxu0
      %v1860 = vadd.f32 0.0, %v1859
      %v1861 = vpop.f32.mrb[0].mxu0
      %v1862 = vpop.f32.mrb[0].mxu0
      %v1863 = vadd.f32 0.0, %v1862
      %v1864 = vpop.f32.mrb[0].mxu0
      %1865 = vdwg.mxu0
      %1866 = vrot.lane.b32.xlu0 %v540, 64
      %v1867 = vpop.permute.xlu0 %1866
      %v1870 = vsel %vm1356, %v1712, 0
      %1872 = vmatprep.subr.bf16.mxu0 0
      %1873 = vmatpush1.bf16.msra.mxu0 %v1867
      %1874 = vmatprep.subr.bf16.mxu0 0
      %1875 = vmatpush1.bf16.msra.mxu0 0
      %1876 = vmatprep.subr.bf16.mxu0 0
      %1877 = vmatpush1.bf16.msra.mxu0 0
      %1878 = vmatprep.subr.bf16.mxu0 0
      %1879 = vmatpush1.bf16.msra.mxu0 0
      %1880 = vmatprep.subr.bf16.mxu0 0
      %1881 = vmatpush1.bf16.msra.mxu0 0
      %1882 = vmatprep.subr.bf16.mxu0 0
      %1883 = vmatpush1.bf16.msra.mxu0 0
      %1884 = vmatprep.subr.bf16.mxu0 0
      %1885 = vmatpush1.bf16.msra.mxu0 0
      %1886 = vmatprep.subr.bf16.mxu0 0
      %1887 = vmatpush1.bf16.msra.mxu0 0
      %1888 = vmatprep.subr.bf16.mxu0 0
      %1889 = vmatpush1.bf16.msra.mxu0 0
      %1890 = vmatprep.subr.bf16.mxu0 0
      %1891 = vmatpush1.bf16.msra.mxu0 0
      %1892 = vmatprep.subr.bf16.mxu0 0
      %1893 = vmatpush1.bf16.msra.mxu0 0
      %1894 = vmatprep.subr.bf16.mxu0 0
      %1895 = vmatpush1.bf16.msra.mxu0 0
      %1896 = vmatprep.subr.bf16.mxu0 0
      %1897 = vmatpush1.bf16.msra.mxu0 0
      %1898 = vmatprep.subr.bf16.mxu0 0
      %1899 = vmatpush1.bf16.msra.mxu0 0
      %1900 = vmatprep.subr.bf16.mxu0 0
      %1901 = vmatpush1.bf16.msra.mxu0 0
      %1902 = vmatprep.subr.bf16.mxu0 0
      %1903 = vmatpush1.bf16.msra.mxu0 0
      %1904 = vmatprep.mubr.bf16.mxu0 0
      %1905 = vmatmul.mubr.bf16.gmra.mrb[0].mxu0 %v1870
      %v1906 = vpop.f32.mrb[0].mxu0
      %v1907 = vadd.f32 0.0, %v1906
      %v1908 = vpop.f32.mrb[0].mxu0
      %v1909 = vpop.f32.mrb[0].mxu0
      %v1910 = vadd.f32 0.0, %v1909
      %v1911 = vpop.f32.mrb[0].mxu0
      %1912 = vdwg.mxu0
      %1913 = vrot.lane.b32.xlu0 %v541, 64
      %v1914 = vpop.permute.xlu0 %1913
      %v1917 = vsel %vm1356, %v1713, 0
      %1919 = vmatprep.subr.bf16.mxu0 0
      %1920 = vmatpush1.bf16.msra.mxu0 %v1914
      %1921 = vmatprep.subr.bf16.mxu0 0
      %1922 = vmatpush1.bf16.msra.mxu0 0
      %1923 = vmatprep.subr.bf16.mxu0 0
      %1924 = vmatpush1.bf16.msra.mxu0 0
      %1925 = vmatprep.subr.bf16.mxu0 0
      %1926 = vmatpush1.bf16.msra.mxu0 0
      %1927 = vmatprep.subr.bf16.mxu0 0
      %1928 = vmatpush1.bf16.msra.mxu0 0
      %1929 = vmatprep.subr.bf16.mxu0 0
      %1930 = vmatpush1.bf16.msra.mxu0 0
      %1931 = vmatprep.subr.bf16.mxu0 0
      %1932 = vmatpush1.bf16.msra.mxu0 0
      %1933 = vmatprep.subr.bf16.mxu0 0
      %1934 = vmatpush1.bf16.msra.mxu0 0
      %1935 = vmatprep.subr.bf16.mxu0 0
      %1936 = vmatpush1.bf16.msra.mxu0 0
      %1937 = vmatprep.subr.bf16.mxu0 0
      %1938 = vmatpush1.bf16.msra.mxu0 0
      %1939 = vmatprep.subr.bf16.mxu0 0
      %1940 = vmatpush1.bf16.msra.mxu0 0
      %1941 = vmatprep.subr.bf16.mxu0 0
      %1942 = vmatpush1.bf16.msra.mxu0 0
      %1943 = vmatprep.subr.bf16.mxu0 0
      %1944 = vmatpush1.bf16.msra.mxu0 0
      %1945 = vmatprep.subr.bf16.mxu0 0
      %1946 = vmatpush1.bf16.msra.mxu0 0
      %1947 = vmatprep.subr.bf16.mxu0 0
      %1948 = vmatpush1.bf16.msra.mxu0 0
      %1949 = vmatprep.subr.bf16.mxu0 0
      %1950 = vmatpush1.bf16.msra.mxu0 0
      %1951 = vmatprep.mubr.bf16.mxu0 0
      %1952 = vmatmul.mubr.bf16.gmra.mrb[0].mxu0 %v1917
      %v1953 = vpop.f32.mrb[0].mxu0
      %v1954 = vadd.f32 0.0, %v1953
      %v1955 = vpop.f32.mrb[0].mxu0
      %v1956 = vpop.f32.mrb[0].mxu0
      %v1957 = vadd.f32 0.0, %v1956
      %v1958 = vpop.f32.mrb[0].mxu0
      %1959 = vdwg.mxu0
      %1960 = vrot.lane.b32.xlu0 %v542, 64
      %v1961 = vpop.permute.xlu0 %1960
      %v1964 = vsel %vm1356, %v1714, 0
      %1966 = vmatprep.subr.bf16.mxu0 0
      %1967 = vmatpush1.bf16.msra.mxu0 %v1961
      %1968 = vmatprep.subr.bf16.mxu0 0
      %1969 = vmatpush1.bf16.msra.mxu0 0
      %1970 = vmatprep.subr.bf16.mxu0 0
      %1971 = vmatpush1.bf16.msra.mxu0 0
      %1972 = vmatprep.subr.bf16.mxu0 0
      %1973 = vmatpush1.bf16.msra.mxu0 0
      %1974 = vmatprep.subr.bf16.mxu0 0
      %1975 = vmatpush1.bf16.msra.mxu0 0
      %1976 = vmatprep.subr.bf16.mxu0 0
      %1977 = vmatpush1.bf16.msra.mxu0 0
      %1978 = vmatprep.subr.bf16.mxu0 0
      %1979 = vmatpush1.bf16.msra.mxu0 0
      %1980 = vmatprep.subr.bf16.mxu0 0
      %1981 = vmatpush1.bf16.msra.mxu0 0
      %1982 = vmatprep.subr.bf16.mxu0 0
      %1983 = vmatpush1.bf16.msra.mxu0 0
      %1984 = vmatprep.subr.bf16.mxu0 0
      %1985 = vmatpush1.bf16.msra.mxu0 0
      %1986 = vmatprep.subr.bf16.mxu0 0
      %1987 = vmatpush1.bf16.msra.mxu0 0
      %1988 = vmatprep.subr.bf16.mxu0 0
      %1989 = vmatpush1.bf16.msra.mxu0 0
      %1990 = vmatprep.subr.bf16.mxu0 0
      %1991 = vmatpush1.bf16.msra.mxu0 0
      %1992 = vmatprep.subr.bf16.mxu0 0
      %1993 = vmatpush1.bf16.msra.mxu0 0
      %1994 = vmatprep.subr.bf16.mxu0 0
      %1995 = vmatpush1.bf16.msra.mxu0 0
      %1996 = vmatprep.subr.bf16.mxu0 0
      %1997 = vmatpush1.bf16.msra.mxu0 0
      %1998 = vmatprep.mubr.bf16.mxu0 0
      %1999 = vmatmul.mubr.bf16.gmra.mrb[0].mxu0 %v1964
      %v2000 = vpop.f32.mrb[0].mxu0
      %v2001 = vadd.f32 0.0, %v2000
      %v2002 = vpop.f32.mrb[0].mxu0
      %v2003 = vpop.f32.mrb[0].mxu0
      %v2004 = vadd.f32 0.0, %v2003
      %v2005 = vpop.f32.mrb[0].mxu0
      %2006 = vdwg.mxu0
      %2007 = vrot.lane.b32.xlu0 %v543, 64
      %v2008 = vpop.permute.xlu0 %2007
      %v2011 = vsel %vm1356, %v1715, 0
      %2013 = vmatprep.subr.bf16.mxu0 0
      %2014 = vmatpush1.bf16.msra.mxu0 %v2008
      %2015 = vmatprep.subr.bf16.mxu0 0
      %2016 = vmatpush1.bf16.msra.mxu0 0
      %2017 = vmatprep.subr.bf16.mxu0 0
      %2018 = vmatpush1.bf16.msra.mxu0 0
      %2019 = vmatprep.subr.bf16.mxu0 0
      %2020 = vmatpush1.bf16.msra.mxu0 0
      %2021 = vmatprep.subr.bf16.mxu0 0
      %2022 = vmatpush1.bf16.msra.mxu0 0
      %2023 = vmatprep.subr.bf16.mxu0 0
      %2024 = vmatpush1.bf16.msra.mxu0 0
      %2025 = vmatprep.subr.bf16.mxu0 0
      %2026 = vmatpush1.bf16.msra.mxu0 0
      %2027 = vmatprep.subr.bf16.mxu0 0
      %2028 = vmatpush1.bf16.msra.mxu0 0
      %2029 = vmatprep.subr.bf16.mxu0 0
      %2030 = vmatpush1.bf16.msra.mxu0 0
      %2031 = vmatprep.subr.bf16.mxu0 0
      %2032 = vmatpush1.bf16.msra.mxu0 0
      %2033 = vmatprep.subr.bf16.mxu0 0
      %2034 = vmatpush1.bf16.msra.mxu0 0
      %2035 = vmatprep.subr.bf16.mxu0 0
      %2036 = vmatpush1.bf16.msra.mxu0 0
      %2037 = vmatprep.subr.bf16.mxu0 0
      %2038 = vmatpush1.bf16.msra.mxu0 0
      %2039 = vmatprep.subr.bf16.mxu0 0
      %2040 = vmatpush1.bf16.msra.mxu0 0
      %2041 = vmatprep.subr.bf16.mxu0 0
      %2042 = vmatpush1.bf16.msra.mxu0 0
      %2043 = vmatprep.subr.bf16.mxu0 0
      %2044 = vmatpush1.bf16.msra.mxu0 0
      %2045 = vmatprep.mubr.bf16.mxu0 0
      %2046 = vmatmul.mubr.bf16.gmra.mrb[0].mxu0 %v2011
      %v2047 = vpop.f32.mrb[0].mxu0
      %v2048 = vadd.f32 0.0, %v2047
      %v2049 = vpop.f32.mrb[0].mxu0
      %v2050 = vpop.f32.mrb[0].mxu0
      %v2051 = vadd.f32 0.0, %v2050
      %v2052 = vpop.f32.mrb[0].mxu0
      %2053 = vdwg.mxu0
      %2054 = vrot.lane.b32.xlu0 %v544, 64
      %v2055 = vpop.permute.xlu0 %2054
      %v2058 = vsel %vm1356, %v1716, 0
      %2060 = vmatprep.subr.bf16.mxu0 0
      %2061 = vmatpush1.bf16.msra.mxu0 %v2055
      %2062 = vmatprep.subr.bf16.mxu0 0
      %2063 = vmatpush1.bf16.msra.mxu0 0
      %2064 = vmatprep.subr.bf16.mxu0 0
      %2065 = vmatpush1.bf16.msra.mxu0 0
      %2066 = vmatprep.subr.bf16.mxu0 0
      %2067 = vmatpush1.bf16.msra.mxu0 0
      %2068 = vmatprep.subr.bf16.mxu0 0
      %2069 = vmatpush1.bf16.msra.mxu0 0
      %2070 = vmatprep.subr.bf16.mxu0 0
      %2071 = vmatpush1.bf16.msra.mxu0 0
      %2072 = vmatprep.subr.bf16.mxu0 0
      %2073 = vmatpush1.bf16.msra.mxu0 0
      %2074 = vmatprep.subr.bf16.mxu0 0
      %2075 = vmatpush1.bf16.msra.mxu0 0
      %2076 = vmatprep.subr.bf16.mxu0 0
      %2077 = vmatpush1.bf16.msra.mxu0 0
      %2078 = vmatprep.subr.bf16.mxu0 0
      %2079 = vmatpush1.bf16.msra.mxu0 0
      %2080 = vmatprep.subr.bf16.mxu0 0
      %2081 = vmatpush1.bf16.msra.mxu0 0
      %2082 = vmatprep.subr.bf16.mxu0 0
      %2083 = vmatpush1.bf16.msra.mxu0 0
      %2084 = vmatprep.subr.bf16.mxu0 0
      %2085 = vmatpush1.bf16.msra.mxu0 0
      %2086 = vmatprep.subr.bf16.mxu0 0
      %2087 = vmatpush1.bf16.msra.mxu0 0
      %2088 = vmatprep.subr.bf16.mxu0 0
      %2089 = vmatpush1.bf16.msra.mxu0 0
      %2090 = vmatprep.subr.bf16.mxu0 0
      %2091 = vmatpush1.bf16.msra.mxu0 0
      %2092 = vmatprep.mubr.bf16.mxu0 0
      %2093 = vmatmul.mubr.bf16.gmra.mrb[0].mxu0 %v2058
      %v2094 = vpop.f32.mrb[0].mxu0
      %v2095 = vadd.f32 0.0, %v2094
      %v2096 = vpop.f32.mrb[0].mxu0
      %v2097 = vpop.f32.mrb[0].mxu0
      %v2098 = vadd.f32 0.0, %v2097
      %v2099 = vpop.f32.mrb[0].mxu0
      %2100 = vdwg.mxu0
      %2101 = vrot.lane.b32.xlu0 %v545, 64
      %v2102 = vpop.permute.xlu0 %2101
      %v2105 = vsel %vm1356, %v1717, 0
      %2107 = vmatprep.subr.bf16.mxu0 0
      %2108 = vmatpush1.bf16.msra.mxu0 %v2102
      %2109 = vmatprep.subr.bf16.mxu0 0
      %2110 = vmatpush1.bf16.msra.mxu0 0
      %2111 = vmatprep.subr.bf16.mxu0 0
      %2112 = vmatpush1.bf16.msra.mxu0 0
      %2113 = vmatprep.subr.bf16.mxu0 0
      %2114 = vmatpush1.bf16.msra.mxu0 0
      %2115 = vmatprep.subr.bf16.mxu0 0
      %2116 = vmatpush1.bf16.msra.mxu0 0
      %2117 = vmatprep.subr.bf16.mxu0 0
      %2118 = vmatpush1.bf16.msra.mxu0 0
      %2119 = vmatprep.subr.bf16.mxu0 0
      %2120 = vmatpush1.bf16.msra.mxu0 0
      %2121 = vmatprep.subr.bf16.mxu0 0
      %2122 = vmatpush1.bf16.msra.mxu0 0
      %2123 = vmatprep.subr.bf16.mxu0 0
      %2124 = vmatpush1.bf16.msra.mxu0 0
      %2125 = vmatprep.subr.bf16.mxu0 0
      %2126 = vmatpush1.bf16.msra.mxu0 0
      %2127 = vmatprep.subr.bf16.mxu0 0
      %2128 = vmatpush1.bf16.msra.mxu0 0
      %2129 = vmatprep.subr.bf16.mxu0 0
      %2130 = vmatpush1.bf16.msra.mxu0 0
      %2131 = vmatprep.subr.bf16.mxu0 0
      %2132 = vmatpush1.bf16.msra.mxu0 0
      %2133 = vmatprep.subr.bf16.mxu0 0
      %2134 = vmatpush1.bf16.msra.mxu0 0
      %2135 = vmatprep.subr.bf16.mxu0 0
      %2136 = vmatpush1.bf16.msra.mxu0 0
      %2137 = vmatprep.subr.bf16.mxu0 0
      %2138 = vmatpush1.bf16.msra.mxu0 0
      %2139 = vmatprep.mubr.bf16.mxu0 0
      %2140 = vmatmul.mubr.bf16.gmra.mrb[0].mxu0 %v2105
      %v2141 = vpop.f32.mrb[0].mxu0
      %v2142 = vadd.f32 0.0, %v2141
      %v2143 = vpop.f32.mrb[0].mxu0
      %v2144 = vpop.f32.mrb[0].mxu0
      %v2145 = vadd.f32 0.0, %v2144
      %v2146 = vpop.f32.mrb[0].mxu0
      %2147 = vdwg.mxu0
      %2148 = vrot.lane.b32.xlu0 %v546, 64
      %v2149 = vpop.permute.xlu0 %2148
      %v2152 = vsel %vm1356, %v1718, 0
      %2154 = vmatprep.subr.bf16.mxu0 0
      %2155 = vmatpush1.bf16.msra.mxu0 %v2149
      %2156 = vmatprep.subr.bf16.mxu0 0
      %2157 = vmatpush1.bf16.msra.mxu0 0
      %2158 = vmatprep.subr.bf16.mxu0 0
      %2159 = vmatpush1.bf16.msra.mxu0 0
      %2160 = vmatprep.subr.bf16.mxu0 0
      %2161 = vmatpush1.bf16.msra.mxu0 0
      %2162 = vmatprep.subr.bf16.mxu0 0
      %2163 = vmatpush1.bf16.msra.mxu0 0
      %2164 = vmatprep.subr.bf16.mxu0 0
      %2165 = vmatpush1.bf16.msra.mxu0 0
      %2166 = vmatprep.subr.bf16.mxu0 0
      %2167 = vmatpush1.bf16.msra.mxu0 0
      %2168 = vmatprep.subr.bf16.mxu0 0
      %2169 = vmatpush1.bf16.msra.mxu0 0
      %2170 = vmatprep.subr.bf16.mxu0 0
      %2171 = vmatpush1.bf16.msra.mxu0 0
      %2172 = vmatprep.subr.bf16.mxu0 0
      %2173 = vmatpush1.bf16.msra.mxu0 0
      %2174 = vmatprep.subr.bf16.mxu0 0
      %2175 = vmatpush1.bf16.msra.mxu0 0
      %2176 = vmatprep.subr.bf16.mxu0 0
      %2177 = vmatpush1.bf16.msra.mxu0 0
      %2178 = vmatprep.subr.bf16.mxu0 0
      %2179 = vmatpush1.bf16.msra.mxu0 0
      %2180 = vmatprep.subr.bf16.mxu0 0
      %2181 = vmatpush1.bf16.msra.mxu0 0
      %2182 = vmatprep.subr.bf16.mxu0 0
      %2183 = vmatpush1.bf16.msra.mxu0 0
      %2184 = vmatprep.subr.bf16.mxu0 0
      %2185 = vmatpush1.bf16.msra.mxu0 0
      %2186 = vmatprep.mubr.bf16.mxu0 0
      %2187 = vmatmul.mubr.bf16.gmra.mrb[0].mxu0 %v2152
      %v2188 = vpop.f32.mrb[0].mxu0
      %v2189 = vadd.f32 0.0, %v2188
      %v2190 = vpop.f32.mrb[0].mxu0
      %v2191 = vpop.f32.mrb[0].mxu0
      %v2192 = vadd.f32 0.0, %v2191
      %v2193 = vpop.f32.mrb[0].mxu0
      %2194 = vdwg.mxu0
      %2195 = vrot.lane.b32.xlu0 %v547, 64
      %v2196 = vpop.permute.xlu0 %2195
      %v2199 = vsel %vm1356, %v1719, 0
      %2201 = vmatprep.subr.bf16.mxu0 0
      %2202 = vmatpush1.bf16.msra.mxu0 %v2196
      %2203 = vmatprep.subr.bf16.mxu0 0
      %2204 = vmatpush1.bf16.msra.mxu0 0
      %2205 = vmatprep.subr.bf16.mxu0 0
      %2206 = vmatpush1.bf16.msra.mxu0 0
      %2207 = vmatprep.subr.bf16.mxu0 0
      %2208 = vmatpush1.bf16.msra.mxu0 0
      %2209 = vmatprep.subr.bf16.mxu0 0
      %2210 = vmatpush1.bf16.msra.mxu0 0
      %2211 = vmatprep.subr.bf16.mxu0 0
      %2212 = vmatpush1.bf16.msra.mxu0 0
      %2213 = vmatprep.subr.bf16.mxu0 0
      %2214 = vmatpush1.bf16.msra.mxu0 0
      %2215 = vmatprep.subr.bf16.mxu0 0
      %2216 = vmatpush1.bf16.msra.mxu0 0
      %2217 = vmatprep.subr.bf16.mxu0 0
      %2218 = vmatpush1.bf16.msra.mxu0 0
      %2219 = vmatprep.subr.bf16.mxu0 0
      %2220 = vmatpush1.bf16.msra.mxu0 0
      %2221 = vmatprep.subr.bf16.mxu0 0
      %2222 = vmatpush1.bf16.msra.mxu0 0
      %2223 = vmatprep.subr.bf16.mxu0 0
      %2224 = vmatpush1.bf16.msra.mxu0 0
      %2225 = vmatprep.subr.bf16.mxu0 0
      %2226 = vmatpush1.bf16.msra.mxu0 0
      %2227 = vmatprep.subr.bf16.mxu0 0
      %2228 = vmatpush1.bf16.msra.mxu0 0
      %2229 = vmatprep.subr.bf16.mxu0 0
      %2230 = vmatpush1.bf16.msra.mxu0 0
      %2231 = vmatprep.subr.bf16.mxu0 0
      %2232 = vmatpush1.bf16.msra.mxu0 0
      %2233 = vmatprep.mubr.bf16.mxu0 0
      %2234 = vmatmul.mubr.bf16.gmra.mrb[0].mxu0 %v2199
      %v2235 = vpop.f32.mrb[0].mxu0
      %v2236 = vadd.f32 0.0, %v2235
      %v2237 = vpop.f32.mrb[0].mxu0
      %v2238 = vpop.f32.mrb[0].mxu0
      %v2239 = vadd.f32 0.0, %v2238
      %v2240 = vpop.f32.mrb[0].mxu0
      %2241 = vdwg.mxu0
      %2242 = vrot.lane.b32.xlu0 %v548, 64
      %v2243 = vpop.permute.xlu0 %2242
      %v2246 = vsel %vm1356, %v1720, 0
      %2248 = vmatprep.subr.bf16.mxu0 0
      %2249 = vmatpush1.bf16.msra.mxu0 %v2243
      %2250 = vmatprep.subr.bf16.mxu0 0
      %2251 = vmatpush1.bf16.msra.mxu0 0
      %2252 = vmatprep.subr.bf16.mxu0 0
      %2253 = vmatpush1.bf16.msra.mxu0 0
      %2254 = vmatprep.subr.bf16.mxu0 0
      %2255 = vmatpush1.bf16.msra.mxu0 0
      %2256 = vmatprep.subr.bf16.mxu0 0
      %2257 = vmatpush1.bf16.msra.mxu0 0
      %2258 = vmatprep.subr.bf16.mxu0 0
      %2259 = vmatpush1.bf16.msra.mxu0 0
      %2260 = vmatprep.subr.bf16.mxu0 0
      %2261 = vmatpush1.bf16.msra.mxu0 0
      %2262 = vmatprep.subr.bf16.mxu0 0
      %2263 = vmatpush1.bf16.msra.mxu0 0
      %2264 = vmatprep.subr.bf16.mxu0 0
      %2265 = vmatpush1.bf16.msra.mxu0 0
      %2266 = vmatprep.subr.bf16.mxu0 0
      %2267 = vmatpush1.bf16.msra.mxu0 0
      %2268 = vmatprep.subr.bf16.mxu0 0
      %2269 = vmatpush1.bf16.msra.mxu0 0
      %2270 = vmatprep.subr.bf16.mxu0 0
      %2271 = vmatpush1.bf16.msra.mxu0 0
      %2272 = vmatprep.subr.bf16.mxu0 0
      %2273 = vmatpush1.bf16.msra.mxu0 0
      %2274 = vmatprep.subr.bf16.mxu0 0
      %2275 = vmatpush1.bf16.msra.mxu0 0
      %2276 = vmatprep.subr.bf16.mxu0 0
      %2277 = vmatpush1.bf16.msra.mxu0 0
      %2278 = vmatprep.subr.bf16.mxu0 0
      %2279 = vmatpush1.bf16.msra.mxu0 0
      %2280 = vmatprep.mubr.bf16.mxu0 0
      %2281 = vmatmul.mubr.bf16.gmra.mrb[0].mxu0 %v2246
      %v2282 = vpop.f32.mrb[0].mxu0
      %v2283 = vadd.f32 0.0, %v2282
      %v2284 = vpop.f32.mrb[0].mxu0
      %v2285 = vpop.f32.mrb[0].mxu0
      %v2286 = vadd.f32 0.0, %v2285
      %v2287 = vpop.f32.mrb[0].mxu0
      %2288 = vdwg.mxu0
      %2289 = vrot.lane.b32.xlu0 %v549, 64
      %v2290 = vpop.permute.xlu0 %2289
      %v2293 = vsel %vm1356, %v1721, 0
      %2295 = vmatprep.subr.bf16.mxu0 0
      %2296 = vmatpush1.bf16.msra.mxu0 %v2290
      %2297 = vmatprep.subr.bf16.mxu0 0
      %2298 = vmatpush1.bf16.msra.mxu0 0
      %2299 = vmatprep.subr.bf16.mxu0 0
      %2300 = vmatpush1.bf16.msra.mxu0 0
      %2301 = vmatprep.subr.bf16.mxu0 0
      %2302 = vmatpush1.bf16.msra.mxu0 0
      %2303 = vmatprep.subr.bf16.mxu0 0
      %2304 = vmatpush1.bf16.msra.mxu0 0
      %2305 = vmatprep.subr.bf16.mxu0 0
      %2306 = vmatpush1.bf16.msra.mxu0 0
      %2307 = vmatprep.subr.bf16.mxu0 0
      %2308 = vmatpush1.bf16.msra.mxu0 0
      %2309 = vmatprep.subr.bf16.mxu0 0
      %2310 = vmatpush1.bf16.msra.mxu0 0
      %2311 = vmatprep.subr.bf16.mxu0 0
      %2312 = vmatpush1.bf16.msra.mxu0 0
      %2313 = vmatprep.subr.bf16.mxu0 0
      %2314 = vmatpush1.bf16.msra.mxu0 0
      %2315 = vmatprep.subr.bf16.mxu0 0
      %2316 = vmatpush1.bf16.msra.mxu0 0
      %2317 = vmatprep.subr.bf16.mxu0 0
      %2318 = vmatpush1.bf16.msra.mxu0 0
      %2319 = vmatprep.subr.bf16.mxu0 0
      %2320 = vmatpush1.bf16.msra.mxu0 0
      %2321 = vmatprep.subr.bf16.mxu0 0
      %2322 = vmatpush1.bf16.msra.mxu0 0
      %2323 = vmatprep.subr.bf16.mxu0 0
      %2324 = vmatpush1.bf16.msra.mxu0 0
      %2325 = vmatprep.subr.bf16.mxu0 0
      %2326 = vmatpush1.bf16.msra.mxu0 0
      %2327 = vmatprep.mubr.bf16.mxu0 0
      %2328 = vmatmul.mubr.bf16.gmra.mrb[0].mxu0 %v2293
      %v2329 = vpop.f32.mrb[0].mxu0
      %v2330 = vadd.f32 0.0, %v2329
      %v2331 = vpop.f32.mrb[0].mxu0
      %v2332 = vpop.f32.mrb[0].mxu0
      %v2333 = vadd.f32 0.0, %v2332
      %v2334 = vpop.f32.mrb[0].mxu0
      %2335 = vdwg.mxu0
      %2336 = vrot.lane.b32.xlu0 %v550, 64
      %v2337 = vpop.permute.xlu0 %2336
      %v2340 = vsel %vm1356, %v1722, 0
      %2342 = vmatprep.subr.bf16.mxu0 0
      %2343 = vmatpush1.bf16.msra.mxu0 %v2337
      %2344 = vmatprep.subr.bf16.mxu0 0
      %2345 = vmatpush1.bf16.msra.mxu0 0
      %2346 = vmatprep.subr.bf16.mxu0 0
      %2347 = vmatpush1.bf16.msra.mxu0 0
      %2348 = vmatprep.subr.bf16.mxu0 0
      %2349 = vmatpush1.bf16.msra.mxu0 0
      %2350 = vmatprep.subr.bf16.mxu0 0
      %2351 = vmatpush1.bf16.msra.mxu0 0
      %2352 = vmatprep.subr.bf16.mxu0 0
      %2353 = vmatpush1.bf16.msra.mxu0 0
      %2354 = vmatprep.subr.bf16.mxu0 0
      %2355 = vmatpush1.bf16.msra.mxu0 0
      %2356 = vmatprep.subr.bf16.mxu0 0
      %2357 = vmatpush1.bf16.msra.mxu0 0
      %2358 = vmatprep.subr.bf16.mxu0 0
      %2359 = vmatpush1.bf16.msra.mxu0 0
      %2360 = vmatprep.subr.bf16.mxu0 0
      %2361 = vmatpush1.bf16.msra.mxu0 0
      %2362 = vmatprep.subr.bf16.mxu0 0
      %2363 = vmatpush1.bf16.msra.mxu0 0
      %2364 = vmatprep.subr.bf16.mxu0 0
      %2365 = vmatpush1.bf16.msra.mxu0 0
      %2366 = vmatprep.subr.bf16.mxu0 0
      %2367 = vmatpush1.bf16.msra.mxu0 0
      %2368 = vmatprep.subr.bf16.mxu0 0
      %2369 = vmatpush1.bf16.msra.mxu0 0
      %2370 = vmatprep.subr.bf16.mxu0 0
      %2371 = vmatpush1.bf16.msra.mxu0 0
      %2372 = vmatprep.subr.bf16.mxu0 0
      %2373 = vmatpush1.bf16.msra.mxu0 0
      %2374 = vmatprep.mubr.bf16.mxu0 0
      %2375 = vmatmul.mubr.bf16.gmra.mrb[0].mxu0 %v2340
      %v2376 = vpop.f32.mrb[0].mxu0
      %v2377 = vadd.f32 0.0, %v2376
      %v2378 = vpop.f32.mrb[0].mxu0
      %v2379 = vpop.f32.mrb[0].mxu0
      %v2380 = vadd.f32 0.0, %v2379
      %v2381 = vpop.f32.mrb[0].mxu0
      %2382 = vdwg.mxu0
      %2383 = vrot.lane.b32.xlu0 %v551, 64
      %v2384 = vpop.permute.xlu0 %2383
      %v2387 = vsel %vm1356, %v1723, 0
      %2389 = vmatprep.subr.bf16.mxu0 0
      %2390 = vmatpush1.bf16.msra.mxu0 %v2384
      %2391 = vmatprep.subr.bf16.mxu0 0
      %2392 = vmatpush1.bf16.msra.mxu0 0
      %2393 = vmatprep.subr.bf16.mxu0 0
      %2394 = vmatpush1.bf16.msra.mxu0 0
      %2395 = vmatprep.subr.bf16.mxu0 0
      %2396 = vmatpush1.bf16.msra.mxu0 0
      %2397 = vmatprep.subr.bf16.mxu0 0
      %2398 = vmatpush1.bf16.msra.mxu0 0
      %2399 = vmatprep.subr.bf16.mxu0 0
      %2400 = vmatpush1.bf16.msra.mxu0 0
      %2401 = vmatprep.subr.bf16.mxu0 0
      %2402 = vmatpush1.bf16.msra.mxu0 0
      %2403 = vmatprep.subr.bf16.mxu0 0
      %2404 = vmatpush1.bf16.msra.mxu0 0
      %2405 = vmatprep.subr.bf16.mxu0 0
      %2406 = vmatpush1.bf16.msra.mxu0 0
      %2407 = vmatprep.subr.bf16.mxu0 0
      %2408 = vmatpush1.bf16.msra.mxu0 0
      %2409 = vmatprep.subr.bf16.mxu0 0
      %2410 = vmatpush1.bf16.msra.mxu0 0
      %2411 = vmatprep.subr.bf16.mxu0 0
      %2412 = vmatpush1.bf16.msra.mxu0 0
      %2413 = vmatprep.subr.bf16.mxu0 0
      %2414 = vmatpush1.bf16.msra.mxu0 0
      %2415 = vmatprep.subr.bf16.mxu0 0
      %2416 = vmatpush1.bf16.msra.mxu0 0
      %2417 = vmatprep.subr.bf16.mxu0 0
      %2418 = vmatpush1.bf16.msra.mxu0 0
      %2419 = vmatprep.subr.bf16.mxu0 0
      %2420 = vmatpush1.bf16.msra.mxu0 0
      %2421 = vmatprep.mubr.bf16.mxu0 0
      %2422 = vmatmul.mubr.bf16.gmra.mrb[0].mxu0 %v2387
      %v2423 = vpop.f32.mrb[0].mxu0
      %v2424 = vadd.f32 0.0, %v2423
      %v2425 = vpop.f32.mrb[0].mxu0
      %v2426 = vpop.f32.mrb[0].mxu0
      %v2427 = vadd.f32 0.0, %v2426
      %v2428 = vpop.f32.mrb[0].mxu0
      %2429 = vdwg.mxu0
      %2430 = vrot.lane.b32.xlu0 %v552, 64
      %v2431 = vpop.permute.xlu0 %2430
      %v2434 = vsel %vm1356, %v1724, 0
      %2436 = vmatprep.subr.bf16.mxu0 0
      %2437 = vmatpush1.bf16.msra.mxu0 %v2431
      %2438 = vmatprep.subr.bf16.mxu0 0
      %2439 = vmatpush1.bf16.msra.mxu0 0
      %2440 = vmatprep.subr.bf16.mxu0 0
      %2441 = vmatpush1.bf16.msra.mxu0 0
      %2442 = vmatprep.subr.bf16.mxu0 0
      %2443 = vmatpush1.bf16.msra.mxu0 0
      %2444 = vmatprep.subr.bf16.mxu0 0
      %2445 = vmatpush1.bf16.msra.mxu0 0
      %2446 = vmatprep.subr.bf16.mxu0 0
      %2447 = vmatpush1.bf16.msra.mxu0 0
      %2448 = vmatprep.subr.bf16.mxu0 0
      %2449 = vmatpush1.bf16.msra.mxu0 0
      %2450 = vmatprep.subr.bf16.mxu0 0
      %2451 = vmatpush1.bf16.msra.mxu0 0
      %2452 = vmatprep.subr.bf16.mxu0 0
      %2453 = vmatpush1.bf16.msra.mxu0 0
      %2454 = vmatprep.subr.bf16.mxu0 0
      %2455 = vmatpush1.bf16.msra.mxu0 0
      %2456 = vmatprep.subr.bf16.mxu0 0
      %2457 = vmatpush1.bf16.msra.mxu0 0
      %2458 = vmatprep.subr.bf16.mxu0 0
      %2459 = vmatpush1.bf16.msra.mxu0 0
      %2460 = vmatprep.subr.bf16.mxu0 0
      %2461 = vmatpush1.bf16.msra.mxu0 0
      %2462 = vmatprep.subr.bf16.mxu0 0
      %2463 = vmatpush1.bf16.msra.mxu0 0
      %2464 = vmatprep.subr.bf16.mxu0 0
      %2465 = vmatpush1.bf16.msra.mxu0 0
      %2466 = vmatprep.subr.bf16.mxu0 0
      %2467 = vmatpush1.bf16.msra.mxu0 0
      %2468 = vmatprep.mubr.bf16.mxu0 0
      %2469 = vmatmul.mubr.bf16.gmra.mrb[0].mxu0 %v2434
      %v2470 = vpop.f32.mrb[0].mxu0
      %v2471 = vadd.f32 0.0, %v2470
      %v2472 = vpop.f32.mrb[0].mxu0
      %v2473 = vpop.f32.mrb[0].mxu0
      %v2474 = vadd.f32 0.0, %v2473
      %v2475 = vpop.f32.mrb[0].mxu0
      %2476 = vdwg.mxu0
      %s2477 = scalar_lea.vmem %s3, 16
      %v2478 = vld [vmem:[%s2477] sm:$0xff]
      %v2479 = vld [vmem:[%s2477 + $0x8] sm:$0xff]
      %2480 = vrot.lane.b32.xlu0 %v537, 120
      %v2481 = vpop.permute.xlu0 %2480
      %2482 = vrot.lane.b32.xlu0 %v537, 88
      %v2483 = vpop.permute.xlu0 %2482
      %v2485 = vsel %vm558, %v2481, 0
      %v2488 = vsel %vm558, %v2483, 0
      %2490 = vmatprep.subr.bf16.mxu0 0
      %2491 = vmatpush1.bf16.xpose.msra.mxu0 %v2488
      %2492 = vmatprep.subr.bf16.mxu0 0
      %2493 = vmatpush1.bf16.xpose.msra.mxu0 0
      %2494 = vmatprep.subr.bf16.mxu0 0
      %2495 = vmatpush1.bf16.xpose.msra.mxu0 0
      %2496 = vmatprep.subr.bf16.mxu0 0
      %2497 = vmatpush1.bf16.xpose.msra.mxu0 0
      %2498 = vmatprep.subr.bf16.mxu0 0
      %2499 = vmatpush1.bf16.xpose.msra.mxu0 0
      %2500 = vmatprep.subr.bf16.mxu0 0
      %2501 = vmatpush1.bf16.xpose.msra.mxu0 0
      %2502 = vmatprep.subr.bf16.mxu0 0
      %2503 = vmatpush1.bf16.xpose.msra.mxu0 0
      %2504 = vmatprep.subr.bf16.mxu0 0
      %2505 = vmatpush1.bf16.xpose.msra.mxu0 0
      %2506 = vmatprep.subr.bf16.mxu0 0
      %2507 = vmatpush1.bf16.xpose.msra.mxu0 0
      %2508 = vmatprep.subr.bf16.mxu0 0
      %2509 = vmatpush1.bf16.xpose.msra.mxu0 0
      %2510 = vmatprep.subr.bf16.mxu0 0
      %2511 = vmatpush1.bf16.xpose.msra.mxu0 0
      %2512 = vmatprep.subr.bf16.mxu0 0
      %2513 = vmatpush1.bf16.xpose.msra.mxu0 0
      %2514 = vmatprep.subr.bf16.mxu0 0
      %2515 = vmatpush1.bf16.xpose.msra.mxu0 0
      %2516 = vmatprep.subr.bf16.mxu0 0
      %2517 = vmatpush1.bf16.xpose.msra.mxu0 0
      %2518 = vmatprep.subr.bf16.mxu0 0
      %2519 = vmatpush1.bf16.xpose.msra.mxu0 0
      %2520 = vmatprep.subr.bf16.mxu0 0
      %2521 = vmatpush1.bf16.xpose.msra.mxu0 0
      %2522 = vmatprep.mubr.bf16.mxu0 0
      %2523 = vmatmul.mubr.bf16.gmra.mrb[0].mxu0 %v2485
      %v2524 = vpop.f32.mrb[0].mxu0
      %v2525 = vadd.f32 %v2478, %v2524
      %v2526 = vpop.f32.mrb[0].mxu0
      %v2527 = vpop.f32.mrb[0].mxu0
      %v2528 = vadd.f32 %v2479, %v2527
      %v2529 = vpop.f32.mrb[0].mxu0
      %2530 = vdwg.mxu0
      %2531 = vrot.lane.b32.xlu0 %v538, 120
      %v2532 = vpop.permute.xlu0 %2531
      %2533 = vrot.lane.b32.xlu0 %v538, 88
      %v2534 = vpop.permute.xlu0 %2533
      %v2536 = vsel %vm558, %v2532, 0
      %v2539 = vsel %vm558, %v2534, 0
      %2541 = vmatprep.subr.bf16.mxu0 0
      %2542 = vmatpush1.bf16.xpose.msra.mxu0 %v2539
      %2543 = vmatprep.subr.bf16.mxu0 0
      %2544 = vmatpush1.bf16.xpose.msra.mxu0 0
      %2545 = vmatprep.subr.bf16.mxu0 0
      %2546 = vmatpush1.bf16.xpose.msra.mxu0 0
      %2547 = vmatprep.subr.bf16.mxu0 0
      %2548 = vmatpush1.bf16.xpose.msra.mxu0 0
      %2549 = vmatprep.subr.bf16.mxu0 0
      %2550 = vmatpush1.bf16.xpose.msra.mxu0 0
      %2551 = vmatprep.subr.bf16.mxu0 0
      %2552 = vmatpush1.bf16.xpose.msra.mxu0 0
      %2553 = vmatprep.subr.bf16.mxu0 0
      %2554 = vmatpush1.bf16.xpose.msra.mxu0 0
      %2555 = vmatprep.subr.bf16.mxu0 0
      %2556 = vmatpush1.bf16.xpose.msra.mxu0 0
      %2557 = vmatprep.subr.bf16.mxu0 0
      %2558 = vmatpush1.bf16.xpose.msra.mxu0 0
      %2559 = vmatprep.subr.bf16.mxu0 0
      %2560 = vmatpush1.bf16.xpose.msra.mxu0 0
      %2561 = vmatprep.subr.bf16.mxu0 0
      %2562 = vmatpush1.bf16.xpose.msra.mxu0 0
      %2563 = vmatprep.subr.bf16.mxu0 0
      %2564 = vmatpush1.bf16.xpose.msra.mxu0 0
      %2565 = vmatprep.subr.bf16.mxu0 0
      %2566 = vmatpush1.bf16.xpose.msra.mxu0 0
      %2567 = vmatprep.subr.bf16.mxu0 0
      %2568 = vmatpush1.bf16.xpose.msra.mxu0 0
      %2569 = vmatprep.subr.bf16.mxu0 0
      %2570 = vmatpush1.bf16.xpose.msra.mxu0 0
      %2571 = vmatprep.subr.bf16.mxu0 0
      %2572 = vmatpush1.bf16.xpose.msra.mxu0 0
      %2573 = vmatprep.mubr.bf16.mxu0 0
      %2574 = vmatmul.mubr.bf16.gmra.mrb[0].mxu0 %v2536
      %v2575 = vpop.f32.mrb[0].mxu0
      %v2576 = vadd.f32 %v2478, %v2575
      %v2577 = vpop.f32.mrb[0].mxu0
      %v2578 = vpop.f32.mrb[0].mxu0
      %v2579 = vadd.f32 %v2479, %v2578
      %v2580 = vpop.f32.mrb[0].mxu0
      %2581 = vdwg.mxu0
      %2582 = vrot.lane.b32.xlu0 %v539, 120
      %v2583 = vpop.permute.xlu0 %2582
      %2584 = vrot.lane.b32.xlu0 %v539, 88
      %v2585 = vpop.permute.xlu0 %2584
      %v2587 = vsel %vm558, %v2583, 0
      %v2590 = vsel %vm558, %v2585, 0
      %2592 = vmatprep.subr.bf16.mxu0 0
      %2593 = vmatpush1.bf16.xpose.msra.mxu0 %v2590
      %2594 = vmatprep.subr.bf16.mxu0 0
      %2595 = vmatpush1.bf16.xpose.msra.mxu0 0
      %2596 = vmatprep.subr.bf16.mxu0 0
      %2597 = vmatpush1.bf16.xpose.msra.mxu0 0
      %2598 = vmatprep.subr.bf16.mxu0 0
      %2599 = vmatpush1.bf16.xpose.msra.mxu0 0
      %2600 = vmatprep.subr.bf16.mxu0 0
      %2601 = vmatpush1.bf16.xpose.msra.mxu0 0
      %2602 = vmatprep.subr.bf16.mxu0 0
      %2603 = vmatpush1.bf16.xpose.msra.mxu0 0
      %2604 = vmatprep.subr.bf16.mxu0 0
      %2605 = vmatpush1.bf16.xpose.msra.mxu0 0
      %2606 = vmatprep.subr.bf16.mxu0 0
      %2607 = vmatpush1.bf16.xpose.msra.mxu0 0
      %2608 = vmatprep.subr.bf16.mxu0 0
      %2609 = vmatpush1.bf16.xpose.msra.mxu0 0
      %2610 = vmatprep.subr.bf16.mxu0 0
      %2611 = vmatpush1.bf16.xpose.msra.mxu0 0
      %2612 = vmatprep.subr.bf16.mxu0 0
      %2613 = vmatpush1.bf16.xpose.msra.mxu0 0
      %2614 = vmatprep.subr.bf16.mxu0 0
      %2615 = vmatpush1.bf16.xpose.msra.mxu0 0
      %2616 = vmatprep.subr.bf16.mxu0 0
      %2617 = vmatpush1.bf16.xpose.msra.mxu0 0
      %2618 = vmatprep.subr.bf16.mxu0 0
      %2619 = vmatpush1.bf16.xpose.msra.mxu0 0
      %2620 = vmatprep.subr.bf16.mxu0 0
      %2621 = vmatpush1.bf16.xpose.msra.mxu0 0
      %2622 = vmatprep.subr.bf16.mxu0 0
      %2623 = vmatpush1.bf16.xpose.msra.mxu0 0
      %2624 = vmatprep.mubr.bf16.mxu0 0
      %2625 = vmatmul.mubr.bf16.gmra.mrb[0].mxu0 %v2587
      %v2626 = vpop.f32.mrb[0].mxu0
      %v2627 = vadd.f32 %v2478, %v2626
      %v2628 = vpop.f32.mrb[0].mxu0
      %v2629 = vpop.f32.mrb[0].mxu0
      %v2630 = vadd.f32 %v2479, %v2629
      %v2631 = vpop.f32.mrb[0].mxu0
      %2632 = vdwg.mxu0
      %2633 = vrot.lane.b32.xlu0 %v540, 120
      %v2634 = vpop.permute.xlu0 %2633
      %2635 = vrot.lane.b32.xlu0 %v540, 88
      %v2636 = vpop.permute.xlu0 %2635
      %v2638 = vsel %vm558, %v2634, 0
      %v2641 = vsel %vm558, %v2636, 0
      %2643 = vmatprep.subr.bf16.mxu0 0
      %2644 = vmatpush1.bf16.xpose.msra.mxu0 %v2641
      %2645 = vmatprep.subr.bf16.mxu0 0
      %2646 = vmatpush1.bf16.xpose.msra.mxu0 0
      %2647 = vmatprep.subr.bf16.mxu0 0
      %2648 = vmatpush1.bf16.xpose.msra.mxu0 0
      %2649 = vmatprep.subr.bf16.mxu0 0
      %2650 = vmatpush1.bf16.xpose.msra.mxu0 0
      %2651 = vmatprep.subr.bf16.mxu0 0
      %2652 = vmatpush1.bf16.xpose.msra.mxu0 0
      %2653 = vmatprep.subr.bf16.mxu0 0
      %2654 = vmatpush1.bf16.xpose.msra.mxu0 0
      %2655 = vmatprep.subr.bf16.mxu0 0
      %2656 = vmatpush1.bf16.xpose.msra.mxu0 0
      %2657 = vmatprep.subr.bf16.mxu0 0
      %2658 = vmatpush1.bf16.xpose.msra.mxu0 0
      %2659 = vmatprep.subr.bf16.mxu0 0
      %2660 = vmatpush1.bf16.xpose.msra.mxu0 0
      %2661 = vmatprep.subr.bf16.mxu0 0
      %2662 = vmatpush1.bf16.xpose.msra.mxu0 0
      %2663 = vmatprep.subr.bf16.mxu0 0
      %2664 = vmatpush1.bf16.xpose.msra.mxu0 0
      %2665 = vmatprep.subr.bf16.mxu0 0
      %2666 = vmatpush1.bf16.xpose.msra.mxu0 0
      %2667 = vmatprep.subr.bf16.mxu0 0
      %2668 = vmatpush1.bf16.xpose.msra.mxu0 0
      %2669 = vmatprep.subr.bf16.mxu0 0
      %2670 = vmatpush1.bf16.xpose.msra.mxu0 0
      %2671 = vmatprep.subr.bf16.mxu0 0
      %2672 = vmatpush1.bf16.xpose.msra.mxu0 0
      %2673 = vmatprep.subr.bf16.mxu0 0
      %2674 = vmatpush1.bf16.xpose.msra.mxu0 0
      %2675 = vmatprep.mubr.bf16.mxu0 0
      %2676 = vmatmul.mubr.bf16.gmra.mrb[0].mxu0 %v2638
      %v2677 = vpop.f32.mrb[0].mxu0
      %v2678 = vadd.f32 %v2478, %v2677
      %v2679 = vpop.f32.mrb[0].mxu0
      %v2680 = vpop.f32.mrb[0].mxu0
      %v2681 = vadd.f32 %v2479, %v2680
      %v2682 = vpop.f32.mrb[0].mxu0
      %2683 = vdwg.mxu0
      %2684 = vrot.lane.b32.xlu0 %v541, 120
      %v2685 = vpop.permute.xlu0 %2684
      %2686 = vrot.lane.b32.xlu0 %v541, 88
      %v2687 = vpop.permute.xlu0 %2686
      %v2689 = vsel %vm558, %v2685, 0
      %v2692 = vsel %vm558, %v2687, 0
      %2694 = vmatprep.subr.bf16.mxu0 0
      %2695 = vmatpush1.bf16.xpose.msra.mxu0 %v2692
      %2696 = vmatprep.subr.bf16.mxu0 0
      %2697 = vmatpush1.bf16.xpose.msra.mxu0 0
      %2698 = vmatprep.subr.bf16.mxu0 0
      %2699 = vmatpush1.bf16.xpose.msra.mxu0 0
      %2700 = vmatprep.subr.bf16.mxu0 0
      %2701 = vmatpush1.bf16.xpose.msra.mxu0 0
      %2702 = vmatprep.subr.bf16.mxu0 0
      %2703 = vmatpush1.bf16.xpose.msra.mxu0 0
      %2704 = vmatprep.subr.bf16.mxu0 0
      %2705 = vmatpush1.bf16.xpose.msra.mxu0 0
      %2706 = vmatprep.subr.bf16.mxu0 0
      %2707 = vmatpush1.bf16.xpose.msra.mxu0 0
      %2708 = vmatprep.subr.bf16.mxu0 0
      %2709 = vmatpush1.bf16.xpose.msra.mxu0 0
      %2710 = vmatprep.subr.bf16.mxu0 0
      %2711 = vmatpush1.bf16.xpose.msra.mxu0 0
      %2712 = vmatprep.subr.bf16.mxu0 0
      %2713 = vmatpush1.bf16.xpose.msra.mxu0 0
      %2714 = vmatprep.subr.bf16.mxu0 0
      %2715 = vmatpush1.bf16.xpose.msra.mxu0 0
      %2716 = vmatprep.subr.bf16.mxu0 0
      %2717 = vmatpush1.bf16.xpose.msra.mxu0 0
      %2718 = vmatprep.subr.bf16.mxu0 0
      %2719 = vmatpush1.bf16.xpose.msra.mxu0 0
      %2720 = vmatprep.subr.bf16.mxu0 0
      %2721 = vmatpush1.bf16.xpose.msra.mxu0 0
      %2722 = vmatprep.subr.bf16.mxu0 0
      %2723 = vmatpush1.bf16.xpose.msra.mxu0 0
      %2724 = vmatprep.subr.bf16.mxu0 0
      %2725 = vmatpush1.bf16.xpose.msra.mxu0 0
      %2726 = vmatprep.mubr.bf16.mxu0 0
      %2727 = vmatmul.mubr.bf16.gmra.mrb[0].mxu0 %v2689
      %v2728 = vpop.f32.mrb[0].mxu0
      %v2729 = vadd.f32 %v2478, %v2728
      %v2730 = vpop.f32.mrb[0].mxu0
      %v2731 = vpop.f32.mrb[0].mxu0
      %v2732 = vadd.f32 %v2479, %v2731
      %v2733 = vpop.f32.mrb[0].mxu0
      %2734 = vdwg.mxu0
      %2735 = vrot.lane.b32.xlu0 %v542, 120
      %v2736 = vpop.permute.xlu0 %2735
      %2737 = vrot.lane.b32.xlu0 %v542, 88
      %v2738 = vpop.permute.xlu0 %2737
      %v2740 = vsel %vm558, %v2736, 0
      %v2743 = vsel %vm558, %v2738, 0
      %2745 = vmatprep.subr.bf16.mxu0 0
      %2746 = vmatpush1.bf16.xpose.msra.mxu0 %v2743
      %2747 = vmatprep.subr.bf16.mxu0 0
      %2748 = vmatpush1.bf16.xpose.msra.mxu0 0
      %2749 = vmatprep.subr.bf16.mxu0 0
      %2750 = vmatpush1.bf16.xpose.msra.mxu0 0
      %2751 = vmatprep.subr.bf16.mxu0 0
      %2752 = vmatpush1.bf16.xpose.msra.mxu0 0
      %2753 = vmatprep.subr.bf16.mxu0 0
      %2754 = vmatpush1.bf16.xpose.msra.mxu0 0
      %2755 = vmatprep.subr.bf16.mxu0 0
      %2756 = vmatpush1.bf16.xpose.msra.mxu0 0
      %2757 = vmatprep.subr.bf16.mxu0 0
      %2758 = vmatpush1.bf16.xpose.msra.mxu0 0
      %2759 = vmatprep.subr.bf16.mxu0 0
      %2760 = vmatpush1.bf16.xpose.msra.mxu0 0
      %2761 = vmatprep.subr.bf16.mxu0 0
      %2762 = vmatpush1.bf16.xpose.msra.mxu0 0
      %2763 = vmatprep.subr.bf16.mxu0 0
      %2764 = vmatpush1.bf16.xpose.msra.mxu0 0
      %2765 = vmatprep.subr.bf16.mxu0 0
      %2766 = vmatpush1.bf16.xpose.msra.mxu0 0
      %2767 = vmatprep.subr.bf16.mxu0 0
      %2768 = vmatpush1.bf16.xpose.msra.mxu0 0
      %2769 = vmatprep.subr.bf16.mxu0 0
      %2770 = vmatpush1.bf16.xpose.msra.mxu0 0
      %2771 = vmatprep.subr.bf16.mxu0 0
      %2772 = vmatpush1.bf16.xpose.msra.mxu0 0
      %2773 = vmatprep.subr.bf16.mxu0 0
      %2774 = vmatpush1.bf16.xpose.msra.mxu0 0
      %2775 = vmatprep.subr.bf16.mxu0 0
      %2776 = vmatpush1.bf16.xpose.msra.mxu0 0
      %2777 = vmatprep.mubr.bf16.mxu0 0
      %2778 = vmatmul.mubr.bf16.gmra.mrb[0].mxu0 %v2740
      %v2779 = vpop.f32.mrb[0].mxu0
      %v2780 = vadd.f32 %v2478, %v2779
      %v2781 = vpop.f32.mrb[0].mxu0
      %v2782 = vpop.f32.mrb[0].mxu0
      %v2783 = vadd.f32 %v2479, %v2782
      %v2784 = vpop.f32.mrb[0].mxu0
      %2785 = vdwg.mxu0
      %2786 = vrot.lane.b32.xlu0 %v543, 120
      %v2787 = vpop.permute.xlu0 %2786
      %2788 = vrot.lane.b32.xlu0 %v543, 88
      %v2789 = vpop.permute.xlu0 %2788
      %v2791 = vsel %vm558, %v2787, 0
      %v2794 = vsel %vm558, %v2789, 0
      %2796 = vmatprep.subr.bf16.mxu0 0
      %2797 = vmatpush1.bf16.xpose.msra.mxu0 %v2794
      %2798 = vmatprep.subr.bf16.mxu0 0
      %2799 = vmatpush1.bf16.xpose.msra.mxu0 0
      %2800 = vmatprep.subr.bf16.mxu0 0
      %2801 = vmatpush1.bf16.xpose.msra.mxu0 0
      %2802 = vmatprep.subr.bf16.mxu0 0
      %2803 = vmatpush1.bf16.xpose.msra.mxu0 0
      %2804 = vmatprep.subr.bf16.mxu0 0
      %2805 = vmatpush1.bf16.xpose.msra.mxu0 0
      %2806 = vmatprep.subr.bf16.mxu0 0
      %2807 = vmatpush1.bf16.xpose.msra.mxu0 0
      %2808 = vmatprep.subr.bf16.mxu0 0
      %2809 = vmatpush1.bf16.xpose.msra.mxu0 0
      %2810 = vmatprep.subr.bf16.mxu0 0
      %2811 = vmatpush1.bf16.xpose.msra.mxu0 0
      %2812 = vmatprep.subr.bf16.mxu0 0
      %2813 = vmatpush1.bf16.xpose.msra.mxu0 0
      %2814 = vmatprep.subr.bf16.mxu0 0
      %2815 = vmatpush1.bf16.xpose.msra.mxu0 0
      %2816 = vmatprep.subr.bf16.mxu0 0
      %2817 = vmatpush1.bf16.xpose.msra.mxu0 0
      %2818 = vmatprep.subr.bf16.mxu0 0
      %2819 = vmatpush1.bf16.xpose.msra.mxu0 0
      %2820 = vmatprep.subr.bf16.mxu0 0
      %2821 = vmatpush1.bf16.xpose.msra.mxu0 0
      %2822 = vmatprep.subr.bf16.mxu0 0
      %2823 = vmatpush1.bf16.xpose.msra.mxu0 0
      %2824 = vmatprep.subr.bf16.mxu0 0
      %2825 = vmatpush1.bf16.xpose.msra.mxu0 0
      %2826 = vmatprep.subr.bf16.mxu0 0
      %2827 = vmatpush1.bf16.xpose.msra.mxu0 0
      %2828 = vmatprep.mubr.bf16.mxu0 0
      %2829 = vmatmul.mubr.bf16.gmra.mrb[0].mxu0 %v2791
      %v2830 = vpop.f32.mrb[0].mxu0
      %v2831 = vadd.f32 %v2478, %v2830
      %v2832 = vpop.f32.mrb[0].mxu0
      %v2833 = vpop.f32.mrb[0].mxu0
      %v2834 = vadd.f32 %v2479, %v2833
      %v2835 = vpop.f32.mrb[0].mxu0
      %2836 = vdwg.mxu0
      %2837 = vrot.lane.b32.xlu0 %v544, 120
      %v2838 = vpop.permute.xlu0 %2837
      %2839 = vrot.lane.b32.xlu0 %v544, 88
      %v2840 = vpop.permute.xlu0 %2839
      %v2842 = vsel %vm558, %v2838, 0
      %v2845 = vsel %vm558, %v2840, 0
      %2847 = vmatprep.subr.bf16.mxu0 0
      %2848 = vmatpush1.bf16.xpose.msra.mxu0 %v2845
      %2849 = vmatprep.subr.bf16.mxu0 0
      %2850 = vmatpush1.bf16.xpose.msra.mxu0 0
      %2851 = vmatprep.subr.bf16.mxu0 0
      %2852 = vmatpush1.bf16.xpose.msra.mxu0 0
      %2853 = vmatprep.subr.bf16.mxu0 0
      %2854 = vmatpush1.bf16.xpose.msra.mxu0 0
      %2855 = vmatprep.subr.bf16.mxu0 0
      %2856 = vmatpush1.bf16.xpose.msra.mxu0 0
      %2857 = vmatprep.subr.bf16.mxu0 0
      %2858 = vmatpush1.bf16.xpose.msra.mxu0 0
      %2859 = vmatprep.subr.bf16.mxu0 0
      %2860 = vmatpush1.bf16.xpose.msra.mxu0 0
      %2861 = vmatprep.subr.bf16.mxu0 0
      %2862 = vmatpush1.bf16.xpose.msra.mxu0 0
      %2863 = vmatprep.subr.bf16.mxu0 0
      %2864 = vmatpush1.bf16.xpose.msra.mxu0 0
      %2865 = vmatprep.subr.bf16.mxu0 0
      %2866 = vmatpush1.bf16.xpose.msra.mxu0 0
      %2867 = vmatprep.subr.bf16.mxu0 0
      %2868 = vmatpush1.bf16.xpose.msra.mxu0 0
      %2869 = vmatprep.subr.bf16.mxu0 0
      %2870 = vmatpush1.bf16.xpose.msra.mxu0 0
      %2871 = vmatprep.subr.bf16.mxu0 0
      %2872 = vmatpush1.bf16.xpose.msra.mxu0 0
      %2873 = vmatprep.subr.bf16.mxu0 0
      %2874 = vmatpush1.bf16.xpose.msra.mxu0 0
      %2875 = vmatprep.subr.bf16.mxu0 0
      %2876 = vmatpush1.bf16.xpose.msra.mxu0 0
      %2877 = vmatprep.subr.bf16.mxu0 0
      %2878 = vmatpush1.bf16.xpose.msra.mxu0 0
      %2879 = vmatprep.mubr.bf16.mxu0 0
      %2880 = vmatmul.mubr.bf16.gmra.mrb[0].mxu0 %v2842
      %v2881 = vpop.f32.mrb[0].mxu0
      %v2882 = vadd.f32 %v2478, %v2881
      %v2883 = vpop.f32.mrb[0].mxu0
      %v2884 = vpop.f32.mrb[0].mxu0
      %v2885 = vadd.f32 %v2479, %v2884
      %v2886 = vpop.f32.mrb[0].mxu0
      %2887 = vdwg.mxu0
      %2888 = vrot.lane.b32.xlu0 %v545, 120
      %v2889 = vpop.permute.xlu0 %2888
      %2890 = vrot.lane.b32.xlu0 %v545, 88
      %v2891 = vpop.permute.xlu0 %2890
      %v2893 = vsel %vm558, %v2889, 0
      %v2896 = vsel %vm558, %v2891, 0
      %2898 = vmatprep.subr.bf16.mxu0 0
      %2899 = vmatpush1.bf16.xpose.msra.mxu0 %v2896
      %2900 = vmatprep.subr.bf16.mxu0 0
      %2901 = vmatpush1.bf16.xpose.msra.mxu0 0
      %2902 = vmatprep.subr.bf16.mxu0 0
      %2903 = vmatpush1.bf16.xpose.msra.mxu0 0
      %2904 = vmatprep.subr.bf16.mxu0 0
      %2905 = vmatpush1.bf16.xpose.msra.mxu0 0
      %2906 = vmatprep.subr.bf16.mxu0 0
      %2907 = vmatpush1.bf16.xpose.msra.mxu0 0
      %2908 = vmatprep.subr.bf16.mxu0 0
      %2909 = vmatpush1.bf16.xpose.msra.mxu0 0
      %2910 = vmatprep.subr.bf16.mxu0 0
      %2911 = vmatpush1.bf16.xpose.msra.mxu0 0
      %2912 = vmatprep.subr.bf16.mxu0 0
      %2913 = vmatpush1.bf16.xpose.msra.mxu0 0
      %2914 = vmatprep.subr.bf16.mxu0 0
      %2915 = vmatpush1.bf16.xpose.msra.mxu0 0
      %2916 = vmatprep.subr.bf16.mxu0 0
      %2917 = vmatpush1.bf16.xpose.msra.mxu0 0
      %2918 = vmatprep.subr.bf16.mxu0 0
      %2919 = vmatpush1.bf16.xpose.msra.mxu0 0
      %2920 = vmatprep.subr.bf16.mxu0 0
      %2921 = vmatpush1.bf16.xpose.msra.mxu0 0
      %2922 = vmatprep.subr.bf16.mxu0 0
      %2923 = vmatpush1.bf16.xpose.msra.mxu0 0
      %2924 = vmatprep.subr.bf16.mxu0 0
      %2925 = vmatpush1.bf16.xpose.msra.mxu0 0
      %2926 = vmatprep.subr.bf16.mxu0 0
      %2927 = vmatpush1.bf16.xpose.msra.mxu0 0
      %2928 = vmatprep.subr.bf16.mxu0 0
      %2929 = vmatpush1.bf16.xpose.msra.mxu0 0
      %2930 = vmatprep.mubr.bf16.mxu0 0
      %2931 = vmatmul.mubr.bf16.gmra.mrb[0].mxu0 %v2893
      %v2932 = vpop.f32.mrb[0].mxu0
      %v2933 = vadd.f32 %v2478, %v2932
      %v2934 = vpop.f32.mrb[0].mxu0
      %v2935 = vpop.f32.mrb[0].mxu0
      %v2936 = vadd.f32 %v2479, %v2935
      %v2937 = vpop.f32.mrb[0].mxu0
      %2938 = vdwg.mxu0
      %2939 = vrot.lane.b32.xlu0 %v546, 120
      %v2940 = vpop.permute.xlu0 %2939
      %2941 = vrot.lane.b32.xlu0 %v546, 88
      %v2942 = vpop.permute.xlu0 %2941
      %v2944 = vsel %vm558, %v2940, 0
      %v2947 = vsel %vm558, %v2942, 0
      %2949 = vmatprep.subr.bf16.mxu0 0
      %2950 = vmatpush1.bf16.xpose.msra.mxu0 %v2947
      %2951 = vmatprep.subr.bf16.mxu0 0
      %2952 = vmatpush1.bf16.xpose.msra.mxu0 0
      %2953 = vmatprep.subr.bf16.mxu0 0
      %2954 = vmatpush1.bf16.xpose.msra.mxu0 0
      %2955 = vmatprep.subr.bf16.mxu0 0
      %2956 = vmatpush1.bf16.xpose.msra.mxu0 0
      %2957 = vmatprep.subr.bf16.mxu0 0
      %2958 = vmatpush1.bf16.xpose.msra.mxu0 0
      %2959 = vmatprep.subr.bf16.mxu0 0
      %2960 = vmatpush1.bf16.xpose.msra.mxu0 0
      %2961 = vmatprep.subr.bf16.mxu0 0
      %2962 = vmatpush1.bf16.xpose.msra.mxu0 0
      %2963 = vmatprep.subr.bf16.mxu0 0
      %2964 = vmatpush1.bf16.xpose.msra.mxu0 0
      %2965 = vmatprep.subr.bf16.mxu0 0
      %2966 = vmatpush1.bf16.xpose.msra.mxu0 0
      %2967 = vmatprep.subr.bf16.mxu0 0
      %2968 = vmatpush1.bf16.xpose.msra.mxu0 0
      %2969 = vmatprep.subr.bf16.mxu0 0
      %2970 = vmatpush1.bf16.xpose.msra.mxu0 0
      %2971 = vmatprep.subr.bf16.mxu0 0
      %2972 = vmatpush1.bf16.xpose.msra.mxu0 0
      %2973 = vmatprep.subr.bf16.mxu0 0
      %2974 = vmatpush1.bf16.xpose.msra.mxu0 0
      %2975 = vmatprep.subr.bf16.mxu0 0
      %2976 = vmatpush1.bf16.xpose.msra.mxu0 0
      %2977 = vmatprep.subr.bf16.mxu0 0
      %2978 = vmatpush1.bf16.xpose.msra.mxu0 0
      %2979 = vmatprep.subr.bf16.mxu0 0
      %2980 = vmatpush1.bf16.xpose.msra.mxu0 0
      %2981 = vmatprep.mubr.bf16.mxu0 0
      %2982 = vmatmul.mubr.bf16.gmra.mrb[0].mxu0 %v2944
      %v2983 = vpop.f32.mrb[0].mxu0
      %v2984 = vadd.f32 %v2478, %v2983
      %v2985 = vpop.f32.mrb[0].mxu0
      %v2986 = vpop.f32.mrb[0].mxu0
      %v2987 = vadd.f32 %v2479, %v2986
      %v2988 = vpop.f32.mrb[0].mxu0
      %2989 = vdwg.mxu0
      %2990 = vrot.lane.b32.xlu0 %v547, 120
      %v2991 = vpop.permute.xlu0 %2990
      %2992 = vrot.lane.b32.xlu0 %v547, 88
      %v2993 = vpop.permute.xlu0 %2992
      %v2995 = vsel %vm558, %v2991, 0
      %v2998 = vsel %vm558, %v2993, 0
      %3000 = vmatprep.subr.bf16.mxu0 0
      %3001 = vmatpush1.bf16.xpose.msra.mxu0 %v2998
      %3002 = vmatprep.subr.bf16.mxu0 0
      %3003 = vmatpush1.bf16.xpose.msra.mxu0 0
      %3004 = vmatprep.subr.bf16.mxu0 0
      %3005 = vmatpush1.bf16.xpose.msra.mxu0 0
      %3006 = vmatprep.subr.bf16.mxu0 0
      %3007 = vmatpush1.bf16.xpose.msra.mxu0 0
      %3008 = vmatprep.subr.bf16.mxu0 0
      %3009 = vmatpush1.bf16.xpose.msra.mxu0 0
      %3010 = vmatprep.subr.bf16.mxu0 0
      %3011 = vmatpush1.bf16.xpose.msra.mxu0 0
      %3012 = vmatprep.subr.bf16.mxu0 0
      %3013 = vmatpush1.bf16.xpose.msra.mxu0 0
      %3014 = vmatprep.subr.bf16.mxu0 0
      %3015 = vmatpush1.bf16.xpose.msra.mxu0 0
      %3016 = vmatprep.subr.bf16.mxu0 0
      %3017 = vmatpush1.bf16.xpose.msra.mxu0 0
      %3018 = vmatprep.subr.bf16.mxu0 0
      %3019 = vmatpush1.bf16.xpose.msra.mxu0 0
      %3020 = vmatprep.subr.bf16.mxu0 0
      %3021 = vmatpush1.bf16.xpose.msra.mxu0 0
      %3022 = vmatprep.subr.bf16.mxu0 0
      %3023 = vmatpush1.bf16.xpose.msra.mxu0 0
      %3024 = vmatprep.subr.bf16.mxu0 0
      %3025 = vmatpush1.bf16.xpose.msra.mxu0 0
      %3026 = vmatprep.subr.bf16.mxu0 0
      %3027 = vmatpush1.bf16.xpose.msra.mxu0 0
      %3028 = vmatprep.subr.bf16.mxu0 0
      %3029 = vmatpush1.bf16.xpose.msra.mxu0 0
      %3030 = vmatprep.subr.bf16.mxu0 0
      %3031 = vmatpush1.bf16.xpose.msra.mxu0 0
      %3032 = vmatprep.mubr.bf16.mxu0 0
      %3033 = vmatmul.mubr.bf16.gmra.mrb[0].mxu0 %v2995
      %v3034 = vpop.f32.mrb[0].mxu0
      %v3035 = vadd.f32 %v2478, %v3034
      %v3036 = vpop.f32.mrb[0].mxu0
      %v3037 = vpop.f32.mrb[0].mxu0
      %v3038 = vadd.f32 %v2479, %v3037
      %v3039 = vpop.f32.mrb[0].mxu0
      %3040 = vdwg.mxu0
      %3041 = vrot.lane.b32.xlu0 %v548, 120
      %v3042 = vpop.permute.xlu0 %3041
      %3043 = vrot.lane.b32.xlu0 %v548, 88
      %v3044 = vpop.permute.xlu0 %3043
      %v3046 = vsel %vm558, %v3042, 0
      %v3049 = vsel %vm558, %v3044, 0
      %3051 = vmatprep.subr.bf16.mxu0 0
      %3052 = vmatpush1.bf16.xpose.msra.mxu0 %v3049
      %3053 = vmatprep.subr.bf16.mxu0 0
      %3054 = vmatpush1.bf16.xpose.msra.mxu0 0
      %3055 = vmatprep.subr.bf16.mxu0 0
      %3056 = vmatpush1.bf16.xpose.msra.mxu0 0
      %3057 = vmatprep.subr.bf16.mxu0 0
      %3058 = vmatpush1.bf16.xpose.msra.mxu0 0
      %3059 = vmatprep.subr.bf16.mxu0 0
      %3060 = vmatpush1.bf16.xpose.msra.mxu0 0
      %3061 = vmatprep.subr.bf16.mxu0 0
      %3062 = vmatpush1.bf16.xpose.msra.mxu0 0
      %3063 = vmatprep.subr.bf16.mxu0 0
      %3064 = vmatpush1.bf16.xpose.msra.mxu0 0
      %3065 = vmatprep.subr.bf16.mxu0 0
      %3066 = vmatpush1.bf16.xpose.msra.mxu0 0
      %3067 = vmatprep.subr.bf16.mxu0 0
      %3068 = vmatpush1.bf16.xpose.msra.mxu0 0
      %3069 = vmatprep.subr.bf16.mxu0 0
      %3070 = vmatpush1.bf16.xpose.msra.mxu0 0
      %3071 = vmatprep.subr.bf16.mxu0 0
      %3072 = vmatpush1.bf16.xpose.msra.mxu0 0
      %3073 = vmatprep.subr.bf16.mxu0 0
      %3074 = vmatpush1.bf16.xpose.msra.mxu0 0
      %3075 = vmatprep.subr.bf16.mxu0 0
      %3076 = vmatpush1.bf16.xpose.msra.mxu0 0
      %3077 = vmatprep.subr.bf16.mxu0 0
      %3078 = vmatpush1.bf16.xpose.msra.mxu0 0
      %3079 = vmatprep.subr.bf16.mxu0 0
      %3080 = vmatpush1.bf16.xpose.msra.mxu0 0
      %3081 = vmatprep.subr.bf16.mxu0 0
      %3082 = vmatpush1.bf16.xpose.msra.mxu0 0
      %3083 = vmatprep.mubr.bf16.mxu0 0
      %3084 = vmatmul.mubr.bf16.gmra.mrb[0].mxu0 %v3046
      %v3085 = vpop.f32.mrb[0].mxu0
      %v3086 = vadd.f32 %v2478, %v3085
      %v3087 = vpop.f32.mrb[0].mxu0
      %v3088 = vpop.f32.mrb[0].mxu0
      %v3089 = vadd.f32 %v2479, %v3088
      %v3090 = vpop.f32.mrb[0].mxu0
      %3091 = vdwg.mxu0
      %3092 = vrot.lane.b32.xlu0 %v549, 120
      %v3093 = vpop.permute.xlu0 %3092
      %3094 = vrot.lane.b32.xlu0 %v549, 88
      %v3095 = vpop.permute.xlu0 %3094
      %v3097 = vsel %vm558, %v3093, 0
      %v3100 = vsel %vm558, %v3095, 0
      %3102 = vmatprep.subr.bf16.mxu0 0
      %3103 = vmatpush1.bf16.xpose.msra.mxu0 %v3100
      %3104 = vmatprep.subr.bf16.mxu0 0
      %3105 = vmatpush1.bf16.xpose.msra.mxu0 0
      %3106 = vmatprep.subr.bf16.mxu0 0
      %3107 = vmatpush1.bf16.xpose.msra.mxu0 0
      %3108 = vmatprep.subr.bf16.mxu0 0
      %3109 = vmatpush1.bf16.xpose.msra.mxu0 0
      %3110 = vmatprep.subr.bf16.mxu0 0
      %3111 = vmatpush1.bf16.xpose.msra.mxu0 0
      %3112 = vmatprep.subr.bf16.mxu0 0
      %3113 = vmatpush1.bf16.xpose.msra.mxu0 0
      %3114 = vmatprep.subr.bf16.mxu0 0
      %3115 = vmatpush1.bf16.xpose.msra.mxu0 0
      %3116 = vmatprep.subr.bf16.mxu0 0
      %3117 = vmatpush1.bf16.xpose.msra.mxu0 0
      %3118 = vmatprep.subr.bf16.mxu0 0
      %3119 = vmatpush1.bf16.xpose.msra.mxu0 0
      %3120 = vmatprep.subr.bf16.mxu0 0
      %3121 = vmatpush1.bf16.xpose.msra.mxu0 0
      %3122 = vmatprep.subr.bf16.mxu0 0
      %3123 = vmatpush1.bf16.xpose.msra.mxu0 0
      %3124 = vmatprep.subr.bf16.mxu0 0
      %3125 = vmatpush1.bf16.xpose.msra.mxu0 0
      %3126 = vmatprep.subr.bf16.mxu0 0
      %3127 = vmatpush1.bf16.xpose.msra.mxu0 0
      %3128 = vmatprep.subr.bf16.mxu0 0
      %3129 = vmatpush1.bf16.xpose.msra.mxu0 0
      %3130 = vmatprep.subr.bf16.mxu0 0
      %3131 = vmatpush1.bf16.xpose.msra.mxu0 0
      %3132 = vmatprep.subr.bf16.mxu0 0
      %3133 = vmatpush1.bf16.xpose.msra.mxu0 0
      %3134 = vmatprep.mubr.bf16.mxu0 0
      %3135 = vmatmul.mubr.bf16.gmra.mrb[0].mxu0 %v3097
      %v3136 = vpop.f32.mrb[0].mxu0
      %v3137 = vadd.f32 %v2478, %v3136
      %v3138 = vpop.f32.mrb[0].mxu0
      %v3139 = vpop.f32.mrb[0].mxu0
      %v3140 = vadd.f32 %v2479, %v3139
      %v3141 = vpop.f32.mrb[0].mxu0
      %3142 = vdwg.mxu0
      %3143 = vrot.lane.b32.xlu0 %v550, 120
      %v3144 = vpop.permute.xlu0 %3143
      %3145 = vrot.lane.b32.xlu0 %v550, 88
      %v3146 = vpop.permute.xlu0 %3145
      %v3148 = vsel %vm558, %v3144, 0
      %v3151 = vsel %vm558, %v3146, 0
      %3153 = vmatprep.subr.bf16.mxu0 0
      %3154 = vmatpush1.bf16.xpose.msra.mxu0 %v3151
      %3155 = vmatprep.subr.bf16.mxu0 0
      %3156 = vmatpush1.bf16.xpose.msra.mxu0 0
      %3157 = vmatprep.subr.bf16.mxu0 0
      %3158 = vmatpush1.bf16.xpose.msra.mxu0 0
      %3159 = vmatprep.subr.bf16.mxu0 0
      %3160 = vmatpush1.bf16.xpose.msra.mxu0 0
      %3161 = vmatprep.subr.bf16.mxu0 0
      %3162 = vmatpush1.bf16.xpose.msra.mxu0 0
      %3163 = vmatprep.subr.bf16.mxu0 0
      %3164 = vmatpush1.bf16.xpose.msra.mxu0 0
      %3165 = vmatprep.subr.bf16.mxu0 0
      %3166 = vmatpush1.bf16.xpose.msra.mxu0 0
      %3167 = vmatprep.subr.bf16.mxu0 0
      %3168 = vmatpush1.bf16.xpose.msra.mxu0 0
      %3169 = vmatprep.subr.bf16.mxu0 0
      %3170 = vmatpush1.bf16.xpose.msra.mxu0 0
      %3171 = vmatprep.subr.bf16.mxu0 0
      %3172 = vmatpush1.bf16.xpose.msra.mxu0 0
      %3173 = vmatprep.subr.bf16.mxu0 0
      %3174 = vmatpush1.bf16.xpose.msra.mxu0 0
      %3175 = vmatprep.subr.bf16.mxu0 0
      %3176 = vmatpush1.bf16.xpose.msra.mxu0 0
      %3177 = vmatprep.subr.bf16.mxu0 0
      %3178 = vmatpush1.bf16.xpose.msra.mxu0 0
      %3179 = vmatprep.subr.bf16.mxu0 0
      %3180 = vmatpush1.bf16.xpose.msra.mxu0 0
      %3181 = vmatprep.subr.bf16.mxu0 0
      %3182 = vmatpush1.bf16.xpose.msra.mxu0 0
      %3183 = vmatprep.subr.bf16.mxu0 0
      %3184 = vmatpush1.bf16.xpose.msra.mxu0 0
      %3185 = vmatprep.mubr.bf16.mxu0 0
      %3186 = vmatmul.mubr.bf16.gmra.mrb[0].mxu0 %v3148
      %v3187 = vpop.f32.mrb[0].mxu0
      %v3188 = vadd.f32 %v2478, %v3187
      %v3189 = vpop.f32.mrb[0].mxu0
      %v3190 = vpop.f32.mrb[0].mxu0
      %v3191 = vadd.f32 %v2479, %v3190
      %v3192 = vpop.f32.mrb[0].mxu0
      %3193 = vdwg.mxu0
      %3194 = vrot.lane.b32.xlu0 %v551, 120
      %v3195 = vpop.permute.xlu0 %3194
      %3196 = vrot.lane.b32.xlu0 %v551, 88
      %v3197 = vpop.permute.xlu0 %3196
      %v3199 = vsel %vm558, %v3195, 0
      %v3202 = vsel %vm558, %v3197, 0
      %3204 = vmatprep.subr.bf16.mxu0 0
      %3205 = vmatpush1.bf16.xpose.msra.mxu0 %v3202
      %3206 = vmatprep.subr.bf16.mxu0 0
      %3207 = vmatpush1.bf16.xpose.msra.mxu0 0
      %3208 = vmatprep.subr.bf16.mxu0 0
      %3209 = vmatpush1.bf16.xpose.msra.mxu0 0
      %3210 = vmatprep.subr.bf16.mxu0 0
      %3211 = vmatpush1.bf16.xpose.msra.mxu0 0
      %3212 = vmatprep.subr.bf16.mxu0 0
      %3213 = vmatpush1.bf16.xpose.msra.mxu0 0
      %3214 = vmatprep.subr.bf16.mxu0 0
      %3215 = vmatpush1.bf16.xpose.msra.mxu0 0
      %3216 = vmatprep.subr.bf16.mxu0 0
      %3217 = vmatpush1.bf16.xpose.msra.mxu0 0
      %3218 = vmatprep.subr.bf16.mxu0 0
      %3219 = vmatpush1.bf16.xpose.msra.mxu0 0
      %3220 = vmatprep.subr.bf16.mxu0 0
      %3221 = vmatpush1.bf16.xpose.msra.mxu0 0
      %3222 = vmatprep.subr.bf16.mxu0 0
      %3223 = vmatpush1.bf16.xpose.msra.mxu0 0
      %3224 = vmatprep.subr.bf16.mxu0 0
      %3225 = vmatpush1.bf16.xpose.msra.mxu0 0
      %3226 = vmatprep.subr.bf16.mxu0 0
      %3227 = vmatpush1.bf16.xpose.msra.mxu0 0
      %3228 = vmatprep.subr.bf16.mxu0 0
      %3229 = vmatpush1.bf16.xpose.msra.mxu0 0
      %3230 = vmatprep.subr.bf16.mxu0 0
      %3231 = vmatpush1.bf16.xpose.msra.mxu0 0
      %3232 = vmatprep.subr.bf16.mxu0 0
      %3233 = vmatpush1.bf16.xpose.msra.mxu0 0
      %3234 = vmatprep.subr.bf16.mxu0 0
      %3235 = vmatpush1.bf16.xpose.msra.mxu0 0
      %3236 = vmatprep.mubr.bf16.mxu0 0
      %3237 = vmatmul.mubr.bf16.gmra.mrb[0].mxu0 %v3199
      %v3238 = vpop.f32.mrb[0].mxu0
      %v3239 = vadd.f32 %v2478, %v3238
      %v3240 = vpop.f32.mrb[0].mxu0
      %v3241 = vpop.f32.mrb[0].mxu0
      %v3242 = vadd.f32 %v2479, %v3241
      %v3243 = vpop.f32.mrb[0].mxu0
      %3244 = vdwg.mxu0
      %3245 = vrot.lane.b32.xlu0 %v552, 120
      %v3246 = vpop.permute.xlu0 %3245
      %3247 = vrot.lane.b32.xlu0 %v552, 88
      %v3248 = vpop.permute.xlu0 %3247
      %v3250 = vsel %vm558, %v3246, 0
      %v3253 = vsel %vm558, %v3248, 0
      %3255 = vmatprep.subr.bf16.mxu0 0
      %3256 = vmatpush1.bf16.xpose.msra.mxu0 %v3253
      %3257 = vmatprep.subr.bf16.mxu0 0
      %3258 = vmatpush1.bf16.xpose.msra.mxu0 0
      %3259 = vmatprep.subr.bf16.mxu0 0
      %3260 = vmatpush1.bf16.xpose.msra.mxu0 0
      %3261 = vmatprep.subr.bf16.mxu0 0
      %3262 = vmatpush1.bf16.xpose.msra.mxu0 0
      %3263 = vmatprep.subr.bf16.mxu0 0
      %3264 = vmatpush1.bf16.xpose.msra.mxu0 0
      %3265 = vmatprep.subr.bf16.mxu0 0
      %3266 = vmatpush1.bf16.xpose.msra.mxu0 0
      %3267 = vmatprep.subr.bf16.mxu0 0
      %3268 = vmatpush1.bf16.xpose.msra.mxu0 0
      %3269 = vmatprep.subr.bf16.mxu0 0
      %3270 = vmatpush1.bf16.xpose.msra.mxu0 0
      %3271 = vmatprep.subr.bf16.mxu0 0
      %3272 = vmatpush1.bf16.xpose.msra.mxu0 0
      %3273 = vmatprep.subr.bf16.mxu0 0
      %3274 = vmatpush1.bf16.xpose.msra.mxu0 0
      %3275 = vmatprep.subr.bf16.mxu0 0
      %3276 = vmatpush1.bf16.xpose.msra.mxu0 0
      %3277 = vmatprep.subr.bf16.mxu0 0
      %3278 = vmatpush1.bf16.xpose.msra.mxu0 0
      %3279 = vmatprep.subr.bf16.mxu0 0
      %3280 = vmatpush1.bf16.xpose.msra.mxu0 0
      %3281 = vmatprep.subr.bf16.mxu0 0
      %3282 = vmatpush1.bf16.xpose.msra.mxu0 0
      %3283 = vmatprep.subr.bf16.mxu0 0
      %3284 = vmatpush1.bf16.xpose.msra.mxu0 0
      %3285 = vmatprep.subr.bf16.mxu0 0
      %3286 = vmatpush1.bf16.xpose.msra.mxu0 0
      %3287 = vmatprep.mubr.bf16.mxu0 0
      %3288 = vmatmul.mubr.bf16.gmra.mrb[0].mxu0 %v3250
      %v3289 = vpop.f32.mrb[0].mxu0
      %v3290 = vadd.f32 %v2478, %v3289
      %v3291 = vpop.f32.mrb[0].mxu0
      %v3292 = vpop.f32.mrb[0].mxu0
      %v3293 = vadd.f32 %v2479, %v3292
      %v3294 = vpop.f32.mrb[0].mxu0
      %3295 = vdwg.mxu0
      %v3296 = vsel %vm1356, %v2525, -inf
      %3297 = vmax.xlane.f32.xlu0 %v3296
      %v3298 = vpop.xlane.xlu0 %3297
      %v3299 = vsel %vm1356, %v2528, -inf
      %3300 = vmax.xlane.f32.xlu0 %v3299
      %v3301 = vpop.xlane.xlu0 %3300
      %v3302 = vsel %vm1356, %v2576, -inf
      %3303 = vmax.xlane.f32.xlu0 %v3302
      %v3304 = vpop.xlane.xlu0 %3303
      %v3305 = vsel %vm1356, %v2579, -inf
      %3306 = vmax.xlane.f32.xlu0 %v3305
      %v3307 = vpop.xlane.xlu0 %3306
      %v3308 = vsel %vm1356, %v2627, -inf
      %3309 = vmax.xlane.f32.xlu0 %v3308
      %v3310 = vpop.xlane.xlu0 %3309
      %v3311 = vsel %vm1356, %v2630, -inf
      %3312 = vmax.xlane.f32.xlu0 %v3311
      %v3313 = vpop.xlane.xlu0 %3312
      %v3314 = vsel %vm1356, %v2678, -inf
      %3315 = vmax.xlane.f32.xlu0 %v3314
      %v3316 = vpop.xlane.xlu0 %3315
      %v3317 = vsel %vm1356, %v2681, -inf
      %3318 = vmax.xlane.f32.xlu0 %v3317
      %v3319 = vpop.xlane.xlu0 %3318
      %v3320 = vsel %vm1356, %v2729, -inf
      %3321 = vmax.xlane.f32.xlu0 %v3320
      %v3322 = vpop.xlane.xlu0 %3321
      %v3323 = vsel %vm1356, %v2732, -inf
      %3324 = vmax.xlane.f32.xlu0 %v3323
      %v3325 = vpop.xlane.xlu0 %3324
      %v3326 = vsel %vm1356, %v2780, -inf
      %3327 = vmax.xlane.f32.xlu0 %v3326
      %v3328 = vpop.xlane.xlu0 %3327
      %v3329 = vsel %vm1356, %v2783, -inf
      %3330 = vmax.xlane.f32.xlu0 %v3329
      %v3331 = vpop.xlane.xlu0 %3330
      %v3332 = vsel %vm1356, %v2831, -inf
      %3333 = vmax.xlane.f32.xlu0 %v3332
      %v3334 = vpop.xlane.xlu0 %3333
      %v3335 = vsel %vm1356, %v2834, -inf
      %3336 = vmax.xlane.f32.xlu0 %v3335
      %v3337 = vpop.xlane.xlu0 %3336
      %v3338 = vsel %vm1356, %v2882, -inf
      %3339 = vmax.xlane.f32.xlu0 %v3338
      %v3340 = vpop.xlane.xlu0 %3339
      %v3341 = vsel %vm1356, %v2885, -inf
      %3342 = vmax.xlane.f32.xlu0 %v3341
      %v3343 = vpop.xlane.xlu0 %3342
      %v3344 = vsel %vm1356, %v2933, -inf
      %3345 = vmax.xlane.f32.xlu0 %v3344
      %v3346 = vpop.xlane.xlu0 %3345
      %v3347 = vsel %vm1356, %v2936, -inf
      %3348 = vmax.xlane.f32.xlu0 %v3347
      %v3349 = vpop.xlane.xlu0 %3348
      %v3350 = vsel %vm1356, %v2984, -inf
      %3351 = vmax.xlane.f32.xlu0 %v3350
      %v3352 = vpop.xlane.xlu0 %3351
      %v3353 = vsel %vm1356, %v2987, -inf
      %3354 = vmax.xlane.f32.xlu0 %v3353
      %v3355 = vpop.xlane.xlu0 %3354
      %v3356 = vsel %vm1356, %v3035, -inf
      %3357 = vmax.xlane.f32.xlu0 %v3356
      %v3358 = vpop.xlane.xlu0 %3357
      %v3359 = vsel %vm1356, %v3038, -inf
      %3360 = vmax.xlane.f32.xlu0 %v3359
      %v3361 = vpop.xlane.xlu0 %3360
      %v3362 = vsel %vm1356, %v3086, -inf
      %3363 = vmax.xlane.f32.xlu0 %v3362
      %v3364 = vpop.xlane.xlu0 %3363
      %v3365 = vsel %vm1356, %v3089, -inf
      %3366 = vmax.xlane.f32.xlu0 %v3365
      %v3367 = vpop.xlane.xlu0 %3366
      %v3368 = vsel %vm1356, %v3137, -inf
      %3369 = vmax.xlane.f32.xlu0 %v3368
      %v3370 = vpop.xlane.xlu0 %3369
      %v3371 = vsel %vm1356, %v3140, -inf
      %3372 = vmax.xlane.f32.xlu0 %v3371
      %v3373 = vpop.xlane.xlu0 %3372
      %v3374 = vsel %vm1356, %v3188, -inf
      %3375 = vmax.xlane.f32.xlu0 %v3374
      %v3376 = vpop.xlane.xlu0 %3375
      %v3377 = vsel %vm1356, %v3191, -inf
      %3378 = vmax.xlane.f32.xlu0 %v3377
      %v3379 = vpop.xlane.xlu0 %3378
      %v3380 = vsel %vm1356, %v3239, -inf
      %3381 = vmax.xlane.f32.xlu0 %v3380
      %v3382 = vpop.xlane.xlu0 %3381
      %v3383 = vsel %vm1356, %v3242, -inf
      %3384 = vmax.xlane.f32.xlu0 %v3383
      %v3385 = vpop.xlane.xlu0 %3384
      %v3386 = vsel %vm1356, %v3290, -inf
      %3387 = vmax.xlane.f32.xlu0 %v3386
      %v3388 = vpop.xlane.xlu0 %3387
      %v3389 = vsel %vm1356, %v3293, -inf
      %3390 = vmax.xlane.f32.xlu0 %v3389
      %v3391 = vpop.xlane.xlu0 %3390
      %v3392 = vsub.f32 %v2525, %v3298
      %v3393 = vsub.f32 %v2528, %v3301
      %v3394 = vsub.f32 %v2576, %v3304
      %v3395 = vsub.f32 %v2579, %v3307
      %v3396 = vsub.f32 %v2627, %v3310
      %v3397 = vsub.f32 %v2630, %v3313
      %v3398 = vsub.f32 %v2678, %v3316
      %v3399 = vsub.f32 %v2681, %v3319
      %v3400 = vsub.f32 %v2729, %v3322
      %v3401 = vsub.f32 %v2732, %v3325
      %v3402 = vsub.f32 %v2780, %v3328
      %v3403 = vsub.f32 %v2783, %v3331
      %v3404 = vsub.f32 %v2831, %v3334
      %v3405 = vsub.f32 %v2834, %v3337
      %v3406 = vsub.f32 %v2882, %v3340
      %v3407 = vsub.f32 %v2885, %v3343
      %v3408 = vsub.f32 %v2933, %v3346
      %v3409 = vsub.f32 %v2936, %v3349
      %v3410 = vsub.f32 %v2984, %v3352
      %v3411 = vsub.f32 %v2987, %v3355
      %v3412 = vsub.f32 %v3035, %v3358
      %v3413 = vsub.f32 %v3038, %v3361
      %v3414 = vsub.f32 %v3086, %v3364
      %v3415 = vsub.f32 %v3089, %v3367
      %v3416 = vsub.f32 %v3137, %v3370
      %v3417 = vsub.f32 %v3140, %v3373
      %v3418 = vsub.f32 %v3188, %v3376
      %v3419 = vsub.f32 %v3191, %v3379
      %v3420 = vsub.f32 %v3239, %v3382
      %v3421 = vsub.f32 %v3242, %v3385
      %v3422 = vsub.f32 %v3290, %v3388
      %v3423 = vsub.f32 %v3293, %v3391
      %v3424 = vmul.f32 %v3392, 1.442695
      %v3425 = vpow.pop %v3424
      %v3426 = vmul.f32 %v3393, 1.442695
      %v3427 = vpow.pop %v3426
      %v3428 = vmul.f32 %v3394, 1.442695
      %v3429 = vpow.pop %v3428
      %v3430 = vmul.f32 %v3395, 1.442695
      %v3431 = vpow.pop %v3430
      %v3432 = vmul.f32 %v3396, 1.442695
      %v3433 = vpow.pop %v3432
      %v3434 = vmul.f32 %v3397, 1.442695
      %v3435 = vpow.pop %v3434
      %v3436 = vmul.f32 %v3398, 1.442695
      %v3437 = vpow.pop %v3436
      %v3438 = vmul.f32 %v3399, 1.442695
      %v3439 = vpow.pop %v3438
      %v3440 = vmul.f32 %v3400, 1.442695
      %v3441 = vpow.pop %v3440
      %v3442 = vmul.f32 %v3401, 1.442695
      %v3443 = vpow.pop %v3442
      %v3444 = vmul.f32 %v3402, 1.442695
      %v3445 = vpow.pop %v3444
      %v3446 = vmul.f32 %v3403, 1.442695
      %v3447 = vpow.pop %v3446
      %v3448 = vmul.f32 %v3404, 1.442695
      %v3449 = vpow.pop %v3448
      %v3450 = vmul.f32 %v3405, 1.442695
      %v3451 = vpow.pop %v3450
      %v3452 = vmul.f32 %v3406, 1.442695
      %v3453 = vpow.pop %v3452
      %v3454 = vmul.f32 %v3407, 1.442695
      %v3455 = vpow.pop %v3454
      %v3456 = vmul.f32 %v3408, 1.442695
      %v3457 = vpow.pop %v3456
      %v3458 = vmul.f32 %v3409, 1.442695
      %v3459 = vpow.pop %v3458
      %v3460 = vmul.f32 %v3410, 1.442695
      %v3461 = vpow.pop %v3460
      %v3462 = vmul.f32 %v3411, 1.442695
      %v3463 = vpow.pop %v3462
      %v3464 = vmul.f32 %v3412, 1.442695
      %v3465 = vpow.pop %v3464
      %v3466 = vmul.f32 %v3413, 1.442695
      %v3467 = vpow.pop %v3466
      %v3468 = vmul.f32 %v3414, 1.442695
      %v3469 = vpow.pop %v3468
      %v3470 = vmul.f32 %v3415, 1.442695
      %v3471 = vpow.pop %v3470
      %v3472 = vmul.f32 %v3416, 1.442695
      %v3473 = vpow.pop %v3472
      %v3474 = vmul.f32 %v3417, 1.442695
      %v3475 = vpow.pop %v3474
      %v3476 = vmul.f32 %v3418, 1.442695
      %v3477 = vpow.pop %v3476
      %v3478 = vmul.f32 %v3419, 1.442695
      %v3479 = vpow.pop %v3478
      %v3480 = vmul.f32 %v3420, 1.442695
      %v3481 = vpow.pop %v3480
      %v3482 = vmul.f32 %v3421, 1.442695
      %v3483 = vpow.pop %v3482
      %v3484 = vmul.f32 %v3422, 1.442695
      %v3485 = vpow.pop %v3484
      %v3486 = vmul.f32 %v3423, 1.442695
      %v3487 = vpow.pop %v3486
      %v3488 = vsel %vm1356, %v3425, 0.0
      %3489 = vadd.xlane.f32.xlu0 %v3488
      %v3490 = vpop.xlane.xlu0 %3489
      %v3491 = vsel %vm1356, %v3427, 0.0
      %3492 = vadd.xlane.f32.xlu0 %v3491
      %v3493 = vpop.xlane.xlu0 %3492
      %v3494 = vsel %vm1356, %v3429, 0.0
      %3495 = vadd.xlane.f32.xlu0 %v3494
      %v3496 = vpop.xlane.xlu0 %3495
      %v3497 = vsel %vm1356, %v3431, 0.0
      %3498 = vadd.xlane.f32.xlu0 %v3497
      %v3499 = vpop.xlane.xlu0 %3498
      %v3500 = vsel %vm1356, %v3433, 0.0
      %3501 = vadd.xlane.f32.xlu0 %v3500
      %v3502 = vpop.xlane.xlu0 %3501
      %v3503 = vsel %vm1356, %v3435, 0.0
      %3504 = vadd.xlane.f32.xlu0 %v3503
      %v3505 = vpop.xlane.xlu0 %3504
      %v3506 = vsel %vm1356, %v3437, 0.0
      %3507 = vadd.xlane.f32.xlu0 %v3506
      %v3508 = vpop.xlane.xlu0 %3507
      %v3509 = vsel %vm1356, %v3439, 0.0
      %3510 = vadd.xlane.f32.xlu0 %v3509
      %v3511 = vpop.xlane.xlu0 %3510
      %v3512 = vsel %vm1356, %v3441, 0.0
      %3513 = vadd.xlane.f32.xlu0 %v3512
      %v3514 = vpop.xlane.xlu0 %3513
      %v3515 = vsel %vm1356, %v3443, 0.0
      %3516 = vadd.xlane.f32.xlu0 %v3515
      %v3517 = vpop.xlane.xlu0 %3516
      %v3518 = vsel %vm1356, %v3445, 0.0
      %3519 = vadd.xlane.f32.xlu0 %v3518
      %v3520 = vpop.xlane.xlu0 %3519
      %v3521 = vsel %vm1356, %v3447, 0.0
      %3522 = vadd.xlane.f32.xlu0 %v3521
      %v3523 = vpop.xlane.xlu0 %3522
      %v3524 = vsel %vm1356, %v3449, 0.0
      %3525 = vadd.xlane.f32.xlu0 %v3524
      %v3526 = vpop.xlane.xlu0 %3525
      %v3527 = vsel %vm1356, %v3451, 0.0
      %3528 = vadd.xlane.f32.xlu0 %v3527
      %v3529 = vpop.xlane.xlu0 %3528
      %v3530 = vsel %vm1356, %v3453, 0.0
      %3531 = vadd.xlane.f32.xlu0 %v3530
      %v3532 = vpop.xlane.xlu0 %3531
      %v3533 = vsel %vm1356, %v3455, 0.0
      %3534 = vadd.xlane.f32.xlu0 %v3533
      %v3535 = vpop.xlane.xlu0 %3534
      %v3536 = vsel %vm1356, %v3457, 0.0
      %3537 = vadd.xlane.f32.xlu0 %v3536
      %v3538 = vpop.xlane.xlu0 %3537
      %v3539 = vsel %vm1356, %v3459, 0.0
      %3540 = vadd.xlane.f32.xlu0 %v3539
      %v3541 = vpop.xlane.xlu0 %3540
      %v3542 = vsel %vm1356, %v3461, 0.0
      %3543 = vadd.xlane.f32.xlu0 %v3542
      %v3544 = vpop.xlane.xlu0 %3543
      %v3545 = vsel %vm1356, %v3463, 0.0
      %3546 = vadd.xlane.f32.xlu0 %v3545
      %v3547 = vpop.xlane.xlu0 %3546
      %v3548 = vsel %vm1356, %v3465, 0.0
      %3549 = vadd.xlane.f32.xlu0 %v3548
      %v3550 = vpop.xlane.xlu0 %3549
      %v3551 = vsel %vm1356, %v3467, 0.0
      %3552 = vadd.xlane.f32.xlu0 %v3551
      %v3553 = vpop.xlane.xlu0 %3552
      %v3554 = vsel %vm1356, %v3469, 0.0
      %3555 = vadd.xlane.f32.xlu0 %v3554
      %v3556 = vpop.xlane.xlu0 %3555
      %v3557 = vsel %vm1356, %v3471, 0.0
      %3558 = vadd.xlane.f32.xlu0 %v3557
      %v3559 = vpop.xlane.xlu0 %3558
      %v3560 = vsel %vm1356, %v3473, 0.0
      %3561 = vadd.xlane.f32.xlu0 %v3560
      %v3562 = vpop.xlane.xlu0 %3561
      %v3563 = vsel %vm1356, %v3475, 0.0
      %3564 = vadd.xlane.f32.xlu0 %v3563
      %v3565 = vpop.xlane.xlu0 %3564
      %v3566 = vsel %vm1356, %v3477, 0.0
      %3567 = vadd.xlane.f32.xlu0 %v3566
      %v3568 = vpop.xlane.xlu0 %3567
      %v3569 = vsel %vm1356, %v3479, 0.0
      %3570 = vadd.xlane.f32.xlu0 %v3569
      %v3571 = vpop.xlane.xlu0 %3570
      %v3572 = vsel %vm1356, %v3481, 0.0
      %3573 = vadd.xlane.f32.xlu0 %v3572
      %v3574 = vpop.xlane.xlu0 %3573
      %v3575 = vsel %vm1356, %v3483, 0.0
      %3576 = vadd.xlane.f32.xlu0 %v3575
      %v3577 = vpop.xlane.xlu0 %3576
      %v3578 = vsel %vm1356, %v3485, 0.0
      %3579 = vadd.xlane.f32.xlu0 %v3578
      %v3580 = vpop.xlane.xlu0 %3579
      %v3581 = vsel %vm1356, %v3487, 0.0
      %3582 = vadd.xlane.f32.xlu0 %v3581
      %v3583 = vpop.xlane.xlu0 %3582
      %v3584 = vrcp.pop %v3490
      %v3585 = vrcp.pop %v3493
      %v3586 = vrcp.pop %v3496
      %v3587 = vrcp.pop %v3499
      %v3588 = vrcp.pop %v3502
      %v3589 = vrcp.pop %v3505
      %v3590 = vrcp.pop %v3508
      %v3591 = vrcp.pop %v3511
      %v3592 = vrcp.pop %v3514
      %v3593 = vrcp.pop %v3517
      %v3594 = vrcp.pop %v3520
      %v3595 = vrcp.pop %v3523
      %v3596 = vrcp.pop %v3526
      %v3597 = vrcp.pop %v3529
      %v3598 = vrcp.pop %v3532
      %v3599 = vrcp.pop %v3535
      %v3600 = vrcp.pop %v3538
      %v3601 = vrcp.pop %v3541
      %v3602 = vrcp.pop %v3544
      %v3603 = vrcp.pop %v3547
      %v3604 = vrcp.pop %v3550
      %v3605 = vrcp.pop %v3553
      %v3606 = vrcp.pop %v3556
      %v3607 = vrcp.pop %v3559
      %v3608 = vrcp.pop %v3562
      %v3609 = vrcp.pop %v3565
      %v3610 = vrcp.pop %v3568
      %v3611 = vrcp.pop %v3571
      %v3612 = vrcp.pop %v3574
      %v3613 = vrcp.pop %v3577
      %v3614 = vrcp.pop %v3580
      %v3615 = vrcp.pop %v3583
      %v3616 = vmul.f32 %v3425, %v3584
      %v3617 = vmul.f32 %v3427, %v3585
      %v3618 = vmul.f32 %v3429, %v3586
      %v3619 = vmul.f32 %v3431, %v3587
      %v3620 = vmul.f32 %v3433, %v3588
      %v3621 = vmul.f32 %v3435, %v3589
      %v3622 = vmul.f32 %v3437, %v3590
      %v3623 = vmul.f32 %v3439, %v3591
      %v3624 = vmul.f32 %v3441, %v3592
      %v3625 = vmul.f32 %v3443, %v3593
      %v3626 = vmul.f32 %v3445, %v3594
      %v3627 = vmul.f32 %v3447, %v3595
      %v3628 = vmul.f32 %v3449, %v3596
      %v3629 = vmul.f32 %v3451, %v3597
      %v3630 = vmul.f32 %v3453, %v3598
      %v3631 = vmul.f32 %v3455, %v3599
      %v3632 = vmul.f32 %v3457, %v3600
      %v3633 = vmul.f32 %v3459, %v3601
      %v3634 = vmul.f32 %v3461, %v3602
      %v3635 = vmul.f32 %v3463, %v3603
      %v3636 = vmul.f32 %v3465, %v3604
      %v3637 = vmul.f32 %v3467, %v3605
      %v3638 = vmul.f32 %v3469, %v3606
      %v3639 = vmul.f32 %v3471, %v3607
      %v3640 = vmul.f32 %v3473, %v3608
      %v3641 = vmul.f32 %v3475, %v3609
      %v3642 = vmul.f32 %v3477, %v3610
      %v3643 = vmul.f32 %v3479, %v3611
      %v3644 = vmul.f32 %v3481, %v3612
      %v3645 = vmul.f32 %v3483, %v3613
      %v3646 = vmul.f32 %v3485, %v3614
      %v3647 = vmul.f32 %v3487, %v3615
      %v3648 = vpack.c.bf16 %v3617, %v3616
      %v3649 = vpack.c.bf16 %v3619, %v3618
      %v3650 = vpack.c.bf16 %v3621, %v3620
      %v3651 = vpack.c.bf16 %v3623, %v3622
      %v3652 = vpack.c.bf16 %v3625, %v3624
      %v3653 = vpack.c.bf16 %v3627, %v3626
      %v3654 = vpack.c.bf16 %v3629, %v3628
      %v3655 = vpack.c.bf16 %v3631, %v3630
      %v3656 = vpack.c.bf16 %v3633, %v3632
      %v3657 = vpack.c.bf16 %v3635, %v3634
      %v3658 = vpack.c.bf16 %v3637, %v3636
      %v3659 = vpack.c.bf16 %v3639, %v3638
      %v3660 = vpack.c.bf16 %v3641, %v3640
      %v3661 = vpack.c.bf16 %v3643, %v3642
      %v3662 = vpack.c.bf16 %v3645, %v3644
      %v3663 = vpack.c.bf16 %v3647, %v3646
      %3664 = vrot.lane.b32.xlu0 %v537, 56
      %v3665 = vpop.permute.xlu0 %3664
      %v3668 = vsel %vm1356, %v3648, 0
      %3670 = vmatprep.subr.bf16.mxu0 0
      %3671 = vmatpush1.bf16.msra.mxu0 %v3665
      %3672 = vmatprep.subr.bf16.mxu0 0
      %3673 = vmatpush1.bf16.msra.mxu0 0
      %3674 = vmatprep.subr.bf16.mxu0 0
      %3675 = vmatpush1.bf16.msra.mxu0 0
      %3676 = vmatprep.subr.bf16.mxu0 0
      %3677 = vmatpush1.bf16.msra.mxu0 0
      %3678 = vmatprep.subr.bf16.mxu0 0
      %3679 = vmatpush1.bf16.msra.mxu0 0
      %3680 = vmatprep.subr.bf16.mxu0 0
      %3681 = vmatpush1.bf16.msra.mxu0 0
      %3682 = vmatprep.subr.bf16.mxu0 0
      %3683 = vmatpush1.bf16.msra.mxu0 0
      %3684 = vmatprep.subr.bf16.mxu0 0
      %3685 = vmatpush1.bf16.msra.mxu0 0
      %3686 = vmatprep.subr.bf16.mxu0 0
      %3687 = vmatpush1.bf16.msra.mxu0 0
      %3688 = vmatprep.subr.bf16.mxu0 0
      %3689 = vmatpush1.bf16.msra.mxu0 0
      %3690 = vmatprep.subr.bf16.mxu0 0
      %3691 = vmatpush1.bf16.msra.mxu0 0
      %3692 = vmatprep.subr.bf16.mxu0 0
      %3693 = vmatpush1.bf16.msra.mxu0 0
      %3694 = vmatprep.subr.bf16.mxu0 0
      %3695 = vmatpush1.bf16.msra.mxu0 0
      %3696 = vmatprep.subr.bf16.mxu0 0
      %3697 = vmatpush1.bf16.msra.mxu0 0
      %3698 = vmatprep.subr.bf16.mxu0 0
      %3699 = vmatpush1.bf16.msra.mxu0 0
      %3700 = vmatprep.subr.bf16.mxu0 0
      %3701 = vmatpush1.bf16.msra.mxu0 0
      %3702 = vmatprep.mubr.bf16.mxu0 0
      %3703 = vmatmul.mubr.bf16.gmra.mrb[0].mxu0 %v3668
      %v3704 = vpop.f32.mrb[0].mxu0
      %v3705 = vadd.f32 0.0, %v3704
      %v3706 = vpop.f32.mrb[0].mxu0
      %v3707 = vpop.f32.mrb[0].mxu0
      %v3708 = vadd.f32 0.0, %v3707
      %v3709 = vpop.f32.mrb[0].mxu0
      %3710 = vdwg.mxu0
      %3711 = vrot.lane.b32.xlu0 %v538, 56
      %v3712 = vpop.permute.xlu0 %3711
      %v3715 = vsel %vm1356, %v3649, 0
      %3717 = vmatprep.subr.bf16.mxu0 0
      %3718 = vmatpush1.bf16.msra.mxu0 %v3712
      %3719 = vmatprep.subr.bf16.mxu0 0
      %3720 = vmatpush1.bf16.msra.mxu0 0
      %3721 = vmatprep.subr.bf16.mxu0 0
      %3722 = vmatpush1.bf16.msra.mxu0 0
      %3723 = vmatprep.subr.bf16.mxu0 0
      %3724 = vmatpush1.bf16.msra.mxu0 0
      %3725 = vmatprep.subr.bf16.mxu0 0
      %3726 = vmatpush1.bf16.msra.mxu0 0
      %3727 = vmatprep.subr.bf16.mxu0 0
      %3728 = vmatpush1.bf16.msra.mxu0 0
      %3729 = vmatprep.subr.bf16.mxu0 0
      %3730 = vmatpush1.bf16.msra.mxu0 0
      %3731 = vmatprep.subr.bf16.mxu0 0
      %3732 = vmatpush1.bf16.msra.mxu0 0
      %3733 = vmatprep.subr.bf16.mxu0 0
      %3734 = vmatpush1.bf16.msra.mxu0 0
      %3735 = vmatprep.subr.bf16.mxu0 0
      %3736 = vmatpush1.bf16.msra.mxu0 0
      %3737 = vmatprep.subr.bf16.mxu0 0
      %3738 = vmatpush1.bf16.msra.mxu0 0
      %3739 = vmatprep.subr.bf16.mxu0 0
      %3740 = vmatpush1.bf16.msra.mxu0 0
      %3741 = vmatprep.subr.bf16.mxu0 0
      %3742 = vmatpush1.bf16.msra.mxu0 0
      %3743 = vmatprep.subr.bf16.mxu0 0
      %3744 = vmatpush1.bf16.msra.mxu0 0
      %3745 = vmatprep.subr.bf16.mxu0 0
      %3746 = vmatpush1.bf16.msra.mxu0 0
      %3747 = vmatprep.subr.bf16.mxu0 0
      %3748 = vmatpush1.bf16.msra.mxu0 0
      %3749 = vmatprep.mubr.bf16.mxu0 0
      %3750 = vmatmul.mubr.bf16.gmra.mrb[0].mxu0 %v3715
      %v3751 = vpop.f32.mrb[0].mxu0
      %v3752 = vadd.f32 0.0, %v3751
      %v3753 = vpop.f32.mrb[0].mxu0
      %v3754 = vpop.f32.mrb[0].mxu0
      %v3755 = vadd.f32 0.0, %v3754
      %v3756 = vpop.f32.mrb[0].mxu0
      %3757 = vdwg.mxu0
      %3758 = vrot.lane.b32.xlu0 %v539, 56
      %v3759 = vpop.permute.xlu0 %3758
      %v3762 = vsel %vm1356, %v3650, 0
      %3764 = vmatprep.subr.bf16.mxu0 0
      %3765 = vmatpush1.bf16.msra.mxu0 %v3759
      %3766 = vmatprep.subr.bf16.mxu0 0
      %3767 = vmatpush1.bf16.msra.mxu0 0
      %3768 = vmatprep.subr.bf16.mxu0 0
      %3769 = vmatpush1.bf16.msra.mxu0 0
      %3770 = vmatprep.subr.bf16.mxu0 0
      %3771 = vmatpush1.bf16.msra.mxu0 0
      %3772 = vmatprep.subr.bf16.mxu0 0
      %3773 = vmatpush1.bf16.msra.mxu0 0
      %3774 = vmatprep.subr.bf16.mxu0 0
      %3775 = vmatpush1.bf16.msra.mxu0 0
      %3776 = vmatprep.subr.bf16.mxu0 0
      %3777 = vmatpush1.bf16.msra.mxu0 0
      %3778 = vmatprep.subr.bf16.mxu0 0
      %3779 = vmatpush1.bf16.msra.mxu0 0
      %3780 = vmatprep.subr.bf16.mxu0 0
      %3781 = vmatpush1.bf16.msra.mxu0 0
      %3782 = vmatprep.subr.bf16.mxu0 0
      %3783 = vmatpush1.bf16.msra.mxu0 0
      %3784 = vmatprep.subr.bf16.mxu0 0
      %3785 = vmatpush1.bf16.msra.mxu0 0
      %3786 = vmatprep.subr.bf16.mxu0 0
      %3787 = vmatpush1.bf16.msra.mxu0 0
      %3788 = vmatprep.subr.bf16.mxu0 0
      %3789 = vmatpush1.bf16.msra.mxu0 0
      %3790 = vmatprep.subr.bf16.mxu0 0
      %3791 = vmatpush1.bf16.msra.mxu0 0
      %3792 = vmatprep.subr.bf16.mxu0 0
      %3793 = vmatpush1.bf16.msra.mxu0 0
      %3794 = vmatprep.subr.bf16.mxu0 0
      %3795 = vmatpush1.bf16.msra.mxu0 0
      %3796 = vmatprep.mubr.bf16.mxu0 0
      %3797 = vmatmul.mubr.bf16.gmra.mrb[0].mxu0 %v3762
      %v3798 = vpop.f32.mrb[0].mxu0
      %v3799 = vadd.f32 0.0, %v3798
      %v3800 = vpop.f32.mrb[0].mxu0
      %v3801 = vpop.f32.mrb[0].mxu0
      %v3802 = vadd.f32 0.0, %v3801
      %v3803 = vpop.f32.mrb[0].mxu0
      %3804 = vdwg.mxu0
      %3805 = vrot.lane.b32.xlu0 %v540, 56
      %v3806 = vpop.permute.xlu0 %3805
      %v3809 = vsel %vm1356, %v3651, 0
      %3811 = vmatprep.subr.bf16.mxu0 0
      %3812 = vmatpush1.bf16.msra.mxu0 %v3806
      %3813 = vmatprep.subr.bf16.mxu0 0
      %3814 = vmatpush1.bf16.msra.mxu0 0
      %3815 = vmatprep.subr.bf16.mxu0 0
      %3816 = vmatpush1.bf16.msra.mxu0 0
      %3817 = vmatprep.subr.bf16.mxu0 0
      %3818 = vmatpush1.bf16.msra.mxu0 0
      %3819 = vmatprep.subr.bf16.mxu0 0
      %3820 = vmatpush1.bf16.msra.mxu0 0
      %3821 = vmatprep.subr.bf16.mxu0 0
      %3822 = vmatpush1.bf16.msra.mxu0 0
      %3823 = vmatprep.subr.bf16.mxu0 0
      %3824 = vmatpush1.bf16.msra.mxu0 0
      %3825 = vmatprep.subr.bf16.mxu0 0
      %3826 = vmatpush1.bf16.msra.mxu0 0
      %3827 = vmatprep.subr.bf16.mxu0 0
      %3828 = vmatpush1.bf16.msra.mxu0 0
      %3829 = vmatprep.subr.bf16.mxu0 0
      %3830 = vmatpush1.bf16.msra.mxu0 0
      %3831 = vmatprep.subr.bf16.mxu0 0
      %3832 = vmatpush1.bf16.msra.mxu0 0
      %3833 = vmatprep.subr.bf16.mxu0 0
      %3834 = vmatpush1.bf16.msra.mxu0 0
      %3835 = vmatprep.subr.bf16.mxu0 0
      %3836 = vmatpush1.bf16.msra.mxu0 0
      %3837 = vmatprep.subr.bf16.mxu0 0
      %3838 = vmatpush1.bf16.msra.mxu0 0
      %3839 = vmatprep.subr.bf16.mxu0 0
      %3840 = vmatpush1.bf16.msra.mxu0 0
      %3841 = vmatprep.subr.bf16.mxu0 0
      %3842 = vmatpush1.bf16.msra.mxu0 0
      %3843 = vmatprep.mubr.bf16.mxu0 0
      %3844 = vmatmul.mubr.bf16.gmra.mrb[0].mxu0 %v3809
      %v3845 = vpop.f32.mrb[0].mxu0
      %v3846 = vadd.f32 0.0, %v3845
      %v3847 = vpop.f32.mrb[0].mxu0
      %v3848 = vpop.f32.mrb[0].mxu0
      %v3849 = vadd.f32 0.0, %v3848
      %v3850 = vpop.f32.mrb[0].mxu0
      %3851 = vdwg.mxu0
      %3852 = vrot.lane.b32.xlu0 %v541, 56
      %v3853 = vpop.permute.xlu0 %3852
      %v3856 = vsel %vm1356, %v3652, 0
      %3858 = vmatprep.subr.bf16.mxu0 0
      %3859 = vmatpush1.bf16.msra.mxu0 %v3853
      %3860 = vmatprep.subr.bf16.mxu0 0
      %3861 = vmatpush1.bf16.msra.mxu0 0
      %3862 = vmatprep.subr.bf16.mxu0 0
      %3863 = vmatpush1.bf16.msra.mxu0 0
      %3864 = vmatprep.subr.bf16.mxu0 0
      %3865 = vmatpush1.bf16.msra.mxu0 0
      %3866 = vmatprep.subr.bf16.mxu0 0
      %3867 = vmatpush1.bf16.msra.mxu0 0
      %3868 = vmatprep.subr.bf16.mxu0 0
      %3869 = vmatpush1.bf16.msra.mxu0 0
      %3870 = vmatprep.subr.bf16.mxu0 0
      %3871 = vmatpush1.bf16.msra.mxu0 0
      %3872 = vmatprep.subr.bf16.mxu0 0
      %3873 = vmatpush1.bf16.msra.mxu0 0
      %3874 = vmatprep.subr.bf16.mxu0 0
      %3875 = vmatpush1.bf16.msra.mxu0 0
      %3876 = vmatprep.subr.bf16.mxu0 0
      %3877 = vmatpush1.bf16.msra.mxu0 0
      %3878 = vmatprep.subr.bf16.mxu0 0
      %3879 = vmatpush1.bf16.msra.mxu0 0
      %3880 = vmatprep.subr.bf16.mxu0 0
      %3881 = vmatpush1.bf16.msra.mxu0 0
      %3882 = vmatprep.subr.bf16.mxu0 0
      %3883 = vmatpush1.bf16.msra.mxu0 0
      %3884 = vmatprep.subr.bf16.mxu0 0
      %3885 = vmatpush1.bf16.msra.mxu0 0
      %3886 = vmatprep.subr.bf16.mxu0 0
      %3887 = vmatpush1.bf16.msra.mxu0 0
      %3888 = vmatprep.subr.bf16.mxu0 0
      %3889 = vmatpush1.bf16.msra.mxu0 0
      %3890 = vmatprep.mubr.bf16.mxu0 0
      %3891 = vmatmul.mubr.bf16.gmra.mrb[0].mxu0 %v3856
      %v3892 = vpop.f32.mrb[0].mxu0
      %v3893 = vadd.f32 0.0, %v3892
      %v3894 = vpop.f32.mrb[0].mxu0
      %v3895 = vpop.f32.mrb[0].mxu0
      %v3896 = vadd.f32 0.0, %v3895
      %v3897 = vpop.f32.mrb[0].mxu0
      %3898 = vdwg.mxu0
      %3899 = vrot.lane.b32.xlu0 %v542, 56
      %v3900 = vpop.permute.xlu0 %3899
      %v3903 = vsel %vm1356, %v3653, 0
      %3905 = vmatprep.subr.bf16.mxu0 0
      %3906 = vmatpush1.bf16.msra.mxu0 %v3900
      %3907 = vmatprep.subr.bf16.mxu0 0
      %3908 = vmatpush1.bf16.msra.mxu0 0
      %3909 = vmatprep.subr.bf16.mxu0 0
      %3910 = vmatpush1.bf16.msra.mxu0 0
      %3911 = vmatprep.subr.bf16.mxu0 0
      %3912 = vmatpush1.bf16.msra.mxu0 0
      %3913 = vmatprep.subr.bf16.mxu0 0
      %3914 = vmatpush1.bf16.msra.mxu0 0
      %3915 = vmatprep.subr.bf16.mxu0 0
      %3916 = vmatpush1.bf16.msra.mxu0 0
      %3917 = vmatprep.subr.bf16.mxu0 0
      %3918 = vmatpush1.bf16.msra.mxu0 0
      %3919 = vmatprep.subr.bf16.mxu0 0
      %3920 = vmatpush1.bf16.msra.mxu0 0
      %3921 = vmatprep.subr.bf16.mxu0 0
      %3922 = vmatpush1.bf16.msra.mxu0 0
      %3923 = vmatprep.subr.bf16.mxu0 0
      %3924 = vmatpush1.bf16.msra.mxu0 0
      %3925 = vmatprep.subr.bf16.mxu0 0
      %3926 = vmatpush1.bf16.msra.mxu0 0
      %3927 = vmatprep.subr.bf16.mxu0 0
      %3928 = vmatpush1.bf16.msra.mxu0 0
      %3929 = vmatprep.subr.bf16.mxu0 0
      %3930 = vmatpush1.bf16.msra.mxu0 0
      %3931 = vmatprep.subr.bf16.mxu0 0
      %3932 = vmatpush1.bf16.msra.mxu0 0
      %3933 = vmatprep.subr.bf16.mxu0 0
      %3934 = vmatpush1.bf16.msra.mxu0 0
      %3935 = vmatprep.subr.bf16.mxu0 0
      %3936 = vmatpush1.bf16.msra.mxu0 0
      %3937 = vmatprep.mubr.bf16.mxu0 0
      %3938 = vmatmul.mubr.bf16.gmra.mrb[0].mxu0 %v3903
      %v3939 = vpop.f32.mrb[0].mxu0
      %v3940 = vadd.f32 0.0, %v3939
      %v3941 = vpop.f32.mrb[0].mxu0
      %v3942 = vpop.f32.mrb[0].mxu0
      %v3943 = vadd.f32 0.0, %v3942
      %v3944 = vpop.f32.mrb[0].mxu0
      %3945 = vdwg.mxu0
      %3946 = vrot.lane.b32.xlu0 %v543, 56
      %v3947 = vpop.permute.xlu0 %3946
      %v3950 = vsel %vm1356, %v3654, 0
      %3952 = vmatprep.subr.bf16.mxu0 0
      %3953 = vmatpush1.bf16.msra.mxu0 %v3947
      %3954 = vmatprep.subr.bf16.mxu0 0
      %3955 = vmatpush1.bf16.msra.mxu0 0
      %3956 = vmatprep.subr.bf16.mxu0 0
      %3957 = vmatpush1.bf16.msra.mxu0 0
      %3958 = vmatprep.subr.bf16.mxu0 0
      %3959 = vmatpush1.bf16.msra.mxu0 0
      %3960 = vmatprep.subr.bf16.mxu0 0
      %3961 = vmatpush1.bf16.msra.mxu0 0
      %3962 = vmatprep.subr.bf16.mxu0 0
      %3963 = vmatpush1.bf16.msra.mxu0 0
      %3964 = vmatprep.subr.bf16.mxu0 0
      %3965 = vmatpush1.bf16.msra.mxu0 0
      %3966 = vmatprep.subr.bf16.mxu0 0
      %3967 = vmatpush1.bf16.msra.mxu0 0
      %3968 = vmatprep.subr.bf16.mxu0 0
      %3969 = vmatpush1.bf16.msra.mxu0 0
      %3970 = vmatprep.subr.bf16.mxu0 0
      %3971 = vmatpush1.bf16.msra.mxu0 0
      %3972 = vmatprep.subr.bf16.mxu0 0
      %3973 = vmatpush1.bf16.msra.mxu0 0
      %3974 = vmatprep.subr.bf16.mxu0 0
      %3975 = vmatpush1.bf16.msra.mxu0 0
      %3976 = vmatprep.subr.bf16.mxu0 0
      %3977 = vmatpush1.bf16.msra.mxu0 0
      %3978 = vmatprep.subr.bf16.mxu0 0
      %3979 = vmatpush1.bf16.msra.mxu0 0
      %3980 = vmatprep.subr.bf16.mxu0 0
      %3981 = vmatpush1.bf16.msra.mxu0 0
      %3982 = vmatprep.subr.bf16.mxu0 0
      %3983 = vmatpush1.bf16.msra.mxu0 0
      %3984 = vmatprep.mubr.bf16.mxu0 0
      %3985 = vmatmul.mubr.bf16.gmra.mrb[0].mxu0 %v3950
      %v3986 = vpop.f32.mrb[0].mxu0
      %v3987 = vadd.f32 0.0, %v3986
      %v3988 = vpop.f32.mrb[0].mxu0
      %v3989 = vpop.f32.mrb[0].mxu0
      %v3990 = vadd.f32 0.0, %v3989
      %v3991 = vpop.f32.mrb[0].mxu0
      %3992 = vdwg.mxu0
      %3993 = vrot.lane.b32.xlu0 %v544, 56
      %v3994 = vpop.permute.xlu0 %3993
      %v3997 = vsel %vm1356, %v3655, 0
      %3999 = vmatprep.subr.bf16.mxu0 0
      %4000 = vmatpush1.bf16.msra.mxu0 %v3994
      %4001 = vmatprep.subr.bf16.mxu0 0
      %4002 = vmatpush1.bf16.msra.mxu0 0
      %4003 = vmatprep.subr.bf16.mxu0 0
      %4004 = vmatpush1.bf16.msra.mxu0 0
      %4005 = vmatprep.subr.bf16.mxu0 0
      %4006 = vmatpush1.bf16.msra.mxu0 0
      %4007 = vmatprep.subr.bf16.mxu0 0
      %4008 = vmatpush1.bf16.msra.mxu0 0
      %4009 = vmatprep.subr.bf16.mxu0 0
      %4010 = vmatpush1.bf16.msra.mxu0 0
      %4011 = vmatprep.subr.bf16.mxu0 0
      %4012 = vmatpush1.bf16.msra.mxu0 0
      %4013 = vmatprep.subr.bf16.mxu0 0
      %4014 = vmatpush1.bf16.msra.mxu0 0
      %4015 = vmatprep.subr.bf16.mxu0 0
      %4016 = vmatpush1.bf16.msra.mxu0 0
      %4017 = vmatprep.subr.bf16.mxu0 0
      %4018 = vmatpush1.bf16.msra.mxu0 0
      %4019 = vmatprep.subr.bf16.mxu0 0
      %4020 = vmatpush1.bf16.msra.mxu0 0
      %4021 = vmatprep.subr.bf16.mxu0 0
      %4022 = vmatpush1.bf16.msra.mxu0 0
      %4023 = vmatprep.subr.bf16.mxu0 0
      %4024 = vmatpush1.bf16.msra.mxu0 0
      %4025 = vmatprep.subr.bf16.mxu0 0
      %4026 = vmatpush1.bf16.msra.mxu0 0
      %4027 = vmatprep.subr.bf16.mxu0 0
      %4028 = vmatpush1.bf16.msra.mxu0 0
      %4029 = vmatprep.subr.bf16.mxu0 0
      %4030 = vmatpush1.bf16.msra.mxu0 0
      %4031 = vmatprep.mubr.bf16.mxu0 0
      %4032 = vmatmul.mubr.bf16.gmra.mrb[0].mxu0 %v3997
      %v4033 = vpop.f32.mrb[0].mxu0
      %v4034 = vadd.f32 0.0, %v4033
      %v4035 = vpop.f32.mrb[0].mxu0
      %v4036 = vpop.f32.mrb[0].mxu0
      %v4037 = vadd.f32 0.0, %v4036
      %v4038 = vpop.f32.mrb[0].mxu0
      %4039 = vdwg.mxu0
      %4040 = vrot.lane.b32.xlu0 %v545, 56
      %v4041 = vpop.permute.xlu0 %4040
      %v4044 = vsel %vm1356, %v3656, 0
      %4046 = vmatprep.subr.bf16.mxu0 0
      %4047 = vmatpush1.bf16.msra.mxu0 %v4041
      %4048 = vmatprep.subr.bf16.mxu0 0
      %4049 = vmatpush1.bf16.msra.mxu0 0
      %4050 = vmatprep.subr.bf16.mxu0 0
      %4051 = vmatpush1.bf16.msra.mxu0 0
      %4052 = vmatprep.subr.bf16.mxu0 0
      %4053 = vmatpush1.bf16.msra.mxu0 0
      %4054 = vmatprep.subr.bf16.mxu0 0
      %4055 = vmatpush1.bf16.msra.mxu0 0
      %4056 = vmatprep.subr.bf16.mxu0 0
      %4057 = vmatpush1.bf16.msra.mxu0 0
      %4058 = vmatprep.subr.bf16.mxu0 0
      %4059 = vmatpush1.bf16.msra.mxu0 0
      %4060 = vmatprep.subr.bf16.mxu0 0
      %4061 = vmatpush1.bf16.msra.mxu0 0
      %4062 = vmatprep.subr.bf16.mxu0 0
      %4063 = vmatpush1.bf16.msra.mxu0 0
      %4064 = vmatprep.subr.bf16.mxu0 0
      %4065 = vmatpush1.bf16.msra.mxu0 0
      %4066 = vmatprep.subr.bf16.mxu0 0
      %4067 = vmatpush1.bf16.msra.mxu0 0
      %4068 = vmatprep.subr.bf16.mxu0 0
      %4069 = vmatpush1.bf16.msra.mxu0 0
      %4070 = vmatprep.subr.bf16.mxu0 0
      %4071 = vmatpush1.bf16.msra.mxu0 0
      %4072 = vmatprep.subr.bf16.mxu0 0
      %4073 = vmatpush1.bf16.msra.mxu0 0
      %4074 = vmatprep.subr.bf16.mxu0 0
      %4075 = vmatpush1.bf16.msra.mxu0 0
      %4076 = vmatprep.subr.bf16.mxu0 0
      %4077 = vmatpush1.bf16.msra.mxu0 0
      %4078 = vmatprep.mubr.bf16.mxu0 0
      %4079 = vmatmul.mubr.bf16.gmra.mrb[0].mxu0 %v4044
      %v4080 = vpop.f32.mrb[0].mxu0
      %v4081 = vadd.f32 0.0, %v4080
      %v4082 = vpop.f32.mrb[0].mxu0
      %v4083 = vpop.f32.mrb[0].mxu0
      %v4084 = vadd.f32 0.0, %v4083
      %v4085 = vpop.f32.mrb[0].mxu0
      %4086 = vdwg.mxu0
      %4087 = vrot.lane.b32.xlu0 %v546, 56
      %v4088 = vpop.permute.xlu0 %4087
      %v4091 = vsel %vm1356, %v3657, 0
      %4093 = vmatprep.subr.bf16.mxu0 0
      %4094 = vmatpush1.bf16.msra.mxu0 %v4088
      %4095 = vmatprep.subr.bf16.mxu0 0
      %4096 = vmatpush1.bf16.msra.mxu0 0
      %4097 = vmatprep.subr.bf16.mxu0 0
      %4098 = vmatpush1.bf16.msra.mxu0 0
      %4099 = vmatprep.subr.bf16.mxu0 0
      %4100 = vmatpush1.bf16.msra.mxu0 0
      %4101 = vmatprep.subr.bf16.mxu0 0
      %4102 = vmatpush1.bf16.msra.mxu0 0
      %4103 = vmatprep.subr.bf16.mxu0 0
      %4104 = vmatpush1.bf16.msra.mxu0 0
      %4105 = vmatprep.subr.bf16.mxu0 0
      %4106 = vmatpush1.bf16.msra.mxu0 0
      %4107 = vmatprep.subr.bf16.mxu0 0
      %4108 = vmatpush1.bf16.msra.mxu0 0
      %4109 = vmatprep.subr.bf16.mxu0 0
      %4110 = vmatpush1.bf16.msra.mxu0 0
      %4111 = vmatprep.subr.bf16.mxu0 0
      %4112 = vmatpush1.bf16.msra.mxu0 0
      %4113 = vmatprep.subr.bf16.mxu0 0
      %4114 = vmatpush1.bf16.msra.mxu0 0
      %4115 = vmatprep.subr.bf16.mxu0 0
      %4116 = vmatpush1.bf16.msra.mxu0 0
      %4117 = vmatprep.subr.bf16.mxu0 0
      %4118 = vmatpush1.bf16.msra.mxu0 0
      %4119 = vmatprep.subr.bf16.mxu0 0
      %4120 = vmatpush1.bf16.msra.mxu0 0
      %4121 = vmatprep.subr.bf16.mxu0 0
      %4122 = vmatpush1.bf16.msra.mxu0 0
      %4123 = vmatprep.subr.bf16.mxu0 0
      %4124 = vmatpush1.bf16.msra.mxu0 0
      %4125 = vmatprep.mubr.bf16.mxu0 0
      %4126 = vmatmul.mubr.bf16.gmra.mrb[0].mxu0 %v4091
      %v4127 = vpop.f32.mrb[0].mxu0
      %v4128 = vadd.f32 0.0, %v4127
      %v4129 = vpop.f32.mrb[0].mxu0
      %v4130 = vpop.f32.mrb[0].mxu0
      %v4131 = vadd.f32 0.0, %v4130
      %v4132 = vpop.f32.mrb[0].mxu0
      %4133 = vdwg.mxu0
      %4134 = vrot.lane.b32.xlu0 %v547, 56
      %v4135 = vpop.permute.xlu0 %4134
      %v4138 = vsel %vm1356, %v3658, 0
      %4140 = vmatprep.subr.bf16.mxu0 0
      %4141 = vmatpush1.bf16.msra.mxu0 %v4135
      %4142 = vmatprep.subr.bf16.mxu0 0
      %4143 = vmatpush1.bf16.msra.mxu0 0
      %4144 = vmatprep.subr.bf16.mxu0 0
      %4145 = vmatpush1.bf16.msra.mxu0 0
      %4146 = vmatprep.subr.bf16.mxu0 0
      %4147 = vmatpush1.bf16.msra.mxu0 0
      %4148 = vmatprep.subr.bf16.mxu0 0
      %4149 = vmatpush1.bf16.msra.mxu0 0
      %4150 = vmatprep.subr.bf16.mxu0 0
      %4151 = vmatpush1.bf16.msra.mxu0 0
      %4152 = vmatprep.subr.bf16.mxu0 0
      %4153 = vmatpush1.bf16.msra.mxu0 0
      %4154 = vmatprep.subr.bf16.mxu0 0
      %4155 = vmatpush1.bf16.msra.mxu0 0
      %4156 = vmatprep.subr.bf16.mxu0 0
      %4157 = vmatpush1.bf16.msra.mxu0 0
      %4158 = vmatprep.subr.bf16.mxu0 0
      %4159 = vmatpush1.bf16.msra.mxu0 0
      %4160 = vmatprep.subr.bf16.mxu0 0
      %4161 = vmatpush1.bf16.msra.mxu0 0
      %4162 = vmatprep.subr.bf16.mxu0 0
      %4163 = vmatpush1.bf16.msra.mxu0 0
      %4164 = vmatprep.subr.bf16.mxu0 0
      %4165 = vmatpush1.bf16.msra.mxu0 0
      %4166 = vmatprep.subr.bf16.mxu0 0
      %4167 = vmatpush1.bf16.msra.mxu0 0
      %4168 = vmatprep.subr.bf16.mxu0 0
      %4169 = vmatpush1.bf16.msra.mxu0 0
      %4170 = vmatprep.subr.bf16.mxu0 0
      %4171 = vmatpush1.bf16.msra.mxu0 0
      %4172 = vmatprep.mubr.bf16.mxu0 0
      %4173 = vmatmul.mubr.bf16.gmra.mrb[0].mxu0 %v4138
      %v4174 = vpop.f32.mrb[0].mxu0
      %v4175 = vadd.f32 0.0, %v4174
      %v4176 = vpop.f32.mrb[0].mxu0
      %v4177 = vpop.f32.mrb[0].mxu0
      %v4178 = vadd.f32 0.0, %v4177
      %v4179 = vpop.f32.mrb[0].mxu0
      %4180 = vdwg.mxu0
      %4181 = vrot.lane.b32.xlu0 %v548, 56
      %v4182 = vpop.permute.xlu0 %4181
      %v4185 = vsel %vm1356, %v3659, 0
      %4187 = vmatprep.subr.bf16.mxu0 0
      %4188 = vmatpush1.bf16.msra.mxu0 %v4182
      %4189 = vmatprep.subr.bf16.mxu0 0
      %4190 = vmatpush1.bf16.msra.mxu0 0
      %4191 = vmatprep.subr.bf16.mxu0 0
      %4192 = vmatpush1.bf16.msra.mxu0 0
      %4193 = vmatprep.subr.bf16.mxu0 0
      %4194 = vmatpush1.bf16.msra.mxu0 0
      %4195 = vmatprep.subr.bf16.mxu0 0
      %4196 = vmatpush1.bf16.msra.mxu0 0
      %4197 = vmatprep.subr.bf16.mxu0 0
      %4198 = vmatpush1.bf16.msra.mxu0 0
      %4199 = vmatprep.subr.bf16.mxu0 0
      %4200 = vmatpush1.bf16.msra.mxu0 0
      %4201 = vmatprep.subr.bf16.mxu0 0
      %4202 = vmatpush1.bf16.msra.mxu0 0
      %4203 = vmatprep.subr.bf16.mxu0 0
      %4204 = vmatpush1.bf16.msra.mxu0 0
      %4205 = vmatprep.subr.bf16.mxu0 0
      %4206 = vmatpush1.bf16.msra.mxu0 0
      %4207 = vmatprep.subr.bf16.mxu0 0
      %4208 = vmatpush1.bf16.msra.mxu0 0
      %4209 = vmatprep.subr.bf16.mxu0 0
      %4210 = vmatpush1.bf16.msra.mxu0 0
      %4211 = vmatprep.subr.bf16.mxu0 0
      %4212 = vmatpush1.bf16.msra.mxu0 0
      %4213 = vmatprep.subr.bf16.mxu0 0
      %4214 = vmatpush1.bf16.msra.mxu0 0
      %4215 = vmatprep.subr.bf16.mxu0 0
      %4216 = vmatpush1.bf16.msra.mxu0 0
      %4217 = vmatprep.subr.bf16.mxu0 0
      %4218 = vmatpush1.bf16.msra.mxu0 0
      %4219 = vmatprep.mubr.bf16.mxu0 0
      %4220 = vmatmul.mubr.bf16.gmra.mrb[0].mxu0 %v4185
      %v4221 = vpop.f32.mrb[0].mxu0
      %v4222 = vadd.f32 0.0, %v4221
      %v4223 = vpop.f32.mrb[0].mxu0
      %v4224 = vpop.f32.mrb[0].mxu0
      %v4225 = vadd.f32 0.0, %v4224
      %v4226 = vpop.f32.mrb[0].mxu0
      %4227 = vdwg.mxu0
      %4228 = vrot.lane.b32.xlu0 %v549, 56
      %v4229 = vpop.permute.xlu0 %4228
      %v4232 = vsel %vm1356, %v3660, 0
      %4234 = vmatprep.subr.bf16.mxu0 0
      %4235 = vmatpush1.bf16.msra.mxu0 %v4229
      %4236 = vmatprep.subr.bf16.mxu0 0
      %4237 = vmatpush1.bf16.msra.mxu0 0
      %4238 = vmatprep.subr.bf16.mxu0 0
      %4239 = vmatpush1.bf16.msra.mxu0 0
      %4240 = vmatprep.subr.bf16.mxu0 0
      %4241 = vmatpush1.bf16.msra.mxu0 0
      %4242 = vmatprep.subr.bf16.mxu0 0
      %4243 = vmatpush1.bf16.msra.mxu0 0
      %4244 = vmatprep.subr.bf16.mxu0 0
      %4245 = vmatpush1.bf16.msra.mxu0 0
      %4246 = vmatprep.subr.bf16.mxu0 0
      %4247 = vmatpush1.bf16.msra.mxu0 0
      %4248 = vmatprep.subr.bf16.mxu0 0
      %4249 = vmatpush1.bf16.msra.mxu0 0
      %4250 = vmatprep.subr.bf16.mxu0 0
      %4251 = vmatpush1.bf16.msra.mxu0 0
      %4252 = vmatprep.subr.bf16.mxu0 0
      %4253 = vmatpush1.bf16.msra.mxu0 0
      %4254 = vmatprep.subr.bf16.mxu0 0
      %4255 = vmatpush1.bf16.msra.mxu0 0
      %4256 = vmatprep.subr.bf16.mxu0 0
      %4257 = vmatpush1.bf16.msra.mxu0 0
      %4258 = vmatprep.subr.bf16.mxu0 0
      %4259 = vmatpush1.bf16.msra.mxu0 0
      %4260 = vmatprep.subr.bf16.mxu0 0
      %4261 = vmatpush1.bf16.msra.mxu0 0
      %4262 = vmatprep.subr.bf16.mxu0 0
      %4263 = vmatpush1.bf16.msra.mxu0 0
      %4264 = vmatprep.subr.bf16.mxu0 0
      %4265 = vmatpush1.bf16.msra.mxu0 0
      %4266 = vmatprep.mubr.bf16.mxu0 0
      %4267 = vmatmul.mubr.bf16.gmra.mrb[0].mxu0 %v4232
      %v4268 = vpop.f32.mrb[0].mxu0
      %v4269 = vadd.f32 0.0, %v4268
      %v4270 = vpop.f32.mrb[0].mxu0
      %v4271 = vpop.f32.mrb[0].mxu0
      %v4272 = vadd.f32 0.0, %v4271
      %v4273 = vpop.f32.mrb[0].mxu0
      %4274 = vdwg.mxu0
      %4275 = vrot.lane.b32.xlu0 %v550, 56
      %v4276 = vpop.permute.xlu0 %4275
      %v4279 = vsel %vm1356, %v3661, 0
      %4281 = vmatprep.subr.bf16.mxu0 0
      %4282 = vmatpush1.bf16.msra.mxu0 %v4276
      %4283 = vmatprep.subr.bf16.mxu0 0
      %4284 = vmatpush1.bf16.msra.mxu0 0
      %4285 = vmatprep.subr.bf16.mxu0 0
      %4286 = vmatpush1.bf16.msra.mxu0 0
      %4287 = vmatprep.subr.bf16.mxu0 0
      %4288 = vmatpush1.bf16.msra.mxu0 0
      %4289 = vmatprep.subr.bf16.mxu0 0
      %4290 = vmatpush1.bf16.msra.mxu0 0
      %4291 = vmatprep.subr.bf16.mxu0 0
      %4292 = vmatpush1.bf16.msra.mxu0 0
      %4293 = vmatprep.subr.bf16.mxu0 0
      %4294 = vmatpush1.bf16.msra.mxu0 0
      %4295 = vmatprep.subr.bf16.mxu0 0
      %4296 = vmatpush1.bf16.msra.mxu0 0
      %4297 = vmatprep.subr.bf16.mxu0 0
      %4298 = vmatpush1.bf16.msra.mxu0 0
      %4299 = vmatprep.subr.bf16.mxu0 0
      %4300 = vmatpush1.bf16.msra.mxu0 0
      %4301 = vmatprep.subr.bf16.mxu0 0
      %4302 = vmatpush1.bf16.msra.mxu0 0
      %4303 = vmatprep.subr.bf16.mxu0 0
      %4304 = vmatpush1.bf16.msra.mxu0 0
      %4305 = vmatprep.subr.bf16.mxu0 0
      %4306 = vmatpush1.bf16.msra.mxu0 0
      %4307 = vmatprep.subr.bf16.mxu0 0
      %4308 = vmatpush1.bf16.msra.mxu0 0
      %4309 = vmatprep.subr.bf16.mxu0 0
      %4310 = vmatpush1.bf16.msra.mxu0 0
      %4311 = vmatprep.subr.bf16.mxu0 0
      %4312 = vmatpush1.bf16.msra.mxu0 0
      %4313 = vmatprep.mubr.bf16.mxu0 0
      %4314 = vmatmul.mubr.bf16.gmra.mrb[0].mxu0 %v4279
      %v4315 = vpop.f32.mrb[0].mxu0
      %v4316 = vadd.f32 0.0, %v4315
      %v4317 = vpop.f32.mrb[0].mxu0
      %v4318 = vpop.f32.mrb[0].mxu0
      %v4319 = vadd.f32 0.0, %v4318
      %v4320 = vpop.f32.mrb[0].mxu0
      %4321 = vdwg.mxu0
      %4322 = vrot.lane.b32.xlu0 %v551, 56
      %v4323 = vpop.permute.xlu0 %4322
      %v4326 = vsel %vm1356, %v3662, 0
      %4328 = vmatprep.subr.bf16.mxu0 0
      %4329 = vmatpush1.bf16.msra.mxu0 %v4323
      %4330 = vmatprep.subr.bf16.mxu0 0
      %4331 = vmatpush1.bf16.msra.mxu0 0
      %4332 = vmatprep.subr.bf16.mxu0 0
      %4333 = vmatpush1.bf16.msra.mxu0 0
      %4334 = vmatprep.subr.bf16.mxu0 0
      %4335 = vmatpush1.bf16.msra.mxu0 0
      %4336 = vmatprep.subr.bf16.mxu0 0
      %4337 = vmatpush1.bf16.msra.mxu0 0
      %4338 = vmatprep.subr.bf16.mxu0 0
      %4339 = vmatpush1.bf16.msra.mxu0 0
      %4340 = vmatprep.subr.bf16.mxu0 0
      %4341 = vmatpush1.bf16.msra.mxu0 0
      %4342 = vmatprep.subr.bf16.mxu0 0
      %4343 = vmatpush1.bf16.msra.mxu0 0
      %4344 = vmatprep.subr.bf16.mxu0 0
      %4345 = vmatpush1.bf16.msra.mxu0 0
      %4346 = vmatprep.subr.bf16.mxu0 0
      %4347 = vmatpush1.bf16.msra.mxu0 0
      %4348 = vmatprep.subr.bf16.mxu0 0
      %4349 = vmatpush1.bf16.msra.mxu0 0
      %4350 = vmatprep.subr.bf16.mxu0 0
      %4351 = vmatpush1.bf16.msra.mxu0 0
      %4352 = vmatprep.subr.bf16.mxu0 0
      %4353 = vmatpush1.bf16.msra.mxu0 0
      %4354 = vmatprep.subr.bf16.mxu0 0
      %4355 = vmatpush1.bf16.msra.mxu0 0
      %4356 = vmatprep.subr.bf16.mxu0 0
      %4357 = vmatpush1.bf16.msra.mxu0 0
      %4358 = vmatprep.subr.bf16.mxu0 0
      %4359 = vmatpush1.bf16.msra.mxu0 0
      %4360 = vmatprep.mubr.bf16.mxu0 0
      %4361 = vmatmul.mubr.bf16.gmra.mrb[0].mxu0 %v4326
      %v4362 = vpop.f32.mrb[0].mxu0
      %v4363 = vadd.f32 0.0, %v4362
      %v4364 = vpop.f32.mrb[0].mxu0
      %v4365 = vpop.f32.mrb[0].mxu0
      %v4366 = vadd.f32 0.0, %v4365
      %v4367 = vpop.f32.mrb[0].mxu0
      %4368 = vdwg.mxu0
      %4369 = vrot.lane.b32.xlu0 %v552, 56
      %v4370 = vpop.permute.xlu0 %4369
      %v4373 = vsel %vm1356, %v3663, 0
      %4375 = vmatprep.subr.bf16.mxu0 0
      %4376 = vmatpush1.bf16.msra.mxu0 %v4370
      %4377 = vmatprep.subr.bf16.mxu0 0
      %4378 = vmatpush1.bf16.msra.mxu0 0
      %4379 = vmatprep.subr.bf16.mxu0 0
      %4380 = vmatpush1.bf16.msra.mxu0 0
      %4381 = vmatprep.subr.bf16.mxu0 0
      %4382 = vmatpush1.bf16.msra.mxu0 0
      %4383 = vmatprep.subr.bf16.mxu0 0
      %4384 = vmatpush1.bf16.msra.mxu0 0
      %4385 = vmatprep.subr.bf16.mxu0 0
      %4386 = vmatpush1.bf16.msra.mxu0 0
      %4387 = vmatprep.subr.bf16.mxu0 0
      %4388 = vmatpush1.bf16.msra.mxu0 0
      %4389 = vmatprep.subr.bf16.mxu0 0
      %4390 = vmatpush1.bf16.msra.mxu0 0
      %4391 = vmatprep.subr.bf16.mxu0 0
      %4392 = vmatpush1.bf16.msra.mxu0 0
      %4393 = vmatprep.subr.bf16.mxu0 0
      %4394 = vmatpush1.bf16.msra.mxu0 0
      %4395 = vmatprep.subr.bf16.mxu0 0
      %4396 = vmatpush1.bf16.msra.mxu0 0
      %4397 = vmatprep.subr.bf16.mxu0 0
      %4398 = vmatpush1.bf16.msra.mxu0 0
      %4399 = vmatprep.subr.bf16.mxu0 0
      %4400 = vmatpush1.bf16.msra.mxu0 0
      %4401 = vmatprep.subr.bf16.mxu0 0
      %4402 = vmatpush1.bf16.msra.mxu0 0
      %4403 = vmatprep.subr.bf16.mxu0 0
      %4404 = vmatpush1.bf16.msra.mxu0 0
      %4405 = vmatprep.subr.bf16.mxu0 0
      %4406 = vmatpush1.bf16.msra.mxu0 0
      %4407 = vmatprep.mubr.bf16.mxu0 0
      %4408 = vmatmul.mubr.bf16.gmra.mrb[0].mxu0 %v4373
      %v4409 = vpop.f32.mrb[0].mxu0
      %v4410 = vadd.f32 0.0, %v4409
      %v4411 = vpop.f32.mrb[0].mxu0
      %v4412 = vpop.f32.mrb[0].mxu0
      %v4413 = vadd.f32 0.0, %v4412
      %v4414 = vpop.f32.mrb[0].mxu0
      %4415 = vdwg.mxu0
      %s4416 = scalar_lea.vmem %s3, 32
      %v4417 = vld [vmem:[%s4416] sm:$0xff]
      %v4418 = vld [vmem:[%s4416 + $0x8] sm:$0xff]
      %4419 = vrot.lane.b32.xlu0 %v537, 112
      %v4420 = vpop.permute.xlu0 %4419
      %4421 = vrot.lane.b32.xlu0 %v537, 80
      %v4422 = vpop.permute.xlu0 %4421
      %v4424 = vsel %vm558, %v4420, 0
      %v4427 = vsel %vm558, %v4422, 0
      %4429 = vmatprep.subr.bf16.mxu0 0
      %4430 = vmatpush1.bf16.xpose.msra.mxu0 %v4427
      %4431 = vmatprep.subr.bf16.mxu0 0
      %4432 = vmatpush1.bf16.xpose.msra.mxu0 0
      %4433 = vmatprep.subr.bf16.mxu0 0
      %4434 = vmatpush1.bf16.xpose.msra.mxu0 0
      %4435 = vmatprep.subr.bf16.mxu0 0
      %4436 = vmatpush1.bf16.xpose.msra.mxu0 0
      %4437 = vmatprep.subr.bf16.mxu0 0
      %4438 = vmatpush1.bf16.xpose.msra.mxu0 0
      %4439 = vmatprep.subr.bf16.mxu0 0
      %4440 = vmatpush1.bf16.xpose.msra.mxu0 0
      %4441 = vmatprep.subr.bf16.mxu0 0
      %4442 = vmatpush1.bf16.xpose.msra.mxu0 0
      %4443 = vmatprep.subr.bf16.mxu0 0
      %4444 = vmatpush1.bf16.xpose.msra.mxu0 0
      %4445 = vmatprep.subr.bf16.mxu0 0
      %4446 = vmatpush1.bf16.xpose.msra.mxu0 0
      %4447 = vmatprep.subr.bf16.mxu0 0
      %4448 = vmatpush1.bf16.xpose.msra.mxu0 0
      %4449 = vmatprep.subr.bf16.mxu0 0
      %4450 = vmatpush1.bf16.xpose.msra.mxu0 0
      %4451 = vmatprep.subr.bf16.mxu0 0
      %4452 = vmatpush1.bf16.xpose.msra.mxu0 0
      %4453 = vmatprep.subr.bf16.mxu0 0
      %4454 = vmatpush1.bf16.xpose.msra.mxu0 0
      %4455 = vmatprep.subr.bf16.mxu0 0
      %4456 = vmatpush1.bf16.xpose.msra.mxu0 0
      %4457 = vmatprep.subr.bf16.mxu0 0
      %4458 = vmatpush1.bf16.xpose.msra.mxu0 0
      %4459 = vmatprep.subr.bf16.mxu0 0
      %4460 = vmatpush1.bf16.xpose.msra.mxu0 0
      %4461 = vmatprep.mubr.bf16.mxu0 0
      %4462 = vmatmul.mubr.bf16.gmra.mrb[0].mxu0 %v4424
      %v4463 = vpop.f32.mrb[0].mxu0
      %v4464 = vadd.f32 %v4417, %v4463
      %v4465 = vpop.f32.mrb[0].mxu0
      %v4466 = vpop.f32.mrb[0].mxu0
      %v4467 = vadd.f32 %v4418, %v4466
      %v4468 = vpop.f32.mrb[0].mxu0
      %4469 = vdwg.mxu0
      %4470 = vrot.lane.b32.xlu0 %v538, 112
      %v4471 = vpop.permute.xlu0 %4470
      %4472 = vrot.lane.b32.xlu0 %v538, 80
      %v4473 = vpop.permute.xlu0 %4472
      %v4475 = vsel %vm558, %v4471, 0
      %v4478 = vsel %vm558, %v4473, 0
      %4480 = vmatprep.subr.bf16.mxu0 0
      %4481 = vmatpush1.bf16.xpose.msra.mxu0 %v4478
      %4482 = vmatprep.subr.bf16.mxu0 0
      %4483 = vmatpush1.bf16.xpose.msra.mxu0 0
      %4484 = vmatprep.subr.bf16.mxu0 0
      %4485 = vmatpush1.bf16.xpose.msra.mxu0 0
      %4486 = vmatprep.subr.bf16.mxu0 0
      %4487 = vmatpush1.bf16.xpose.msra.mxu0 0
      %4488 = vmatprep.subr.bf16.mxu0 0
      %4489 = vmatpush1.bf16.xpose.msra.mxu0 0
      %4490 = vmatprep.subr.bf16.mxu0 0
      %4491 = vmatpush1.bf16.xpose.msra.mxu0 0
      %4492 = vmatprep.subr.bf16.mxu0 0
      %4493 = vmatpush1.bf16.xpose.msra.mxu0 0
      %4494 = vmatprep.subr.bf16.mxu0 0
      %4495 = vmatpush1.bf16.xpose.msra.mxu0 0
      %4496 = vmatprep.subr.bf16.mxu0 0
      %4497 = vmatpush1.bf16.xpose.msra.mxu0 0
      %4498 = vmatprep.subr.bf16.mxu0 0
      %4499 = vmatpush1.bf16.xpose.msra.mxu0 0
      %4500 = vmatprep.subr.bf16.mxu0 0
      %4501 = vmatpush1.bf16.xpose.msra.mxu0 0
      %4502 = vmatprep.subr.bf16.mxu0 0
      %4503 = vmatpush1.bf16.xpose.msra.mxu0 0
      %4504 = vmatprep.subr.bf16.mxu0 0
      %4505 = vmatpush1.bf16.xpose.msra.mxu0 0
      %4506 = vmatprep.subr.bf16.mxu0 0
      %4507 = vmatpush1.bf16.xpose.msra.mxu0 0
      %4508 = vmatprep.subr.bf16.mxu0 0
      %4509 = vmatpush1.bf16.xpose.msra.mxu0 0
      %4510 = vmatprep.subr.bf16.mxu0 0
      %4511 = vmatpush1.bf16.xpose.msra.mxu0 0
      %4512 = vmatprep.mubr.bf16.mxu0 0
      %4513 = vmatmul.mubr.bf16.gmra.mrb[0].mxu0 %v4475
      %v4514 = vpop.f32.mrb[0].mxu0
      %v4515 = vadd.f32 %v4417, %v4514
      %v4516 = vpop.f32.mrb[0].mxu0
      %v4517 = vpop.f32.mrb[0].mxu0
      %v4518 = vadd.f32 %v4418, %v4517
      %v4519 = vpop.f32.mrb[0].mxu0
      %4520 = vdwg.mxu0
      %4521 = vrot.lane.b32.xlu0 %v539, 112
      %v4522 = vpop.permute.xlu0 %4521
      %4523 = vrot.lane.b32.xlu0 %v539, 80
      %v4524 = vpop.permute.xlu0 %4523
      %v4526 = vsel %vm558, %v4522, 0
      %v4529 = vsel %vm558, %v4524, 0
      %4531 = vmatprep.subr.bf16.mxu0 0
      %4532 = vmatpush1.bf16.xpose.msra.mxu0 %v4529
      %4533 = vmatprep.subr.bf16.mxu0 0
      %4534 = vmatpush1.bf16.xpose.msra.mxu0 0
      %4535 = vmatprep.subr.bf16.mxu0 0
      %4536 = vmatpush1.bf16.xpose.msra.mxu0 0
      %4537 = vmatprep.subr.bf16.mxu0 0
      %4538 = vmatpush1.bf16.xpose.msra.mxu0 0
      %4539 = vmatprep.subr.bf16.mxu0 0
      %4540 = vmatpush1.bf16.xpose.msra.mxu0 0
      %4541 = vmatprep.subr.bf16.mxu0 0
      %4542 = vmatpush1.bf16.xpose.msra.mxu0 0
      %4543 = vmatprep.subr.bf16.mxu0 0
      %4544 = vmatpush1.bf16.xpose.msra.mxu0 0
      %4545 = vmatprep.subr.bf16.mxu0 0
      %4546 = vmatpush1.bf16.xpose.msra.mxu0 0
      %4547 = vmatprep.subr.bf16.mxu0 0
      %4548 = vmatpush1.bf16.xpose.msra.mxu0 0
      %4549 = vmatprep.subr.bf16.mxu0 0
      %4550 = vmatpush1.bf16.xpose.msra.mxu0 0
      %4551 = vmatprep.subr.bf16.mxu0 0
      %4552 = vmatpush1.bf16.xpose.msra.mxu0 0
      %4553 = vmatprep.subr.bf16.mxu0 0
      %4554 = vmatpush1.bf16.xpose.msra.mxu0 0
      %4555 = vmatprep.subr.bf16.mxu0 0
      %4556 = vmatpush1.bf16.xpose.msra.mxu0 0
      %4557 = vmatprep.subr.bf16.mxu0 0
      %4558 = vmatpush1.bf16.xpose.msra.mxu0 0
      %4559 = vmatprep.subr.bf16.mxu0 0
      %4560 = vmatpush1.bf16.xpose.msra.mxu0 0
      %4561 = vmatprep.subr.bf16.mxu0 0
      %4562 = vmatpush1.bf16.xpose.msra.mxu0 0
      %4563 = vmatprep.mubr.bf16.mxu0 0
      %4564 = vmatmul.mubr.bf16.gmra.mrb[0].mxu0 %v4526
      %v4565 = vpop.f32.mrb[0].mxu0
      %v4566 = vadd.f32 %v4417, %v4565
      %v4567 = vpop.f32.mrb[0].mxu0
      %v4568 = vpop.f32.mrb[0].mxu0
      %v4569 = vadd.f32 %v4418, %v4568
      %v4570 = vpop.f32.mrb[0].mxu0
      %4571 = vdwg.mxu0
      %4572 = vrot.lane.b32.xlu0 %v540, 112
      %v4573 = vpop.permute.xlu0 %4572
      %4574 = vrot.lane.b32.xlu0 %v540, 80
      %v4575 = vpop.permute.xlu0 %4574
      %v4577 = vsel %vm558, %v4573, 0
      %v4580 = vsel %vm558, %v4575, 0
      %4582 = vmatprep.subr.bf16.mxu0 0
      %4583 = vmatpush1.bf16.xpose.msra.mxu0 %v4580
      %4584 = vmatprep.subr.bf16.mxu0 0
      %4585 = vmatpush1.bf16.xpose.msra.mxu0 0
      %4586 = vmatprep.subr.bf16.mxu0 0
      %4587 = vmatpush1.bf16.xpose.msra.mxu0 0
      %4588 = vmatprep.subr.bf16.mxu0 0
      %4589 = vmatpush1.bf16.xpose.msra.mxu0 0
      %4590 = vmatprep.subr.bf16.mxu0 0
      %4591 = vmatpush1.bf16.xpose.msra.mxu0 0
      %4592 = vmatprep.subr.bf16.mxu0 0
      %4593 = vmatpush1.bf16.xpose.msra.mxu0 0
      %4594 = vmatprep.subr.bf16.mxu0 0
      %4595 = vmatpush1.bf16.xpose.msra.mxu0 0
      %4596 = vmatprep.subr.bf16.mxu0 0
      %4597 = vmatpush1.bf16.xpose.msra.mxu0 0
      %4598 = vmatprep.subr.bf16.mxu0 0
      %4599 = vmatpush1.bf16.xpose.msra.mxu0 0
      %4600 = vmatprep.subr.bf16.mxu0 0
      %4601 = vmatpush1.bf16.xpose.msra.mxu0 0
      %4602 = vmatprep.subr.bf16.mxu0 0
      %4603 = vmatpush1.bf16.xpose.msra.mxu0 0
      %4604 = vmatprep.subr.bf16.mxu0 0
      %4605 = vmatpush1.bf16.xpose.msra.mxu0 0
      %4606 = vmatprep.subr.bf16.mxu0 0
      %4607 = vmatpush1.bf16.xpose.msra.mxu0 0
      %4608 = vmatprep.subr.bf16.mxu0 0
      %4609 = vmatpush1.bf16.xpose.msra.mxu0 0
      %4610 = vmatprep.subr.bf16.mxu0 0
      %4611 = vmatpush1.bf16.xpose.msra.mxu0 0
      %4612 = vmatprep.subr.bf16.mxu0 0
      %4613 = vmatpush1.bf16.xpose.msra.mxu0 0
      %4614 = vmatprep.mubr.bf16.mxu0 0
      %4615 = vmatmul.mubr.bf16.gmra.mrb[0].mxu0 %v4577
      %v4616 = vpop.f32.mrb[0].mxu0
      %v4617 = vadd.f32 %v4417, %v4616
      %v4618 = vpop.f32.mrb[0].mxu0
      %v4619 = vpop.f32.mrb[0].mxu0
      %v4620 = vadd.f32 %v4418, %v4619
      %v4621 = vpop.f32.mrb[0].mxu0
      %4622 = vdwg.mxu0
      %4623 = vrot.lane.b32.xlu0 %v541, 112
      %v4624 = vpop.permute.xlu0 %4623
      %4625 = vrot.lane.b32.xlu0 %v541, 80
      %v4626 = vpop.permute.xlu0 %4625
      %v4628 = vsel %vm558, %v4624, 0
      %v4631 = vsel %vm558, %v4626, 0
      %4633 = vmatprep.subr.bf16.mxu0 0
      %4634 = vmatpush1.bf16.xpose.msra.mxu0 %v4631
      %4635 = vmatprep.subr.bf16.mxu0 0
      %4636 = vmatpush1.bf16.xpose.msra.mxu0 0
      %4637 = vmatprep.subr.bf16.mxu0 0
      %4638 = vmatpush1.bf16.xpose.msra.mxu0 0
      %4639 = vmatprep.subr.bf16.mxu0 0
      %4640 = vmatpush1.bf16.xpose.msra.mxu0 0
      %4641 = vmatprep.subr.bf16.mxu0 0
      %4642 = vmatpush1.bf16.xpose.msra.mxu0 0
      %4643 = vmatprep.subr.bf16.mxu0 0
      %4644 = vmatpush1.bf16.xpose.msra.mxu0 0
      %4645 = vmatprep.subr.bf16.mxu0 0
      %4646 = vmatpush1.bf16.xpose.msra.mxu0 0
      %4647 = vmatprep.subr.bf16.mxu0 0
      %4648 = vmatpush1.bf16.xpose.msra.mxu0 0
      %4649 = vmatprep.subr.bf16.mxu0 0
      %4650 = vmatpush1.bf16.xpose.msra.mxu0 0
      %4651 = vmatprep.subr.bf16.mxu0 0
      %4652 = vmatpush1.bf16.xpose.msra.mxu0 0
      %4653 = vmatprep.subr.bf16.mxu0 0
      %4654 = vmatpush1.bf16.xpose.msra.mxu0 0
      %4655 = vmatprep.subr.bf16.mxu0 0
      %4656 = vmatpush1.bf16.xpose.msra.mxu0 0
      %4657 = vmatprep.subr.bf16.mxu0 0
      %4658 = vmatpush1.bf16.xpose.msra.mxu0 0
      %4659 = vmatprep.subr.bf16.mxu0 0
      %4660 = vmatpush1.bf16.xpose.msra.mxu0 0
      %4661 = vmatprep.subr.bf16.mxu0 0
      %4662 = vmatpush1.bf16.xpose.msra.mxu0 0
      %4663 = vmatprep.subr.bf16.mxu0 0
      %4664 = vmatpush1.bf16.xpose.msra.mxu0 0
      %4665 = vmatprep.mubr.bf16.mxu0 0
      %4666 = vmatmul.mubr.bf16.gmra.mrb[0].mxu0 %v4628
      %v4667 = vpop.f32.mrb[0].mxu0
      %v4668 = vadd.f32 %v4417, %v4667
      %v4669 = vpop.f32.mrb[0].mxu0
      %v4670 = vpop.f32.mrb[0].mxu0
      %v4671 = vadd.f32 %v4418, %v4670
      %v4672 = vpop.f32.mrb[0].mxu0
      %4673 = vdwg.mxu0
      %4674 = vrot.lane.b32.xlu0 %v542, 112
      %v4675 = vpop.permute.xlu0 %4674
      %4676 = vrot.lane.b32.xlu0 %v542, 80
      %v4677 = vpop.permute.xlu0 %4676
      %v4679 = vsel %vm558, %v4675, 0
      %v4682 = vsel %vm558, %v4677, 0
      %4684 = vmatprep.subr.bf16.mxu0 0
      %4685 = vmatpush1.bf16.xpose.msra.mxu0 %v4682
      %4686 = vmatprep.subr.bf16.mxu0 0
      %4687 = vmatpush1.bf16.xpose.msra.mxu0 0
      %4688 = vmatprep.subr.bf16.mxu0 0
      %4689 = vmatpush1.bf16.xpose.msra.mxu0 0
      %4690 = vmatprep.subr.bf16.mxu0 0
      %4691 = vmatpush1.bf16.xpose.msra.mxu0 0
      %4692 = vmatprep.subr.bf16.mxu0 0
      %4693 = vmatpush1.bf16.xpose.msra.mxu0 0
      %4694 = vmatprep.subr.bf16.mxu0 0
      %4695 = vmatpush1.bf16.xpose.msra.mxu0 0
      %4696 = vmatprep.subr.bf16.mxu0 0
      %4697 = vmatpush1.bf16.xpose.msra.mxu0 0
      %4698 = vmatprep.subr.bf16.mxu0 0
      %4699 = vmatpush1.bf16.xpose.msra.mxu0 0
      %4700 = vmatprep.subr.bf16.mxu0 0
      %4701 = vmatpush1.bf16.xpose.msra.mxu0 0
      %4702 = vmatprep.subr.bf16.mxu0 0
      %4703 = vmatpush1.bf16.xpose.msra.mxu0 0
      %4704 = vmatprep.subr.bf16.mxu0 0
      %4705 = vmatpush1.bf16.xpose.msra.mxu0 0
      %4706 = vmatprep.subr.bf16.mxu0 0
      %4707 = vmatpush1.bf16.xpose.msra.mxu0 0
      %4708 = vmatprep.subr.bf16.mxu0 0
      %4709 = vmatpush1.bf16.xpose.msra.mxu0 0
      %4710 = vmatprep.subr.bf16.mxu0 0
      %4711 = vmatpush1.bf16.xpose.msra.mxu0 0
      %4712 = vmatprep.subr.bf16.mxu0 0
      %4713 = vmatpush1.bf16.xpose.msra.mxu0 0
      %4714 = vmatprep.subr.bf16.mxu0 0
      %4715 = vmatpush1.bf16.xpose.msra.mxu0 0
      %4716 = vmatprep.mubr.bf16.mxu0 0
      %4717 = vmatmul.mubr.bf16.gmra.mrb[0].mxu0 %v4679
      %v4718 = vpop.f32.mrb[0].mxu0
      %v4719 = vadd.f32 %v4417, %v4718
      %v4720 = vpop.f32.mrb[0].mxu0
      %v4721 = vpop.f32.mrb[0].mxu0
      %v4722 = vadd.f32 %v4418, %v4721
      %v4723 = vpop.f32.mrb[0].mxu0
      %4724 = vdwg.mxu0
      %4725 = vrot.lane.b32.xlu0 %v543, 112
      %v4726 = vpop.permute.xlu0 %4725
      %4727 = vrot.lane.b32.xlu0 %v543, 80
      %v4728 = vpop.permute.xlu0 %4727
      %v4730 = vsel %vm558, %v4726, 0
      %v4733 = vsel %vm558, %v4728, 0
      %4735 = vmatprep.subr.bf16.mxu0 0
      %4736 = vmatpush1.bf16.xpose.msra.mxu0 %v4733
      %4737 = vmatprep.subr.bf16.mxu0 0
      %4738 = vmatpush1.bf16.xpose.msra.mxu0 0
      %4739 = vmatprep.subr.bf16.mxu0 0
      %4740 = vmatpush1.bf16.xpose.msra.mxu0 0
      %4741 = vmatprep.subr.bf16.mxu0 0
      %4742 = vmatpush1.bf16.xpose.msra.mxu0 0
      %4743 = vmatprep.subr.bf16.mxu0 0
      %4744 = vmatpush1.bf16.xpose.msra.mxu0 0
      %4745 = vmatprep.subr.bf16.mxu0 0
      %4746 = vmatpush1.bf16.xpose.msra.mxu0 0
      %4747 = vmatprep.subr.bf16.mxu0 0
      %4748 = vmatpush1.bf16.xpose.msra.mxu0 0
      %4749 = vmatprep.subr.bf16.mxu0 0
      %4750 = vmatpush1.bf16.xpose.msra.mxu0 0
      %4751 = vmatprep.subr.bf16.mxu0 0
      %4752 = vmatpush1.bf16.xpose.msra.mxu0 0
      %4753 = vmatprep.subr.bf16.mxu0 0
      %4754 = vmatpush1.bf16.xpose.msra.mxu0 0
      %4755 = vmatprep.subr.bf16.mxu0 0
      %4756 = vmatpush1.bf16.xpose.msra.mxu0 0
      %4757 = vmatprep.subr.bf16.mxu0 0
      %4758 = vmatpush1.bf16.xpose.msra.mxu0 0
      %4759 = vmatprep.subr.bf16.mxu0 0
      %4760 = vmatpush1.bf16.xpose.msra.mxu0 0
      %4761 = vmatprep.subr.bf16.mxu0 0
      %4762 = vmatpush1.bf16.xpose.msra.mxu0 0
      %4763 = vmatprep.subr.bf16.mxu0 0
      %4764 = vmatpush1.bf16.xpose.msra.mxu0 0
      %4765 = vmatprep.subr.bf16.mxu0 0
      %4766 = vmatpush1.bf16.xpose.msra.mxu0 0
      %4767 = vmatprep.mubr.bf16.mxu0 0
      %4768 = vmatmul.mubr.bf16.gmra.mrb[0].mxu0 %v4730
      %v4769 = vpop.f32.mrb[0].mxu0
      %v4770 = vadd.f32 %v4417, %v4769
      %v4771 = vpop.f32.mrb[0].mxu0
      %v4772 = vpop.f32.mrb[0].mxu0
      %v4773 = vadd.f32 %v4418, %v4772
      %v4774 = vpop.f32.mrb[0].mxu0
      %4775 = vdwg.mxu0
      %4776 = vrot.lane.b32.xlu0 %v544, 112
      %v4777 = vpop.permute.xlu0 %4776
      %4778 = vrot.lane.b32.xlu0 %v544, 80
      %v4779 = vpop.permute.xlu0 %4778
      %v4781 = vsel %vm558, %v4777, 0
      %v4784 = vsel %vm558, %v4779, 0
      %4786 = vmatprep.subr.bf16.mxu0 0
      %4787 = vmatpush1.bf16.xpose.msra.mxu0 %v4784
      %4788 = vmatprep.subr.bf16.mxu0 0
      %4789 = vmatpush1.bf16.xpose.msra.mxu0 0
      %4790 = vmatprep.subr.bf16.mxu0 0
      %4791 = vmatpush1.bf16.xpose.msra.mxu0 0
      %4792 = vmatprep.subr.bf16.mxu0 0
      %4793 = vmatpush1.bf16.xpose.msra.mxu0 0
      %4794 = vmatprep.subr.bf16.mxu0 0
      %4795 = vmatpush1.bf16.xpose.msra.mxu0 0
      %4796 = vmatprep.subr.bf16.mxu0 0
      %4797 = vmatpush1.bf16.xpose.msra.mxu0 0
      %4798 = vmatprep.subr.bf16.mxu0 0
      %4799 = vmatpush1.bf16.xpose.msra.mxu0 0
      %4800 = vmatprep.subr.bf16.mxu0 0
      %4801 = vmatpush1.bf16.xpose.msra.mxu0 0
      %4802 = vmatprep.subr.bf16.mxu0 0
      %4803 = vmatpush1.bf16.xpose.msra.mxu0 0
      %4804 = vmatprep.subr.bf16.mxu0 0
      %4805 = vmatpush1.bf16.xpose.msra.mxu0 0
      %4806 = vmatprep.subr.bf16.mxu0 0
      %4807 = vmatpush1.bf16.xpose.msra.mxu0 0
      %4808 = vmatprep.subr.bf16.mxu0 0
      %4809 = vmatpush1.bf16.xpose.msra.mxu0 0
      %4810 = vmatprep.subr.bf16.mxu0 0
      %4811 = vmatpush1.bf16.xpose.msra.mxu0 0
      %4812 = vmatprep.subr.bf16.mxu0 0
      %4813 = vmatpush1.bf16.xpose.msra.mxu0 0
      %4814 = vmatprep.subr.bf16.mxu0 0
      %4815 = vmatpush1.bf16.xpose.msra.mxu0 0
      %4816 = vmatprep.subr.bf16.mxu0 0
      %4817 = vmatpush1.bf16.xpose.msra.mxu0 0
      %4818 = vmatprep.mubr.bf16.mxu0 0
      %4819 = vmatmul.mubr.bf16.gmra.mrb[0].mxu0 %v4781
      %v4820 = vpop.f32.mrb[0].mxu0
      %v4821 = vadd.f32 %v4417, %v4820
      %v4822 = vpop.f32.mrb[0].mxu0
      %v4823 = vpop.f32.mrb[0].mxu0
      %v4824 = vadd.f32 %v4418, %v4823
      %v4825 = vpop.f32.mrb[0].mxu0
      %4826 = vdwg.mxu0
      %4827 = vrot.lane.b32.xlu0 %v545, 112
      %v4828 = vpop.permute.xlu0 %4827
      %4829 = vrot.lane.b32.xlu0 %v545, 80
      %v4830 = vpop.permute.xlu0 %4829
      %v4832 = vsel %vm558, %v4828, 0
      %v4835 = vsel %vm558, %v4830, 0
      %4837 = vmatprep.subr.bf16.mxu0 0
      %4838 = vmatpush1.bf16.xpose.msra.mxu0 %v4835
      %4839 = vmatprep.subr.bf16.mxu0 0
      %4840 = vmatpush1.bf16.xpose.msra.mxu0 0
      %4841 = vmatprep.subr.bf16.mxu0 0
      %4842 = vmatpush1.bf16.xpose.msra.mxu0 0
      %4843 = vmatprep.subr.bf16.mxu0 0
      %4844 = vmatpush1.bf16.xpose.msra.mxu0 0
      %4845 = vmatprep.subr.bf16.mxu0 0
      %4846 = vmatpush1.bf16.xpose.msra.mxu0 0
      %4847 = vmatprep.subr.bf16.mxu0 0
      %4848 = vmatpush1.bf16.xpose.msra.mxu0 0
      %4849 = vmatprep.subr.bf16.mxu0 0
      %4850 = vmatpush1.bf16.xpose.msra.mxu0 0
      %4851 = vmatprep.subr.bf16.mxu0 0
      %4852 = vmatpush1.bf16.xpose.msra.mxu0 0
      %4853 = vmatprep.subr.bf16.mxu0 0
      %4854 = vmatpush1.bf16.xpose.msra.mxu0 0
      %4855 = vmatprep.subr.bf16.mxu0 0
      %4856 = vmatpush1.bf16.xpose.msra.mxu0 0
      %4857 = vmatprep.subr.bf16.mxu0 0
      %4858 = vmatpush1.bf16.xpose.msra.mxu0 0
      %4859 = vmatprep.subr.bf16.mxu0 0
      %4860 = vmatpush1.bf16.xpose.msra.mxu0 0
      %4861 = vmatprep.subr.bf16.mxu0 0
      %4862 = vmatpush1.bf16.xpose.msra.mxu0 0
      %4863 = vmatprep.subr.bf16.mxu0 0
      %4864 = vmatpush1.bf16.xpose.msra.mxu0 0
      %4865 = vmatprep.subr.bf16.mxu0 0
      %4866 = vmatpush1.bf16.xpose.msra.mxu0 0
      %4867 = vmatprep.subr.bf16.mxu0 0
      %4868 = vmatpush1.bf16.xpose.msra.mxu0 0
      %4869 = vmatprep.mubr.bf16.mxu0 0
      %4870 = vmatmul.mubr.bf16.gmra.mrb[0].mxu0 %v4832
      %v4871 = vpop.f32.mrb[0].mxu0
      %v4872 = vadd.f32 %v4417, %v4871
      %v4873 = vpop.f32.mrb[0].mxu0
      %v4874 = vpop.f32.mrb[0].mxu0
      %v4875 = vadd.f32 %v4418, %v4874
      %v4876 = vpop.f32.mrb[0].mxu0
      %4877 = vdwg.mxu0
      %4878 = vrot.lane.b32.xlu0 %v546, 112
      %v4879 = vpop.permute.xlu0 %4878
      %4880 = vrot.lane.b32.xlu0 %v546, 80
      %v4881 = vpop.permute.xlu0 %4880
      %v4883 = vsel %vm558, %v4879, 0
      %v4886 = vsel %vm558, %v4881, 0
      %4888 = vmatprep.subr.bf16.mxu0 0
      %4889 = vmatpush1.bf16.xpose.msra.mxu0 %v4886
      %4890 = vmatprep.subr.bf16.mxu0 0
      %4891 = vmatpush1.bf16.xpose.msra.mxu0 0
      %4892 = vmatprep.subr.bf16.mxu0 0
      %4893 = vmatpush1.bf16.xpose.msra.mxu0 0
      %4894 = vmatprep.subr.bf16.mxu0 0
      %4895 = vmatpush1.bf16.xpose.msra.mxu0 0
      %4896 = vmatprep.subr.bf16.mxu0 0
      %4897 = vmatpush1.bf16.xpose.msra.mxu0 0
      %4898 = vmatprep.subr.bf16.mxu0 0
      %4899 = vmatpush1.bf16.xpose.msra.mxu0 0
      %4900 = vmatprep.subr.bf16.mxu0 0
      %4901 = vmatpush1.bf16.xpose.msra.mxu0 0
      %4902 = vmatprep.subr.bf16.mxu0 0
      %4903 = vmatpush1.bf16.xpose.msra.mxu0 0
      %4904 = vmatprep.subr.bf16.mxu0 0
      %4905 = vmatpush1.bf16.xpose.msra.mxu0 0
      %4906 = vmatprep.subr.bf16.mxu0 0
      %4907 = vmatpush1.bf16.xpose.msra.mxu0 0
      %4908 = vmatprep.subr.bf16.mxu0 0
      %4909 = vmatpush1.bf16.xpose.msra.mxu0 0
      %4910 = vmatprep.subr.bf16.mxu0 0
      %4911 = vmatpush1.bf16.xpose.msra.mxu0 0
      %4912 = vmatprep.subr.bf16.mxu0 0
      %4913 = vmatpush1.bf16.xpose.msra.mxu0 0
      %4914 = vmatprep.subr.bf16.mxu0 0
      %4915 = vmatpush1.bf16.xpose.msra.mxu0 0
      %4916 = vmatprep.subr.bf16.mxu0 0
      %4917 = vmatpush1.bf16.xpose.msra.mxu0 0
      %4918 = vmatprep.subr.bf16.mxu0 0
      %4919 = vmatpush1.bf16.xpose.msra.mxu0 0
      %4920 = vmatprep.mubr.bf16.mxu0 0
      %4921 = vmatmul.mubr.bf16.gmra.mrb[0].mxu0 %v4883
      %v4922 = vpop.f32.mrb[0].mxu0
      %v4923 = vadd.f32 %v4417, %v4922
      %v4924 = vpop.f32.mrb[0].mxu0
      %v4925 = vpop.f32.mrb[0].mxu0
      %v4926 = vadd.f32 %v4418, %v4925
      %v4927 = vpop.f32.mrb[0].mxu0
      %4928 = vdwg.mxu0
      %4929 = vrot.lane.b32.xlu0 %v547, 112
      %v4930 = vpop.permute.xlu0 %4929
      %4931 = vrot.lane.b32.xlu0 %v547, 80
      %v4932 = vpop.permute.xlu0 %4931
      %v4934 = vsel %vm558, %v4930, 0
      %v4937 = vsel %vm558, %v4932, 0
      %4939 = vmatprep.subr.bf16.mxu0 0
      %4940 = vmatpush1.bf16.xpose.msra.mxu0 %v4937
      %4941 = vmatprep.subr.bf16.mxu0 0
      %4942 = vmatpush1.bf16.xpose.msra.mxu0 0
      %4943 = vmatprep.subr.bf16.mxu0 0
      %4944 = vmatpush1.bf16.xpose.msra.mxu0 0
      %4945 = vmatprep.subr.bf16.mxu0 0
      %4946 = vmatpush1.bf16.xpose.msra.mxu0 0
      %4947 = vmatprep.subr.bf16.mxu0 0
      %4948 = vmatpush1.bf16.xpose.msra.mxu0 0
      %4949 = vmatprep.subr.bf16.mxu0 0
      %4950 = vmatpush1.bf16.xpose.msra.mxu0 0
      %4951 = vmatprep.subr.bf16.mxu0 0
      %4952 = vmatpush1.bf16.xpose.msra.mxu0 0
      %4953 = vmatprep.subr.bf16.mxu0 0
      %4954 = vmatpush1.bf16.xpose.msra.mxu0 0
      %4955 = vmatprep.subr.bf16.mxu0 0
      %4956 = vmatpush1.bf16.xpose.msra.mxu0 0
      %4957 = vmatprep.subr.bf16.mxu0 0
      %4958 = vmatpush1.bf16.xpose.msra.mxu0 0
      %4959 = vmatprep.subr.bf16.mxu0 0
      %4960 = vmatpush1.bf16.xpose.msra.mxu0 0
      %4961 = vmatprep.subr.bf16.mxu0 0
      %4962 = vmatpush1.bf16.xpose.msra.mxu0 0
      %4963 = vmatprep.subr.bf16.mxu0 0
      %4964 = vmatpush1.bf16.xpose.msra.mxu0 0
      %4965 = vmatprep.subr.bf16.mxu0 0
      %4966 = vmatpush1.bf16.xpose.msra.mxu0 0
      %4967 = vmatprep.subr.bf16.mxu0 0
      %4968 = vmatpush1.bf16.xpose.msra.mxu0 0
      %4969 = vmatprep.subr.bf16.mxu0 0
      %4970 = vmatpush1.bf16.xpose.msra.mxu0 0
      %4971 = vmatprep.mubr.bf16.mxu0 0
      %4972 = vmatmul.mubr.bf16.gmra.mrb[0].mxu0 %v4934
      %v4973 = vpop.f32.mrb[0].mxu0
      %v4974 = vadd.f32 %v4417, %v4973
      %v4975 = vpop.f32.mrb[0].mxu0
      %v4976 = vpop.f32.mrb[0].mxu0
      %v4977 = vadd.f32 %v4418, %v4976
      %v4978 = vpop.f32.mrb[0].mxu0
      %4979 = vdwg.mxu0
      %4980 = vrot.lane.b32.xlu0 %v548, 112
      %v4981 = vpop.permute.xlu0 %4980
      %4982 = vrot.lane.b32.xlu0 %v548, 80
      %v4983 = vpop.permute.xlu0 %4982
      %v4985 = vsel %vm558, %v4981, 0
      %v4988 = vsel %vm558, %v4983, 0
      %4990 = vmatprep.subr.bf16.mxu0 0
      %4991 = vmatpush1.bf16.xpose.msra.mxu0 %v4988
      %4992 = vmatprep.subr.bf16.mxu0 0
      %4993 = vmatpush1.bf16.xpose.msra.mxu0 0
      %4994 = vmatprep.subr.bf16.mxu0 0
      %4995 = vmatpush1.bf16.xpose.msra.mxu0 0
      %4996 = vmatprep.subr.bf16.mxu0 0
      %4997 = vmatpush1.bf16.xpose.msra.mxu0 0
      %4998 = vmatprep.subr.bf16.mxu0 0
      %4999 = vmatpush1.bf16.xpose.msra.mxu0 0
      %5000 = vmatprep.subr.bf16.mxu0 0
      %5001 = vmatpush1.bf16.xpose.msra.mxu0 0
      %5002 = vmatprep.subr.bf16.mxu0 0
      %5003 = vmatpush1.bf16.xpose.msra.mxu0 0
      %5004 = vmatprep.subr.bf16.mxu0 0
      %5005 = vmatpush1.bf16.xpose.msra.mxu0 0
      %5006 = vmatprep.subr.bf16.mxu0 0
      %5007 = vmatpush1.bf16.xpose.msra.mxu0 0
      %5008 = vmatprep.subr.bf16.mxu0 0
      %5009 = vmatpush1.bf16.xpose.msra.mxu0 0
      %5010 = vmatprep.subr.bf16.mxu0 0
      %5011 = vmatpush1.bf16.xpose.msra.mxu0 0
      %5012 = vmatprep.subr.bf16.mxu0 0
      %5013 = vmatpush1.bf16.xpose.msra.mxu0 0
      %5014 = vmatprep.subr.bf16.mxu0 0
      %5015 = vmatpush1.bf16.xpose.msra.mxu0 0
      %5016 = vmatprep.subr.bf16.mxu0 0
      %5017 = vmatpush1.bf16.xpose.msra.mxu0 0
      %5018 = vmatprep.subr.bf16.mxu0 0
      %5019 = vmatpush1.bf16.xpose.msra.mxu0 0
      %5020 = vmatprep.subr.bf16.mxu0 0
      %5021 = vmatpush1.bf16.xpose.msra.mxu0 0
      %5022 = vmatprep.mubr.bf16.mxu0 0
      %5023 = vmatmul.mubr.bf16.gmra.mrb[0].mxu0 %v4985
      %v5024 = vpop.f32.mrb[0].mxu0
      %v5025 = vadd.f32 %v4417, %v5024
      %v5026 = vpop.f32.mrb[0].mxu0
      %v5027 = vpop.f32.mrb[0].mxu0
      %v5028 = vadd.f32 %v4418, %v5027
      %v5029 = vpop.f32.mrb[0].mxu0
      %5030 = vdwg.mxu0
      %5031 = vrot.lane.b32.xlu0 %v549, 112
      %v5032 = vpop.permute.xlu0 %5031
      %5033 = vrot.lane.b32.xlu0 %v549, 80
      %v5034 = vpop.permute.xlu0 %5033
      %v5036 = vsel %vm558, %v5032, 0
      %v5039 = vsel %vm558, %v5034, 0
      %5041 = vmatprep.subr.bf16.mxu0 0
      %5042 = vmatpush1.bf16.xpose.msra.mxu0 %v5039
      %5043 = vmatprep.subr.bf16.mxu0 0
      %5044 = vmatpush1.bf16.xpose.msra.mxu0 0
      %5045 = vmatprep.subr.bf16.mxu0 0
      %5046 = vmatpush1.bf16.xpose.msra.mxu0 0
      %5047 = vmatprep.subr.bf16.mxu0 0
      %5048 = vmatpush1.bf16.xpose.msra.mxu0 0
      %5049 = vmatprep.subr.bf16.mxu0 0
      %5050 = vmatpush1.bf16.xpose.msra.mxu0 0
      %5051 = vmatprep.subr.bf16.mxu0 0
      %5052 = vmatpush1.bf16.xpose.msra.mxu0 0
      %5053 = vmatprep.subr.bf16.mxu0 0
      %5054 = vmatpush1.bf16.xpose.msra.mxu0 0
      %5055 = vmatprep.subr.bf16.mxu0 0
      %5056 = vmatpush1.bf16.xpose.msra.mxu0 0
      %5057 = vmatprep.subr.bf16.mxu0 0
      %5058 = vmatpush1.bf16.xpose.msra.mxu0 0
      %5059 = vmatprep.subr.bf16.mxu0 0
      %5060 = vmatpush1.bf16.xpose.msra.mxu0 0
      %5061 = vmatprep.subr.bf16.mxu0 0
      %5062 = vmatpush1.bf16.xpose.msra.mxu0 0
      %5063 = vmatprep.subr.bf16.mxu0 0
      %5064 = vmatpush1.bf16.xpose.msra.mxu0 0
      %5065 = vmatprep.subr.bf16.mxu0 0
      %5066 = vmatpush1.bf16.xpose.msra.mxu0 0
      %5067 = vmatprep.subr.bf16.mxu0 0
      %5068 = vmatpush1.bf16.xpose.msra.mxu0 0
      %5069 = vmatprep.subr.bf16.mxu0 0
      %5070 = vmatpush1.bf16.xpose.msra.mxu0 0
      %5071 = vmatprep.subr.bf16.mxu0 0
      %5072 = vmatpush1.bf16.xpose.msra.mxu0 0
      %5073 = vmatprep.mubr.bf16.mxu0 0
      %5074 = vmatmul.mubr.bf16.gmra.mrb[0].mxu0 %v5036
      %v5075 = vpop.f32.mrb[0].mxu0
      %v5076 = vadd.f32 %v4417, %v5075
      %v5077 = vpop.f32.mrb[0].mxu0
      %v5078 = vpop.f32.mrb[0].mxu0
      %v5079 = vadd.f32 %v4418, %v5078
      %v5080 = vpop.f32.mrb[0].mxu0
      %5081 = vdwg.mxu0
      %5082 = vrot.lane.b32.xlu0 %v550, 112
      %v5083 = vpop.permute.xlu0 %5082
      %5084 = vrot.lane.b32.xlu0 %v550, 80
      %v5085 = vpop.permute.xlu0 %5084
      %v5087 = vsel %vm558, %v5083, 0
      %v5090 = vsel %vm558, %v5085, 0
      %5092 = vmatprep.subr.bf16.mxu0 0
      %5093 = vmatpush1.bf16.xpose.msra.mxu0 %v5090
      %5094 = vmatprep.subr.bf16.mxu0 0
      %5095 = vmatpush1.bf16.xpose.msra.mxu0 0
      %5096 = vmatprep.subr.bf16.mxu0 0
      %5097 = vmatpush1.bf16.xpose.msra.mxu0 0
      %5098 = vmatprep.subr.bf16.mxu0 0
      %5099 = vmatpush1.bf16.xpose.msra.mxu0 0
      %5100 = vmatprep.subr.bf16.mxu0 0
      %5101 = vmatpush1.bf16.xpose.msra.mxu0 0
      %5102 = vmatprep.subr.bf16.mxu0 0
      %5103 = vmatpush1.bf16.xpose.msra.mxu0 0
      %5104 = vmatprep.subr.bf16.mxu0 0
      %5105 = vmatpush1.bf16.xpose.msra.mxu0 0
      %5106 = vmatprep.subr.bf16.mxu0 0
      %5107 = vmatpush1.bf16.xpose.msra.mxu0 0
      %5108 = vmatprep.subr.bf16.mxu0 0
      %5109 = vmatpush1.bf16.xpose.msra.mxu0 0
      %5110 = vmatprep.subr.bf16.mxu0 0
      %5111 = vmatpush1.bf16.xpose.msra.mxu0 0
      %5112 = vmatprep.subr.bf16.mxu0 0
      %5113 = vmatpush1.bf16.xpose.msra.mxu0 0
      %5114 = vmatprep.subr.bf16.mxu0 0
      %5115 = vmatpush1.bf16.xpose.msra.mxu0 0
      %5116 = vmatprep.subr.bf16.mxu0 0
      %5117 = vmatpush1.bf16.xpose.msra.mxu0 0
      %5118 = vmatprep.subr.bf16.mxu0 0
      %5119 = vmatpush1.bf16.xpose.msra.mxu0 0
      %5120 = vmatprep.subr.bf16.mxu0 0
      %5121 = vmatpush1.bf16.xpose.msra.mxu0 0
      %5122 = vmatprep.subr.bf16.mxu0 0
      %5123 = vmatpush1.bf16.xpose.msra.mxu0 0
      %5124 = vmatprep.mubr.bf16.mxu0 0
      %5125 = vmatmul.mubr.bf16.gmra.mrb[0].mxu0 %v5087
      %v5126 = vpop.f32.mrb[0].mxu0
      %v5127 = vadd.f32 %v4417, %v5126
      %v5128 = vpop.f32.mrb[0].mxu0
      %v5129 = vpop.f32.mrb[0].mxu0
      %v5130 = vadd.f32 %v4418, %v5129
      %v5131 = vpop.f32.mrb[0].mxu0
      %5132 = vdwg.mxu0
      %5133 = vrot.lane.b32.xlu0 %v551, 112
      %v5134 = vpop.permute.xlu0 %5133
      %5135 = vrot.lane.b32.xlu0 %v551, 80
      %v5136 = vpop.permute.xlu0 %5135
      %v5138 = vsel %vm558, %v5134, 0
      %v5141 = vsel %vm558, %v5136, 0
      %5143 = vmatprep.subr.bf16.mxu0 0
      %5144 = vmatpush1.bf16.xpose.msra.mxu0 %v5141
      %5145 = vmatprep.subr.bf16.mxu0 0
      %5146 = vmatpush1.bf16.xpose.msra.mxu0 0
      %5147 = vmatprep.subr.bf16.mxu0 0
      %5148 = vmatpush1.bf16.xpose.msra.mxu0 0
      %5149 = vmatprep.subr.bf16.mxu0 0
      %5150 = vmatpush1.bf16.xpose.msra.mxu0 0
      %5151 = vmatprep.subr.bf16.mxu0 0
      %5152 = vmatpush1.bf16.xpose.msra.mxu0 0
      %5153 = vmatprep.subr.bf16.mxu0 0
      %5154 = vmatpush1.bf16.xpose.msra.mxu0 0
      %5155 = vmatprep.subr.bf16.mxu0 0
      %5156 = vmatpush1.bf16.xpose.msra.mxu0 0
      %5157 = vmatprep.subr.bf16.mxu0 0
      %5158 = vmatpush1.bf16.xpose.msra.mxu0 0
      %5159 = vmatprep.subr.bf16.mxu0 0
      %5160 = vmatpush1.bf16.xpose.msra.mxu0 0
      %5161 = vmatprep.subr.bf16.mxu0 0
      %5162 = vmatpush1.bf16.xpose.msra.mxu0 0
      %5163 = vmatprep.subr.bf16.mxu0 0
      %5164 = vmatpush1.bf16.xpose.msra.mxu0 0
      %5165 = vmatprep.subr.bf16.mxu0 0
      %5166 = vmatpush1.bf16.xpose.msra.mxu0 0
      %5167 = vmatprep.subr.bf16.mxu0 0
      %5168 = vmatpush1.bf16.xpose.msra.mxu0 0
      %5169 = vmatprep.subr.bf16.mxu0 0
      %5170 = vmatpush1.bf16.xpose.msra.mxu0 0
      %5171 = vmatprep.subr.bf16.mxu0 0
      %5172 = vmatpush1.bf16.xpose.msra.mxu0 0
      %5173 = vmatprep.subr.bf16.mxu0 0
      %5174 = vmatpush1.bf16.xpose.msra.mxu0 0
      %5175 = vmatprep.mubr.bf16.mxu0 0
      %5176 = vmatmul.mubr.bf16.gmra.mrb[0].mxu0 %v5138
      %v5177 = vpop.f32.mrb[0].mxu0
      %v5178 = vadd.f32 %v4417, %v5177
      %v5179 = vpop.f32.mrb[0].mxu0
      %v5180 = vpop.f32.mrb[0].mxu0
      %v5181 = vadd.f32 %v4418, %v5180
      %v5182 = vpop.f32.mrb[0].mxu0
      %5183 = vdwg.mxu0
      %5184 = vrot.lane.b32.xlu0 %v552, 112
      %v5185 = vpop.permute.xlu0 %5184
      %5186 = vrot.lane.b32.xlu0 %v552, 80
      %v5187 = vpop.permute.xlu0 %5186
      %v5189 = vsel %vm558, %v5185, 0
      %v5192 = vsel %vm558, %v5187, 0
      %5194 = vmatprep.subr.bf16.mxu0 0
      %5195 = vmatpush1.bf16.xpose.msra.mxu0 %v5192
      %5196 = vmatprep.subr.bf16.mxu0 0
      %5197 = vmatpush1.bf16.xpose.msra.mxu0 0
      %5198 = vmatprep.subr.bf16.mxu0 0
      %5199 = vmatpush1.bf16.xpose.msra.mxu0 0
      %5200 = vmatprep.subr.bf16.mxu0 0
      %5201 = vmatpush1.bf16.xpose.msra.mxu0 0
      %5202 = vmatprep.subr.bf16.mxu0 0
      %5203 = vmatpush1.bf16.xpose.msra.mxu0 0
      %5204 = vmatprep.subr.bf16.mxu0 0
      %5205 = vmatpush1.bf16.xpose.msra.mxu0 0
      %5206 = vmatprep.subr.bf16.mxu0 0
      %5207 = vmatpush1.bf16.xpose.msra.mxu0 0
      %5208 = vmatprep.subr.bf16.mxu0 0
      %5209 = vmatpush1.bf16.xpose.msra.mxu0 0
      %5210 = vmatprep.subr.bf16.mxu0 0
      %5211 = vmatpush1.bf16.xpose.msra.mxu0 0
      %5212 = vmatprep.subr.bf16.mxu0 0
      %5213 = vmatpush1.bf16.xpose.msra.mxu0 0
      %5214 = vmatprep.subr.bf16.mxu0 0
      %5215 = vmatpush1.bf16.xpose.msra.mxu0 0
      %5216 = vmatprep.subr.bf16.mxu0 0
      %5217 = vmatpush1.bf16.xpose.msra.mxu0 0
      %5218 = vmatprep.subr.bf16.mxu0 0
      %5219 = vmatpush1.bf16.xpose.msra.mxu0 0
      %5220 = vmatprep.subr.bf16.mxu0 0
      %5221 = vmatpush1.bf16.xpose.msra.mxu0 0
      %5222 = vmatprep.subr.bf16.mxu0 0
      %5223 = vmatpush1.bf16.xpose.msra.mxu0 0
      %5224 = vmatprep.subr.bf16.mxu0 0
      %5225 = vmatpush1.bf16.xpose.msra.mxu0 0
      %5226 = vmatprep.mubr.bf16.mxu0 0
      %5227 = vmatmul.mubr.bf16.gmra.mrb[0].mxu0 %v5189
      %v5228 = vpop.f32.mrb[0].mxu0
      %v5229 = vadd.f32 %v4417, %v5228
      %v5230 = vpop.f32.mrb[0].mxu0
      %v5231 = vpop.f32.mrb[0].mxu0
      %v5232 = vadd.f32 %v4418, %v5231
      %v5233 = vpop.f32.mrb[0].mxu0
      %5234 = vdwg.mxu0
      %v5235 = vsel %vm1356, %v4464, -inf
      %5236 = vmax.xlane.f32.xlu0 %v5235
      %v5237 = vpop.xlane.xlu0 %5236
      %v5238 = vsel %vm1356, %v4467, -inf
      %5239 = vmax.xlane.f32.xlu0 %v5238
      %v5240 = vpop.xlane.xlu0 %5239
      %v5241 = vsel %vm1356, %v4515, -inf
      %5242 = vmax.xlane.f32.xlu0 %v5241
      %v5243 = vpop.xlane.xlu0 %5242
      %v5244 = vsel %vm1356, %v4518, -inf
      %5245 = vmax.xlane.f32.xlu0 %v5244
      %v5246 = vpop.xlane.xlu0 %5245
      %v5247 = vsel %vm1356, %v4566, -inf
      %5248 = vmax.xlane.f32.xlu0 %v5247
      %v5249 = vpop.xlane.xlu0 %5248
      %v5250 = vsel %vm1356, %v4569, -inf
      %5251 = vmax.xlane.f32.xlu0 %v5250
      %v5252 = vpop.xlane.xlu0 %5251
      %v5253 = vsel %vm1356, %v4617, -inf
      %5254 = vmax.xlane.f32.xlu0 %v5253
      %v5255 = vpop.xlane.xlu0 %5254
      %v5256 = vsel %vm1356, %v4620, -inf
      %5257 = vmax.xlane.f32.xlu0 %v5256
      %v5258 = vpop.xlane.xlu0 %5257
      %v5259 = vsel %vm1356, %v4668, -inf
      %5260 = vmax.xlane.f32.xlu0 %v5259
      %v5261 = vpop.xlane.xlu0 %5260
      %v5262 = vsel %vm1356, %v4671, -inf
      %5263 = vmax.xlane.f32.xlu0 %v5262
      %v5264 = vpop.xlane.xlu0 %5263
      %v5265 = vsel %vm1356, %v4719, -inf
      %5266 = vmax.xlane.f32.xlu0 %v5265
      %v5267 = vpop.xlane.xlu0 %5266
      %v5268 = vsel %vm1356, %v4722, -inf
      %5269 = vmax.xlane.f32.xlu0 %v5268
      %v5270 = vpop.xlane.xlu0 %5269
      %v5271 = vsel %vm1356, %v4770, -inf
      %5272 = vmax.xlane.f32.xlu0 %v5271
      %v5273 = vpop.xlane.xlu0 %5272
      %v5274 = vsel %vm1356, %v4773, -inf
      %5275 = vmax.xlane.f32.xlu0 %v5274
      %v5276 = vpop.xlane.xlu0 %5275
      %v5277 = vsel %vm1356, %v4821, -inf
      %5278 = vmax.xlane.f32.xlu0 %v5277
      %v5279 = vpop.xlane.xlu0 %5278
      %v5280 = vsel %vm1356, %v4824, -inf
      %5281 = vmax.xlane.f32.xlu0 %v5280
      %v5282 = vpop.xlane.xlu0 %5281
      %v5283 = vsel %vm1356, %v4872, -inf
      %5284 = vmax.xlane.f32.xlu0 %v5283
      %v5285 = vpop.xlane.xlu0 %5284
      %v5286 = vsel %vm1356, %v4875, -inf
      %5287 = vmax.xlane.f32.xlu0 %v5286
      %v5288 = vpop.xlane.xlu0 %5287
      %v5289 = vsel %vm1356, %v4923, -inf
      %5290 = vmax.xlane.f32.xlu0 %v5289
      %v5291 = vpop.xlane.xlu0 %5290
      %v5292 = vsel %vm1356, %v4926, -inf
      %5293 = vmax.xlane.f32.xlu0 %v5292
      %v5294 = vpop.xlane.xlu0 %5293
      %v5295 = vsel %vm1356, %v4974, -inf
      %5296 = vmax.xlane.f32.xlu0 %v5295
      %v5297 = vpop.xlane.xlu0 %5296
      %v5298 = vsel %vm1356, %v4977, -inf
      %5299 = vmax.xlane.f32.xlu0 %v5298
      %v5300 = vpop.xlane.xlu0 %5299
      %v5301 = vsel %vm1356, %v5025, -inf
      %5302 = vmax.xlane.f32.xlu0 %v5301
      %v5303 = vpop.xlane.xlu0 %5302
      %v5304 = vsel %vm1356, %v5028, -inf
      %5305 = vmax.xlane.f32.xlu0 %v5304
      %v5306 = vpop.xlane.xlu0 %5305
      %v5307 = vsel %vm1356, %v5076, -inf
      %5308 = vmax.xlane.f32.xlu0 %v5307
      %v5309 = vpop.xlane.xlu0 %5308
      %v5310 = vsel %vm1356, %v5079, -inf
      %5311 = vmax.xlane.f32.xlu0 %v5310
      %v5312 = vpop.xlane.xlu0 %5311
      %v5313 = vsel %vm1356, %v5127, -inf
      %5314 = vmax.xlane.f32.xlu0 %v5313
      %v5315 = vpop.xlane.xlu0 %5314
      %v5316 = vsel %vm1356, %v5130, -inf
      %5317 = vmax.xlane.f32.xlu0 %v5316
      %v5318 = vpop.xlane.xlu0 %5317
      %v5319 = vsel %vm1356, %v5178, -inf
      %5320 = vmax.xlane.f32.xlu0 %v5319
      %v5321 = vpop.xlane.xlu0 %5320
      %v5322 = vsel %vm1356, %v5181, -inf
      %5323 = vmax.xlane.f32.xlu0 %v5322
      %v5324 = vpop.xlane.xlu0 %5323
      %v5325 = vsel %vm1356, %v5229, -inf
      %5326 = vmax.xlane.f32.xlu0 %v5325
      %v5327 = vpop.xlane.xlu0 %5326
      %v5328 = vsel %vm1356, %v5232, -inf
      %5329 = vmax.xlane.f32.xlu0 %v5328
      %v5330 = vpop.xlane.xlu0 %5329
      %v5331 = vsub.f32 %v4464, %v5237
      %v5332 = vsub.f32 %v4467, %v5240
      %v5333 = vsub.f32 %v4515, %v5243
      %v5334 = vsub.f32 %v4518, %v5246
      %v5335 = vsub.f32 %v4566, %v5249
      %v5336 = vsub.f32 %v4569, %v5252
      %v5337 = vsub.f32 %v4617, %v5255
      %v5338 = vsub.f32 %v4620, %v5258
      %v5339 = vsub.f32 %v4668, %v5261
      %v5340 = vsub.f32 %v4671, %v5264
      %v5341 = vsub.f32 %v4719, %v5267
      %v5342 = vsub.f32 %v4722, %v5270
      %v5343 = vsub.f32 %v4770, %v5273
      %v5344 = vsub.f32 %v4773, %v5276
      %v5345 = vsub.f32 %v4821, %v5279
      %v5346 = vsub.f32 %v4824, %v5282
      %v5347 = vsub.f32 %v4872, %v5285
      %v5348 = vsub.f32 %v4875, %v5288
      %v5349 = vsub.f32 %v4923, %v5291
      %v5350 = vsub.f32 %v4926, %v5294
      %v5351 = vsub.f32 %v4974, %v5297
      %v5352 = vsub.f32 %v4977, %v5300
      %v5353 = vsub.f32 %v5025, %v5303
      %v5354 = vsub.f32 %v5028, %v5306
      %v5355 = vsub.f32 %v5076, %v5309
      %v5356 = vsub.f32 %v5079, %v5312
      %v5357 = vsub.f32 %v5127, %v5315
      %v5358 = vsub.f32 %v5130, %v5318
      %v5359 = vsub.f32 %v5178, %v5321
      %v5360 = vsub.f32 %v5181, %v5324
      %v5361 = vsub.f32 %v5229, %v5327
      %v5362 = vsub.f32 %v5232, %v5330
      %v5363 = vmul.f32 %v5331, 1.442695
      %v5364 = vpow.pop %v5363
      %v5365 = vmul.f32 %v5332, 1.442695
      %v5366 = vpow.pop %v5365
      %v5367 = vmul.f32 %v5333, 1.442695
      %v5368 = vpow.pop %v5367
      %v5369 = vmul.f32 %v5334, 1.442695
      %v5370 = vpow.pop %v5369
      %v5371 = vmul.f32 %v5335, 1.442695
      %v5372 = vpow.pop %v5371
      %v5373 = vmul.f32 %v5336, 1.442695
      %v5374 = vpow.pop %v5373
      %v5375 = vmul.f32 %v5337, 1.442695
      %v5376 = vpow.pop %v5375
      %v5377 = vmul.f32 %v5338, 1.442695
      %v5378 = vpow.pop %v5377
      %v5379 = vmul.f32 %v5339, 1.442695
      %v5380 = vpow.pop %v5379
      %v5381 = vmul.f32 %v5340, 1.442695
      %v5382 = vpow.pop %v5381
      %v5383 = vmul.f32 %v5341, 1.442695
      %v5384 = vpow.pop %v5383
      %v5385 = vmul.f32 %v5342, 1.442695
      %v5386 = vpow.pop %v5385
      %v5387 = vmul.f32 %v5343, 1.442695
      %v5388 = vpow.pop %v5387
      %v5389 = vmul.f32 %v5344, 1.442695
      %v5390 = vpow.pop %v5389
      %v5391 = vmul.f32 %v5345, 1.442695
      %v5392 = vpow.pop %v5391
      %v5393 = vmul.f32 %v5346, 1.442695
      %v5394 = vpow.pop %v5393
      %v5395 = vmul.f32 %v5347, 1.442695
      %v5396 = vpow.pop %v5395
      %v5397 = vmul.f32 %v5348, 1.442695
      %v5398 = vpow.pop %v5397
      %v5399 = vmul.f32 %v5349, 1.442695
      %v5400 = vpow.pop %v5399
      %v5401 = vmul.f32 %v5350, 1.442695
      %v5402 = vpow.pop %v5401
      %v5403 = vmul.f32 %v5351, 1.442695
      %v5404 = vpow.pop %v5403
      %v5405 = vmul.f32 %v5352, 1.442695
      %v5406 = vpow.pop %v5405
      %v5407 = vmul.f32 %v5353, 1.442695
      %v5408 = vpow.pop %v5407
      %v5409 = vmul.f32 %v5354, 1.442695
      %v5410 = vpow.pop %v5409
      %v5411 = vmul.f32 %v5355, 1.442695
      %v5412 = vpow.pop %v5411
      %v5413 = vmul.f32 %v5356, 1.442695
      %v5414 = vpow.pop %v5413
      %v5415 = vmul.f32 %v5357, 1.442695
      %v5416 = vpow.pop %v5415
      %v5417 = vmul.f32 %v5358, 1.442695
      %v5418 = vpow.pop %v5417
      %v5419 = vmul.f32 %v5359, 1.442695
      %v5420 = vpow.pop %v5419
      %v5421 = vmul.f32 %v5360, 1.442695
      %v5422 = vpow.pop %v5421
      %v5423 = vmul.f32 %v5361, 1.442695
      %v5424 = vpow.pop %v5423
      %v5425 = vmul.f32 %v5362, 1.442695
      %v5426 = vpow.pop %v5425
      %v5427 = vsel %vm1356, %v5364, 0.0
      %5428 = vadd.xlane.f32.xlu0 %v5427
      %v5429 = vpop.xlane.xlu0 %5428
      %v5430 = vsel %vm1356, %v5366, 0.0
      %5431 = vadd.xlane.f32.xlu0 %v5430
      %v5432 = vpop.xlane.xlu0 %5431
      %v5433 = vsel %vm1356, %v5368, 0.0
      %5434 = vadd.xlane.f32.xlu0 %v5433
      %v5435 = vpop.xlane.xlu0 %5434
      %v5436 = vsel %vm1356, %v5370, 0.0
      %5437 = vadd.xlane.f32.xlu0 %v5436
      %v5438 = vpop.xlane.xlu0 %5437
      %v5439 = vsel %vm1356, %v5372, 0.0
      %5440 = vadd.xlane.f32.xlu0 %v5439
      %v5441 = vpop.xlane.xlu0 %5440
      %v5442 = vsel %vm1356, %v5374, 0.0
      %5443 = vadd.xlane.f32.xlu0 %v5442
      %v5444 = vpop.xlane.xlu0 %5443
      %v5445 = vsel %vm1356, %v5376, 0.0
      %5446 = vadd.xlane.f32.xlu0 %v5445
      %v5447 = vpop.xlane.xlu0 %5446
      %v5448 = vsel %vm1356, %v5378, 0.0
      %5449 = vadd.xlane.f32.xlu0 %v5448
      %v5450 = vpop.xlane.xlu0 %5449
      %v5451 = vsel %vm1356, %v5380, 0.0
      %5452 = vadd.xlane.f32.xlu0 %v5451
      %v5453 = vpop.xlane.xlu0 %5452
      %v5454 = vsel %vm1356, %v5382, 0.0
      %5455 = vadd.xlane.f32.xlu0 %v5454
      %v5456 = vpop.xlane.xlu0 %5455
      %v5457 = vsel %vm1356, %v5384, 0.0
      %5458 = vadd.xlane.f32.xlu0 %v5457
      %v5459 = vpop.xlane.xlu0 %5458
      %v5460 = vsel %vm1356, %v5386, 0.0
      %5461 = vadd.xlane.f32.xlu0 %v5460
      %v5462 = vpop.xlane.xlu0 %5461
      %v5463 = vsel %vm1356, %v5388, 0.0
      %5464 = vadd.xlane.f32.xlu0 %v5463
      %v5465 = vpop.xlane.xlu0 %5464
      %v5466 = vsel %vm1356, %v5390, 0.0
      %5467 = vadd.xlane.f32.xlu0 %v5466
      %v5468 = vpop.xlane.xlu0 %5467
      %v5469 = vsel %vm1356, %v5392, 0.0
      %5470 = vadd.xlane.f32.xlu0 %v5469
      %v5471 = vpop.xlane.xlu0 %5470
      %v5472 = vsel %vm1356, %v5394, 0.0
      %5473 = vadd.xlane.f32.xlu0 %v5472
      %v5474 = vpop.xlane.xlu0 %5473
      %v5475 = vsel %vm1356, %v5396, 0.0
      %5476 = vadd.xlane.f32.xlu0 %v5475
      %v5477 = vpop.xlane.xlu0 %5476
      %v5478 = vsel %vm1356, %v5398, 0.0
      %5479 = vadd.xlane.f32.xlu0 %v5478
      %v5480 = vpop.xlane.xlu0 %5479
      %v5481 = vsel %vm1356, %v5400, 0.0
      %5482 = vadd.xlane.f32.xlu0 %v5481
      %v5483 = vpop.xlane.xlu0 %5482
      %v5484 = vsel %vm1356, %v5402, 0.0
      %5485 = vadd.xlane.f32.xlu0 %v5484
      %v5486 = vpop.xlane.xlu0 %5485
      %v5487 = vsel %vm1356, %v5404, 0.0
      %5488 = vadd.xlane.f32.xlu0 %v5487
      %v5489 = vpop.xlane.xlu0 %5488
      %v5490 = vsel %vm1356, %v5406, 0.0
      %5491 = vadd.xlane.f32.xlu0 %v5490
      %v5492 = vpop.xlane.xlu0 %5491
      %v5493 = vsel %vm1356, %v5408, 0.0
      %5494 = vadd.xlane.f32.xlu0 %v5493
      %v5495 = vpop.xlane.xlu0 %5494
      %v5496 = vsel %vm1356, %v5410, 0.0
      %5497 = vadd.xlane.f32.xlu0 %v5496
      %v5498 = vpop.xlane.xlu0 %5497
      %v5499 = vsel %vm1356, %v5412, 0.0
      %5500 = vadd.xlane.f32.xlu0 %v5499
      %v5501 = vpop.xlane.xlu0 %5500
      %v5502 = vsel %vm1356, %v5414, 0.0
      %5503 = vadd.xlane.f32.xlu0 %v5502
      %v5504 = vpop.xlane.xlu0 %5503
      %v5505 = vsel %vm1356, %v5416, 0.0
      %5506 = vadd.xlane.f32.xlu0 %v5505
      %v5507 = vpop.xlane.xlu0 %5506
      %v5508 = vsel %vm1356, %v5418, 0.0
      %5509 = vadd.xlane.f32.xlu0 %v5508
      %v5510 = vpop.xlane.xlu0 %5509
      %v5511 = vsel %vm1356, %v5420, 0.0
      %5512 = vadd.xlane.f32.xlu0 %v5511
      %v5513 = vpop.xlane.xlu0 %5512
      %v5514 = vsel %vm1356, %v5422, 0.0
      %5515 = vadd.xlane.f32.xlu0 %v5514
      %v5516 = vpop.xlane.xlu0 %5515
      %v5517 = vsel %vm1356, %v5424, 0.0
      %5518 = vadd.xlane.f32.xlu0 %v5517
      %v5519 = vpop.xlane.xlu0 %5518
      %v5520 = vsel %vm1356, %v5426, 0.0
      %5521 = vadd.xlane.f32.xlu0 %v5520
      %v5522 = vpop.xlane.xlu0 %5521
      %v5523 = vrcp.pop %v5429
      %v5524 = vrcp.pop %v5432
      %v5525 = vrcp.pop %v5435
      %v5526 = vrcp.pop %v5438
      %v5527 = vrcp.pop %v5441
      %v5528 = vrcp.pop %v5444
      %v5529 = vrcp.pop %v5447
      %v5530 = vrcp.pop %v5450
      %v5531 = vrcp.pop %v5453
      %v5532 = vrcp.pop %v5456
      %v5533 = vrcp.pop %v5459
      %v5534 = vrcp.pop %v5462
      %v5535 = vrcp.pop %v5465
      %v5536 = vrcp.pop %v5468
      %v5537 = vrcp.pop %v5471
      %v5538 = vrcp.pop %v5474
      %v5539 = vrcp.pop %v5477
      %v5540 = vrcp.pop %v5480
      %v5541 = vrcp.pop %v5483
      %v5542 = vrcp.pop %v5486
      %v5543 = vrcp.pop %v5489
      %v5544 = vrcp.pop %v5492
      %v5545 = vrcp.pop %v5495
      %v5546 = vrcp.pop %v5498
      %v5547 = vrcp.pop %v5501
      %v5548 = vrcp.pop %v5504
      %v5549 = vrcp.pop %v5507
      %v5550 = vrcp.pop %v5510
      %v5551 = vrcp.pop %v5513
      %v5552 = vrcp.pop %v5516
      %v5553 = vrcp.pop %v5519
      %v5554 = vrcp.pop %v5522
      %v5555 = vmul.f32 %v5364, %v5523
      %v5556 = vmul.f32 %v5366, %v5524
      %v5557 = vmul.f32 %v5368, %v5525
      %v5558 = vmul.f32 %v5370, %v5526
      %v5559 = vmul.f32 %v5372, %v5527
      %v5560 = vmul.f32 %v5374, %v5528
      %v5561 = vmul.f32 %v5376, %v5529
      %v5562 = vmul.f32 %v5378, %v5530
      %v5563 = vmul.f32 %v5380, %v5531
      %v5564 = vmul.f32 %v5382, %v5532
      %v5565 = vmul.f32 %v5384, %v5533
      %v5566 = vmul.f32 %v5386, %v5534
      %v5567 = vmul.f32 %v5388, %v5535
      %v5568 = vmul.f32 %v5390, %v5536
      %v5569 = vmul.f32 %v5392, %v5537
      %v5570 = vmul.f32 %v5394, %v5538
      %v5571 = vmul.f32 %v5396, %v5539
      %v5572 = vmul.f32 %v5398, %v5540
      %v5573 = vmul.f32 %v5400, %v5541
      %v5574 = vmul.f32 %v5402, %v5542
      %v5575 = vmul.f32 %v5404, %v5543
      %v5576 = vmul.f32 %v5406, %v5544
      %v5577 = vmul.f32 %v5408, %v5545
      %v5578 = vmul.f32 %v5410, %v5546
      %v5579 = vmul.f32 %v5412, %v5547
      %v5580 = vmul.f32 %v5414, %v5548
      %v5581 = vmul.f32 %v5416, %v5549
      %v5582 = vmul.f32 %v5418, %v5550
      %v5583 = vmul.f32 %v5420, %v5551
      %v5584 = vmul.f32 %v5422, %v5552
      %v5585 = vmul.f32 %v5424, %v5553
      %v5586 = vmul.f32 %v5426, %v5554
      %v5587 = vpack.c.bf16 %v5556, %v5555
      %v5588 = vpack.c.bf16 %v5558, %v5557
      %v5589 = vpack.c.bf16 %v5560, %v5559
      %v5590 = vpack.c.bf16 %v5562, %v5561
      %v5591 = vpack.c.bf16 %v5564, %v5563
      %v5592 = vpack.c.bf16 %v5566, %v5565
      %v5593 = vpack.c.bf16 %v5568, %v5567
      %v5594 = vpack.c.bf16 %v5570, %v5569
      %v5595 = vpack.c.bf16 %v5572, %v5571
      %v5596 = vpack.c.bf16 %v5574, %v5573
      %v5597 = vpack.c.bf16 %v5576, %v5575
      %v5598 = vpack.c.bf16 %v5578, %v5577
      %v5599 = vpack.c.bf16 %v5580, %v5579
      %v5600 = vpack.c.bf16 %v5582, %v5581
      %v5601 = vpack.c.bf16 %v5584, %v5583
      %v5602 = vpack.c.bf16 %v5586, %v5585
      %5603 = vrot.lane.b32.xlu0 %v537, 48
      %v5604 = vpop.permute.xlu0 %5603
      %v5607 = vsel %vm1356, %v5587, 0
      %5609 = vmatprep.subr.bf16.mxu0 0
      %5610 = vmatpush1.bf16.msra.mxu0 %v5604
      %5611 = vmatprep.subr.bf16.mxu0 0
      %5612 = vmatpush1.bf16.msra.mxu0 0
      %5613 = vmatprep.subr.bf16.mxu0 0
      %5614 = vmatpush1.bf16.msra.mxu0 0
      %5615 = vmatprep.subr.bf16.mxu0 0
      %5616 = vmatpush1.bf16.msra.mxu0 0
      %5617 = vmatprep.subr.bf16.mxu0 0
      %5618 = vmatpush1.bf16.msra.mxu0 0
      %5619 = vmatprep.subr.bf16.mxu0 0
      %5620 = vmatpush1.bf16.msra.mxu0 0
      %5621 = vmatprep.subr.bf16.mxu0 0
      %5622 = vmatpush1.bf16.msra.mxu0 0
      %5623 = vmatprep.subr.bf16.mxu0 0
      %5624 = vmatpush1.bf16.msra.mxu0 0
      %5625 = vmatprep.subr.bf16.mxu0 0
      %5626 = vmatpush1.bf16.msra.mxu0 0
      %5627 = vmatprep.subr.bf16.mxu0 0
      %5628 = vmatpush1.bf16.msra.mxu0 0
      %5629 = vmatprep.subr.bf16.mxu0 0
      %5630 = vmatpush1.bf16.msra.mxu0 0
      %5631 = vmatprep.subr.bf16.mxu0 0
      %5632 = vmatpush1.bf16.msra.mxu0 0
      %5633 = vmatprep.subr.bf16.mxu0 0
      %5634 = vmatpush1.bf16.msra.mxu0 0
      %5635 = vmatprep.subr.bf16.mxu0 0
      %5636 = vmatpush1.bf16.msra.mxu0 0
      %5637 = vmatprep.subr.bf16.mxu0 0
      %5638 = vmatpush1.bf16.msra.mxu0 0
      %5639 = vmatprep.subr.bf16.mxu0 0
      %5640 = vmatpush1.bf16.msra.mxu0 0
      %5641 = vmatprep.mubr.bf16.mxu0 0
      %5642 = vmatmul.mubr.bf16.gmra.mrb[0].mxu0 %v5607
      %v5643 = vpop.f32.mrb[0].mxu0
      %v5644 = vadd.f32 0.0, %v5643
      %v5645 = vpop.f32.mrb[0].mxu0
      %v5646 = vpop.f32.mrb[0].mxu0
      %v5647 = vadd.f32 0.0, %v5646
      %v5648 = vpop.f32.mrb[0].mxu0
      %5649 = vdwg.mxu0
      %5650 = vrot.lane.b32.xlu0 %v538, 48
      %v5651 = vpop.permute.xlu0 %5650
      %v5654 = vsel %vm1356, %v5588, 0
      %5656 = vmatprep.subr.bf16.mxu0 0
      %5657 = vmatpush1.bf16.msra.mxu0 %v5651
      %5658 = vmatprep.subr.bf16.mxu0 0
      %5659 = vmatpush1.bf16.msra.mxu0 0
      %5660 = vmatprep.subr.bf16.mxu0 0
      %5661 = vmatpush1.bf16.msra.mxu0 0
      %5662 = vmatprep.subr.bf16.mxu0 0
      %5663 = vmatpush1.bf16.msra.mxu0 0
      %5664 = vmatprep.subr.bf16.mxu0 0
      %5665 = vmatpush1.bf16.msra.mxu0 0
      %5666 = vmatprep.subr.bf16.mxu0 0
      %5667 = vmatpush1.bf16.msra.mxu0 0
      %5668 = vmatprep.subr.bf16.mxu0 0
      %5669 = vmatpush1.bf16.msra.mxu0 0
      %5670 = vmatprep.subr.bf16.mxu0 0
      %5671 = vmatpush1.bf16.msra.mxu0 0
      %5672 = vmatprep.subr.bf16.mxu0 0
      %5673 = vmatpush1.bf16.msra.mxu0 0
      %5674 = vmatprep.subr.bf16.mxu0 0
      %5675 = vmatpush1.bf16.msra.mxu0 0
      %5676 = vmatprep.subr.bf16.mxu0 0
      %5677 = vmatpush1.bf16.msra.mxu0 0
      %5678 = vmatprep.subr.bf16.mxu0 0
      %5679 = vmatpush1.bf16.msra.mxu0 0
      %5680 = vmatprep.subr.bf16.mxu0 0
      %5681 = vmatpush1.bf16.msra.mxu0 0
      %5682 = vmatprep.subr.bf16.mxu0 0
      %5683 = vmatpush1.bf16.msra.mxu0 0
      %5684 = vmatprep.subr.bf16.mxu0 0
      %5685 = vmatpush1.bf16.msra.mxu0 0
      %5686 = vmatprep.subr.bf16.mxu0 0
      %5687 = vmatpush1.bf16.msra.mxu0 0
      %5688 = vmatprep.mubr.bf16.mxu0 0
      %5689 = vmatmul.mubr.bf16.gmra.mrb[0].mxu0 %v5654
      %v5690 = vpop.f32.mrb[0].mxu0
      %v5691 = vadd.f32 0.0, %v5690
      %v5692 = vpop.f32.mrb[0].mxu0
      %v5693 = vpop.f32.mrb[0].mxu0
      %v5694 = vadd.f32 0.0, %v5693
      %v5695 = vpop.f32.mrb[0].mxu0
      %5696 = vdwg.mxu0
      %5697 = vrot.lane.b32.xlu0 %v539, 48
      %v5698 = vpop.permute.xlu0 %5697
      %v5701 = vsel %vm1356, %v5589, 0
      %5703 = vmatprep.subr.bf16.mxu0 0
      %5704 = vmatpush1.bf16.msra.mxu0 %v5698
      %5705 = vmatprep.subr.bf16.mxu0 0
      %5706 = vmatpush1.bf16.msra.mxu0 0
      %5707 = vmatprep.subr.bf16.mxu0 0
      %5708 = vmatpush1.bf16.msra.mxu0 0
      %5709 = vmatprep.subr.bf16.mxu0 0
      %5710 = vmatpush1.bf16.msra.mxu0 0
      %5711 = vmatprep.subr.bf16.mxu0 0
      %5712 = vmatpush1.bf16.msra.mxu0 0
      %5713 = vmatprep.subr.bf16.mxu0 0
      %5714 = vmatpush1.bf16.msra.mxu0 0
      %5715 = vmatprep.subr.bf16.mxu0 0
      %5716 = vmatpush1.bf16.msra.mxu0 0
      %5717 = vmatprep.subr.bf16.mxu0 0
      %5718 = vmatpush1.bf16.msra.mxu0 0
      %5719 = vmatprep.subr.bf16.mxu0 0
      %5720 = vmatpush1.bf16.msra.mxu0 0
      %5721 = vmatprep.subr.bf16.mxu0 0
      %5722 = vmatpush1.bf16.msra.mxu0 0
      %5723 = vmatprep.subr.bf16.mxu0 0
      %5724 = vmatpush1.bf16.msra.mxu0 0
      %5725 = vmatprep.subr.bf16.mxu0 0
      %5726 = vmatpush1.bf16.msra.mxu0 0
      %5727 = vmatprep.subr.bf16.mxu0 0
      %5728 = vmatpush1.bf16.msra.mxu0 0
      %5729 = vmatprep.subr.bf16.mxu0 0
      %5730 = vmatpush1.bf16.msra.mxu0 0
      %5731 = vmatprep.subr.bf16.mxu0 0
      %5732 = vmatpush1.bf16.msra.mxu0 0
      %5733 = vmatprep.subr.bf16.mxu0 0
      %5734 = vmatpush1.bf16.msra.mxu0 0
      %5735 = vmatprep.mubr.bf16.mxu0 0
      %5736 = vmatmul.mubr.bf16.gmra.mrb[0].mxu0 %v5701
      %v5737 = vpop.f32.mrb[0].mxu0
      %v5738 = vadd.f32 0.0, %v5737
      %v5739 = vpop.f32.mrb[0].mxu0
      %v5740 = vpop.f32.mrb[0].mxu0
      %v5741 = vadd.f32 0.0, %v5740
      %v5742 = vpop.f32.mrb[0].mxu0
      %5743 = vdwg.mxu0
      %5744 = vrot.lane.b32.xlu0 %v540, 48
      %v5745 = vpop.permute.xlu0 %5744
      %v5748 = vsel %vm1356, %v5590, 0
      %5750 = vmatprep.subr.bf16.mxu0 0
      %5751 = vmatpush1.bf16.msra.mxu0 %v5745
      %5752 = vmatprep.subr.bf16.mxu0 0
      %5753 = vmatpush1.bf16.msra.mxu0 0
      %5754 = vmatprep.subr.bf16.mxu0 0
      %5755 = vmatpush1.bf16.msra.mxu0 0
      %5756 = vmatprep.subr.bf16.mxu0 0
      %5757 = vmatpush1.bf16.msra.mxu0 0
      %5758 = vmatprep.subr.bf16.mxu0 0
      %5759 = vmatpush1.bf16.msra.mxu0 0
      %5760 = vmatprep.subr.bf16.mxu0 0
      %5761 = vmatpush1.bf16.msra.mxu0 0
      %5762 = vmatprep.subr.bf16.mxu0 0
      %5763 = vmatpush1.bf16.msra.mxu0 0
      %5764 = vmatprep.subr.bf16.mxu0 0
      %5765 = vmatpush1.bf16.msra.mxu0 0
      %5766 = vmatprep.subr.bf16.mxu0 0
      %5767 = vmatpush1.bf16.msra.mxu0 0
      %5768 = vmatprep.subr.bf16.mxu0 0
      %5769 = vmatpush1.bf16.msra.mxu0 0
      %5770 = vmatprep.subr.bf16.mxu0 0
      %5771 = vmatpush1.bf16.msra.mxu0 0
      %5772 = vmatprep.subr.bf16.mxu0 0
      %5773 = vmatpush1.bf16.msra.mxu0 0
      %5774 = vmatprep.subr.bf16.mxu0 0
      %5775 = vmatpush1.bf16.msra.mxu0 0
      %5776 = vmatprep.subr.bf16.mxu0 0
      %5777 = vmatpush1.bf16.msra.mxu0 0
      %5778 = vmatprep.subr.bf16.mxu0 0
      %5779 = vmatpush1.bf16.msra.mxu0 0
      %5780 = vmatprep.subr.bf16.mxu0 0
      %5781 = vmatpush1.bf16.msra.mxu0 0
      %5782 = vmatprep.mubr.bf16.mxu0 0
      %5783 = vmatmul.mubr.bf16.gmra.mrb[0].mxu0 %v5748
      %v5784 = vpop.f32.mrb[0].mxu0
      %v5785 = vadd.f32 0.0, %v5784
      %v5786 = vpop.f32.mrb[0].mxu0
      %v5787 = vpop.f32.mrb[0].mxu0
      %v5788 = vadd.f32 0.0, %v5787
      %v5789 = vpop.f32.mrb[0].mxu0
      %5790 = vdwg.mxu0
      %5791 = vrot.lane.b32.xlu0 %v541, 48
      %v5792 = vpop.permute.xlu0 %5791
      %v5795 = vsel %vm1356, %v5591, 0
      %5797 = vmatprep.subr.bf16.mxu0 0
      %5798 = vmatpush1.bf16.msra.mxu0 %v5792
      %5799 = vmatprep.subr.bf16.mxu0 0
      %5800 = vmatpush1.bf16.msra.mxu0 0
      %5801 = vmatprep.subr.bf16.mxu0 0
      %5802 = vmatpush1.bf16.msra.mxu0 0
      %5803 = vmatprep.subr.bf16.mxu0 0
      %5804 = vmatpush1.bf16.msra.mxu0 0
      %5805 = vmatprep.subr.bf16.mxu0 0
      %5806 = vmatpush1.bf16.msra.mxu0 0
      %5807 = vmatprep.subr.bf16.mxu0 0
      %5808 = vmatpush1.bf16.msra.mxu0 0
      %5809 = vmatprep.subr.bf16.mxu0 0
      %5810 = vmatpush1.bf16.msra.mxu0 0
      %5811 = vmatprep.subr.bf16.mxu0 0
      %5812 = vmatpush1.bf16.msra.mxu0 0
      %5813 = vmatprep.subr.bf16.mxu0 0
      %5814 = vmatpush1.bf16.msra.mxu0 0
      %5815 = vmatprep.subr.bf16.mxu0 0
      %5816 = vmatpush1.bf16.msra.mxu0 0
      %5817 = vmatprep.subr.bf16.mxu0 0
      %5818 = vmatpush1.bf16.msra.mxu0 0
      %5819 = vmatprep.subr.bf16.mxu0 0
      %5820 = vmatpush1.bf16.msra.mxu0 0
      %5821 = vmatprep.subr.bf16.mxu0 0
      %5822 = vmatpush1.bf16.msra.mxu0 0
      %5823 = vmatprep.subr.bf16.mxu0 0
      %5824 = vmatpush1.bf16.msra.mxu0 0
      %5825 = vmatprep.subr.bf16.mxu0 0
      %5826 = vmatpush1.bf16.msra.mxu0 0
      %5827 = vmatprep.subr.bf16.mxu0 0
      %5828 = vmatpush1.bf16.msra.mxu0 0
      %5829 = vmatprep.mubr.bf16.mxu0 0
      %5830 = vmatmul.mubr.bf16.gmra.mrb[0].mxu0 %v5795
      %v5831 = vpop.f32.mrb[0].mxu0
      %v5832 = vadd.f32 0.0, %v5831
      %v5833 = vpop.f32.mrb[0].mxu0
      %v5834 = vpop.f32.mrb[0].mxu0
      %v5835 = vadd.f32 0.0, %v5834
      %v5836 = vpop.f32.mrb[0].mxu0
      %5837 = vdwg.mxu0
      %5838 = vrot.lane.b32.xlu0 %v542, 48
      %v5839 = vpop.permute.xlu0 %5838
      %v5842 = vsel %vm1356, %v5592, 0
      %5844 = vmatprep.subr.bf16.mxu0 0
      %5845 = vmatpush1.bf16.msra.mxu0 %v5839
      %5846 = vmatprep.subr.bf16.mxu0 0
      %5847 = vmatpush1.bf16.msra.mxu0 0
      %5848 = vmatprep.subr.bf16.mxu0 0
      %5849 = vmatpush1.bf16.msra.mxu0 0
      %5850 = vmatprep.subr.bf16.mxu0 0
      %5851 = vmatpush1.bf16.msra.mxu0 0
      %5852 = vmatprep.subr.bf16.mxu0 0
      %5853 = vmatpush1.bf16.msra.mxu0 0
      %5854 = vmatprep.subr.bf16.mxu0 0
      %5855 = vmatpush1.bf16.msra.mxu0 0
      %5856 = vmatprep.subr.bf16.mxu0 0
      %5857 = vmatpush1.bf16.msra.mxu0 0
      %5858 = vmatprep.subr.bf16.mxu0 0
      %5859 = vmatpush1.bf16.msra.mxu0 0
      %5860 = vmatprep.subr.bf16.mxu0 0
      %5861 = vmatpush1.bf16.msra.mxu0 0
      %5862 = vmatprep.subr.bf16.mxu0 0
      %5863 = vmatpush1.bf16.msra.mxu0 0
      %5864 = vmatprep.subr.bf16.mxu0 0
      %5865 = vmatpush1.bf16.msra.mxu0 0
      %5866 = vmatprep.subr.bf16.mxu0 0
      %5867 = vmatpush1.bf16.msra.mxu0 0
      %5868 = vmatprep.subr.bf16.mxu0 0
      %5869 = vmatpush1.bf16.msra.mxu0 0
      %5870 = vmatprep.subr.bf16.mxu0 0
      %5871 = vmatpush1.bf16.msra.mxu0 0
      %5872 = vmatprep.subr.bf16.mxu0 0
      %5873 = vmatpush1.bf16.msra.mxu0 0
      %5874 = vmatprep.subr.bf16.mxu0 0
      %5875 = vmatpush1.bf16.msra.mxu0 0
      %5876 = vmatprep.mubr.bf16.mxu0 0
      %5877 = vmatmul.mubr.bf16.gmra.mrb[0].mxu0 %v5842
      %v5878 = vpop.f32.mrb[0].mxu0
      %v5879 = vadd.f32 0.0, %v5878
      %v5880 = vpop.f32.mrb[0].mxu0
      %v5881 = vpop.f32.mrb[0].mxu0
      %v5882 = vadd.f32 0.0, %v5881
      %v5883 = vpop.f32.mrb[0].mxu0
      %5884 = vdwg.mxu0
      %5885 = vrot.lane.b32.xlu0 %v543, 48
      %v5886 = vpop.permute.xlu0 %5885
      %v5889 = vsel %vm1356, %v5593, 0
      %5891 = vmatprep.subr.bf16.mxu0 0
      %5892 = vmatpush1.bf16.msra.mxu0 %v5886
      %5893 = vmatprep.subr.bf16.mxu0 0
      %5894 = vmatpush1.bf16.msra.mxu0 0
      %5895 = vmatprep.subr.bf16.mxu0 0
      %5896 = vmatpush1.bf16.msra.mxu0 0
      %5897 = vmatprep.subr.bf16.mxu0 0
      %5898 = vmatpush1.bf16.msra.mxu0 0
      %5899 = vmatprep.subr.bf16.mxu0 0
      %5900 = vmatpush1.bf16.msra.mxu0 0
      %5901 = vmatprep.subr.bf16.mxu0 0
      %5902 = vmatpush1.bf16.msra.mxu0 0
      %5903 = vmatprep.subr.bf16.mxu0 0
      %5904 = vmatpush1.bf16.msra.mxu0 0
      %5905 = vmatprep.subr.bf16.mxu0 0
      %5906 = vmatpush1.bf16.msra.mxu0 0
      %5907 = vmatprep.subr.bf16.mxu0 0
      %5908 = vmatpush1.bf16.msra.mxu0 0
      %5909 = vmatprep.subr.bf16.mxu0 0
      %5910 = vmatpush1.bf16.msra.mxu0 0
      %5911 = vmatprep.subr.bf16.mxu0 0
      %5912 = vmatpush1.bf16.msra.mxu0 0
      %5913 = vmatprep.subr.bf16.mxu0 0
      %5914 = vmatpush1.bf16.msra.mxu0 0
      %5915 = vmatprep.subr.bf16.mxu0 0
      %5916 = vmatpush1.bf16.msra.mxu0 0
      %5917 = vmatprep.subr.bf16.mxu0 0
      %5918 = vmatpush1.bf16.msra.mxu0 0
      %5919 = vmatprep.subr.bf16.mxu0 0
      %5920 = vmatpush1.bf16.msra.mxu0 0
      %5921 = vmatprep.subr.bf16.mxu0 0
      %5922 = vmatpush1.bf16.msra.mxu0 0
      %5923 = vmatprep.mubr.bf16.mxu0 0
      %5924 = vmatmul.mubr.bf16.gmra.mrb[0].mxu0 %v5889
      %v5925 = vpop.f32.mrb[0].mxu0
      %v5926 = vadd.f32 0.0, %v5925
      %v5927 = vpop.f32.mrb[0].mxu0
      %v5928 = vpop.f32.mrb[0].mxu0
      %v5929 = vadd.f32 0.0, %v5928
      %v5930 = vpop.f32.mrb[0].mxu0
      %5931 = vdwg.mxu0
      %5932 = vrot.lane.b32.xlu0 %v544, 48
      %v5933 = vpop.permute.xlu0 %5932
      %v5936 = vsel %vm1356, %v5594, 0
      %5938 = vmatprep.subr.bf16.mxu0 0
      %5939 = vmatpush1.bf16.msra.mxu0 %v5933
      %5940 = vmatprep.subr.bf16.mxu0 0
      %5941 = vmatpush1.bf16.msra.mxu0 0
      %5942 = vmatprep.subr.bf16.mxu0 0
      %5943 = vmatpush1.bf16.msra.mxu0 0
      %5944 = vmatprep.subr.bf16.mxu0 0
      %5945 = vmatpush1.bf16.msra.mxu0 0
      %5946 = vmatprep.subr.bf16.mxu0 0
      %5947 = vmatpush1.bf16.msra.mxu0 0
      %5948 = vmatprep.subr.bf16.mxu0 0
      %5949 = vmatpush1.bf16.msra.mxu0 0
      %5950 = vmatprep.subr.bf16.mxu0 0
      %5951 = vmatpush1.bf16.msra.mxu0 0
      %5952 = vmatprep.subr.bf16.mxu0 0
      %5953 = vmatpush1.bf16.msra.mxu0 0
      %5954 = vmatprep.subr.bf16.mxu0 0
      %5955 = vmatpush1.bf16.msra.mxu0 0
      %5956 = vmatprep.subr.bf16.mxu0 0
      %5957 = vmatpush1.bf16.msra.mxu0 0
      %5958 = vmatprep.subr.bf16.mxu0 0
      %5959 = vmatpush1.bf16.msra.mxu0 0
      %5960 = vmatprep.subr.bf16.mxu0 0
      %5961 = vmatpush1.bf16.msra.mxu0 0
      %5962 = vmatprep.subr.bf16.mxu0 0
      %5963 = vmatpush1.bf16.msra.mxu0 0
      %5964 = vmatprep.subr.bf16.mxu0 0
      %5965 = vmatpush1.bf16.msra.mxu0 0
      %5966 = vmatprep.subr.bf16.mxu0 0
      %5967 = vmatpush1.bf16.msra.mxu0 0
      %5968 = vmatprep.subr.bf16.mxu0 0
      %5969 = vmatpush1.bf16.msra.mxu0 0
      %5970 = vmatprep.mubr.bf16.mxu0 0
      %5971 = vmatmul.mubr.bf16.gmra.mrb[0].mxu0 %v5936
      %v5972 = vpop.f32.mrb[0].mxu0
      %v5973 = vadd.f32 0.0, %v5972
      %v5974 = vpop.f32.mrb[0].mxu0
      %v5975 = vpop.f32.mrb[0].mxu0
      %v5976 = vadd.f32 0.0, %v5975
      %v5977 = vpop.f32.mrb[0].mxu0
      %5978 = vdwg.mxu0
      %5979 = vrot.lane.b32.xlu0 %v545, 48
      %v5980 = vpop.permute.xlu0 %5979
      %v5983 = vsel %vm1356, %v5595, 0
      %5985 = vmatprep.subr.bf16.mxu0 0
      %5986 = vmatpush1.bf16.msra.mxu0 %v5980
      %5987 = vmatprep.subr.bf16.mxu0 0
      %5988 = vmatpush1.bf16.msra.mxu0 0
      %5989 = vmatprep.subr.bf16.mxu0 0
      %5990 = vmatpush1.bf16.msra.mxu0 0
      %5991 = vmatprep.subr.bf16.mxu0 0
      %5992 = vmatpush1.bf16.msra.mxu0 0
      %5993 = vmatprep.subr.bf16.mxu0 0
      %5994 = vmatpush1.bf16.msra.mxu0 0
      %5995 = vmatprep.subr.bf16.mxu0 0
      %5996 = vmatpush1.bf16.msra.mxu0 0
      %5997 = vmatprep.subr.bf16.mxu0 0
      %5998 = vmatpush1.bf16.msra.mxu0 0
      %5999 = vmatprep.subr.bf16.mxu0 0
      %6000 = vmatpush1.bf16.msra.mxu0 0
      %6001 = vmatprep.subr.bf16.mxu0 0
      %6002 = vmatpush1.bf16.msra.mxu0 0
      %6003 = vmatprep.subr.bf16.mxu0 0
      %6004 = vmatpush1.bf16.msra.mxu0 0
      %6005 = vmatprep.subr.bf16.mxu0 0
      %6006 = vmatpush1.bf16.msra.mxu0 0
      %6007 = vmatprep.subr.bf16.mxu0 0
      %6008 = vmatpush1.bf16.msra.mxu0 0
      %6009 = vmatprep.subr.bf16.mxu0 0
      %6010 = vmatpush1.bf16.msra.mxu0 0
      %6011 = vmatprep.subr.bf16.mxu0 0
      %6012 = vmatpush1.bf16.msra.mxu0 0
      %6013 = vmatprep.subr.bf16.mxu0 0
      %6014 = vmatpush1.bf16.msra.mxu0 0
      %6015 = vmatprep.subr.bf16.mxu0 0
      %6016 = vmatpush1.bf16.msra.mxu0 0
      %6017 = vmatprep.mubr.bf16.mxu0 0
      %6018 = vmatmul.mubr.bf16.gmra.mrb[0].mxu0 %v5983
      %v6019 = vpop.f32.mrb[0].mxu0
      %v6020 = vadd.f32 0.0, %v6019
      %v6021 = vpop.f32.mrb[0].mxu0
      %v6022 = vpop.f32.mrb[0].mxu0
      %v6023 = vadd.f32 0.0, %v6022
      %v6024 = vpop.f32.mrb[0].mxu0
      %6025 = vdwg.mxu0
      %6026 = vrot.lane.b32.xlu0 %v546, 48
      %v6027 = vpop.permute.xlu0 %6026
      %v6030 = vsel %vm1356, %v5596, 0
      %6032 = vmatprep.subr.bf16.mxu0 0
      %6033 = vmatpush1.bf16.msra.mxu0 %v6027
      %6034 = vmatprep.subr.bf16.mxu0 0
      %6035 = vmatpush1.bf16.msra.mxu0 0
      %6036 = vmatprep.subr.bf16.mxu0 0
      %6037 = vmatpush1.bf16.msra.mxu0 0
      %6038 = vmatprep.subr.bf16.mxu0 0
      %6039 = vmatpush1.bf16.msra.mxu0 0
      %6040 = vmatprep.subr.bf16.mxu0 0
      %6041 = vmatpush1.bf16.msra.mxu0 0
      %6042 = vmatprep.subr.bf16.mxu0 0
      %6043 = vmatpush1.bf16.msra.mxu0 0
      %6044 = vmatprep.subr.bf16.mxu0 0
      %6045 = vmatpush1.bf16.msra.mxu0 0
      %6046 = vmatprep.subr.bf16.mxu0 0
      %6047 = vmatpush1.bf16.msra.mxu0 0
      %6048 = vmatprep.subr.bf16.mxu0 0
      %6049 = vmatpush1.bf16.msra.mxu0 0
      %6050 = vmatprep.subr.bf16.mxu0 0
      %6051 = vmatpush1.bf16.msra.mxu0 0
      %6052 = vmatprep.subr.bf16.mxu0 0
      %6053 = vmatpush1.bf16.msra.mxu0 0
      %6054 = vmatprep.subr.bf16.mxu0 0
      %6055 = vmatpush1.bf16.msra.mxu0 0
      %6056 = vmatprep.subr.bf16.mxu0 0
      %6057 = vmatpush1.bf16.msra.mxu0 0
      %6058 = vmatprep.subr.bf16.mxu0 0
      %6059 = vmatpush1.bf16.msra.mxu0 0
      %6060 = vmatprep.subr.bf16.mxu0 0
      %6061 = vmatpush1.bf16.msra.mxu0 0
      %6062 = vmatprep.subr.bf16.mxu0 0
      %6063 = vmatpush1.bf16.msra.mxu0 0
      %6064 = vmatprep.mubr.bf16.mxu0 0
      %6065 = vmatmul.mubr.bf16.gmra.mrb[0].mxu0 %v6030
      %v6066 = vpop.f32.mrb[0].mxu0
      %v6067 = vadd.f32 0.0, %v6066
      %v6068 = vpop.f32.mrb[0].mxu0
      %v6069 = vpop.f32.mrb[0].mxu0
      %v6070 = vadd.f32 0.0, %v6069
      %v6071 = vpop.f32.mrb[0].mxu0
      %6072 = vdwg.mxu0
      %6073 = vrot.lane.b32.xlu0 %v547, 48
      %v6074 = vpop.permute.xlu0 %6073
      %v6077 = vsel %vm1356, %v5597, 0
      %6079 = vmatprep.subr.bf16.mxu0 0
      %6080 = vmatpush1.bf16.msra.mxu0 %v6074
      %6081 = vmatprep.subr.bf16.mxu0 0
      %6082 = vmatpush1.bf16.msra.mxu0 0
      %6083 = vmatprep.subr.bf16.mxu0 0
      %6084 = vmatpush1.bf16.msra.mxu0 0
      %6085 = vmatprep.subr.bf16.mxu0 0
      %6086 = vmatpush1.bf16.msra.mxu0 0
      %6087 = vmatprep.subr.bf16.mxu0 0
      %6088 = vmatpush1.bf16.msra.mxu0 0
      %6089 = vmatprep.subr.bf16.mxu0 0
      %6090 = vmatpush1.bf16.msra.mxu0 0
      %6091 = vmatprep.subr.bf16.mxu0 0
      %6092 = vmatpush1.bf16.msra.mxu0 0
      %6093 = vmatprep.subr.bf16.mxu0 0
      %6094 = vmatpush1.bf16.msra.mxu0 0
      %6095 = vmatprep.subr.bf16.mxu0 0
      %6096 = vmatpush1.bf16.msra.mxu0 0
      %6097 = vmatprep.subr.bf16.mxu0 0
      %6098 = vmatpush1.bf16.msra.mxu0 0
      %6099 = vmatprep.subr.bf16.mxu0 0
      %6100 = vmatpush1.bf16.msra.mxu0 0
      %6101 = vmatprep.subr.bf16.mxu0 0
      %6102 = vmatpush1.bf16.msra.mxu0 0
      %6103 = vmatprep.subr.bf16.mxu0 0
      %6104 = vmatpush1.bf16.msra.mxu0 0
      %6105 = vmatprep.subr.bf16.mxu0 0
      %6106 = vmatpush1.bf16.msra.mxu0 0
      %6107 = vmatprep.subr.bf16.mxu0 0
      %6108 = vmatpush1.bf16.msra.mxu0 0
      %6109 = vmatprep.subr.bf16.mxu0 0
      %6110 = vmatpush1.bf16.msra.mxu0 0
      %6111 = vmatprep.mubr.bf16.mxu0 0
      %6112 = vmatmul.mubr.bf16.gmra.mrb[0].mxu0 %v6077
      %v6113 = vpop.f32.mrb[0].mxu0
      %v6114 = vadd.f32 0.0, %v6113
      %v6115 = vpop.f32.mrb[0].mxu0
      %v6116 = vpop.f32.mrb[0].mxu0
      %v6117 = vadd.f32 0.0, %v6116
      %v6118 = vpop.f32.mrb[0].mxu0
      %6119 = vdwg.mxu0
      %6120 = vrot.lane.b32.xlu0 %v548, 48
      %v6121 = vpop.permute.xlu0 %6120
      %v6124 = vsel %vm1356, %v5598, 0
      %6126 = vmatprep.subr.bf16.mxu0 0
      %6127 = vmatpush1.bf16.msra.mxu0 %v6121
      %6128 = vmatprep.subr.bf16.mxu0 0
      %6129 = vmatpush1.bf16.msra.mxu0 0
      %6130 = vmatprep.subr.bf16.mxu0 0
      %6131 = vmatpush1.bf16.msra.mxu0 0
      %6132 = vmatprep.subr.bf16.mxu0 0
      %6133 = vmatpush1.bf16.msra.mxu0 0
      %6134 = vmatprep.subr.bf16.mxu0 0
      %6135 = vmatpush1.bf16.msra.mxu0 0
      %6136 = vmatprep.subr.bf16.mxu0 0
      %6137 = vmatpush1.bf16.msra.mxu0 0
      %6138 = vmatprep.subr.bf16.mxu0 0
      %6139 = vmatpush1.bf16.msra.mxu0 0
      %6140 = vmatprep.subr.bf16.mxu0 0
      %6141 = vmatpush1.bf16.msra.mxu0 0
      %6142 = vmatprep.subr.bf16.mxu0 0
      %6143 = vmatpush1.bf16.msra.mxu0 0
      %6144 = vmatprep.subr.bf16.mxu0 0
      %6145 = vmatpush1.bf16.msra.mxu0 0
      %6146 = vmatprep.subr.bf16.mxu0 0
      %6147 = vmatpush1.bf16.msra.mxu0 0
      %6148 = vmatprep.subr.bf16.mxu0 0
      %6149 = vmatpush1.bf16.msra.mxu0 0
      %6150 = vmatprep.subr.bf16.mxu0 0
      %6151 = vmatpush1.bf16.msra.mxu0 0
      %6152 = vmatprep.subr.bf16.mxu0 0
      %6153 = vmatpush1.bf16.msra.mxu0 0
      %6154 = vmatprep.subr.bf16.mxu0 0
      %6155 = vmatpush1.bf16.msra.mxu0 0
      %6156 = vmatprep.subr.bf16.mxu0 0
      %6157 = vmatpush1.bf16.msra.mxu0 0
      %6158 = vmatprep.mubr.bf16.mxu0 0
      %6159 = vmatmul.mubr.bf16.gmra.mrb[0].mxu0 %v6124
      %v6160 = vpop.f32.mrb[0].mxu0
      %v6161 = vadd.f32 0.0, %v6160
      %v6162 = vpop.f32.mrb[0].mxu0
      %v6163 = vpop.f32.mrb[0].mxu0
      %v6164 = vadd.f32 0.0, %v6163
      %v6165 = vpop.f32.mrb[0].mxu0
      %6166 = vdwg.mxu0
      %6167 = vrot.lane.b32.xlu0 %v549, 48
      %v6168 = vpop.permute.xlu0 %6167
      %v6171 = vsel %vm1356, %v5599, 0
      %6173 = vmatprep.subr.bf16.mxu0 0
      %6174 = vmatpush1.bf16.msra.mxu0 %v6168
      %6175 = vmatprep.subr.bf16.mxu0 0
      %6176 = vmatpush1.bf16.msra.mxu0 0
      %6177 = vmatprep.subr.bf16.mxu0 0
      %6178 = vmatpush1.bf16.msra.mxu0 0
      %6179 = vmatprep.subr.bf16.mxu0 0
      %6180 = vmatpush1.bf16.msra.mxu0 0
      %6181 = vmatprep.subr.bf16.mxu0 0
      %6182 = vmatpush1.bf16.msra.mxu0 0
      %6183 = vmatprep.subr.bf16.mxu0 0
      %6184 = vmatpush1.bf16.msra.mxu0 0
      %6185 = vmatprep.subr.bf16.mxu0 0
      %6186 = vmatpush1.bf16.msra.mxu0 0
      %6187 = vmatprep.subr.bf16.mxu0 0
      %6188 = vmatpush1.bf16.msra.mxu0 0
      %6189 = vmatprep.subr.bf16.mxu0 0
      %6190 = vmatpush1.bf16.msra.mxu0 0
      %6191 = vmatprep.subr.bf16.mxu0 0
      %6192 = vmatpush1.bf16.msra.mxu0 0
      %6193 = vmatprep.subr.bf16.mxu0 0
      %6194 = vmatpush1.bf16.msra.mxu0 0
      %6195 = vmatprep.subr.bf16.mxu0 0
      %6196 = vmatpush1.bf16.msra.mxu0 0
      %6197 = vmatprep.subr.bf16.mxu0 0
      %6198 = vmatpush1.bf16.msra.mxu0 0
      %6199 = vmatprep.subr.bf16.mxu0 0
      %6200 = vmatpush1.bf16.msra.mxu0 0
      %6201 = vmatprep.subr.bf16.mxu0 0
      %6202 = vmatpush1.bf16.msra.mxu0 0
      %6203 = vmatprep.subr.bf16.mxu0 0
      %6204 = vmatpush1.bf16.msra.mxu0 0
      %6205 = vmatprep.mubr.bf16.mxu0 0
      %6206 = vmatmul.mubr.bf16.gmra.mrb[0].mxu0 %v6171
      %v6207 = vpop.f32.mrb[0].mxu0
      %v6208 = vadd.f32 0.0, %v6207
      %v6209 = vpop.f32.mrb[0].mxu0
      %v6210 = vpop.f32.mrb[0].mxu0
      %v6211 = vadd.f32 0.0, %v6210
      %v6212 = vpop.f32.mrb[0].mxu0
      %6213 = vdwg.mxu0
      %6214 = vrot.lane.b32.xlu0 %v550, 48
      %v6215 = vpop.permute.xlu0 %6214
      %v6218 = vsel %vm1356, %v5600, 0
      %6220 = vmatprep.subr.bf16.mxu0 0
      %6221 = vmatpush1.bf16.msra.mxu0 %v6215
      %6222 = vmatprep.subr.bf16.mxu0 0
      %6223 = vmatpush1.bf16.msra.mxu0 0
      %6224 = vmatprep.subr.bf16.mxu0 0
      %6225 = vmatpush1.bf16.msra.mxu0 0
      %6226 = vmatprep.subr.bf16.mxu0 0
      %6227 = vmatpush1.bf16.msra.mxu0 0
      %6228 = vmatprep.subr.bf16.mxu0 0
      %6229 = vmatpush1.bf16.msra.mxu0 0
      %6230 = vmatprep.subr.bf16.mxu0 0
      %6231 = vmatpush1.bf16.msra.mxu0 0
      %6232 = vmatprep.subr.bf16.mxu0 0
      %6233 = vmatpush1.bf16.msra.mxu0 0
      %6234 = vmatprep.subr.bf16.mxu0 0
      %6235 = vmatpush1.bf16.msra.mxu0 0
      %6236 = vmatprep.subr.bf16.mxu0 0
      %6237 = vmatpush1.bf16.msra.mxu0 0
      %6238 = vmatprep.subr.bf16.mxu0 0
      %6239 = vmatpush1.bf16.msra.mxu0 0
      %6240 = vmatprep.subr.bf16.mxu0 0
      %6241 = vmatpush1.bf16.msra.mxu0 0
      %6242 = vmatprep.subr.bf16.mxu0 0
      %6243 = vmatpush1.bf16.msra.mxu0 0
      %6244 = vmatprep.subr.bf16.mxu0 0
      %6245 = vmatpush1.bf16.msra.mxu0 0
      %6246 = vmatprep.subr.bf16.mxu0 0
      %6247 = vmatpush1.bf16.msra.mxu0 0
      %6248 = vmatprep.subr.bf16.mxu0 0
      %6249 = vmatpush1.bf16.msra.mxu0 0
      %6250 = vmatprep.subr.bf16.mxu0 0
      %6251 = vmatpush1.bf16.msra.mxu0 0
      %6252 = vmatprep.mubr.bf16.mxu0 0
      %6253 = vmatmul.mubr.bf16.gmra.mrb[0].mxu0 %v6218
      %v6254 = vpop.f32.mrb[0].mxu0
      %v6255 = vadd.f32 0.0, %v6254
      %v6256 = vpop.f32.mrb[0].mxu0
      %v6257 = vpop.f32.mrb[0].mxu0
      %v6258 = vadd.f32 0.0, %v6257
      %v6259 = vpop.f32.mrb[0].mxu0
      %6260 = vdwg.mxu0
      %6261 = vrot.lane.b32.xlu0 %v551, 48
      %v6262 = vpop.permute.xlu0 %6261
      %v6265 = vsel %vm1356, %v5601, 0
      %6267 = vmatprep.subr.bf16.mxu0 0
      %6268 = vmatpush1.bf16.msra.mxu0 %v6262
      %6269 = vmatprep.subr.bf16.mxu0 0
      %6270 = vmatpush1.bf16.msra.mxu0 0
      %6271 = vmatprep.subr.bf16.mxu0 0
      %6272 = vmatpush1.bf16.msra.mxu0 0
      %6273 = vmatprep.subr.bf16.mxu0 0
      %6274 = vmatpush1.bf16.msra.mxu0 0
      %6275 = vmatprep.subr.bf16.mxu0 0
      %6276 = vmatpush1.bf16.msra.mxu0 0
      %6277 = vmatprep.subr.bf16.mxu0 0
      %6278 = vmatpush1.bf16.msra.mxu0 0
      %6279 = vmatprep.subr.bf16.mxu0 0
      %6280 = vmatpush1.bf16.msra.mxu0 0
      %6281 = vmatprep.subr.bf16.mxu0 0
      %6282 = vmatpush1.bf16.msra.mxu0 0
      %6283 = vmatprep.subr.bf16.mxu0 0
      %6284 = vmatpush1.bf16.msra.mxu0 0
      %6285 = vmatprep.subr.bf16.mxu0 0
      %6286 = vmatpush1.bf16.msra.mxu0 0
      %6287 = vmatprep.subr.bf16.mxu0 0
      %6288 = vmatpush1.bf16.msra.mxu0 0
      %6289 = vmatprep.subr.bf16.mxu0 0
      %6290 = vmatpush1.bf16.msra.mxu0 0
      %6291 = vmatprep.subr.bf16.mxu0 0
      %6292 = vmatpush1.bf16.msra.mxu0 0
      %6293 = vmatprep.subr.bf16.mxu0 0
      %6294 = vmatpush1.bf16.msra.mxu0 0
      %6295 = vmatprep.subr.bf16.mxu0 0
      %6296 = vmatpush1.bf16.msra.mxu0 0
      %6297 = vmatprep.subr.bf16.mxu0 0
      %6298 = vmatpush1.bf16.msra.mxu0 0
      %6299 = vmatprep.mubr.bf16.mxu0 0
      %6300 = vmatmul.mubr.bf16.gmra.mrb[0].mxu0 %v6265
      %v6301 = vpop.f32.mrb[0].mxu0
      %v6302 = vadd.f32 0.0, %v6301
      %v6303 = vpop.f32.mrb[0].mxu0
      %v6304 = vpop.f32.mrb[0].mxu0
      %v6305 = vadd.f32 0.0, %v6304
      %v6306 = vpop.f32.mrb[0].mxu0
      %6307 = vdwg.mxu0
      %6308 = vrot.lane.b32.xlu0 %v552, 48
      %v6309 = vpop.permute.xlu0 %6308
      %v6312 = vsel %vm1356, %v5602, 0
      %6314 = vmatprep.subr.bf16.mxu0 0
      %6315 = vmatpush1.bf16.msra.mxu0 %v6309
      %6316 = vmatprep.subr.bf16.mxu0 0
      %6317 = vmatpush1.bf16.msra.mxu0 0
      %6318 = vmatprep.subr.bf16.mxu0 0
      %6319 = vmatpush1.bf16.msra.mxu0 0
      %6320 = vmatprep.subr.bf16.mxu0 0
      %6321 = vmatpush1.bf16.msra.mxu0 0
      %6322 = vmatprep.subr.bf16.mxu0 0
      %6323 = vmatpush1.bf16.msra.mxu0 0
      %6324 = vmatprep.subr.bf16.mxu0 0
      %6325 = vmatpush1.bf16.msra.mxu0 0
      %6326 = vmatprep.subr.bf16.mxu0 0
      %6327 = vmatpush1.bf16.msra.mxu0 0
      %6328 = vmatprep.subr.bf16.mxu0 0
      %6329 = vmatpush1.bf16.msra.mxu0 0
      %6330 = vmatprep.subr.bf16.mxu0 0
      %6331 = vmatpush1.bf16.msra.mxu0 0
      %6332 = vmatprep.subr.bf16.mxu0 0
      %6333 = vmatpush1.bf16.msra.mxu0 0
      %6334 = vmatprep.subr.bf16.mxu0 0
      %6335 = vmatpush1.bf16.msra.mxu0 0
      %6336 = vmatprep.subr.bf16.mxu0 0
      %6337 = vmatpush1.bf16.msra.mxu0 0
      %6338 = vmatprep.subr.bf16.mxu0 0
      %6339 = vmatpush1.bf16.msra.mxu0 0
      %6340 = vmatprep.subr.bf16.mxu0 0
      %6341 = vmatpush1.bf16.msra.mxu0 0
      %6342 = vmatprep.subr.bf16.mxu0 0
      %6343 = vmatpush1.bf16.msra.mxu0 0
      %6344 = vmatprep.subr.bf16.mxu0 0
      %6345 = vmatpush1.bf16.msra.mxu0 0
      %6346 = vmatprep.mubr.bf16.mxu0 0
      %6347 = vmatmul.mubr.bf16.gmra.mrb[0].mxu0 %v6312
      %v6348 = vpop.f32.mrb[0].mxu0
      %v6349 = vadd.f32 0.0, %v6348
      %v6350 = vpop.f32.mrb[0].mxu0
      %v6351 = vpop.f32.mrb[0].mxu0
      %v6352 = vadd.f32 0.0, %v6351
      %v6353 = vpop.f32.mrb[0].mxu0
      %6354 = vdwg.mxu0
      %s6355 = scalar_lea.vmem %s3, 48
      %v6356 = vld [vmem:[%s6355] sm:$0xff]
      %v6357 = vld [vmem:[%s6355 + $0x8] sm:$0xff]
      %6358 = vrot.lane.b32.xlu0 %v537, 104
      %v6359 = vpop.permute.xlu0 %6358
      %6360 = vrot.lane.b32.xlu0 %v537, 72
      %v6361 = vpop.permute.xlu0 %6360
      %v6363 = vsel %vm558, %v6359, 0
      %v6366 = vsel %vm558, %v6361, 0
      %6368 = vmatprep.subr.bf16.mxu0 0
      %6369 = vmatpush1.bf16.xpose.msra.mxu0 %v6366
      %6370 = vmatprep.subr.bf16.mxu0 0
      %6371 = vmatpush1.bf16.xpose.msra.mxu0 0
      %6372 = vmatprep.subr.bf16.mxu0 0
      %6373 = vmatpush1.bf16.xpose.msra.mxu0 0
      %6374 = vmatprep.subr.bf16.mxu0 0
      %6375 = vmatpush1.bf16.xpose.msra.mxu0 0
      %6376 = vmatprep.subr.bf16.mxu0 0
      %6377 = vmatpush1.bf16.xpose.msra.mxu0 0
      %6378 = vmatprep.subr.bf16.mxu0 0
      %6379 = vmatpush1.bf16.xpose.msra.mxu0 0
      %6380 = vmatprep.subr.bf16.mxu0 0
      %6381 = vmatpush1.bf16.xpose.msra.mxu0 0
      %6382 = vmatprep.subr.bf16.mxu0 0
      %6383 = vmatpush1.bf16.xpose.msra.mxu0 0
      %6384 = vmatprep.subr.bf16.mxu0 0
      %6385 = vmatpush1.bf16.xpose.msra.mxu0 0
      %6386 = vmatprep.subr.bf16.mxu0 0
      %6387 = vmatpush1.bf16.xpose.msra.mxu0 0
      %6388 = vmatprep.subr.bf16.mxu0 0
      %6389 = vmatpush1.bf16.xpose.msra.mxu0 0
      %6390 = vmatprep.subr.bf16.mxu0 0
      %6391 = vmatpush1.bf16.xpose.msra.mxu0 0
      %6392 = vmatprep.subr.bf16.mxu0 0
      %6393 = vmatpush1.bf16.xpose.msra.mxu0 0
      %6394 = vmatprep.subr.bf16.mxu0 0
      %6395 = vmatpush1.bf16.xpose.msra.mxu0 0
      %6396 = vmatprep.subr.bf16.mxu0 0
      %6397 = vmatpush1.bf16.xpose.msra.mxu0 0
      %6398 = vmatprep.subr.bf16.mxu0 0
      %6399 = vmatpush1.bf16.xpose.msra.mxu0 0
      %6400 = vmatprep.mubr.bf16.mxu0 0
      %6401 = vmatmul.mubr.bf16.gmra.mrb[0].mxu0 %v6363
      %v6402 = vpop.f32.mrb[0].mxu0
      %v6403 = vadd.f32 %v6356, %v6402
      %v6404 = vpop.f32.mrb[0].mxu0
      %v6405 = vpop.f32.mrb[0].mxu0
      %v6406 = vadd.f32 %v6357, %v6405
      %v6407 = vpop.f32.mrb[0].mxu0
      %6408 = vdwg.mxu0
      %6409 = vrot.lane.b32.xlu0 %v538, 104
      %v6410 = vpop.permute.xlu0 %6409
      %6411 = vrot.lane.b32.xlu0 %v538, 72
      %v6412 = vpop.permute.xlu0 %6411
      %v6414 = vsel %vm558, %v6410, 0
      %v6417 = vsel %vm558, %v6412, 0
      %6419 = vmatprep.subr.bf16.mxu0 0
      %6420 = vmatpush1.bf16.xpose.msra.mxu0 %v6417
      %6421 = vmatprep.subr.bf16.mxu0 0
      %6422 = vmatpush1.bf16.xpose.msra.mxu0 0
      %6423 = vmatprep.subr.bf16.mxu0 0
      %6424 = vmatpush1.bf16.xpose.msra.mxu0 0
      %6425 = vmatprep.subr.bf16.mxu0 0
      %6426 = vmatpush1.bf16.xpose.msra.mxu0 0
      %6427 = vmatprep.subr.bf16.mxu0 0
      %6428 = vmatpush1.bf16.xpose.msra.mxu0 0
      %6429 = vmatprep.subr.bf16.mxu0 0
      %6430 = vmatpush1.bf16.xpose.msra.mxu0 0
      %6431 = vmatprep.subr.bf16.mxu0 0
      %6432 = vmatpush1.bf16.xpose.msra.mxu0 0
      %6433 = vmatprep.subr.bf16.mxu0 0
      %6434 = vmatpush1.bf16.xpose.msra.mxu0 0
      %6435 = vmatprep.subr.bf16.mxu0 0
      %6436 = vmatpush1.bf16.xpose.msra.mxu0 0
      %6437 = vmatprep.subr.bf16.mxu0 0
      %6438 = vmatpush1.bf16.xpose.msra.mxu0 0
      %6439 = vmatprep.subr.bf16.mxu0 0
      %6440 = vmatpush1.bf16.xpose.msra.mxu0 0
      %6441 = vmatprep.subr.bf16.mxu0 0
      %6442 = vmatpush1.bf16.xpose.msra.mxu0 0
      %6443 = vmatprep.subr.bf16.mxu0 0
      %6444 = vmatpush1.bf16.xpose.msra.mxu0 0
      %6445 = vmatprep.subr.bf16.mxu0 0
      %6446 = vmatpush1.bf16.xpose.msra.mxu0 0
      %6447 = vmatprep.subr.bf16.mxu0 0
      %6448 = vmatpush1.bf16.xpose.msra.mxu0 0
      %6449 = vmatprep.subr.bf16.mxu0 0
      %6450 = vmatpush1.bf16.xpose.msra.mxu0 0
      %6451 = vmatprep.mubr.bf16.mxu0 0
      %6452 = vmatmul.mubr.bf16.gmra.mrb[0].mxu0 %v6414
      %v6453 = vpop.f32.mrb[0].mxu0
      %v6454 = vadd.f32 %v6356, %v6453
      %v6455 = vpop.f32.mrb[0].mxu0
      %v6456 = vpop.f32.mrb[0].mxu0
      %v6457 = vadd.f32 %v6357, %v6456
      %v6458 = vpop.f32.mrb[0].mxu0
      %6459 = vdwg.mxu0
      %6460 = vrot.lane.b32.xlu0 %v539, 104
      %v6461 = vpop.permute.xlu0 %6460
      %6462 = vrot.lane.b32.xlu0 %v539, 72
      %v6463 = vpop.permute.xlu0 %6462
      %v6465 = vsel %vm558, %v6461, 0
      %v6468 = vsel %vm558, %v6463, 0
      %6470 = vmatprep.subr.bf16.mxu0 0
      %6471 = vmatpush1.bf16.xpose.msra.mxu0 %v6468
      %6472 = vmatprep.subr.bf16.mxu0 0
      %6473 = vmatpush1.bf16.xpose.msra.mxu0 0
      %6474 = vmatprep.subr.bf16.mxu0 0
      %6475 = vmatpush1.bf16.xpose.msra.mxu0 0
      %6476 = vmatprep.subr.bf16.mxu0 0
      %6477 = vmatpush1.bf16.xpose.msra.mxu0 0
      %6478 = vmatprep.subr.bf16.mxu0 0
      %6479 = vmatpush1.bf16.xpose.msra.mxu0 0
      %6480 = vmatprep.subr.bf16.mxu0 0
      %6481 = vmatpush1.bf16.xpose.msra.mxu0 0
      %6482 = vmatprep.subr.bf16.mxu0 0
      %6483 = vmatpush1.bf16.xpose.msra.mxu0 0
      %6484 = vmatprep.subr.bf16.mxu0 0
      %6485 = vmatpush1.bf16.xpose.msra.mxu0 0
      %6486 = vmatprep.subr.bf16.mxu0 0
      %6487 = vmatpush1.bf16.xpose.msra.mxu0 0
      %6488 = vmatprep.subr.bf16.mxu0 0
      %6489 = vmatpush1.bf16.xpose.msra.mxu0 0
      %6490 = vmatprep.subr.bf16.mxu0 0
      %6491 = vmatpush1.bf16.xpose.msra.mxu0 0
      %6492 = vmatprep.subr.bf16.mxu0 0
      %6493 = vmatpush1.bf16.xpose.msra.mxu0 0
      %6494 = vmatprep.subr.bf16.mxu0 0
      %6495 = vmatpush1.bf16.xpose.msra.mxu0 0
      %6496 = vmatprep.subr.bf16.mxu0 0
      %6497 = vmatpush1.bf16.xpose.msra.mxu0 0
      %6498 = vmatprep.subr.bf16.mxu0 0
      %6499 = vmatpush1.bf16.xpose.msra.mxu0 0
      %6500 = vmatprep.subr.bf16.mxu0 0
      %6501 = vmatpush1.bf16.xpose.msra.mxu0 0
      %6502 = vmatprep.mubr.bf16.mxu0 0
      %6503 = vmatmul.mubr.bf16.gmra.mrb[0].mxu0 %v6465
      %v6504 = vpop.f32.mrb[0].mxu0
      %v6505 = vadd.f32 %v6356, %v6504
      %v6506 = vpop.f32.mrb[0].mxu0
      %v6507 = vpop.f32.mrb[0].mxu0
      %v6508 = vadd.f32 %v6357, %v6507
      %v6509 = vpop.f32.mrb[0].mxu0
      %6510 = vdwg.mxu0
      %6511 = vrot.lane.b32.xlu0 %v540, 104
      %v6512 = vpop.permute.xlu0 %6511
      %6513 = vrot.lane.b32.xlu0 %v540, 72
      %v6514 = vpop.permute.xlu0 %6513
      %v6516 = vsel %vm558, %v6512, 0
      %v6519 = vsel %vm558, %v6514, 0
      %6521 = vmatprep.subr.bf16.mxu0 0
      %6522 = vmatpush1.bf16.xpose.msra.mxu0 %v6519
      %6523 = vmatprep.subr.bf16.mxu0 0
      %6524 = vmatpush1.bf16.xpose.msra.mxu0 0
      %6525 = vmatprep.subr.bf16.mxu0 0
      %6526 = vmatpush1.bf16.xpose.msra.mxu0 0
      %6527 = vmatprep.subr.bf16.mxu0 0
      %6528 = vmatpush1.bf16.xpose.msra.mxu0 0
      %6529 = vmatprep.subr.bf16.mxu0 0
      %6530 = vmatpush1.bf16.xpose.msra.mxu0 0
      %6531 = vmatprep.subr.bf16.mxu0 0
      %6532 = vmatpush1.bf16.xpose.msra.mxu0 0
      %6533 = vmatprep.subr.bf16.mxu0 0
      %6534 = vmatpush1.bf16.xpose.msra.mxu0 0
      %6535 = vmatprep.subr.bf16.mxu0 0
      %6536 = vmatpush1.bf16.xpose.msra.mxu0 0
      %6537 = vmatprep.subr.bf16.mxu0 0
      %6538 = vmatpush1.bf16.xpose.msra.mxu0 0
      %6539 = vmatprep.subr.bf16.mxu0 0
      %6540 = vmatpush1.bf16.xpose.msra.mxu0 0
      %6541 = vmatprep.subr.bf16.mxu0 0
      %6542 = vmatpush1.bf16.xpose.msra.mxu0 0
      %6543 = vmatprep.subr.bf16.mxu0 0
      %6544 = vmatpush1.bf16.xpose.msra.mxu0 0
      %6545 = vmatprep.subr.bf16.mxu0 0
      %6546 = vmatpush1.bf16.xpose.msra.mxu0 0
      %6547 = vmatprep.subr.bf16.mxu0 0
      %6548 = vmatpush1.bf16.xpose.msra.mxu0 0
      %6549 = vmatprep.subr.bf16.mxu0 0
      %6550 = vmatpush1.bf16.xpose.msra.mxu0 0
      %6551 = vmatprep.subr.bf16.mxu0 0
      %6552 = vmatpush1.bf16.xpose.msra.mxu0 0
      %6553 = vmatprep.mubr.bf16.mxu0 0
      %6554 = vmatmul.mubr.bf16.gmra.mrb[0].mxu0 %v6516
      %v6555 = vpop.f32.mrb[0].mxu0
      %v6556 = vadd.f32 %v6356, %v6555
      %v6557 = vpop.f32.mrb[0].mxu0
      %v6558 = vpop.f32.mrb[0].mxu0
      %v6559 = vadd.f32 %v6357, %v6558
      %v6560 = vpop.f32.mrb[0].mxu0
      %6561 = vdwg.mxu0
      %6562 = vrot.lane.b32.xlu0 %v541, 104
      %v6563 = vpop.permute.xlu0 %6562
      %6564 = vrot.lane.b32.xlu0 %v541, 72
      %v6565 = vpop.permute.xlu0 %6564
      %v6567 = vsel %vm558, %v6563, 0
      %v6570 = vsel %vm558, %v6565, 0
      %6572 = vmatprep.subr.bf16.mxu0 0
      %6573 = vmatpush1.bf16.xpose.msra.mxu0 %v6570
      %6574 = vmatprep.subr.bf16.mxu0 0
      %6575 = vmatpush1.bf16.xpose.msra.mxu0 0
      %6576 = vmatprep.subr.bf16.mxu0 0
      %6577 = vmatpush1.bf16.xpose.msra.mxu0 0
      %6578 = vmatprep.subr.bf16.mxu0 0
      %6579 = vmatpush1.bf16.xpose.msra.mxu0 0
      %6580 = vmatprep.subr.bf16.mxu0 0
      %6581 = vmatpush1.bf16.xpose.msra.mxu0 0
      %6582 = vmatprep.subr.bf16.mxu0 0
      %6583 = vmatpush1.bf16.xpose.msra.mxu0 0
      %6584 = vmatprep.subr.bf16.mxu0 0
      %6585 = vmatpush1.bf16.xpose.msra.mxu0 0
      %6586 = vmatprep.subr.bf16.mxu0 0
      %6587 = vmatpush1.bf16.xpose.msra.mxu0 0
      %6588 = vmatprep.subr.bf16.mxu0 0
      %6589 = vmatpush1.bf16.xpose.msra.mxu0 0
      %6590 = vmatprep.subr.bf16.mxu0 0
      %6591 = vmatpush1.bf16.xpose.msra.mxu0 0
      %6592 = vmatprep.subr.bf16.mxu0 0
      %6593 = vmatpush1.bf16.xpose.msra.mxu0 0
      %6594 = vmatprep.subr.bf16.mxu0 0
      %6595 = vmatpush1.bf16.xpose.msra.mxu0 0
      %6596 = vmatprep.subr.bf16.mxu0 0
      %6597 = vmatpush1.bf16.xpose.msra.mxu0 0
      %6598 = vmatprep.subr.bf16.mxu0 0
      %6599 = vmatpush1.bf16.xpose.msra.mxu0 0
      %6600 = vmatprep.subr.bf16.mxu0 0
      %6601 = vmatpush1.bf16.xpose.msra.mxu0 0
      %6602 = vmatprep.subr.bf16.mxu0 0
      %6603 = vmatpush1.bf16.xpose.msra.mxu0 0
      %6604 = vmatprep.mubr.bf16.mxu0 0
      %6605 = vmatmul.mubr.bf16.gmra.mrb[0].mxu0 %v6567
      %v6606 = vpop.f32.mrb[0].mxu0
      %v6607 = vadd.f32 %v6356, %v6606
      %v6608 = vpop.f32.mrb[0].mxu0
      %v6609 = vpop.f32.mrb[0].mxu0
      %v6610 = vadd.f32 %v6357, %v6609
      %v6611 = vpop.f32.mrb[0].mxu0
      %6612 = vdwg.mxu0
      %6613 = vrot.lane.b32.xlu0 %v542, 104
      %v6614 = vpop.permute.xlu0 %6613
      %6615 = vrot.lane.b32.xlu0 %v542, 72
      %v6616 = vpop.permute.xlu0 %6615
      %v6618 = vsel %vm558, %v6614, 0
      %v6621 = vsel %vm558, %v6616, 0
      %6623 = vmatprep.subr.bf16.mxu0 0
      %6624 = vmatpush1.bf16.xpose.msra.mxu0 %v6621
      %6625 = vmatprep.subr.bf16.mxu0 0
      %6626 = vmatpush1.bf16.xpose.msra.mxu0 0
      %6627 = vmatprep.subr.bf16.mxu0 0
      %6628 = vmatpush1.bf16.xpose.msra.mxu0 0
      %6629 = vmatprep.subr.bf16.mxu0 0
      %6630 = vmatpush1.bf16.xpose.msra.mxu0 0
      %6631 = vmatprep.subr.bf16.mxu0 0
      %6632 = vmatpush1.bf16.xpose.msra.mxu0 0
      %6633 = vmatprep.subr.bf16.mxu0 0
      %6634 = vmatpush1.bf16.xpose.msra.mxu0 0
      %6635 = vmatprep.subr.bf16.mxu0 0
      %6636 = vmatpush1.bf16.xpose.msra.mxu0 0
      %6637 = vmatprep.subr.bf16.mxu0 0
      %6638 = vmatpush1.bf16.xpose.msra.mxu0 0
      %6639 = vmatprep.subr.bf16.mxu0 0
      %6640 = vmatpush1.bf16.xpose.msra.mxu0 0
      %6641 = vmatprep.subr.bf16.mxu0 0
      %6642 = vmatpush1.bf16.xpose.msra.mxu0 0
      %6643 = vmatprep.subr.bf16.mxu0 0
      %6644 = vmatpush1.bf16.xpose.msra.mxu0 0
      %6645 = vmatprep.subr.bf16.mxu0 0
      %6646 = vmatpush1.bf16.xpose.msra.mxu0 0
      %6647 = vmatprep.subr.bf16.mxu0 0
      %6648 = vmatpush1.bf16.xpose.msra.mxu0 0
      %6649 = vmatprep.subr.bf16.mxu0 0
      %6650 = vmatpush1.bf16.xpose.msra.mxu0 0
      %6651 = vmatprep.subr.bf16.mxu0 0
      %6652 = vmatpush1.bf16.xpose.msra.mxu0 0
      %6653 = vmatprep.subr.bf16.mxu0 0
      %6654 = vmatpush1.bf16.xpose.msra.mxu0 0
      %6655 = vmatprep.mubr.bf16.mxu0 0
      %6656 = vmatmul.mubr.bf16.gmra.mrb[0].mxu0 %v6618
      %v6657 = vpop.f32.mrb[0].mxu0
      %v6658 = vadd.f32 %v6356, %v6657
      %v6659 = vpop.f32.mrb[0].mxu0
      %v6660 = vpop.f32.mrb[0].mxu0
      %v6661 = vadd.f32 %v6357, %v6660
      %v6662 = vpop.f32.mrb[0].mxu0
      %6663 = vdwg.mxu0
      %6664 = vrot.lane.b32.xlu0 %v543, 104
      %v6665 = vpop.permute.xlu0 %6664
      %6666 = vrot.lane.b32.xlu0 %v543, 72
      %v6667 = vpop.permute.xlu0 %6666
      %v6669 = vsel %vm558, %v6665, 0
      %v6672 = vsel %vm558, %v6667, 0
      %6674 = vmatprep.subr.bf16.mxu0 0
      %6675 = vmatpush1.bf16.xpose.msra.mxu0 %v6672
      %6676 = vmatprep.subr.bf16.mxu0 0
      %6677 = vmatpush1.bf16.xpose.msra.mxu0 0
      %6678 = vmatprep.subr.bf16.mxu0 0
      %6679 = vmatpush1.bf16.xpose.msra.mxu0 0
      %6680 = vmatprep.subr.bf16.mxu0 0
      %6681 = vmatpush1.bf16.xpose.msra.mxu0 0
      %6682 = vmatprep.subr.bf16.mxu0 0
      %6683 = vmatpush1.bf16.xpose.msra.mxu0 0
      %6684 = vmatprep.subr.bf16.mxu0 0
      %6685 = vmatpush1.bf16.xpose.msra.mxu0 0
      %6686 = vmatprep.subr.bf16.mxu0 0
      %6687 = vmatpush1.bf16.xpose.msra.mxu0 0
      %6688 = vmatprep.subr.bf16.mxu0 0
      %6689 = vmatpush1.bf16.xpose.msra.mxu0 0
      %6690 = vmatprep.subr.bf16.mxu0 0
      %6691 = vmatpush1.bf16.xpose.msra.mxu0 0
      %6692 = vmatprep.subr.bf16.mxu0 0
      %6693 = vmatpush1.bf16.xpose.msra.mxu0 0
      %6694 = vmatprep.subr.bf16.mxu0 0
      %6695 = vmatpush1.bf16.xpose.msra.mxu0 0
      %6696 = vmatprep.subr.bf16.mxu0 0
      %6697 = vmatpush1.bf16.xpose.msra.mxu0 0
      %6698 = vmatprep.subr.bf16.mxu0 0
      %6699 = vmatpush1.bf16.xpose.msra.mxu0 0
      %6700 = vmatprep.subr.bf16.mxu0 0
      %6701 = vmatpush1.bf16.xpose.msra.mxu0 0
      %6702 = vmatprep.subr.bf16.mxu0 0
      %6703 = vmatpush1.bf16.xpose.msra.mxu0 0
      %6704 = vmatprep.subr.bf16.mxu0 0
      %6705 = vmatpush1.bf16.xpose.msra.mxu0 0
      %6706 = vmatprep.mubr.bf16.mxu0 0
      %6707 = vmatmul.mubr.bf16.gmra.mrb[0].mxu0 %v6669
      %v6708 = vpop.f32.mrb[0].mxu0
      %v6709 = vadd.f32 %v6356, %v6708
      %v6710 = vpop.f32.mrb[0].mxu0
      %v6711 = vpop.f32.mrb[0].mxu0
      %v6712 = vadd.f32 %v6357, %v6711
      %v6713 = vpop.f32.mrb[0].mxu0
      %6714 = vdwg.mxu0
      %6715 = vrot.lane.b32.xlu0 %v544, 104
      %v6716 = vpop.permute.xlu0 %6715
      %6717 = vrot.lane.b32.xlu0 %v544, 72
      %v6718 = vpop.permute.xlu0 %6717
      %v6720 = vsel %vm558, %v6716, 0
      %v6723 = vsel %vm558, %v6718, 0
      %6725 = vmatprep.subr.bf16.mxu0 0
      %6726 = vmatpush1.bf16.xpose.msra.mxu0 %v6723
      %6727 = vmatprep.subr.bf16.mxu0 0
      %6728 = vmatpush1.bf16.xpose.msra.mxu0 0
      %6729 = vmatprep.subr.bf16.mxu0 0
      %6730 = vmatpush1.bf16.xpose.msra.mxu0 0
      %6731 = vmatprep.subr.bf16.mxu0 0
      %6732 = vmatpush1.bf16.xpose.msra.mxu0 0
      %6733 = vmatprep.subr.bf16.mxu0 0
      %6734 = vmatpush1.bf16.xpose.msra.mxu0 0
      %6735 = vmatprep.subr.bf16.mxu0 0
      %6736 = vmatpush1.bf16.xpose.msra.mxu0 0
      %6737 = vmatprep.subr.bf16.mxu0 0
      %6738 = vmatpush1.bf16.xpose.msra.mxu0 0
      %6739 = vmatprep.subr.bf16.mxu0 0
      %6740 = vmatpush1.bf16.xpose.msra.mxu0 0
      %6741 = vmatprep.subr.bf16.mxu0 0
      %6742 = vmatpush1.bf16.xpose.msra.mxu0 0
      %6743 = vmatprep.subr.bf16.mxu0 0
      %6744 = vmatpush1.bf16.xpose.msra.mxu0 0
      %6745 = vmatprep.subr.bf16.mxu0 0
      %6746 = vmatpush1.bf16.xpose.msra.mxu0 0
      %6747 = vmatprep.subr.bf16.mxu0 0
      %6748 = vmatpush1.bf16.xpose.msra.mxu0 0
      %6749 = vmatprep.subr.bf16.mxu0 0
      %6750 = vmatpush1.bf16.xpose.msra.mxu0 0
      %6751 = vmatprep.subr.bf16.mxu0 0
      %6752 = vmatpush1.bf16.xpose.msra.mxu0 0
      %6753 = vmatprep.subr.bf16.mxu0 0
      %6754 = vmatpush1.bf16.xpose.msra.mxu0 0
      %6755 = vmatprep.subr.bf16.mxu0 0
      %6756 = vmatpush1.bf16.xpose.msra.mxu0 0
      %6757 = vmatprep.mubr.bf16.mxu0 0
      %6758 = vmatmul.mubr.bf16.gmra.mrb[0].mxu0 %v6720
      %v6759 = vpop.f32.mrb[0].mxu0
      %v6760 = vadd.f32 %v6356, %v6759
      %v6761 = vpop.f32.mrb[0].mxu0
      %v6762 = vpop.f32.mrb[0].mxu0
      %v6763 = vadd.f32 %v6357, %v6762
      %v6764 = vpop.f32.mrb[0].mxu0
      %6765 = vdwg.mxu0
      %6766 = vrot.lane.b32.xlu0 %v545, 104
      %v6767 = vpop.permute.xlu0 %6766
      %6768 = vrot.lane.b32.xlu0 %v545, 72
      %v6769 = vpop.permute.xlu0 %6768
      %v6771 = vsel %vm558, %v6767, 0
      %v6774 = vsel %vm558, %v6769, 0
      %6776 = vmatprep.subr.bf16.mxu0 0
      %6777 = vmatpush1.bf16.xpose.msra.mxu0 %v6774
      %6778 = vmatprep.subr.bf16.mxu0 0
      %6779 = vmatpush1.bf16.xpose.msra.mxu0 0
      %6780 = vmatprep.subr.bf16.mxu0 0
      %6781 = vmatpush1.bf16.xpose.msra.mxu0 0
      %6782 = vmatprep.subr.bf16.mxu0 0
      %6783 = vmatpush1.bf16.xpose.msra.mxu0 0
      %6784 = vmatprep.subr.bf16.mxu0 0
      %6785 = vmatpush1.bf16.xpose.msra.mxu0 0
      %6786 = vmatprep.subr.bf16.mxu0 0
      %6787 = vmatpush1.bf16.xpose.msra.mxu0 0
      %6788 = vmatprep.subr.bf16.mxu0 0
      %6789 = vmatpush1.bf16.xpose.msra.mxu0 0
      %6790 = vmatprep.subr.bf16.mxu0 0
      %6791 = vmatpush1.bf16.xpose.msra.mxu0 0
      %6792 = vmatprep.subr.bf16.mxu0 0
      %6793 = vmatpush1.bf16.xpose.msra.mxu0 0
      %6794 = vmatprep.subr.bf16.mxu0 0
      %6795 = vmatpush1.bf16.xpose.msra.mxu0 0
      %6796 = vmatprep.subr.bf16.mxu0 0
      %6797 = vmatpush1.bf16.xpose.msra.mxu0 0
      %6798 = vmatprep.subr.bf16.mxu0 0
      %6799 = vmatpush1.bf16.xpose.msra.mxu0 0
      %6800 = vmatprep.subr.bf16.mxu0 0
      %6801 = vmatpush1.bf16.xpose.msra.mxu0 0
      %6802 = vmatprep.subr.bf16.mxu0 0
      %6803 = vmatpush1.bf16.xpose.msra.mxu0 0
      %6804 = vmatprep.subr.bf16.mxu0 0
      %6805 = vmatpush1.bf16.xpose.msra.mxu0 0
      %6806 = vmatprep.subr.bf16.mxu0 0
      %6807 = vmatpush1.bf16.xpose.msra.mxu0 0
      %6808 = vmatprep.mubr.bf16.mxu0 0
      %6809 = vmatmul.mubr.bf16.gmra.mrb[0].mxu0 %v6771
      %v6810 = vpop.f32.mrb[0].mxu0
      %v6811 = vadd.f32 %v6356, %v6810
      %v6812 = vpop.f32.mrb[0].mxu0
      %v6813 = vpop.f32.mrb[0].mxu0
      %v6814 = vadd.f32 %v6357, %v6813
      %v6815 = vpop.f32.mrb[0].mxu0
      %6816 = vdwg.mxu0
      %6817 = vrot.lane.b32.xlu0 %v546, 104
      %v6818 = vpop.permute.xlu0 %6817
      %6819 = vrot.lane.b32.xlu0 %v546, 72
      %v6820 = vpop.permute.xlu0 %6819
      %v6822 = vsel %vm558, %v6818, 0
      %v6825 = vsel %vm558, %v6820, 0
      %6827 = vmatprep.subr.bf16.mxu0 0
      %6828 = vmatpush1.bf16.xpose.msra.mxu0 %v6825
      %6829 = vmatprep.subr.bf16.mxu0 0
      %6830 = vmatpush1.bf16.xpose.msra.mxu0 0
      %6831 = vmatprep.subr.bf16.mxu0 0
      %6832 = vmatpush1.bf16.xpose.msra.mxu0 0
      %6833 = vmatprep.subr.bf16.mxu0 0
      %6834 = vmatpush1.bf16.xpose.msra.mxu0 0
      %6835 = vmatprep.subr.bf16.mxu0 0
      %6836 = vmatpush1.bf16.xpose.msra.mxu0 0
      %6837 = vmatprep.subr.bf16.mxu0 0
      %6838 = vmatpush1.bf16.xpose.msra.mxu0 0
      %6839 = vmatprep.subr.bf16.mxu0 0
      %6840 = vmatpush1.bf16.xpose.msra.mxu0 0
      %6841 = vmatprep.subr.bf16.mxu0 0
      %6842 = vmatpush1.bf16.xpose.msra.mxu0 0
      %6843 = vmatprep.subr.bf16.mxu0 0
      %6844 = vmatpush1.bf16.xpose.msra.mxu0 0
      %6845 = vmatprep.subr.bf16.mxu0 0
      %6846 = vmatpush1.bf16.xpose.msra.mxu0 0
      %6847 = vmatprep.subr.bf16.mxu0 0
      %6848 = vmatpush1.bf16.xpose.msra.mxu0 0
      %6849 = vmatprep.subr.bf16.mxu0 0
      %6850 = vmatpush1.bf16.xpose.msra.mxu0 0
      %6851 = vmatprep.subr.bf16.mxu0 0
      %6852 = vmatpush1.bf16.xpose.msra.mxu0 0
      %6853 = vmatprep.subr.bf16.mxu0 0
      %6854 = vmatpush1.bf16.xpose.msra.mxu0 0
      %6855 = vmatprep.subr.bf16.mxu0 0
      %6856 = vmatpush1.bf16.xpose.msra.mxu0 0
      %6857 = vmatprep.subr.bf16.mxu0 0
      %6858 = vmatpush1.bf16.xpose.msra.mxu0 0
      %6859 = vmatprep.mubr.bf16.mxu0 0
      %6860 = vmatmul.mubr.bf16.gmra.mrb[0].mxu0 %v6822
      %v6861 = vpop.f32.mrb[0].mxu0
      %v6862 = vadd.f32 %v6356, %v6861
      %v6863 = vpop.f32.mrb[0].mxu0
      %v6864 = vpop.f32.mrb[0].mxu0
      %v6865 = vadd.f32 %v6357, %v6864
      %v6866 = vpop.f32.mrb[0].mxu0
      %6867 = vdwg.mxu0
      %6868 = vrot.lane.b32.xlu0 %v547, 104
      %v6869 = vpop.permute.xlu0 %6868
      %6870 = vrot.lane.b32.xlu0 %v547, 72
      %v6871 = vpop.permute.xlu0 %6870
      %v6873 = vsel %vm558, %v6869, 0
      %v6876 = vsel %vm558, %v6871, 0
      %6878 = vmatprep.subr.bf16.mxu0 0
      %6879 = vmatpush1.bf16.xpose.msra.mxu0 %v6876
      %6880 = vmatprep.subr.bf16.mxu0 0
      %6881 = vmatpush1.bf16.xpose.msra.mxu0 0
      %6882 = vmatprep.subr.bf16.mxu0 0
      %6883 = vmatpush1.bf16.xpose.msra.mxu0 0
      %6884 = vmatprep.subr.bf16.mxu0 0
      %6885 = vmatpush1.bf16.xpose.msra.mxu0 0
      %6886 = vmatprep.subr.bf16.mxu0 0
      %6887 = vmatpush1.bf16.xpose.msra.mxu0 0
      %6888 = vmatprep.subr.bf16.mxu0 0
      %6889 = vmatpush1.bf16.xpose.msra.mxu0 0
      %6890 = vmatprep.subr.bf16.mxu0 0
      %6891 = vmatpush1.bf16.xpose.msra.mxu0 0
      %6892 = vmatprep.subr.bf16.mxu0 0
      %6893 = vmatpush1.bf16.xpose.msra.mxu0 0
      %6894 = vmatprep.subr.bf16.mxu0 0
      %6895 = vmatpush1.bf16.xpose.msra.mxu0 0
      %6896 = vmatprep.subr.bf16.mxu0 0
      %6897 = vmatpush1.bf16.xpose.msra.mxu0 0
      %6898 = vmatprep.subr.bf16.mxu0 0
      %6899 = vmatpush1.bf16.xpose.msra.mxu0 0
      %6900 = vmatprep.subr.bf16.mxu0 0
      %6901 = vmatpush1.bf16.xpose.msra.mxu0 0
      %6902 = vmatprep.subr.bf16.mxu0 0
      %6903 = vmatpush1.bf16.xpose.msra.mxu0 0
      %6904 = vmatprep.subr.bf16.mxu0 0
      %6905 = vmatpush1.bf16.xpose.msra.mxu0 0
      %6906 = vmatprep.subr.bf16.mxu0 0
      %6907 = vmatpush1.bf16.xpose.msra.mxu0 0
      %6908 = vmatprep.subr.bf16.mxu0 0
      %6909 = vmatpush1.bf16.xpose.msra.mxu0 0
      %6910 = vmatprep.mubr.bf16.mxu0 0
      %6911 = vmatmul.mubr.bf16.gmra.mrb[0].mxu0 %v6873
      %v6912 = vpop.f32.mrb[0].mxu0
      %v6913 = vadd.f32 %v6356, %v6912
      %v6914 = vpop.f32.mrb[0].mxu0
      %v6915 = vpop.f32.mrb[0].mxu0
      %v6916 = vadd.f32 %v6357, %v6915
      %v6917 = vpop.f32.mrb[0].mxu0
      %6918 = vdwg.mxu0
      %6919 = vrot.lane.b32.xlu0 %v548, 104
      %v6920 = vpop.permute.xlu0 %6919
      %6921 = vrot.lane.b32.xlu0 %v548, 72
      %v6922 = vpop.permute.xlu0 %6921
      %v6924 = vsel %vm558, %v6920, 0
      %v6927 = vsel %vm558, %v6922, 0
      %6929 = vmatprep.subr.bf16.mxu0 0
      %6930 = vmatpush1.bf16.xpose.msra.mxu0 %v6927
      %6931 = vmatprep.subr.bf16.mxu0 0
      %6932 = vmatpush1.bf16.xpose.msra.mxu0 0
      %6933 = vmatprep.subr.bf16.mxu0 0
      %6934 = vmatpush1.bf16.xpose.msra.mxu0 0
      %6935 = vmatprep.subr.bf16.mxu0 0
      %6936 = vmatpush1.bf16.xpose.msra.mxu0 0
      %6937 = vmatprep.subr.bf16.mxu0 0
      %6938 = vmatpush1.bf16.xpose.msra.mxu0 0
      %6939 = vmatprep.subr.bf16.mxu0 0
      %6940 = vmatpush1.bf16.xpose.msra.mxu0 0
      %6941 = vmatprep.subr.bf16.mxu0 0
      %6942 = vmatpush1.bf16.xpose.msra.mxu0 0
      %6943 = vmatprep.subr.bf16.mxu0 0
      %6944 = vmatpush1.bf16.xpose.msra.mxu0 0
      %6945 = vmatprep.subr.bf16.mxu0 0
      %6946 = vmatpush1.bf16.xpose.msra.mxu0 0
      %6947 = vmatprep.subr.bf16.mxu0 0
      %6948 = vmatpush1.bf16.xpose.msra.mxu0 0
      %6949 = vmatprep.subr.bf16.mxu0 0
      %6950 = vmatpush1.bf16.xpose.msra.mxu0 0
      %6951 = vmatprep.subr.bf16.mxu0 0
      %6952 = vmatpush1.bf16.xpose.msra.mxu0 0
      %6953 = vmatprep.subr.bf16.mxu0 0
      %6954 = vmatpush1.bf16.xpose.msra.mxu0 0
      %6955 = vmatprep.subr.bf16.mxu0 0
      %6956 = vmatpush1.bf16.xpose.msra.mxu0 0
      %6957 = vmatprep.subr.bf16.mxu0 0
      %6958 = vmatpush1.bf16.xpose.msra.mxu0 0
      %6959 = vmatprep.subr.bf16.mxu0 0
      %6960 = vmatpush1.bf16.xpose.msra.mxu0 0
      %6961 = vmatprep.mubr.bf16.mxu0 0
      %6962 = vmatmul.mubr.bf16.gmra.mrb[0].mxu0 %v6924
      %v6963 = vpop.f32.mrb[0].mxu0
      %v6964 = vadd.f32 %v6356, %v6963
      %v6965 = vpop.f32.mrb[0].mxu0
      %v6966 = vpop.f32.mrb[0].mxu0
      %v6967 = vadd.f32 %v6357, %v6966
      %v6968 = vpop.f32.mrb[0].mxu0
      %6969 = vdwg.mxu0
      %6970 = vrot.lane.b32.xlu0 %v549, 104
      %v6971 = vpop.permute.xlu0 %6970
      %6972 = vrot.lane.b32.xlu0 %v549, 72
      %v6973 = vpop.permute.xlu0 %6972
      %v6975 = vsel %vm558, %v6971, 0
      %v6978 = vsel %vm558, %v6973, 0
      %6980 = vmatprep.subr.bf16.mxu0 0
      %6981 = vmatpush1.bf16.xpose.msra.mxu0 %v6978
      %6982 = vmatprep.subr.bf16.mxu0 0
      %6983 = vmatpush1.bf16.xpose.msra.mxu0 0
      %6984 = vmatprep.subr.bf16.mxu0 0
      %6985 = vmatpush1.bf16.xpose.msra.mxu0 0
      %6986 = vmatprep.subr.bf16.mxu0 0
      %6987 = vmatpush1.bf16.xpose.msra.mxu0 0
      %6988 = vmatprep.subr.bf16.mxu0 0
      %6989 = vmatpush1.bf16.xpose.msra.mxu0 0
      %6990 = vmatprep.subr.bf16.mxu0 0
      %6991 = vmatpush1.bf16.xpose.msra.mxu0 0
      %6992 = vmatprep.subr.bf16.mxu0 0
      %6993 = vmatpush1.bf16.xpose.msra.mxu0 0
      %6994 = vmatprep.subr.bf16.mxu0 0
      %6995 = vmatpush1.bf16.xpose.msra.mxu0 0
      %6996 = vmatprep.subr.bf16.mxu0 0
      %6997 = vmatpush1.bf16.xpose.msra.mxu0 0
      %6998 = vmatprep.subr.bf16.mxu0 0
      %6999 = vmatpush1.bf16.xpose.msra.mxu0 0
      %7000 = vmatprep.subr.bf16.mxu0 0
      %7001 = vmatpush1.bf16.xpose.msra.mxu0 0
      %7002 = vmatprep.subr.bf16.mxu0 0
      %7003 = vmatpush1.bf16.xpose.msra.mxu0 0
      %7004 = vmatprep.subr.bf16.mxu0 0
      %7005 = vmatpush1.bf16.xpose.msra.mxu0 0
      %7006 = vmatprep.subr.bf16.mxu0 0
      %7007 = vmatpush1.bf16.xpose.msra.mxu0 0
      %7008 = vmatprep.subr.bf16.mxu0 0
      %7009 = vmatpush1.bf16.xpose.msra.mxu0 0
      %7010 = vmatprep.subr.bf16.mxu0 0
      %7011 = vmatpush1.bf16.xpose.msra.mxu0 0
      %7012 = vmatprep.mubr.bf16.mxu0 0
      %7013 = vmatmul.mubr.bf16.gmra.mrb[0].mxu0 %v6975
      %v7014 = vpop.f32.mrb[0].mxu0
      %v7015 = vadd.f32 %v6356, %v7014
      %v7016 = vpop.f32.mrb[0].mxu0
      %v7017 = vpop.f32.mrb[0].mxu0
      %v7018 = vadd.f32 %v6357, %v7017
      %v7019 = vpop.f32.mrb[0].mxu0
      %7020 = vdwg.mxu0
      %7021 = vrot.lane.b32.xlu0 %v550, 104
      %v7022 = vpop.permute.xlu0 %7021
      %7023 = vrot.lane.b32.xlu0 %v550, 72
      %v7024 = vpop.permute.xlu0 %7023
      %v7026 = vsel %vm558, %v7022, 0
      %v7029 = vsel %vm558, %v7024, 0
      %7031 = vmatprep.subr.bf16.mxu0 0
      %7032 = vmatpush1.bf16.xpose.msra.mxu0 %v7029
      %7033 = vmatprep.subr.bf16.mxu0 0
      %7034 = vmatpush1.bf16.xpose.msra.mxu0 0
      %7035 = vmatprep.subr.bf16.mxu0 0
      %7036 = vmatpush1.bf16.xpose.msra.mxu0 0
      %7037 = vmatprep.subr.bf16.mxu0 0
      %7038 = vmatpush1.bf16.xpose.msra.mxu0 0
      %7039 = vmatprep.subr.bf16.mxu0 0
      %7040 = vmatpush1.bf16.xpose.msra.mxu0 0
      %7041 = vmatprep.subr.bf16.mxu0 0
      %7042 = vmatpush1.bf16.xpose.msra.mxu0 0
      %7043 = vmatprep.subr.bf16.mxu0 0
      %7044 = vmatpush1.bf16.xpose.msra.mxu0 0
      %7045 = vmatprep.subr.bf16.mxu0 0
      %7046 = vmatpush1.bf16.xpose.msra.mxu0 0
      %7047 = vmatprep.subr.bf16.mxu0 0
      %7048 = vmatpush1.bf16.xpose.msra.mxu0 0
      %7049 = vmatprep.subr.bf16.mxu0 0
      %7050 = vmatpush1.bf16.xpose.msra.mxu0 0
      %7051 = vmatprep.subr.bf16.mxu0 0
      %7052 = vmatpush1.bf16.xpose.msra.mxu0 0
      %7053 = vmatprep.subr.bf16.mxu0 0
      %7054 = vmatpush1.bf16.xpose.msra.mxu0 0
      %7055 = vmatprep.subr.bf16.mxu0 0
      %7056 = vmatpush1.bf16.xpose.msra.mxu0 0
      %7057 = vmatprep.subr.bf16.mxu0 0
      %7058 = vmatpush1.bf16.xpose.msra.mxu0 0
      %7059 = vmatprep.subr.bf16.mxu0 0
      %7060 = vmatpush1.bf16.xpose.msra.mxu0 0
      %7061 = vmatprep.subr.bf16.mxu0 0
      %7062 = vmatpush1.bf16.xpose.msra.mxu0 0
      %7063 = vmatprep.mubr.bf16.mxu0 0
      %7064 = vmatmul.mubr.bf16.gmra.mrb[0].mxu0 %v7026
      %v7065 = vpop.f32.mrb[0].mxu0
      %v7066 = vadd.f32 %v6356, %v7065
      %v7067 = vpop.f32.mrb[0].mxu0
      %v7068 = vpop.f32.mrb[0].mxu0
      %v7069 = vadd.f32 %v6357, %v7068
      %v7070 = vpop.f32.mrb[0].mxu0
      %7071 = vdwg.mxu0
      %7072 = vrot.lane.b32.xlu0 %v551, 104
      %v7073 = vpop.permute.xlu0 %7072
      %7074 = vrot.lane.b32.xlu0 %v551, 72
      %v7075 = vpop.permute.xlu0 %7074
      %v7077 = vsel %vm558, %v7073, 0
      %v7080 = vsel %vm558, %v7075, 0
      %7082 = vmatprep.subr.bf16.mxu0 0
      %7083 = vmatpush1.bf16.xpose.msra.mxu0 %v7080
      %7084 = vmatprep.subr.bf16.mxu0 0
      %7085 = vmatpush1.bf16.xpose.msra.mxu0 0
      %7086 = vmatprep.subr.bf16.mxu0 0
      %7087 = vmatpush1.bf16.xpose.msra.mxu0 0
      %7088 = vmatprep.subr.bf16.mxu0 0
      %7089 = vmatpush1.bf16.xpose.msra.mxu0 0
      %7090 = vmatprep.subr.bf16.mxu0 0
      %7091 = vmatpush1.bf16.xpose.msra.mxu0 0
      %7092 = vmatprep.subr.bf16.mxu0 0
      %7093 = vmatpush1.bf16.xpose.msra.mxu0 0
      %7094 = vmatprep.subr.bf16.mxu0 0
      %7095 = vmatpush1.bf16.xpose.msra.mxu0 0
      %7096 = vmatprep.subr.bf16.mxu0 0
      %7097 = vmatpush1.bf16.xpose.msra.mxu0 0
      %7098 = vmatprep.subr.bf16.mxu0 0
      %7099 = vmatpush1.bf16.xpose.msra.mxu0 0
      %7100 = vmatprep.subr.bf16.mxu0 0
      %7101 = vmatpush1.bf16.xpose.msra.mxu0 0
      %7102 = vmatprep.subr.bf16.mxu0 0
      %7103 = vmatpush1.bf16.xpose.msra.mxu0 0
      %7104 = vmatprep.subr.bf16.mxu0 0
      %7105 = vmatpush1.bf16.xpose.msra.mxu0 0
      %7106 = vmatprep.subr.bf16.mxu0 0
      %7107 = vmatpush1.bf16.xpose.msra.mxu0 0
      %7108 = vmatprep.subr.bf16.mxu0 0
      %7109 = vmatpush1.bf16.xpose.msra.mxu0 0
      %7110 = vmatprep.subr.bf16.mxu0 0
      %7111 = vmatpush1.bf16.xpose.msra.mxu0 0
      %7112 = vmatprep.subr.bf16.mxu0 0
      %7113 = vmatpush1.bf16.xpose.msra.mxu0 0
      %7114 = vmatprep.mubr.bf16.mxu0 0
      %7115 = vmatmul.mubr.bf16.gmra.mrb[0].mxu0 %v7077
      %v7116 = vpop.f32.mrb[0].mxu0
      %v7117 = vadd.f32 %v6356, %v7116
      %v7118 = vpop.f32.mrb[0].mxu0
      %v7119 = vpop.f32.mrb[0].mxu0
      %v7120 = vadd.f32 %v6357, %v7119
      %v7121 = vpop.f32.mrb[0].mxu0
      %7122 = vdwg.mxu0
      %7123 = vrot.lane.b32.xlu0 %v552, 104
      %v7124 = vpop.permute.xlu0 %7123
      %7125 = vrot.lane.b32.xlu0 %v552, 72
      %v7126 = vpop.permute.xlu0 %7125
      %v7128 = vsel %vm558, %v7124, 0
      %v7131 = vsel %vm558, %v7126, 0
      %7133 = vmatprep.subr.bf16.mxu0 0
      %7134 = vmatpush1.bf16.xpose.msra.mxu0 %v7131
      %7135 = vmatprep.subr.bf16.mxu0 0
      %7136 = vmatpush1.bf16.xpose.msra.mxu0 0
      %7137 = vmatprep.subr.bf16.mxu0 0
      %7138 = vmatpush1.bf16.xpose.msra.mxu0 0
      %7139 = vmatprep.subr.bf16.mxu0 0
      %7140 = vmatpush1.bf16.xpose.msra.mxu0 0
      %7141 = vmatprep.subr.bf16.mxu0 0
      %7142 = vmatpush1.bf16.xpose.msra.mxu0 0
      %7143 = vmatprep.subr.bf16.mxu0 0
      %7144 = vmatpush1.bf16.xpose.msra.mxu0 0
      %7145 = vmatprep.subr.bf16.mxu0 0
      %7146 = vmatpush1.bf16.xpose.msra.mxu0 0
      %7147 = vmatprep.subr.bf16.mxu0 0
      %7148 = vmatpush1.bf16.xpose.msra.mxu0 0
      %7149 = vmatprep.subr.bf16.mxu0 0
      %7150 = vmatpush1.bf16.xpose.msra.mxu0 0
      %7151 = vmatprep.subr.bf16.mxu0 0
      %7152 = vmatpush1.bf16.xpose.msra.mxu0 0
      %7153 = vmatprep.subr.bf16.mxu0 0
      %7154 = vmatpush1.bf16.xpose.msra.mxu0 0
      %7155 = vmatprep.subr.bf16.mxu0 0
      %7156 = vmatpush1.bf16.xpose.msra.mxu0 0
      %7157 = vmatprep.subr.bf16.mxu0 0
      %7158 = vmatpush1.bf16.xpose.msra.mxu0 0
      %7159 = vmatprep.subr.bf16.mxu0 0
      %7160 = vmatpush1.bf16.xpose.msra.mxu0 0
      %7161 = vmatprep.subr.bf16.mxu0 0
      %7162 = vmatpush1.bf16.xpose.msra.mxu0 0
      %7163 = vmatprep.subr.bf16.mxu0 0
      %7164 = vmatpush1.bf16.xpose.msra.mxu0 0
      %7165 = vmatprep.mubr.bf16.mxu0 0
      %7166 = vmatmul.mubr.bf16.gmra.mrb[0].mxu0 %v7128
      %v7167 = vpop.f32.mrb[0].mxu0
      %v7168 = vadd.f32 %v6356, %v7167
      %v7169 = vpop.f32.mrb[0].mxu0
      %v7170 = vpop.f32.mrb[0].mxu0
      %v7171 = vadd.f32 %v6357, %v7170
      %v7172 = vpop.f32.mrb[0].mxu0
      %7173 = vdwg.mxu0
      %v7174 = vsel %vm1356, %v6403, -inf
      %7175 = vmax.xlane.f32.xlu0 %v7174
      %v7176 = vpop.xlane.xlu0 %7175
      %v7177 = vsel %vm1356, %v6406, -inf
      %7178 = vmax.xlane.f32.xlu0 %v7177
      %v7179 = vpop.xlane.xlu0 %7178
      %v7180 = vsel %vm1356, %v6454, -inf
      %7181 = vmax.xlane.f32.xlu0 %v7180
      %v7182 = vpop.xlane.xlu0 %7181
      %v7183 = vsel %vm1356, %v6457, -inf
      %7184 = vmax.xlane.f32.xlu0 %v7183
      %v7185 = vpop.xlane.xlu0 %7184
      %v7186 = vsel %vm1356, %v6505, -inf
      %7187 = vmax.xlane.f32.xlu0 %v7186
      %v7188 = vpop.xlane.xlu0 %7187
      %v7189 = vsel %vm1356, %v6508, -inf
      %7190 = vmax.xlane.f32.xlu0 %v7189
      %v7191 = vpop.xlane.xlu0 %7190
      %v7192 = vsel %vm1356, %v6556, -inf
      %7193 = vmax.xlane.f32.xlu0 %v7192
      %v7194 = vpop.xlane.xlu0 %7193
      %v7195 = vsel %vm1356, %v6559, -inf
      %7196 = vmax.xlane.f32.xlu0 %v7195
      %v7197 = vpop.xlane.xlu0 %7196
      %v7198 = vsel %vm1356, %v6607, -inf
      %7199 = vmax.xlane.f32.xlu0 %v7198
      %v7200 = vpop.xlane.xlu0 %7199
      %v7201 = vsel %vm1356, %v6610, -inf
      %7202 = vmax.xlane.f32.xlu0 %v7201
      %v7203 = vpop.xlane.xlu0 %7202
      %v7204 = vsel %vm1356, %v6658, -inf
      %7205 = vmax.xlane.f32.xlu0 %v7204
      %v7206 = vpop.xlane.xlu0 %7205
      %v7207 = vsel %vm1356, %v6661, -inf
      %7208 = vmax.xlane.f32.xlu0 %v7207
      %v7209 = vpop.xlane.xlu0 %7208
      %v7210 = vsel %vm1356, %v6709, -inf
      %7211 = vmax.xlane.f32.xlu0 %v7210
      %v7212 = vpop.xlane.xlu0 %7211
      %v7213 = vsel %vm1356, %v6712, -inf
      %7214 = vmax.xlane.f32.xlu0 %v7213
      %v7215 = vpop.xlane.xlu0 %7214
      %v7216 = vsel %vm1356, %v6760, -inf
      %7217 = vmax.xlane.f32.xlu0 %v7216
      %v7218 = vpop.xlane.xlu0 %7217
      %v7219 = vsel %vm1356, %v6763, -inf
      %7220 = vmax.xlane.f32.xlu0 %v7219
      %v7221 = vpop.xlane.xlu0 %7220
      %v7222 = vsel %vm1356, %v6811, -inf
      %7223 = vmax.xlane.f32.xlu0 %v7222
      %v7224 = vpop.xlane.xlu0 %7223
      %v7225 = vsel %vm1356, %v6814, -inf
      %7226 = vmax.xlane.f32.xlu0 %v7225
      %v7227 = vpop.xlane.xlu0 %7226
      %v7228 = vsel %vm1356, %v6862, -inf
      %7229 = vmax.xlane.f32.xlu0 %v7228
      %v7230 = vpop.xlane.xlu0 %7229
      %v7231 = vsel %vm1356, %v6865, -inf
      %7232 = vmax.xlane.f32.xlu0 %v7231
      %v7233 = vpop.xlane.xlu0 %7232
      %v7234 = vsel %vm1356, %v6913, -inf
      %7235 = vmax.xlane.f32.xlu0 %v7234
      %v7236 = vpop.xlane.xlu0 %7235
      %v7237 = vsel %vm1356, %v6916, -inf
      %7238 = vmax.xlane.f32.xlu0 %v7237
      %v7239 = vpop.xlane.xlu0 %7238
      %v7240 = vsel %vm1356, %v6964, -inf
      %7241 = vmax.xlane.f32.xlu0 %v7240
      %v7242 = vpop.xlane.xlu0 %7241
      %v7243 = vsel %vm1356, %v6967, -inf
      %7244 = vmax.xlane.f32.xlu0 %v7243
      %v7245 = vpop.xlane.xlu0 %7244
      %v7246 = vsel %vm1356, %v7015, -inf
      %7247 = vmax.xlane.f32.xlu0 %v7246
      %v7248 = vpop.xlane.xlu0 %7247
      %v7249 = vsel %vm1356, %v7018, -inf
      %7250 = vmax.xlane.f32.xlu0 %v7249
      %v7251 = vpop.xlane.xlu0 %7250
      %v7252 = vsel %vm1356, %v7066, -inf
      %7253 = vmax.xlane.f32.xlu0 %v7252
      %v7254 = vpop.xlane.xlu0 %7253
      %v7255 = vsel %vm1356, %v7069, -inf
      %7256 = vmax.xlane.f32.xlu0 %v7255
      %v7257 = vpop.xlane.xlu0 %7256
      %v7258 = vsel %vm1356, %v7117, -inf
      %7259 = vmax.xlane.f32.xlu0 %v7258
      %v7260 = vpop.xlane.xlu0 %7259
      %v7261 = vsel %vm1356, %v7120, -inf
      %7262 = vmax.xlane.f32.xlu0 %v7261
      %v7263 = vpop.xlane.xlu0 %7262
      %v7264 = vsel %vm1356, %v7168, -inf
      %7265 = vmax.xlane.f32.xlu0 %v7264
      %v7266 = vpop.xlane.xlu0 %7265
      %v7267 = vsel %vm1356, %v7171, -inf
      %7268 = vmax.xlane.f32.xlu0 %v7267
      %v7269 = vpop.xlane.xlu0 %7268
      %v7270 = vsub.f32 %v6403, %v7176
      %v7271 = vsub.f32 %v6406, %v7179
      %v7272 = vsub.f32 %v6454, %v7182
      %v7273 = vsub.f32 %v6457, %v7185
      %v7274 = vsub.f32 %v6505, %v7188
      %v7275 = vsub.f32 %v6508, %v7191
      %v7276 = vsub.f32 %v6556, %v7194
      %v7277 = vsub.f32 %v6559, %v7197
      %v7278 = vsub.f32 %v6607, %v7200
      %v7279 = vsub.f32 %v6610, %v7203
      %v7280 = vsub.f32 %v6658, %v7206
      %v7281 = vsub.f32 %v6661, %v7209
      %v7282 = vsub.f32 %v6709, %v7212
      %v7283 = vsub.f32 %v6712, %v7215
      %v7284 = vsub.f32 %v6760, %v7218
      %v7285 = vsub.f32 %v6763, %v7221
      %v7286 = vsub.f32 %v6811, %v7224
      %v7287 = vsub.f32 %v6814, %v7227
      %v7288 = vsub.f32 %v6862, %v7230
      %v7289 = vsub.f32 %v6865, %v7233
      %v7290 = vsub.f32 %v6913, %v7236
      %v7291 = vsub.f32 %v6916, %v7239
      %v7292 = vsub.f32 %v6964, %v7242
      %v7293 = vsub.f32 %v6967, %v7245
      %v7294 = vsub.f32 %v7015, %v7248
      %v7295 = vsub.f32 %v7018, %v7251
      %v7296 = vsub.f32 %v7066, %v7254
      %v7297 = vsub.f32 %v7069, %v7257
      %v7298 = vsub.f32 %v7117, %v7260
      %v7299 = vsub.f32 %v7120, %v7263
      %v7300 = vsub.f32 %v7168, %v7266
      %v7301 = vsub.f32 %v7171, %v7269
      %v7302 = vmul.f32 %v7270, 1.442695
      %v7303 = vpow.pop %v7302
      %v7304 = vmul.f32 %v7271, 1.442695
      %v7305 = vpow.pop %v7304
      %v7306 = vmul.f32 %v7272, 1.442695
      %v7307 = vpow.pop %v7306
      %v7308 = vmul.f32 %v7273, 1.442695
      %v7309 = vpow.pop %v7308
      %v7310 = vmul.f32 %v7274, 1.442695
      %v7311 = vpow.pop %v7310
      %v7312 = vmul.f32 %v7275, 1.442695
      %v7313 = vpow.pop %v7312
      %v7314 = vmul.f32 %v7276, 1.442695
      %v7315 = vpow.pop %v7314
      %v7316 = vmul.f32 %v7277, 1.442695
      %v7317 = vpow.pop %v7316
      %v7318 = vmul.f32 %v7278, 1.442695
      %v7319 = vpow.pop %v7318
      %v7320 = vmul.f32 %v7279, 1.442695
      %v7321 = vpow.pop %v7320
      %v7322 = vmul.f32 %v7280, 1.442695
      %v7323 = vpow.pop %v7322
      %v7324 = vmul.f32 %v7281, 1.442695
      %v7325 = vpow.pop %v7324
      %v7326 = vmul.f32 %v7282, 1.442695
      %v7327 = vpow.pop %v7326
      %v7328 = vmul.f32 %v7283, 1.442695
      %v7329 = vpow.pop %v7328
      %v7330 = vmul.f32 %v7284, 1.442695
      %v7331 = vpow.pop %v7330
      %v7332 = vmul.f32 %v7285, 1.442695
      %v7333 = vpow.pop %v7332
      %v7334 = vmul.f32 %v7286, 1.442695
      %v7335 = vpow.pop %v7334
      %v7336 = vmul.f32 %v7287, 1.442695
      %v7337 = vpow.pop %v7336
      %v7338 = vmul.f32 %v7288, 1.442695
      %v7339 = vpow.pop %v7338
      %v7340 = vmul.f32 %v7289, 1.442695
      %v7341 = vpow.pop %v7340
      %v7342 = vmul.f32 %v7290, 1.442695
      %v7343 = vpow.pop %v7342
      %v7344 = vmul.f32 %v7291, 1.442695
      %v7345 = vpow.pop %v7344
      %v7346 = vmul.f32 %v7292, 1.442695
      %v7347 = vpow.pop %v7346
      %v7348 = vmul.f32 %v7293, 1.442695
      %v7349 = vpow.pop %v7348
      %v7350 = vmul.f32 %v7294, 1.442695
      %v7351 = vpow.pop %v7350
      %v7352 = vmul.f32 %v7295, 1.442695
      %v7353 = vpow.pop %v7352
      %v7354 = vmul.f32 %v7296, 1.442695
      %v7355 = vpow.pop %v7354
      %v7356 = vmul.f32 %v7297, 1.442695
      %v7357 = vpow.pop %v7356
      %v7358 = vmul.f32 %v7298, 1.442695
      %v7359 = vpow.pop %v7358
      %v7360 = vmul.f32 %v7299, 1.442695
      %v7361 = vpow.pop %v7360
      %v7362 = vmul.f32 %v7300, 1.442695
      %v7363 = vpow.pop %v7362
      %v7364 = vmul.f32 %v7301, 1.442695
      %v7365 = vpow.pop %v7364
      %v7366 = vsel %vm1356, %v7303, 0.0
      %7367 = vadd.xlane.f32.xlu0 %v7366
      %v7368 = vpop.xlane.xlu0 %7367
      %v7369 = vsel %vm1356, %v7305, 0.0
      %7370 = vadd.xlane.f32.xlu0 %v7369
      %v7371 = vpop.xlane.xlu0 %7370
      %v7372 = vsel %vm1356, %v7307, 0.0
      %7373 = vadd.xlane.f32.xlu0 %v7372
      %v7374 = vpop.xlane.xlu0 %7373
      %v7375 = vsel %vm1356, %v7309, 0.0
      %7376 = vadd.xlane.f32.xlu0 %v7375
      %v7377 = vpop.xlane.xlu0 %7376
      %v7378 = vsel %vm1356, %v7311, 0.0
      %7379 = vadd.xlane.f32.xlu0 %v7378
      %v7380 = vpop.xlane.xlu0 %7379
      %v7381 = vsel %vm1356, %v7313, 0.0
      %7382 = vadd.xlane.f32.xlu0 %v7381
      %v7383 = vpop.xlane.xlu0 %7382
      %v7384 = vsel %vm1356, %v7315, 0.0
      %7385 = vadd.xlane.f32.xlu0 %v7384
      %v7386 = vpop.xlane.xlu0 %7385
      %v7387 = vsel %vm1356, %v7317, 0.0
      %7388 = vadd.xlane.f32.xlu0 %v7387
      %v7389 = vpop.xlane.xlu0 %7388
      %v7390 = vsel %vm1356, %v7319, 0.0
      %7391 = vadd.xlane.f32.xlu0 %v7390
      %v7392 = vpop.xlane.xlu0 %7391
      %v7393 = vsel %vm1356, %v7321, 0.0
      %7394 = vadd.xlane.f32.xlu0 %v7393
      %v7395 = vpop.xlane.xlu0 %7394
      %v7396 = vsel %vm1356, %v7323, 0.0
      %7397 = vadd.xlane.f32.xlu0 %v7396
      %v7398 = vpop.xlane.xlu0 %7397
      %v7399 = vsel %vm1356, %v7325, 0.0
      %7400 = vadd.xlane.f32.xlu0 %v7399
      %v7401 = vpop.xlane.xlu0 %7400
      %v7402 = vsel %vm1356, %v7327, 0.0
      %7403 = vadd.xlane.f32.xlu0 %v7402
      %v7404 = vpop.xlane.xlu0 %7403
      %v7405 = vsel %vm1356, %v7329, 0.0
      %7406 = vadd.xlane.f32.xlu0 %v7405
      %v7407 = vpop.xlane.xlu0 %7406
      %v7408 = vsel %vm1356, %v7331, 0.0
      %7409 = vadd.xlane.f32.xlu0 %v7408
      %v7410 = vpop.xlane.xlu0 %7409
      %v7411 = vsel %vm1356, %v7333, 0.0
      %7412 = vadd.xlane.f32.xlu0 %v7411
      %v7413 = vpop.xlane.xlu0 %7412
      %v7414 = vsel %vm1356, %v7335, 0.0
      %7415 = vadd.xlane.f32.xlu0 %v7414
      %v7416 = vpop.xlane.xlu0 %7415
      %v7417 = vsel %vm1356, %v7337, 0.0
      %7418 = vadd.xlane.f32.xlu0 %v7417
      %v7419 = vpop.xlane.xlu0 %7418
      %v7420 = vsel %vm1356, %v7339, 0.0
      %7421 = vadd.xlane.f32.xlu0 %v7420
      %v7422 = vpop.xlane.xlu0 %7421
      %v7423 = vsel %vm1356, %v7341, 0.0
      %7424 = vadd.xlane.f32.xlu0 %v7423
      %v7425 = vpop.xlane.xlu0 %7424
      %v7426 = vsel %vm1356, %v7343, 0.0
      %7427 = vadd.xlane.f32.xlu0 %v7426
      %v7428 = vpop.xlane.xlu0 %7427
      %v7429 = vsel %vm1356, %v7345, 0.0
      %7430 = vadd.xlane.f32.xlu0 %v7429
      %v7431 = vpop.xlane.xlu0 %7430
      %v7432 = vsel %vm1356, %v7347, 0.0
      %7433 = vadd.xlane.f32.xlu0 %v7432
      %v7434 = vpop.xlane.xlu0 %7433
      %v7435 = vsel %vm1356, %v7349, 0.0
      %7436 = vadd.xlane.f32.xlu0 %v7435
      %v7437 = vpop.xlane.xlu0 %7436
      %v7438 = vsel %vm1356, %v7351, 0.0
      %7439 = vadd.xlane.f32.xlu0 %v7438
      %v7440 = vpop.xlane.xlu0 %7439
      %v7441 = vsel %vm1356, %v7353, 0.0
      %7442 = vadd.xlane.f32.xlu0 %v7441
      %v7443 = vpop.xlane.xlu0 %7442
      %v7444 = vsel %vm1356, %v7355, 0.0
      %7445 = vadd.xlane.f32.xlu0 %v7444
      %v7446 = vpop.xlane.xlu0 %7445
      %v7447 = vsel %vm1356, %v7357, 0.0
      %7448 = vadd.xlane.f32.xlu0 %v7447
      %v7449 = vpop.xlane.xlu0 %7448
      %v7450 = vsel %vm1356, %v7359, 0.0
      %7451 = vadd.xlane.f32.xlu0 %v7450
      %v7452 = vpop.xlane.xlu0 %7451
      %v7453 = vsel %vm1356, %v7361, 0.0
      %7454 = vadd.xlane.f32.xlu0 %v7453
      %v7455 = vpop.xlane.xlu0 %7454
      %v7456 = vsel %vm1356, %v7363, 0.0
      %7457 = vadd.xlane.f32.xlu0 %v7456
      %v7458 = vpop.xlane.xlu0 %7457
      %v7459 = vsel %vm1356, %v7365, 0.0
      %7460 = vadd.xlane.f32.xlu0 %v7459
      %v7461 = vpop.xlane.xlu0 %7460
      %v7462 = vrcp.pop %v7368
      %v7463 = vrcp.pop %v7371
      %v7464 = vrcp.pop %v7374
      %v7465 = vrcp.pop %v7377
      %v7466 = vrcp.pop %v7380
      %v7467 = vrcp.pop %v7383
      %v7468 = vrcp.pop %v7386
      %v7469 = vrcp.pop %v7389
      %v7470 = vrcp.pop %v7392
      %v7471 = vrcp.pop %v7395
      %v7472 = vrcp.pop %v7398
      %v7473 = vrcp.pop %v7401
      %v7474 = vrcp.pop %v7404
      %v7475 = vrcp.pop %v7407
      %v7476 = vrcp.pop %v7410
      %v7477 = vrcp.pop %v7413
      %v7478 = vrcp.pop %v7416
      %v7479 = vrcp.pop %v7419
      %v7480 = vrcp.pop %v7422
      %v7481 = vrcp.pop %v7425
      %v7482 = vrcp.pop %v7428
      %v7483 = vrcp.pop %v7431
      %v7484 = vrcp.pop %v7434
      %v7485 = vrcp.pop %v7437
      %v7486 = vrcp.pop %v7440
      %v7487 = vrcp.pop %v7443
      %v7488 = vrcp.pop %v7446
      %v7489 = vrcp.pop %v7449
      %v7490 = vrcp.pop %v7452
      %v7491 = vrcp.pop %v7455
      %v7492 = vrcp.pop %v7458
      %v7493 = vrcp.pop %v7461
      %v7494 = vmul.f32 %v7303, %v7462
      %v7495 = vmul.f32 %v7305, %v7463
      %v7496 = vmul.f32 %v7307, %v7464
      %v7497 = vmul.f32 %v7309, %v7465
      %v7498 = vmul.f32 %v7311, %v7466
      %v7499 = vmul.f32 %v7313, %v7467
      %v7500 = vmul.f32 %v7315, %v7468
      %v7501 = vmul.f32 %v7317, %v7469
      %v7502 = vmul.f32 %v7319, %v7470
      %v7503 = vmul.f32 %v7321, %v7471
      %v7504 = vmul.f32 %v7323, %v7472
      %v7505 = vmul.f32 %v7325, %v7473
      %v7506 = vmul.f32 %v7327, %v7474
      %v7507 = vmul.f32 %v7329, %v7475
      %v7508 = vmul.f32 %v7331, %v7476
      %v7509 = vmul.f32 %v7333, %v7477
      %v7510 = vmul.f32 %v7335, %v7478
      %v7511 = vmul.f32 %v7337, %v7479
      %v7512 = vmul.f32 %v7339, %v7480
      %v7513 = vmul.f32 %v7341, %v7481
      %v7514 = vmul.f32 %v7343, %v7482
      %v7515 = vmul.f32 %v7345, %v7483
      %v7516 = vmul.f32 %v7347, %v7484
      %v7517 = vmul.f32 %v7349, %v7485
      %v7518 = vmul.f32 %v7351, %v7486
      %v7519 = vmul.f32 %v7353, %v7487
      %v7520 = vmul.f32 %v7355, %v7488
      %v7521 = vmul.f32 %v7357, %v7489
      %v7522 = vmul.f32 %v7359, %v7490
      %v7523 = vmul.f32 %v7361, %v7491
      %v7524 = vmul.f32 %v7363, %v7492
      %v7525 = vmul.f32 %v7365, %v7493
      %v7526 = vpack.c.bf16 %v7495, %v7494
      %v7527 = vpack.c.bf16 %v7497, %v7496
      %v7528 = vpack.c.bf16 %v7499, %v7498
      %v7529 = vpack.c.bf16 %v7501, %v7500
      %v7530 = vpack.c.bf16 %v7503, %v7502
      %v7531 = vpack.c.bf16 %v7505, %v7504
      %v7532 = vpack.c.bf16 %v7507, %v7506
      %v7533 = vpack.c.bf16 %v7509, %v7508
      %v7534 = vpack.c.bf16 %v7511, %v7510
      %v7535 = vpack.c.bf16 %v7513, %v7512
      %v7536 = vpack.c.bf16 %v7515, %v7514
      %v7537 = vpack.c.bf16 %v7517, %v7516
      %v7538 = vpack.c.bf16 %v7519, %v7518
      %v7539 = vpack.c.bf16 %v7521, %v7520
      %v7540 = vpack.c.bf16 %v7523, %v7522
      %v7541 = vpack.c.bf16 %v7525, %v7524
      %7542 = vrot.lane.b32.xlu0 %v537, 40
      %v7543 = vpop.permute.xlu0 %7542
      %v7546 = vsel %vm1356, %v7526, 0
      %7548 = vmatprep.subr.bf16.mxu0 0
      %7549 = vmatpush1.bf16.msra.mxu0 %v7543
      %7550 = vmatprep.subr.bf16.mxu0 0
      %7551 = vmatpush1.bf16.msra.mxu0 0
      %7552 = vmatprep.subr.bf16.mxu0 0
      %7553 = vmatpush1.bf16.msra.mxu0 0
      %7554 = vmatprep.subr.bf16.mxu0 0
      %7555 = vmatpush1.bf16.msra.mxu0 0
      %7556 = vmatprep.subr.bf16.mxu0 0
      %7557 = vmatpush1.bf16.msra.mxu0 0
      %7558 = vmatprep.subr.bf16.mxu0 0
      %7559 = vmatpush1.bf16.msra.mxu0 0
      %7560 = vmatprep.subr.bf16.mxu0 0
      %7561 = vmatpush1.bf16.msra.mxu0 0
      %7562 = vmatprep.subr.bf16.mxu0 0
      %7563 = vmatpush1.bf16.msra.mxu0 0
      %7564 = vmatprep.subr.bf16.mxu0 0
      %7565 = vmatpush1.bf16.msra.mxu0 0
      %7566 = vmatprep.subr.bf16.mxu0 0
      %7567 = vmatpush1.bf16.msra.mxu0 0
      %7568 = vmatprep.subr.bf16.mxu0 0
      %7569 = vmatpush1.bf16.msra.mxu0 0
      %7570 = vmatprep.subr.bf16.mxu0 0
      %7571 = vmatpush1.bf16.msra.mxu0 0
      %7572 = vmatprep.subr.bf16.mxu0 0
      %7573 = vmatpush1.bf16.msra.mxu0 0
      %7574 = vmatprep.subr.bf16.mxu0 0
      %7575 = vmatpush1.bf16.msra.mxu0 0
      %7576 = vmatprep.subr.bf16.mxu0 0
      %7577 = vmatpush1.bf16.msra.mxu0 0
      %7578 = vmatprep.subr.bf16.mxu0 0
      %7579 = vmatpush1.bf16.msra.mxu0 0
      %7580 = vmatprep.mubr.bf16.mxu0 0
      %7581 = vmatmul.mubr.bf16.gmra.mrb[0].mxu0 %v7546
      %v7582 = vpop.f32.mrb[0].mxu0
      %v7583 = vadd.f32 0.0, %v7582
      %v7584 = vpop.f32.mrb[0].mxu0
      %v7585 = vpop.f32.mrb[0].mxu0
      %v7586 = vadd.f32 0.0, %v7585
      %v7587 = vpop.f32.mrb[0].mxu0
      %7588 = vdwg.mxu0
      %7589 = vrot.lane.b32.xlu0 %v538, 40
      %v7590 = vpop.permute.xlu0 %7589
      %v7593 = vsel %vm1356, %v7527, 0
      %7595 = vmatprep.subr.bf16.mxu0 0
      %7596 = vmatpush1.bf16.msra.mxu0 %v7590
      %7597 = vmatprep.subr.bf16.mxu0 0
      %7598 = vmatpush1.bf16.msra.mxu0 0
      %7599 = vmatprep.subr.bf16.mxu0 0
      %7600 = vmatpush1.bf16.msra.mxu0 0
      %7601 = vmatprep.subr.bf16.mxu0 0
      %7602 = vmatpush1.bf16.msra.mxu0 0
      %7603 = vmatprep.subr.bf16.mxu0 0
      %7604 = vmatpush1.bf16.msra.mxu0 0
      %7605 = vmatprep.subr.bf16.mxu0 0
      %7606 = vmatpush1.bf16.msra.mxu0 0
      %7607 = vmatprep.subr.bf16.mxu0 0
      %7608 = vmatpush1.bf16.msra.mxu0 0
      %7609 = vmatprep.subr.bf16.mxu0 0
      %7610 = vmatpush1.bf16.msra.mxu0 0
      %7611 = vmatprep.subr.bf16.mxu0 0
      %7612 = vmatpush1.bf16.msra.mxu0 0
      %7613 = vmatprep.subr.bf16.mxu0 0
      %7614 = vmatpush1.bf16.msra.mxu0 0
      %7615 = vmatprep.subr.bf16.mxu0 0
      %7616 = vmatpush1.bf16.msra.mxu0 0
      %7617 = vmatprep.subr.bf16.mxu0 0
      %7618 = vmatpush1.bf16.msra.mxu0 0
      %7619 = vmatprep.subr.bf16.mxu0 0
      %7620 = vmatpush1.bf16.msra.mxu0 0
      %7621 = vmatprep.subr.bf16.mxu0 0
      %7622 = vmatpush1.bf16.msra.mxu0 0
      %7623 = vmatprep.subr.bf16.mxu0 0
      %7624 = vmatpush1.bf16.msra.mxu0 0
      %7625 = vmatprep.subr.bf16.mxu0 0
      %7626 = vmatpush1.bf16.msra.mxu0 0
      %7627 = vmatprep.mubr.bf16.mxu0 0
      %7628 = vmatmul.mubr.bf16.gmra.mrb[0].mxu0 %v7593
      %v7629 = vpop.f32.mrb[0].mxu0
      %v7630 = vadd.f32 0.0, %v7629
      %v7631 = vpop.f32.mrb[0].mxu0
      %v7632 = vpop.f32.mrb[0].mxu0
      %v7633 = vadd.f32 0.0, %v7632
      %v7634 = vpop.f32.mrb[0].mxu0
      %7635 = vdwg.mxu0
      %7636 = vrot.lane.b32.xlu0 %v539, 40
      %v7637 = vpop.permute.xlu0 %7636
      %v7640 = vsel %vm1356, %v7528, 0
      %7642 = vmatprep.subr.bf16.mxu0 0
      %7643 = vmatpush1.bf16.msra.mxu0 %v7637
      %7644 = vmatprep.subr.bf16.mxu0 0
      %7645 = vmatpush1.bf16.msra.mxu0 0
      %7646 = vmatprep.subr.bf16.mxu0 0
      %7647 = vmatpush1.bf16.msra.mxu0 0
      %7648 = vmatprep.subr.bf16.mxu0 0
      %7649 = vmatpush1.bf16.msra.mxu0 0
      %7650 = vmatprep.subr.bf16.mxu0 0
      %7651 = vmatpush1.bf16.msra.mxu0 0
      %7652 = vmatprep.subr.bf16.mxu0 0
      %7653 = vmatpush1.bf16.msra.mxu0 0
      %7654 = vmatprep.subr.bf16.mxu0 0
      %7655 = vmatpush1.bf16.msra.mxu0 0
      %7656 = vmatprep.subr.bf16.mxu0 0
      %7657 = vmatpush1.bf16.msra.mxu0 0
      %7658 = vmatprep.subr.bf16.mxu0 0
      %7659 = vmatpush1.bf16.msra.mxu0 0
      %7660 = vmatprep.subr.bf16.mxu0 0
      %7661 = vmatpush1.bf16.msra.mxu0 0
      %7662 = vmatprep.subr.bf16.mxu0 0
      %7663 = vmatpush1.bf16.msra.mxu0 0
      %7664 = vmatprep.subr.bf16.mxu0 0
      %7665 = vmatpush1.bf16.msra.mxu0 0
      %7666 = vmatprep.subr.bf16.mxu0 0
      %7667 = vmatpush1.bf16.msra.mxu0 0
      %7668 = vmatprep.subr.bf16.mxu0 0
      %7669 = vmatpush1.bf16.msra.mxu0 0
      %7670 = vmatprep.subr.bf16.mxu0 0
      %7671 = vmatpush1.bf16.msra.mxu0 0
      %7672 = vmatprep.subr.bf16.mxu0 0
      %7673 = vmatpush1.bf16.msra.mxu0 0
      %7674 = vmatprep.mubr.bf16.mxu0 0
      %7675 = vmatmul.mubr.bf16.gmra.mrb[0].mxu0 %v7640
      %v7676 = vpop.f32.mrb[0].mxu0
      %v7677 = vadd.f32 0.0, %v7676
      %v7678 = vpop.f32.mrb[0].mxu0
      %v7679 = vpop.f32.mrb[0].mxu0
      %v7680 = vadd.f32 0.0, %v7679
      %v7681 = vpop.f32.mrb[0].mxu0
      %7682 = vdwg.mxu0
      %7683 = vrot.lane.b32.xlu0 %v540, 40
      %v7684 = vpop.permute.xlu0 %7683
      %v7687 = vsel %vm1356, %v7529, 0
      %7689 = vmatprep.subr.bf16.mxu0 0
      %7690 = vmatpush1.bf16.msra.mxu0 %v7684
      %7691 = vmatprep.subr.bf16.mxu0 0
      %7692 = vmatpush1.bf16.msra.mxu0 0
      %7693 = vmatprep.subr.bf16.mxu0 0
      %7694 = vmatpush1.bf16.msra.mxu0 0
      %7695 = vmatprep.subr.bf16.mxu0 0
      %7696 = vmatpush1.bf16.msra.mxu0 0
      %7697 = vmatprep.subr.bf16.mxu0 0
      %7698 = vmatpush1.bf16.msra.mxu0 0
      %7699 = vmatprep.subr.bf16.mxu0 0
      %7700 = vmatpush1.bf16.msra.mxu0 0
      %7701 = vmatprep.subr.bf16.mxu0 0
      %7702 = vmatpush1.bf16.msra.mxu0 0
      %7703 = vmatprep.subr.bf16.mxu0 0
      %7704 = vmatpush1.bf16.msra.mxu0 0
      %7705 = vmatprep.subr.bf16.mxu0 0
      %7706 = vmatpush1.bf16.msra.mxu0 0
      %7707 = vmatprep.subr.bf16.mxu0 0
      %7708 = vmatpush1.bf16.msra.mxu0 0
      %7709 = vmatprep.subr.bf16.mxu0 0
      %7710 = vmatpush1.bf16.msra.mxu0 0
      %7711 = vmatprep.subr.bf16.mxu0 0
      %7712 = vmatpush1.bf16.msra.mxu0 0
      %7713 = vmatprep.subr.bf16.mxu0 0
      %7714 = vmatpush1.bf16.msra.mxu0 0
      %7715 = vmatprep.subr.bf16.mxu0 0
      %7716 = vmatpush1.bf16.msra.mxu0 0
      %7717 = vmatprep.subr.bf16.mxu0 0
      %7718 = vmatpush1.bf16.msra.mxu0 0
      %7719 = vmatprep.subr.bf16.mxu0 0
      %7720 = vmatpush1.bf16.msra.mxu0 0
      %7721 = vmatprep.mubr.bf16.mxu0 0
      %7722 = vmatmul.mubr.bf16.gmra.mrb[0].mxu0 %v7687
      %v7723 = vpop.f32.mrb[0].mxu0
      %v7724 = vadd.f32 0.0, %v7723
      %v7725 = vpop.f32.mrb[0].mxu0
      %v7726 = vpop.f32.mrb[0].mxu0
      %v7727 = vadd.f32 0.0, %v7726
      %v7728 = vpop.f32.mrb[0].mxu0
      %7729 = vdwg.mxu0
      %7730 = vrot.lane.b32.xlu0 %v541, 40
      %v7731 = vpop.permute.xlu0 %7730
      %v7734 = vsel %vm1356, %v7530, 0
      %7736 = vmatprep.subr.bf16.mxu0 0
      %7737 = vmatpush1.bf16.msra.mxu0 %v7731
      %7738 = vmatprep.subr.bf16.mxu0 0
      %7739 = vmatpush1.bf16.msra.mxu0 0
      %7740 = vmatprep.subr.bf16.mxu0 0
      %7741 = vmatpush1.bf16.msra.mxu0 0
      %7742 = vmatprep.subr.bf16.mxu0 0
      %7743 = vmatpush1.bf16.msra.mxu0 0
      %7744 = vmatprep.subr.bf16.mxu0 0
      %7745 = vmatpush1.bf16.msra.mxu0 0
      %7746 = vmatprep.subr.bf16.mxu0 0
      %7747 = vmatpush1.bf16.msra.mxu0 0
      %7748 = vmatprep.subr.bf16.mxu0 0
      %7749 = vmatpush1.bf16.msra.mxu0 0
      %7750 = vmatprep.subr.bf16.mxu0 0
      %7751 = vmatpush1.bf16.msra.mxu0 0
      %7752 = vmatprep.subr.bf16.mxu0 0
      %7753 = vmatpush1.bf16.msra.mxu0 0
      %7754 = vmatprep.subr.bf16.mxu0 0
      %7755 = vmatpush1.bf16.msra.mxu0 0
      %7756 = vmatprep.subr.bf16.mxu0 0
      %7757 = vmatpush1.bf16.msra.mxu0 0
      %7758 = vmatprep.subr.bf16.mxu0 0
      %7759 = vmatpush1.bf16.msra.mxu0 0
      %7760 = vmatprep.subr.bf16.mxu0 0
      %7761 = vmatpush1.bf16.msra.mxu0 0
      %7762 = vmatprep.subr.bf16.mxu0 0
      %7763 = vmatpush1.bf16.msra.mxu0 0
      %7764 = vmatprep.subr.bf16.mxu0 0
      %7765 = vmatpush1.bf16.msra.mxu0 0
      %7766 = vmatprep.subr.bf16.mxu0 0
      %7767 = vmatpush1.bf16.msra.mxu0 0
      %7768 = vmatprep.mubr.bf16.mxu0 0
      %7769 = vmatmul.mubr.bf16.gmra.mrb[0].mxu0 %v7734
      %v7770 = vpop.f32.mrb[0].mxu0
      %v7771 = vadd.f32 0.0, %v7770
      %v7772 = vpop.f32.mrb[0].mxu0
      %v7773 = vpop.f32.mrb[0].mxu0
      %v7774 = vadd.f32 0.0, %v7773
      %v7775 = vpop.f32.mrb[0].mxu0
      %7776 = vdwg.mxu0
      %7777 = vrot.lane.b32.xlu0 %v542, 40
      %v7778 = vpop.permute.xlu0 %7777
      %v7781 = vsel %vm1356, %v7531, 0
      %7783 = vmatprep.subr.bf16.mxu0 0
      %7784 = vmatpush1.bf16.msra.mxu0 %v7778
      %7785 = vmatprep.subr.bf16.mxu0 0
      %7786 = vmatpush1.bf16.msra.mxu0 0
      %7787 = vmatprep.subr.bf16.mxu0 0
      %7788 = vmatpush1.bf16.msra.mxu0 0
      %7789 = vmatprep.subr.bf16.mxu0 0
      %7790 = vmatpush1.bf16.msra.mxu0 0
      %7791 = vmatprep.subr.bf16.mxu0 0
      %7792 = vmatpush1.bf16.msra.mxu0 0
      %7793 = vmatprep.subr.bf16.mxu0 0
      %7794 = vmatpush1.bf16.msra.mxu0 0
      %7795 = vmatprep.subr.bf16.mxu0 0
      %7796 = vmatpush1.bf16.msra.mxu0 0
      %7797 = vmatprep.subr.bf16.mxu0 0
      %7798 = vmatpush1.bf16.msra.mxu0 0
      %7799 = vmatprep.subr.bf16.mxu0 0
      %7800 = vmatpush1.bf16.msra.mxu0 0
      %7801 = vmatprep.subr.bf16.mxu0 0
      %7802 = vmatpush1.bf16.msra.mxu0 0
      %7803 = vmatprep.subr.bf16.mxu0 0
      %7804 = vmatpush1.bf16.msra.mxu0 0
      %7805 = vmatprep.subr.bf16.mxu0 0
      %7806 = vmatpush1.bf16.msra.mxu0 0
      %7807 = vmatprep.subr.bf16.mxu0 0
      %7808 = vmatpush1.bf16.msra.mxu0 0
      %7809 = vmatprep.subr.bf16.mxu0 0
      %7810 = vmatpush1.bf16.msra.mxu0 0
      %7811 = vmatprep.subr.bf16.mxu0 0
      %7812 = vmatpush1.bf16.msra.mxu0 0
      %7813 = vmatprep.subr.bf16.mxu0 0
      %7814 = vmatpush1.bf16.msra.mxu0 0
      %7815 = vmatprep.mubr.bf16.mxu0 0
      %7816 = vmatmul.mubr.bf16.gmra.mrb[0].mxu0 %v7781
      %v7817 = vpop.f32.mrb[0].mxu0
      %v7818 = vadd.f32 0.0, %v7817
      %v7819 = vpop.f32.mrb[0].mxu0
      %v7820 = vpop.f32.mrb[0].mxu0
      %v7821 = vadd.f32 0.0, %v7820
      %v7822 = vpop.f32.mrb[0].mxu0
      %7823 = vdwg.mxu0
      %7824 = vrot.lane.b32.xlu0 %v543, 40
      %v7825 = vpop.permute.xlu0 %7824
      %v7828 = vsel %vm1356, %v7532, 0
      %7830 = vmatprep.subr.bf16.mxu0 0
      %7831 = vmatpush1.bf16.msra.mxu0 %v7825
      %7832 = vmatprep.subr.bf16.mxu0 0
      %7833 = vmatpush1.bf16.msra.mxu0 0
      %7834 = vmatprep.subr.bf16.mxu0 0
      %7835 = vmatpush1.bf16.msra.mxu0 0
      %7836 = vmatprep.subr.bf16.mxu0 0
      %7837 = vmatpush1.bf16.msra.mxu0 0
      %7838 = vmatprep.subr.bf16.mxu0 0
      %7839 = vmatpush1.bf16.msra.mxu0 0
      %7840 = vmatprep.subr.bf16.mxu0 0
      %7841 = vmatpush1.bf16.msra.mxu0 0
      %7842 = vmatprep.subr.bf16.mxu0 0
      %7843 = vmatpush1.bf16.msra.mxu0 0
      %7844 = vmatprep.subr.bf16.mxu0 0
      %7845 = vmatpush1.bf16.msra.mxu0 0
      %7846 = vmatprep.subr.bf16.mxu0 0
      %7847 = vmatpush1.bf16.msra.mxu0 0
      %7848 = vmatprep.subr.bf16.mxu0 0
      %7849 = vmatpush1.bf16.msra.mxu0 0
      %7850 = vmatprep.subr.bf16.mxu0 0
      %7851 = vmatpush1.bf16.msra.mxu0 0
      %7852 = vmatprep.subr.bf16.mxu0 0
      %7853 = vmatpush1.bf16.msra.mxu0 0
      %7854 = vmatprep.subr.bf16.mxu0 0
      %7855 = vmatpush1.bf16.msra.mxu0 0
      %7856 = vmatprep.subr.bf16.mxu0 0
      %7857 = vmatpush1.bf16.msra.mxu0 0
      %7858 = vmatprep.subr.bf16.mxu0 0
      %7859 = vmatpush1.bf16.msra.mxu0 0
      %7860 = vmatprep.subr.bf16.mxu0 0
      %7861 = vmatpush1.bf16.msra.mxu0 0
      %7862 = vmatprep.mubr.bf16.mxu0 0
      %7863 = vmatmul.mubr.bf16.gmra.mrb[0].mxu0 %v7828
      %v7864 = vpop.f32.mrb[0].mxu0
      %v7865 = vadd.f32 0.0, %v7864
      %v7866 = vpop.f32.mrb[0].mxu0
      %v7867 = vpop.f32.mrb[0].mxu0
      %v7868 = vadd.f32 0.0, %v7867
      %v7869 = vpop.f32.mrb[0].mxu0
      %7870 = vdwg.mxu0
      %7871 = vrot.lane.b32.xlu0 %v544, 40
      %v7872 = vpop.permute.xlu0 %7871
      %v7875 = vsel %vm1356, %v7533, 0
      %7877 = vmatprep.subr.bf16.mxu0 0
      %7878 = vmatpush1.bf16.msra.mxu0 %v7872
      %7879 = vmatprep.subr.bf16.mxu0 0
      %7880 = vmatpush1.bf16.msra.mxu0 0
      %7881 = vmatprep.subr.bf16.mxu0 0
      %7882 = vmatpush1.bf16.msra.mxu0 0
      %7883 = vmatprep.subr.bf16.mxu0 0
      %7884 = vmatpush1.bf16.msra.mxu0 0
      %7885 = vmatprep.subr.bf16.mxu0 0
      %7886 = vmatpush1.bf16.msra.mxu0 0
      %7887 = vmatprep.subr.bf16.mxu0 0
      %7888 = vmatpush1.bf16.msra.mxu0 0
      %7889 = vmatprep.subr.bf16.mxu0 0
      %7890 = vmatpush1.bf16.msra.mxu0 0
      %7891 = vmatprep.subr.bf16.mxu0 0
      %7892 = vmatpush1.bf16.msra.mxu0 0
      %7893 = vmatprep.subr.bf16.mxu0 0
      %7894 = vmatpush1.bf16.msra.mxu0 0
      %7895 = vmatprep.subr.bf16.mxu0 0
      %7896 = vmatpush1.bf16.msra.mxu0 0
      %7897 = vmatprep.subr.bf16.mxu0 0
      %7898 = vmatpush1.bf16.msra.mxu0 0
      %7899 = vmatprep.subr.bf16.mxu0 0
      %7900 = vmatpush1.bf16.msra.mxu0 0
      %7901 = vmatprep.subr.bf16.mxu0 0
      %7902 = vmatpush1.bf16.msra.mxu0 0
      %7903 = vmatprep.subr.bf16.mxu0 0
      %7904 = vmatpush1.bf16.msra.mxu0 0
      %7905 = vmatprep.subr.bf16.mxu0 0
      %7906 = vmatpush1.bf16.msra.mxu0 0
      %7907 = vmatprep.subr.bf16.mxu0 0
      %7908 = vmatpush1.bf16.msra.mxu0 0
      %7909 = vmatprep.mubr.bf16.mxu0 0
      %7910 = vmatmul.mubr.bf16.gmra.mrb[0].mxu0 %v7875
      %v7911 = vpop.f32.mrb[0].mxu0
      %v7912 = vadd.f32 0.0, %v7911
      %v7913 = vpop.f32.mrb[0].mxu0
      %v7914 = vpop.f32.mrb[0].mxu0
      %v7915 = vadd.f32 0.0, %v7914
      %v7916 = vpop.f32.mrb[0].mxu0
      %7917 = vdwg.mxu0
      %7918 = vrot.lane.b32.xlu0 %v545, 40
      %v7919 = vpop.permute.xlu0 %7918
      %v7922 = vsel %vm1356, %v7534, 0
      %7924 = vmatprep.subr.bf16.mxu0 0
      %7925 = vmatpush1.bf16.msra.mxu0 %v7919
      %7926 = vmatprep.subr.bf16.mxu0 0
      %7927 = vmatpush1.bf16.msra.mxu0 0
      %7928 = vmatprep.subr.bf16.mxu0 0
      %7929 = vmatpush1.bf16.msra.mxu0 0
      %7930 = vmatprep.subr.bf16.mxu0 0
      %7931 = vmatpush1.bf16.msra.mxu0 0
      %7932 = vmatprep.subr.bf16.mxu0 0
      %7933 = vmatpush1.bf16.msra.mxu0 0
      %7934 = vmatprep.subr.bf16.mxu0 0
      %7935 = vmatpush1.bf16.msra.mxu0 0
      %7936 = vmatprep.subr.bf16.mxu0 0
      %7937 = vmatpush1.bf16.msra.mxu0 0
      %7938 = vmatprep.subr.bf16.mxu0 0
      %7939 = vmatpush1.bf16.msra.mxu0 0
      %7940 = vmatprep.subr.bf16.mxu0 0
      %7941 = vmatpush1.bf16.msra.mxu0 0
      %7942 = vmatprep.subr.bf16.mxu0 0
      %7943 = vmatpush1.bf16.msra.mxu0 0
      %7944 = vmatprep.subr.bf16.mxu0 0
      %7945 = vmatpush1.bf16.msra.mxu0 0
      %7946 = vmatprep.subr.bf16.mxu0 0
      %7947 = vmatpush1.bf16.msra.mxu0 0
      %7948 = vmatprep.subr.bf16.mxu0 0
      %7949 = vmatpush1.bf16.msra.mxu0 0
      %7950 = vmatprep.subr.bf16.mxu0 0
      %7951 = vmatpush1.bf16.msra.mxu0 0
      %7952 = vmatprep.subr.bf16.mxu0 0
      %7953 = vmatpush1.bf16.msra.mxu0 0
      %7954 = vmatprep.subr.bf16.mxu0 0
      %7955 = vmatpush1.bf16.msra.mxu0 0
      %7956 = vmatprep.mubr.bf16.mxu0 0
      %7957 = vmatmul.mubr.bf16.gmra.mrb[0].mxu0 %v7922
      %v7958 = vpop.f32.mrb[0].mxu0
      %v7959 = vadd.f32 0.0, %v7958
      %v7960 = vpop.f32.mrb[0].mxu0
      %v7961 = vpop.f32.mrb[0].mxu0
      %v7962 = vadd.f32 0.0, %v7961
      %v7963 = vpop.f32.mrb[0].mxu0
      %7964 = vdwg.mxu0
      %7965 = vrot.lane.b32.xlu0 %v546, 40
      %v7966 = vpop.permute.xlu0 %7965
      %v7969 = vsel %vm1356, %v7535, 0
      %7971 = vmatprep.subr.bf16.mxu0 0
      %7972 = vmatpush1.bf16.msra.mxu0 %v7966
      %7973 = vmatprep.subr.bf16.mxu0 0
      %7974 = vmatpush1.bf16.msra.mxu0 0
      %7975 = vmatprep.subr.bf16.mxu0 0
      %7976 = vmatpush1.bf16.msra.mxu0 0
      %7977 = vmatprep.subr.bf16.mxu0 0
      %7978 = vmatpush1.bf16.msra.mxu0 0
      %7979 = vmatprep.subr.bf16.mxu0 0
      %7980 = vmatpush1.bf16.msra.mxu0 0
      %7981 = vmatprep.subr.bf16.mxu0 0
      %7982 = vmatpush1.bf16.msra.mxu0 0
      %7983 = vmatprep.subr.bf16.mxu0 0
      %7984 = vmatpush1.bf16.msra.mxu0 0
      %7985 = vmatprep.subr.bf16.mxu0 0
      %7986 = vmatpush1.bf16.msra.mxu0 0
      %7987 = vmatprep.subr.bf16.mxu0 0
      %7988 = vmatpush1.bf16.msra.mxu0 0
      %7989 = vmatprep.subr.bf16.mxu0 0
      %7990 = vmatpush1.bf16.msra.mxu0 0
      %7991 = vmatprep.subr.bf16.mxu0 0
      %7992 = vmatpush1.bf16.msra.mxu0 0
      %7993 = vmatprep.subr.bf16.mxu0 0
      %7994 = vmatpush1.bf16.msra.mxu0 0
      %7995 = vmatprep.subr.bf16.mxu0 0
      %7996 = vmatpush1.bf16.msra.mxu0 0
      %7997 = vmatprep.subr.bf16.mxu0 0
      %7998 = vmatpush1.bf16.msra.mxu0 0
      %7999 = vmatprep.subr.bf16.mxu0 0
      %8000 = vmatpush1.bf16.msra.mxu0 0
      %8001 = vmatprep.subr.bf16.mxu0 0
      %8002 = vmatpush1.bf16.msra.mxu0 0
      %8003 = vmatprep.mubr.bf16.mxu0 0
      %8004 = vmatmul.mubr.bf16.gmra.mrb[0].mxu0 %v7969
      %v8005 = vpop.f32.mrb[0].mxu0
      %v8006 = vadd.f32 0.0, %v8005
      %v8007 = vpop.f32.mrb[0].mxu0
      %v8008 = vpop.f32.mrb[0].mxu0
      %v8009 = vadd.f32 0.0, %v8008
      %v8010 = vpop.f32.mrb[0].mxu0
      %8011 = vdwg.mxu0
      %8012 = vrot.lane.b32.xlu0 %v547, 40
      %v8013 = vpop.permute.xlu0 %8012
      %v8016 = vsel %vm1356, %v7536, 0
      %8018 = vmatprep.subr.bf16.mxu0 0
      %8019 = vmatpush1.bf16.msra.mxu0 %v8013
      %8020 = vmatprep.subr.bf16.mxu0 0
      %8021 = vmatpush1.bf16.msra.mxu0 0
      %8022 = vmatprep.subr.bf16.mxu0 0
      %8023 = vmatpush1.bf16.msra.mxu0 0
      %8024 = vmatprep.subr.bf16.mxu0 0
      %8025 = vmatpush1.bf16.msra.mxu0 0
      %8026 = vmatprep.subr.bf16.mxu0 0
      %8027 = vmatpush1.bf16.msra.mxu0 0
      %8028 = vmatprep.subr.bf16.mxu0 0
      %8029 = vmatpush1.bf16.msra.mxu0 0
      %8030 = vmatprep.subr.bf16.mxu0 0
      %8031 = vmatpush1.bf16.msra.mxu0 0
      %8032 = vmatprep.subr.bf16.mxu0 0
      %8033 = vmatpush1.bf16.msra.mxu0 0
      %8034 = vmatprep.subr.bf16.mxu0 0
      %8035 = vmatpush1.bf16.msra.mxu0 0
      %8036 = vmatprep.subr.bf16.mxu0 0
      %8037 = vmatpush1.bf16.msra.mxu0 0
      %8038 = vmatprep.subr.bf16.mxu0 0
      %8039 = vmatpush1.bf16.msra.mxu0 0
      %8040 = vmatprep.subr.bf16.mxu0 0
      %8041 = vmatpush1.bf16.msra.mxu0 0
      %8042 = vmatprep.subr.bf16.mxu0 0
      %8043 = vmatpush1.bf16.msra.mxu0 0
      %8044 = vmatprep.subr.bf16.mxu0 0
      %8045 = vmatpush1.bf16.msra.mxu0 0
      %8046 = vmatprep.subr.bf16.mxu0 0
      %8047 = vmatpush1.bf16.msra.mxu0 0
      %8048 = vmatprep.subr.bf16.mxu0 0
      %8049 = vmatpush1.bf16.msra.mxu0 0
      %8050 = vmatprep.mubr.bf16.mxu0 0
      %8051 = vmatmul.mubr.bf16.gmra.mrb[0].mxu0 %v8016
      %v8052 = vpop.f32.mrb[0].mxu0
      %v8053 = vadd.f32 0.0, %v8052
      %v8054 = vpop.f32.mrb[0].mxu0
      %v8055 = vpop.f32.mrb[0].mxu0
      %v8056 = vadd.f32 0.0, %v8055
      %v8057 = vpop.f32.mrb[0].mxu0
      %8058 = vdwg.mxu0
      %8059 = vrot.lane.b32.xlu0 %v548, 40
      %v8060 = vpop.permute.xlu0 %8059
      %v8063 = vsel %vm1356, %v7537, 0
      %8065 = vmatprep.subr.bf16.mxu0 0
      %8066 = vmatpush1.bf16.msra.mxu0 %v8060
      %8067 = vmatprep.subr.bf16.mxu0 0
      %8068 = vmatpush1.bf16.msra.mxu0 0
      %8069 = vmatprep.subr.bf16.mxu0 0
      %8070 = vmatpush1.bf16.msra.mxu0 0
      %8071 = vmatprep.subr.bf16.mxu0 0
      %8072 = vmatpush1.bf16.msra.mxu0 0
      %8073 = vmatprep.subr.bf16.mxu0 0
      %8074 = vmatpush1.bf16.msra.mxu0 0
      %8075 = vmatprep.subr.bf16.mxu0 0
      %8076 = vmatpush1.bf16.msra.mxu0 0
      %8077 = vmatprep.subr.bf16.mxu0 0
      %8078 = vmatpush1.bf16.msra.mxu0 0
      %8079 = vmatprep.subr.bf16.mxu0 0
      %8080 = vmatpush1.bf16.msra.mxu0 0
      %8081 = vmatprep.subr.bf16.mxu0 0
      %8082 = vmatpush1.bf16.msra.mxu0 0
      %8083 = vmatprep.subr.bf16.mxu0 0
      %8084 = vmatpush1.bf16.msra.mxu0 0
      %8085 = vmatprep.subr.bf16.mxu0 0
      %8086 = vmatpush1.bf16.msra.mxu0 0
      %8087 = vmatprep.subr.bf16.mxu0 0
      %8088 = vmatpush1.bf16.msra.mxu0 0
      %8089 = vmatprep.subr.bf16.mxu0 0
      %8090 = vmatpush1.bf16.msra.mxu0 0
      %8091 = vmatprep.subr.bf16.mxu0 0
      %8092 = vmatpush1.bf16.msra.mxu0 0
      %8093 = vmatprep.subr.bf16.mxu0 0
      %8094 = vmatpush1.bf16.msra.mxu0 0
      %8095 = vmatprep.subr.bf16.mxu0 0
      %8096 = vmatpush1.bf16.msra.mxu0 0
      %8097 = vmatprep.mubr.bf16.mxu0 0
      %8098 = vmatmul.mubr.bf16.gmra.mrb[0].mxu0 %v8063
      %v8099 = vpop.f32.mrb[0].mxu0
      %v8100 = vadd.f32 0.0, %v8099
      %v8101 = vpop.f32.mrb[0].mxu0
      %v8102 = vpop.f32.mrb[0].mxu0
      %v8103 = vadd.f32 0.0, %v8102
      %v8104 = vpop.f32.mrb[0].mxu0
      %8105 = vdwg.mxu0
      %8106 = vrot.lane.b32.xlu0 %v549, 40
      %v8107 = vpop.permute.xlu0 %8106
      %v8110 = vsel %vm1356, %v7538, 0
      %8112 = vmatprep.subr.bf16.mxu0 0
      %8113 = vmatpush1.bf16.msra.mxu0 %v8107
      %8114 = vmatprep.subr.bf16.mxu0 0
      %8115 = vmatpush1.bf16.msra.mxu0 0
      %8116 = vmatprep.subr.bf16.mxu0 0
      %8117 = vmatpush1.bf16.msra.mxu0 0
      %8118 = vmatprep.subr.bf16.mxu0 0
      %8119 = vmatpush1.bf16.msra.mxu0 0
      %8120 = vmatprep.subr.bf16.mxu0 0
      %8121 = vmatpush1.bf16.msra.mxu0 0
      %8122 = vmatprep.subr.bf16.mxu0 0
      %8123 = vmatpush1.bf16.msra.mxu0 0
      %8124 = vmatprep.subr.bf16.mxu0 0
      %8125 = vmatpush1.bf16.msra.mxu0 0
      %8126 = vmatprep.subr.bf16.mxu0 0
      %8127 = vmatpush1.bf16.msra.mxu0 0
      %8128 = vmatprep.subr.bf16.mxu0 0
      %8129 = vmatpush1.bf16.msra.mxu0 0
      %8130 = vmatprep.subr.bf16.mxu0 0
      %8131 = vmatpush1.bf16.msra.mxu0 0
      %8132 = vmatprep.subr.bf16.mxu0 0
      %8133 = vmatpush1.bf16.msra.mxu0 0
      %8134 = vmatprep.subr.bf16.mxu0 0
      %8135 = vmatpush1.bf16.msra.mxu0 0
      %8136 = vmatprep.subr.bf16.mxu0 0
      %8137 = vmatpush1.bf16.msra.mxu0 0
      %8138 = vmatprep.subr.bf16.mxu0 0
      %8139 = vmatpush1.bf16.msra.mxu0 0
      %8140 = vmatprep.subr.bf16.mxu0 0
      %8141 = vmatpush1.bf16.msra.mxu0 0
      %8142 = vmatprep.subr.bf16.mxu0 0
      %8143 = vmatpush1.bf16.msra.mxu0 0
      %8144 = vmatprep.mubr.bf16.mxu0 0
      %8145 = vmatmul.mubr.bf16.gmra.mrb[0].mxu0 %v8110
      %v8146 = vpop.f32.mrb[0].mxu0
      %v8147 = vadd.f32 0.0, %v8146
      %v8148 = vpop.f32.mrb[0].mxu0
      %v8149 = vpop.f32.mrb[0].mxu0
      %v8150 = vadd.f32 0.0, %v8149
      %v8151 = vpop.f32.mrb[0].mxu0
      %8152 = vdwg.mxu0
      %8153 = vrot.lane.b32.xlu0 %v550, 40
      %v8154 = vpop.permute.xlu0 %8153
      %v8157 = vsel %vm1356, %v7539, 0
      %8159 = vmatprep.subr.bf16.mxu0 0
      %8160 = vmatpush1.bf16.msra.mxu0 %v8154
      %8161 = vmatprep.subr.bf16.mxu0 0
      %8162 = vmatpush1.bf16.msra.mxu0 0
      %8163 = vmatprep.subr.bf16.mxu0 0
      %8164 = vmatpush1.bf16.msra.mxu0 0
      %8165 = vmatprep.subr.bf16.mxu0 0
      %8166 = vmatpush1.bf16.msra.mxu0 0
      %8167 = vmatprep.subr.bf16.mxu0 0
      %8168 = vmatpush1.bf16.msra.mxu0 0
      %8169 = vmatprep.subr.bf16.mxu0 0
      %8170 = vmatpush1.bf16.msra.mxu0 0
      %8171 = vmatprep.subr.bf16.mxu0 0
      %8172 = vmatpush1.bf16.msra.mxu0 0
      %8173 = vmatprep.subr.bf16.mxu0 0
      %8174 = vmatpush1.bf16.msra.mxu0 0
      %8175 = vmatprep.subr.bf16.mxu0 0
      %8176 = vmatpush1.bf16.msra.mxu0 0
      %8177 = vmatprep.subr.bf16.mxu0 0
      %8178 = vmatpush1.bf16.msra.mxu0 0
      %8179 = vmatprep.subr.bf16.mxu0 0
      %8180 = vmatpush1.bf16.msra.mxu0 0
      %8181 = vmatprep.subr.bf16.mxu0 0
      %8182 = vmatpush1.bf16.msra.mxu0 0
      %8183 = vmatprep.subr.bf16.mxu0 0
      %8184 = vmatpush1.bf16.msra.mxu0 0
      %8185 = vmatprep.subr.bf16.mxu0 0
      %8186 = vmatpush1.bf16.msra.mxu0 0
      %8187 = vmatprep.subr.bf16.mxu0 0
      %8188 = vmatpush1.bf16.msra.mxu0 0
      %8189 = vmatprep.subr.bf16.mxu0 0
      %8190 = vmatpush1.bf16.msra.mxu0 0
      %8191 = vmatprep.mubr.bf16.mxu0 0
      %8192 = vmatmul.mubr.bf16.gmra.mrb[0].mxu0 %v8157
      %v8193 = vpop.f32.mrb[0].mxu0
      %v8194 = vadd.f32 0.0, %v8193
      %v8195 = vpop.f32.mrb[0].mxu0
      %v8196 = vpop.f32.mrb[0].mxu0
      %v8197 = vadd.f32 0.0, %v8196
      %v8198 = vpop.f32.mrb[0].mxu0
      %8199 = vdwg.mxu0
      %8200 = vrot.lane.b32.xlu0 %v551, 40
      %v8201 = vpop.permute.xlu0 %8200
      %v8204 = vsel %vm1356, %v7540, 0
      %8206 = vmatprep.subr.bf16.mxu0 0
      %8207 = vmatpush1.bf16.msra.mxu0 %v8201
      %8208 = vmatprep.subr.bf16.mxu0 0
      %8209 = vmatpush1.bf16.msra.mxu0 0
      %8210 = vmatprep.subr.bf16.mxu0 0
      %8211 = vmatpush1.bf16.msra.mxu0 0
      %8212 = vmatprep.subr.bf16.mxu0 0
      %8213 = vmatpush1.bf16.msra.mxu0 0
      %8214 = vmatprep.subr.bf16.mxu0 0
      %8215 = vmatpush1.bf16.msra.mxu0 0
      %8216 = vmatprep.subr.bf16.mxu0 0
      %8217 = vmatpush1.bf16.msra.mxu0 0
      %8218 = vmatprep.subr.bf16.mxu0 0
      %8219 = vmatpush1.bf16.msra.mxu0 0
      %8220 = vmatprep.subr.bf16.mxu0 0
      %8221 = vmatpush1.bf16.msra.mxu0 0
      %8222 = vmatprep.subr.bf16.mxu0 0
      %8223 = vmatpush1.bf16.msra.mxu0 0
      %8224 = vmatprep.subr.bf16.mxu0 0
      %8225 = vmatpush1.bf16.msra.mxu0 0
      %8226 = vmatprep.subr.bf16.mxu0 0
      %8227 = vmatpush1.bf16.msra.mxu0 0
      %8228 = vmatprep.subr.bf16.mxu0 0
      %8229 = vmatpush1.bf16.msra.mxu0 0
      %8230 = vmatprep.subr.bf16.mxu0 0
      %8231 = vmatpush1.bf16.msra.mxu0 0
      %8232 = vmatprep.subr.bf16.mxu0 0
      %8233 = vmatpush1.bf16.msra.mxu0 0
      %8234 = vmatprep.subr.bf16.mxu0 0
      %8235 = vmatpush1.bf16.msra.mxu0 0
      %8236 = vmatprep.subr.bf16.mxu0 0
      %8237 = vmatpush1.bf16.msra.mxu0 0
      %8238 = vmatprep.mubr.bf16.mxu0 0
      %8239 = vmatmul.mubr.bf16.gmra.mrb[0].mxu0 %v8204
      %v8240 = vpop.f32.mrb[0].mxu0
      %v8241 = vadd.f32 0.0, %v8240
      %v8242 = vpop.f32.mrb[0].mxu0
      %v8243 = vpop.f32.mrb[0].mxu0
      %v8244 = vadd.f32 0.0, %v8243
      %v8245 = vpop.f32.mrb[0].mxu0
      %8246 = vdwg.mxu0
      %8247 = vrot.lane.b32.xlu0 %v552, 40
      %v8248 = vpop.permute.xlu0 %8247
      %v8251 = vsel %vm1356, %v7541, 0
      %8253 = vmatprep.subr.bf16.mxu0 0
      %8254 = vmatpush1.bf16.msra.mxu0 %v8248
      %8255 = vmatprep.subr.bf16.mxu0 0
      %8256 = vmatpush1.bf16.msra.mxu0 0
      %8257 = vmatprep.subr.bf16.mxu0 0
      %8258 = vmatpush1.bf16.msra.mxu0 0
      %8259 = vmatprep.subr.bf16.mxu0 0
      %8260 = vmatpush1.bf16.msra.mxu0 0
      %8261 = vmatprep.subr.bf16.mxu0 0
      %8262 = vmatpush1.bf16.msra.mxu0 0
      %8263 = vmatprep.subr.bf16.mxu0 0
      %8264 = vmatpush1.bf16.msra.mxu0 0
      %8265 = vmatprep.subr.bf16.mxu0 0
      %8266 = vmatpush1.bf16.msra.mxu0 0
      %8267 = vmatprep.subr.bf16.mxu0 0
      %8268 = vmatpush1.bf16.msra.mxu0 0
      %8269 = vmatprep.subr.bf16.mxu0 0
      %8270 = vmatpush1.bf16.msra.mxu0 0
      %8271 = vmatprep.subr.bf16.mxu0 0
      %8272 = vmatpush1.bf16.msra.mxu0 0
      %8273 = vmatprep.subr.bf16.mxu0 0
      %8274 = vmatpush1.bf16.msra.mxu0 0
      %8275 = vmatprep.subr.bf16.mxu0 0
      %8276 = vmatpush1.bf16.msra.mxu0 0
      %8277 = vmatprep.subr.bf16.mxu0 0
      %8278 = vmatpush1.bf16.msra.mxu0 0
      %8279 = vmatprep.subr.bf16.mxu0 0
      %8280 = vmatpush1.bf16.msra.mxu0 0
      %8281 = vmatprep.subr.bf16.mxu0 0
      %8282 = vmatpush1.bf16.msra.mxu0 0
      %8283 = vmatprep.subr.bf16.mxu0 0
      %8284 = vmatpush1.bf16.msra.mxu0 0
      %8285 = vmatprep.mubr.bf16.mxu0 0
      %8286 = vmatmul.mubr.bf16.gmra.mrb[0].mxu0 %v8251
      %v8287 = vpop.f32.mrb[0].mxu0
      %v8288 = vadd.f32 0.0, %v8287
      %v8289 = vpop.f32.mrb[0].mxu0
      %v8290 = vpop.f32.mrb[0].mxu0
      %v8291 = vadd.f32 0.0, %v8290
      %v8292 = vpop.f32.mrb[0].mxu0
      %8293 = vdwg.mxu0
      %8326 = vrot.lane.b32.xlu0 %v3705, 8
      %v8327 = vpop.permute.xlu0 %8326
      %8328 = vrot.lane.b32.xlu0 %v3708, 8
      %v8329 = vpop.permute.xlu0 %8328
      %8330 = vrot.lane.b32.xlu0 %v3752, 8
      %v8331 = vpop.permute.xlu0 %8330
      %8332 = vrot.lane.b32.xlu0 %v3755, 8
      %v8333 = vpop.permute.xlu0 %8332
      %8334 = vrot.lane.b32.xlu0 %v3799, 8
      %v8335 = vpop.permute.xlu0 %8334
      %8336 = vrot.lane.b32.xlu0 %v3802, 8
      %v8337 = vpop.permute.xlu0 %8336
      %8338 = vrot.lane.b32.xlu0 %v3846, 8
      %v8339 = vpop.permute.xlu0 %8338
      %8340 = vrot.lane.b32.xlu0 %v3849, 8
      %v8341 = vpop.permute.xlu0 %8340
      %8342 = vrot.lane.b32.xlu0 %v3893, 8
      %v8343 = vpop.permute.xlu0 %8342
      %8344 = vrot.lane.b32.xlu0 %v3896, 8
      %v8345 = vpop.permute.xlu0 %8344
      %8346 = vrot.lane.b32.xlu0 %v3940, 8
      %v8347 = vpop.permute.xlu0 %8346
      %8348 = vrot.lane.b32.xlu0 %v3943, 8
      %v8349 = vpop.permute.xlu0 %8348
      %8350 = vrot.lane.b32.xlu0 %v3987, 8
      %v8351 = vpop.permute.xlu0 %8350
      %8352 = vrot.lane.b32.xlu0 %v3990, 8
      %v8353 = vpop.permute.xlu0 %8352
      %8354 = vrot.lane.b32.xlu0 %v4034, 8
      %v8355 = vpop.permute.xlu0 %8354
      %8356 = vrot.lane.b32.xlu0 %v4037, 8
      %v8357 = vpop.permute.xlu0 %8356
      %8358 = vrot.lane.b32.xlu0 %v4081, 8
      %v8359 = vpop.permute.xlu0 %8358
      %8360 = vrot.lane.b32.xlu0 %v4084, 8
      %v8361 = vpop.permute.xlu0 %8360
      %8362 = vrot.lane.b32.xlu0 %v4128, 8
      %v8363 = vpop.permute.xlu0 %8362
      %8364 = vrot.lane.b32.xlu0 %v4131, 8
      %v8365 = vpop.permute.xlu0 %8364
      %8366 = vrot.lane.b32.xlu0 %v4175, 8
      %v8367 = vpop.permute.xlu0 %8366
      %8368 = vrot.lane.b32.xlu0 %v4178, 8
      %v8369 = vpop.permute.xlu0 %8368
      %8370 = vrot.lane.b32.xlu0 %v4222, 8
      %v8371 = vpop.permute.xlu0 %8370
      %8372 = vrot.lane.b32.xlu0 %v4225, 8
      %v8373 = vpop.permute.xlu0 %8372
      %8374 = vrot.lane.b32.xlu0 %v4269, 8
      %v8375 = vpop.permute.xlu0 %8374
      %8376 = vrot.lane.b32.xlu0 %v4272, 8
      %v8377 = vpop.permute.xlu0 %8376
      %8378 = vrot.lane.b32.xlu0 %v4316, 8
      %v8379 = vpop.permute.xlu0 %8378
      %8380 = vrot.lane.b32.xlu0 %v4319, 8
      %v8381 = vpop.permute.xlu0 %8380
      %8382 = vrot.lane.b32.xlu0 %v4363, 8
      %v8383 = vpop.permute.xlu0 %8382
      %8384 = vrot.lane.b32.xlu0 %v4366, 8
      %v8385 = vpop.permute.xlu0 %8384
      %8386 = vrot.lane.b32.xlu0 %v4410, 8
      %v8387 = vpop.permute.xlu0 %8386
      %8388 = vrot.lane.b32.xlu0 %v4413, 8
      %v8389 = vpop.permute.xlu0 %8388
      %8454 = vrot.lane.b32.xlu0 %v5644, 16
      %v8455 = vpop.permute.xlu0 %8454
      %8456 = vrot.lane.b32.xlu0 %v5647, 16
      %v8457 = vpop.permute.xlu0 %8456
      %8458 = vrot.lane.b32.xlu0 %v5691, 16
      %v8459 = vpop.permute.xlu0 %8458
      %8460 = vrot.lane.b32.xlu0 %v5694, 16
      %v8461 = vpop.permute.xlu0 %8460
      %8462 = vrot.lane.b32.xlu0 %v5738, 16
      %v8463 = vpop.permute.xlu0 %8462
      %8464 = vrot.lane.b32.xlu0 %v5741, 16
      %v8465 = vpop.permute.xlu0 %8464
      %8466 = vrot.lane.b32.xlu0 %v5785, 16
      %v8467 = vpop.permute.xlu0 %8466
      %8468 = vrot.lane.b32.xlu0 %v5788, 16
      %v8469 = vpop.permute.xlu0 %8468
      %8470 = vrot.lane.b32.xlu0 %v5832, 16
      %v8471 = vpop.permute.xlu0 %8470
      %8472 = vrot.lane.b32.xlu0 %v5835, 16
      %v8473 = vpop.permute.xlu0 %8472
      %8474 = vrot.lane.b32.xlu0 %v5879, 16
      %v8475 = vpop.permute.xlu0 %8474
      %8476 = vrot.lane.b32.xlu0 %v5882, 16
      %v8477 = vpop.permute.xlu0 %8476
      %8478 = vrot.lane.b32.xlu0 %v5926, 16
      %v8479 = vpop.permute.xlu0 %8478
      %8480 = vrot.lane.b32.xlu0 %v5929, 16
      %v8481 = vpop.permute.xlu0 %8480
      %8482 = vrot.lane.b32.xlu0 %v5973, 16
      %v8483 = vpop.permute.xlu0 %8482
      %8484 = vrot.lane.b32.xlu0 %v5976, 16
      %v8485 = vpop.permute.xlu0 %8484
      %8486 = vrot.lane.b32.xlu0 %v6020, 16
      %v8487 = vpop.permute.xlu0 %8486
      %8488 = vrot.lane.b32.xlu0 %v6023, 16
      %v8489 = vpop.permute.xlu0 %8488
      %8490 = vrot.lane.b32.xlu0 %v6067, 16
      %v8491 = vpop.permute.xlu0 %8490
      %8492 = vrot.lane.b32.xlu0 %v6070, 16
      %v8493 = vpop.permute.xlu0 %8492
      %8494 = vrot.lane.b32.xlu0 %v6114, 16
      %v8495 = vpop.permute.xlu0 %8494
      %8496 = vrot.lane.b32.xlu0 %v6117, 16
      %v8497 = vpop.permute.xlu0 %8496
      %8498 = vrot.lane.b32.xlu0 %v6161, 16
      %v8499 = vpop.permute.xlu0 %8498
      %8500 = vrot.lane.b32.xlu0 %v6164, 16
      %v8501 = vpop.permute.xlu0 %8500
      %8502 = vrot.lane.b32.xlu0 %v6208, 16
      %v8503 = vpop.permute.xlu0 %8502
      %8504 = vrot.lane.b32.xlu0 %v6211, 16
      %v8505 = vpop.permute.xlu0 %8504
      %8506 = vrot.lane.b32.xlu0 %v6255, 16
      %v8507 = vpop.permute.xlu0 %8506
      %8508 = vrot.lane.b32.xlu0 %v6258, 16
      %v8509 = vpop.permute.xlu0 %8508
      %8510 = vrot.lane.b32.xlu0 %v6302, 16
      %v8511 = vpop.permute.xlu0 %8510
      %8512 = vrot.lane.b32.xlu0 %v6305, 16
      %v8513 = vpop.permute.xlu0 %8512
      %8514 = vrot.lane.b32.xlu0 %v6349, 16
      %v8515 = vpop.permute.xlu0 %8514
      %8516 = vrot.lane.b32.xlu0 %v6352, 16
      %v8517 = vpop.permute.xlu0 %8516
      %8582 = vrot.lane.b32.xlu0 %v7583, 24
      %v8583 = vpop.permute.xlu0 %8582
      %8584 = vrot.lane.b32.xlu0 %v7586, 24
      %v8585 = vpop.permute.xlu0 %8584
      %8586 = vrot.lane.b32.xlu0 %v7630, 24
      %v8587 = vpop.permute.xlu0 %8586
      %8588 = vrot.lane.b32.xlu0 %v7633, 24
      %v8589 = vpop.permute.xlu0 %8588
      %8590 = vrot.lane.b32.xlu0 %v7677, 24
      %v8591 = vpop.permute.xlu0 %8590
      %8592 = vrot.lane.b32.xlu0 %v7680, 24
      %v8593 = vpop.permute.xlu0 %8592
      %8594 = vrot.lane.b32.xlu0 %v7724, 24
      %v8595 = vpop.permute.xlu0 %8594
      %8596 = vrot.lane.b32.xlu0 %v7727, 24
      %v8597 = vpop.permute.xlu0 %8596
      %8598 = vrot.lane.b32.xlu0 %v7771, 24
      %v8599 = vpop.permute.xlu0 %8598
      %8600 = vrot.lane.b32.xlu0 %v7774, 24
      %v8601 = vpop.permute.xlu0 %8600
      %8602 = vrot.lane.b32.xlu0 %v7818, 24
      %v8603 = vpop.permute.xlu0 %8602
      %8604 = vrot.lane.b32.xlu0 %v7821, 24
      %v8605 = vpop.permute.xlu0 %8604
      %8606 = vrot.lane.b32.xlu0 %v7865, 24
      %v8607 = vpop.permute.xlu0 %8606
      %8608 = vrot.lane.b32.xlu0 %v7868, 24
      %v8609 = vpop.permute.xlu0 %8608
      %8610 = vrot.lane.b32.xlu0 %v7912, 24
      %v8611 = vpop.permute.xlu0 %8610
      %8612 = vrot.lane.b32.xlu0 %v7915, 24
      %v8613 = vpop.permute.xlu0 %8612
      %8614 = vrot.lane.b32.xlu0 %v7959, 24
      %v8615 = vpop.permute.xlu0 %8614
      %8616 = vrot.lane.b32.xlu0 %v7962, 24
      %v8617 = vpop.permute.xlu0 %8616
      %8618 = vrot.lane.b32.xlu0 %v8006, 24
      %v8619 = vpop.permute.xlu0 %8618
      %8620 = vrot.lane.b32.xlu0 %v8009, 24
      %v8621 = vpop.permute.xlu0 %8620
      %8622 = vrot.lane.b32.xlu0 %v8053, 24
      %v8623 = vpop.permute.xlu0 %8622
      %8624 = vrot.lane.b32.xlu0 %v8056, 24
      %v8625 = vpop.permute.xlu0 %8624
      %8626 = vrot.lane.b32.xlu0 %v8100, 24
      %v8627 = vpop.permute.xlu0 %8626
      %8628 = vrot.lane.b32.xlu0 %v8103, 24
      %v8629 = vpop.permute.xlu0 %8628
      %8630 = vrot.lane.b32.xlu0 %v8147, 24
      %v8631 = vpop.permute.xlu0 %8630
      %8632 = vrot.lane.b32.xlu0 %v8150, 24
      %v8633 = vpop.permute.xlu0 %8632
      %8634 = vrot.lane.b32.xlu0 %v8194, 24
      %v8635 = vpop.permute.xlu0 %8634
      %8636 = vrot.lane.b32.xlu0 %v8197, 24
      %v8637 = vpop.permute.xlu0 %8636
      %8638 = vrot.lane.b32.xlu0 %v8241, 24
      %v8639 = vpop.permute.xlu0 %8638
      %8640 = vrot.lane.b32.xlu0 %v8244, 24
      %v8641 = vpop.permute.xlu0 %8640
      %8642 = vrot.lane.b32.xlu0 %v8288, 24
      %v8643 = vpop.permute.xlu0 %8642
      %8644 = vrot.lane.b32.xlu0 %v8291, 24
      %v8645 = vpop.permute.xlu0 %8644
      %v8678 = vsel %vm558, %v1766, %v8327
      %v8679 = vsel %vm558, %v1769, %v8329
      %v8680 = vsel %vm558, %v1813, %v8331
      %v8681 = vsel %vm558, %v1816, %v8333
      %v8682 = vsel %vm558, %v1860, %v8335
      %v8683 = vsel %vm558, %v1863, %v8337
      %v8684 = vsel %vm558, %v1907, %v8339
      %v8685 = vsel %vm558, %v1910, %v8341
      %v8686 = vsel %vm558, %v1954, %v8343
      %v8687 = vsel %vm558, %v1957, %v8345
      %v8688 = vsel %vm558, %v2001, %v8347
      %v8689 = vsel %vm558, %v2004, %v8349
      %v8690 = vsel %vm558, %v2048, %v8351
      %v8691 = vsel %vm558, %v2051, %v8353
      %v8692 = vsel %vm558, %v2095, %v8355
      %v8693 = vsel %vm558, %v2098, %v8357
      %v8694 = vsel %vm558, %v2142, %v8359
      %v8695 = vsel %vm558, %v2145, %v8361
      %v8696 = vsel %vm558, %v2189, %v8363
      %v8697 = vsel %vm558, %v2192, %v8365
      %v8698 = vsel %vm558, %v2236, %v8367
      %v8699 = vsel %vm558, %v2239, %v8369
      %v8700 = vsel %vm558, %v2283, %v8371
      %v8701 = vsel %vm558, %v2286, %v8373
      %v8702 = vsel %vm558, %v2330, %v8375
      %v8703 = vsel %vm558, %v2333, %v8377
      %v8704 = vsel %vm558, %v2377, %v8379
      %v8705 = vsel %vm558, %v2380, %v8381
      %v8706 = vsel %vm558, %v2424, %v8383
      %v8707 = vsel %vm558, %v2427, %v8385
      %v8708 = vsel %vm558, %v2471, %v8387
      %v8709 = vsel %vm558, %v2474, %v8389
      %v8710 = vsel %vm1356, %v8678, %v8455
      %v8711 = vsel %vm1356, %v8679, %v8457
      %v8712 = vsel %vm1356, %v8680, %v8459
      %v8713 = vsel %vm1356, %v8681, %v8461
      %v8714 = vsel %vm1356, %v8682, %v8463
      %v8715 = vsel %vm1356, %v8683, %v8465
      %v8716 = vsel %vm1356, %v8684, %v8467
      %v8717 = vsel %vm1356, %v8685, %v8469
      %v8718 = vsel %vm1356, %v8686, %v8471
      %v8719 = vsel %vm1356, %v8687, %v8473
      %v8720 = vsel %vm1356, %v8688, %v8475
      %v8721 = vsel %vm1356, %v8689, %v8477
      %v8722 = vsel %vm1356, %v8690, %v8479
      %v8723 = vsel %vm1356, %v8691, %v8481
      %v8724 = vsel %vm1356, %v8692, %v8483
      %v8725 = vsel %vm1356, %v8693, %v8485
      %v8726 = vsel %vm1356, %v8694, %v8487
      %v8727 = vsel %vm1356, %v8695, %v8489
      %v8728 = vsel %vm1356, %v8696, %v8491
      %v8729 = vsel %vm1356, %v8697, %v8493
      %v8730 = vsel %vm1356, %v8698, %v8495
      %v8731 = vsel %vm1356, %v8699, %v8497
      %v8732 = vsel %vm1356, %v8700, %v8499
      %v8733 = vsel %vm1356, %v8701, %v8501
      %v8734 = vsel %vm1356, %v8702, %v8503
      %v8735 = vsel %vm1356, %v8703, %v8505
      %v8736 = vsel %vm1356, %v8704, %v8507
      %v8737 = vsel %vm1356, %v8705, %v8509
      %v8738 = vsel %vm1356, %v8706, %v8511
      %v8739 = vsel %vm1356, %v8707, %v8513
      %v8740 = vsel %vm1356, %v8708, %v8515
      %v8741 = vsel %vm1356, %v8709, %v8517
      %vm8742 = vcmask 195584
      %v8743 = vsel %vm8742, %v8710, %v8583
      %v8744 = vsel %vm8742, %v8711, %v8585
      %v8745 = vsel %vm8742, %v8712, %v8587
      %v8746 = vsel %vm8742, %v8713, %v8589
      %v8747 = vsel %vm8742, %v8714, %v8591
      %v8748 = vsel %vm8742, %v8715, %v8593
      %v8749 = vsel %vm8742, %v8716, %v8595
      %v8750 = vsel %vm8742, %v8717, %v8597
      %v8751 = vsel %vm8742, %v8718, %v8599
      %v8752 = vsel %vm8742, %v8719, %v8601
      %v8753 = vsel %vm8742, %v8720, %v8603
      %v8754 = vsel %vm8742, %v8721, %v8605
      %v8755 = vsel %vm8742, %v8722, %v8607
      %v8756 = vsel %vm8742, %v8723, %v8609
      %v8757 = vsel %vm8742, %v8724, %v8611
      %v8758 = vsel %vm8742, %v8725, %v8613
      %v8759 = vsel %vm8742, %v8726, %v8615
      %v8760 = vsel %vm8742, %v8727, %v8617
      %v8761 = vsel %vm8742, %v8728, %v8619
      %v8762 = vsel %vm8742, %v8729, %v8621
      %v8763 = vsel %vm8742, %v8730, %v8623
      %v8764 = vsel %vm8742, %v8731, %v8625
      %v8765 = vsel %vm8742, %v8732, %v8627
      %v8766 = vsel %vm8742, %v8733, %v8629
      %v8767 = vsel %vm8742, %v8734, %v8631
      %v8768 = vsel %vm8742, %v8735, %v8633
      %v8769 = vsel %vm8742, %v8736, %v8635
      %v8770 = vsel %vm8742, %v8737, %v8637
      %v8771 = vsel %vm8742, %v8738, %v8639
      %v8772 = vsel %vm8742, %v8739, %v8641
      %v8773 = vsel %vm8742, %v8740, %v8643
      %v8774 = vsel %vm8742, %v8741, %v8645
      %v8775 = vpack.c.bf16 %v8744, %v8743
      %v8776 = vpack.c.bf16 %v8746, %v8745
      %v8777 = vpack.c.bf16 %v8748, %v8747
      %v8778 = vpack.c.bf16 %v8750, %v8749
      %v8779 = vpack.c.bf16 %v8752, %v8751
      %v8780 = vpack.c.bf16 %v8754, %v8753
      %v8781 = vpack.c.bf16 %v8756, %v8755
      %v8782 = vpack.c.bf16 %v8758, %v8757
      %v8783 = vpack.c.bf16 %v8760, %v8759
      %v8784 = vpack.c.bf16 %v8762, %v8761
      %v8785 = vpack.c.bf16 %v8764, %v8763
      %v8786 = vpack.c.bf16 %v8766, %v8765
      %v8787 = vpack.c.bf16 %v8768, %v8767
      %v8788 = vpack.c.bf16 %v8770, %v8769
      %v8789 = vpack.c.bf16 %v8772, %v8771
      %v8790 = vpack.c.bf16 %v8774, %v8773
      %v8791 = vld [vmem:[%s4] sm:$0xf]
      %v8792 = vld [vmem:[%s4 + $0x4] sm:$0xf]
      %v8793 = vld [vmem:[%s4 + $0x8] sm:$0xf]
      %v8794 = vld [vmem:[%s4 + $0xc] sm:$0xf]
      %v8795 = vld [vmem:[%s5] sm:$0x1]
      %v8797 = vlaneseq
      %v8798 = vshrl.u32 %v8797, 7
      %v8799 = vsub.s32 0, %v8798
      %v8800 = vrot.slane %v8795, %v8799
      %v8806 = vunpack.c.l.b16 %v8791
      %v8807 = vunpack.c.l.b16 %v8792
      %v8808 = vunpack.c.l.b16 %v8793
      %v8809 = vunpack.c.l.b16 %v8794
      %v8810 = vpack.c.b16 %v8807, %v8806
      %v8811 = vpack.c.b16 %v8809, %v8808
      %v8815 = vsel %vm327, %v8775, 0
      %v8818 = vsel %vm327, %v8776, 0
      %v8821 = vsel %vm327, %v8777, 0
      %v8824 = vsel %vm327, %v8778, 0
      %v8827 = vsel %vm327, %v8779, 0
      %v8830 = vsel %vm327, %v8780, 0
      %v8833 = vsel %vm327, %v8781, 0
      %v8836 = vsel %vm327, %v8782, 0
      %v8839 = vsel %vm327, %v8783, 0
      %v8842 = vsel %vm327, %v8784, 0
      %v8845 = vsel %vm327, %v8785, 0
      %v8848 = vsel %vm327, %v8786, 0
      %v8851 = vsel %vm327, %v8787, 0
      %v8854 = vsel %vm327, %v8788, 0
      %v8857 = vsel %vm327, %v8789, 0
      %v8860 = vsel %vm327, %v8790, 0
      %8862 = vmatprep.subr.bf16.mxu0 0
      %8863 = vmatpush1.bf16.msra.mxu0 %v8810
      %8864 = vmatprep.subr.bf16.mxu0 0
      %8865 = vmatpush1.bf16.msra.mxu0 %v8811
      %8866 = vmatprep.subr.bf16.mxu0 0
      %8867 = vmatpush1.bf16.msra.mxu0 0
      %8868 = vmatprep.subr.bf16.mxu0 0
      %8869 = vmatpush1.bf16.msra.mxu0 0
      %8870 = vmatprep.subr.bf16.mxu0 0
      %8871 = vmatpush1.bf16.msra.mxu0 0
      %8872 = vmatprep.subr.bf16.mxu0 0
      %8873 = vmatpush1.bf16.msra.mxu0 0
      %8874 = vmatprep.subr.bf16.mxu0 0
      %8875 = vmatpush1.bf16.msra.mxu0 0
      %8876 = vmatprep.subr.bf16.mxu0 0
      %8877 = vmatpush1.bf16.msra.mxu0 0
      %8878 = vmatprep.subr.bf16.mxu0 0
      %8879 = vmatpush1.bf16.msra.mxu0 0
      %8880 = vmatprep.subr.bf16.mxu0 0
      %8881 = vmatpush1.bf16.msra.mxu0 0
      %8882 = vmatprep.subr.bf16.mxu0 0
      %8883 = vmatpush1.bf16.msra.mxu0 0
      %8884 = vmatprep.subr.bf16.mxu0 0
      %8885 = vmatpush1.bf16.msra.mxu0 0
      %8886 = vmatprep.subr.bf16.mxu0 0
      %8887 = vmatpush1.bf16.msra.mxu0 0
      %8888 = vmatprep.subr.bf16.mxu0 0
      %8889 = vmatpush1.bf16.msra.mxu0 0
      %8890 = vmatprep.subr.bf16.mxu0 0
      %8891 = vmatpush1.bf16.msra.mxu0 0
      %8892 = vmatprep.subr.bf16.mxu0 0
      %8893 = vmatpush1.bf16.msra.mxu0 0
      %8894 = vmatprep.mubr.bf16.mxu0 0
      %8895 = vmatmul.mubr.bf16.gmra.mrb[0].mxu0 %v8815
      %v8896 = vpop.f32.mrb[0].mxu0
      %v8897 = vadd.f32 %v8800, %v8896
      %v8898 = vpop.f32.mrb[0].mxu0
      %v8899 = vpop.f32.mrb[0].mxu0
      %v8900 = vadd.f32 %v8800, %v8899
      %v8901 = vpop.f32.mrb[0].mxu0
      %8902 = vmatprep.mubr.bf16.mxu0 0
      %8903 = vmatmul.mubr.bf16.gmra.mrb[0].mxu0 %v8818
      %v8904 = vpop.f32.mrb[0].mxu0
      %v8905 = vadd.f32 %v8800, %v8904
      %v8906 = vpop.f32.mrb[0].mxu0
      %v8907 = vpop.f32.mrb[0].mxu0
      %v8908 = vadd.f32 %v8800, %v8907
      %v8909 = vpop.f32.mrb[0].mxu0
      %8910 = vmatprep.mubr.bf16.mxu0 0
      %8911 = vmatmul.mubr.bf16.gmra.mrb[0].mxu0 %v8821
      %v8912 = vpop.f32.mrb[0].mxu0
      %v8913 = vadd.f32 %v8800, %v8912
      %v8914 = vpop.f32.mrb[0].mxu0
      %v8915 = vpop.f32.mrb[0].mxu0
      %v8916 = vadd.f32 %v8800, %v8915
      %v8917 = vpop.f32.mrb[0].mxu0
      %8918 = vmatprep.mubr.bf16.mxu0 0
      %8919 = vmatmul.mubr.bf16.gmra.mrb[0].mxu0 %v8824
      %v8920 = vpop.f32.mrb[0].mxu0
      %v8921 = vadd.f32 %v8800, %v8920
      %v8922 = vpop.f32.mrb[0].mxu0
      %v8923 = vpop.f32.mrb[0].mxu0
      %v8924 = vadd.f32 %v8800, %v8923
      %v8925 = vpop.f32.mrb[0].mxu0
      %8926 = vmatprep.mubr.bf16.mxu0 0
      %8927 = vmatmul.mubr.bf16.gmra.mrb[0].mxu0 %v8827
      %v8928 = vpop.f32.mrb[0].mxu0
      %v8929 = vadd.f32 %v8800, %v8928
      %v8930 = vpop.f32.mrb[0].mxu0
      %v8931 = vpop.f32.mrb[0].mxu0
      %v8932 = vadd.f32 %v8800, %v8931
      %v8933 = vpop.f32.mrb[0].mxu0
      %8934 = vmatprep.mubr.bf16.mxu0 0
      %8935 = vmatmul.mubr.bf16.gmra.mrb[0].mxu0 %v8830
      %v8936 = vpop.f32.mrb[0].mxu0
      %v8937 = vadd.f32 %v8800, %v8936
      %v8938 = vpop.f32.mrb[0].mxu0
      %v8939 = vpop.f32.mrb[0].mxu0
      %v8940 = vadd.f32 %v8800, %v8939
      %v8941 = vpop.f32.mrb[0].mxu0
      %8942 = vmatprep.mubr.bf16.mxu0 0
      %8943 = vmatmul.mubr.bf16.gmra.mrb[0].mxu0 %v8833
      %v8944 = vpop.f32.mrb[0].mxu0
      %v8945 = vadd.f32 %v8800, %v8944
      %v8946 = vpop.f32.mrb[0].mxu0
      %v8947 = vpop.f32.mrb[0].mxu0
      %v8948 = vadd.f32 %v8800, %v8947
      %v8949 = vpop.f32.mrb[0].mxu0
      %8950 = vmatprep.mubr.bf16.mxu0 0
      %8951 = vmatmul.mubr.bf16.gmra.mrb[0].mxu0 %v8836
      %v8952 = vpop.f32.mrb[0].mxu0
      %v8953 = vadd.f32 %v8800, %v8952
      %v8954 = vpop.f32.mrb[0].mxu0
      %v8955 = vpop.f32.mrb[0].mxu0
      %v8956 = vadd.f32 %v8800, %v8955
      %v8957 = vpop.f32.mrb[0].mxu0
      %8958 = vmatprep.mubr.bf16.mxu0 0
      %8959 = vmatmul.mubr.bf16.gmra.mrb[0].mxu0 %v8839
      %v8960 = vpop.f32.mrb[0].mxu0
      %v8961 = vadd.f32 %v8800, %v8960
      %v8962 = vpop.f32.mrb[0].mxu0
      %v8963 = vpop.f32.mrb[0].mxu0
      %v8964 = vadd.f32 %v8800, %v8963
      %v8965 = vpop.f32.mrb[0].mxu0
      %8966 = vmatprep.mubr.bf16.mxu0 0
      %8967 = vmatmul.mubr.bf16.gmra.mrb[0].mxu0 %v8842
      %v8968 = vpop.f32.mrb[0].mxu0
      %v8969 = vadd.f32 %v8800, %v8968
      %v8970 = vpop.f32.mrb[0].mxu0
      %v8971 = vpop.f32.mrb[0].mxu0
      %v8972 = vadd.f32 %v8800, %v8971
      %v8973 = vpop.f32.mrb[0].mxu0
      %8974 = vmatprep.mubr.bf16.mxu0 0
      %8975 = vmatmul.mubr.bf16.gmra.mrb[0].mxu0 %v8845
      %v8976 = vpop.f32.mrb[0].mxu0
      %v8977 = vadd.f32 %v8800, %v8976
      %v8978 = vpop.f32.mrb[0].mxu0
      %v8979 = vpop.f32.mrb[0].mxu0
      %v8980 = vadd.f32 %v8800, %v8979
      %v8981 = vpop.f32.mrb[0].mxu0
      %8982 = vmatprep.mubr.bf16.mxu0 0
      %8983 = vmatmul.mubr.bf16.gmra.mrb[0].mxu0 %v8848
      %v8984 = vpop.f32.mrb[0].mxu0
      %v8985 = vadd.f32 %v8800, %v8984
      %v8986 = vpop.f32.mrb[0].mxu0
      %v8987 = vpop.f32.mrb[0].mxu0
      %v8988 = vadd.f32 %v8800, %v8987
      %v8989 = vpop.f32.mrb[0].mxu0
      %8990 = vmatprep.mubr.bf16.mxu0 0
      %8991 = vmatmul.mubr.bf16.gmra.mrb[0].mxu0 %v8851
      %v8992 = vpop.f32.mrb[0].mxu0
      %v8993 = vadd.f32 %v8800, %v8992
      %v8994 = vpop.f32.mrb[0].mxu0
      %v8995 = vpop.f32.mrb[0].mxu0
      %v8996 = vadd.f32 %v8800, %v8995
      %v8997 = vpop.f32.mrb[0].mxu0
      %8998 = vmatprep.mubr.bf16.mxu0 0
      %8999 = vmatmul.mubr.bf16.gmra.mrb[0].mxu0 %v8854
      %v9000 = vpop.f32.mrb[0].mxu0
      %v9001 = vadd.f32 %v8800, %v9000
      %v9002 = vpop.f32.mrb[0].mxu0
      %v9003 = vpop.f32.mrb[0].mxu0
      %v9004 = vadd.f32 %v8800, %v9003
      %v9005 = vpop.f32.mrb[0].mxu0
      %9006 = vmatprep.mubr.bf16.mxu0 0
      %9007 = vmatmul.mubr.bf16.gmra.mrb[0].mxu0 %v8857
      %v9008 = vpop.f32.mrb[0].mxu0
      %v9009 = vadd.f32 %v8800, %v9008
      %v9010 = vpop.f32.mrb[0].mxu0
      %v9011 = vpop.f32.mrb[0].mxu0
      %v9012 = vadd.f32 %v8800, %v9011
      %v9013 = vpop.f32.mrb[0].mxu0
      %9014 = vmatprep.mubr.bf16.mxu0 0
      %9015 = vmatmul.mubr.bf16.gmra.mrb[0].mxu0 %v8860
      %v9016 = vpop.f32.mrb[0].mxu0
      %v9017 = vadd.f32 %v8800, %v9016
      %v9018 = vpop.f32.mrb[0].mxu0
      %v9019 = vpop.f32.mrb[0].mxu0
      %v9020 = vadd.f32 %v8800, %v9019
      %v9021 = vpop.f32.mrb[0].mxu0
      %9022 = vdwg.mxu0
      %9023 = vst.msk [vmem:[%s253] sm:$0xff] %vm327, %v8897
      %9024 = vst.msk [vmem:[%s253 + $0x8] sm:$0xff] %vm327, %v8900
      %9025 = vst.msk [vmem:[%s253 + $0x10] sm:$0xff] %vm327, %v8905
      %9026 = vst.msk [vmem:[%s253 + $0x18] sm:$0xff] %vm327, %v8908
      %9027 = vst.msk [vmem:[%s253 + $0x20] sm:$0xff] %vm327, %v8913
      %9028 = vst.msk [vmem:[%s253 + $0x28] sm:$0xff] %vm327, %v8916
      %9029 = vst.msk [vmem:[%s253 + $0x30] sm:$0xff] %vm327, %v8921
      %9030 = vst.msk [vmem:[%s253 + $0x38] sm:$0xff] %vm327, %v8924
      %9031 = vst.msk [vmem:[%s253 + $0x40] sm:$0xff] %vm327, %v8929
      %9032 = vst.msk [vmem:[%s253 + $0x48] sm:$0xff] %vm327, %v8932
      %9033 = vst.msk [vmem:[%s253 + $0x50] sm:$0xff] %vm327, %v8937
      %9034 = vst.msk [vmem:[%s253 + $0x58] sm:$0xff] %vm327, %v8940
      %9035 = vst.msk [vmem:[%s253 + $0x60] sm:$0xff] %vm327, %v8945
      %9036 = vst.msk [vmem:[%s253 + $0x68] sm:$0xff] %vm327, %v8948
      %9037 = vst.msk [vmem:[%s253 + $0x70] sm:$0xff] %vm327, %v8953
      %9038 = vst.msk [vmem:[%s253 + $0x78] sm:$0xff] %vm327, %v8956
      %9039 = vst.msk [vmem:[%s253 + $0x80] sm:$0xff] %vm327, %v8961
      %9040 = vst.msk [vmem:[%s253 + $0x88] sm:$0xff] %vm327, %v8964
      %9041 = vst.msk [vmem:[%s253 + $0x90] sm:$0xff] %vm327, %v8969
      %9042 = vst.msk [vmem:[%s253 + $0x98] sm:$0xff] %vm327, %v8972
      %9043 = vst.msk [vmem:[%s253 + $0xa0] sm:$0xff] %vm327, %v8977
      %9044 = vst.msk [vmem:[%s253 + $0xa8] sm:$0xff] %vm327, %v8980
      %9045 = vst.msk [vmem:[%s253 + $0xb0] sm:$0xff] %vm327, %v8985
      %9046 = vst.msk [vmem:[%s253 + $0xb8] sm:$0xff] %vm327, %v8988
      %9047 = vst.msk [vmem:[%s253 + $0xc0] sm:$0xff] %vm327, %v8993
      %9048 = vst.msk [vmem:[%s253 + $0xc8] sm:$0xff] %vm327, %v8996
      %9049 = vst.msk [vmem:[%s253 + $0xd0] sm:$0xff] %vm327, %v9001
      %9050 = vst.msk [vmem:[%s253 + $0xd8] sm:$0xff] %vm327, %v9004
      %9051 = vst.msk [vmem:[%s253 + $0xe0] sm:$0xff] %vm327, %v9009
      %9052 = vst.msk [vmem:[%s253 + $0xe8] sm:$0xff] %vm327, %v9012
      %9053 = vst.msk [vmem:[%s253 + $0xf0] sm:$0xff] %vm327, %v9017
      %9054 = vst.msk [vmem:[%s253 + $0xf8] sm:$0xff] %vm327, %v9020
      %s9055 = smul.u32 32, %s17
      %p9056 = scmp.lt.s32.totalorder %s9055, 63
      %s9057 = scalar_select %p9056, %s9055, 63
      %s9058 = smul.addr %s9057, 8
      %s9059 = scalar_lea.vmem %s6, %s9058
      // Predicated region
      $region45: #{tpu_custom_call.1} parent=43 // pred_check
        %p9060 = pneg %p166
      $region46: #{tpu_custom_call.1} parent=43 // pred_check_branch
        %9062 = sbr.rel (%p9060) target = $region48
      $region47: #{tpu_custom_call.1} parent=43 // pred_region
        %s9063 = smul.u32 32, %s17
      $region48: #{tpu_custom_call.1} parent=43 // pred_fallthru
        _
    $region44: #{tpu_custom_call.1} parent=5 // pred_fallthru
      _
    %p9064 = scmp.le.s32.totalorder 2, %s12
    // Predicated region
    $region49: #{tpu_custom_call.1} parent=5 // pred_check
      %p9065 = pneg %p9064
    $region50: #{tpu_custom_call.1} parent=5 // pred_check_branch
      %9067 = sbr.rel (%p9065) target = $region52
    $region51: #{tpu_custom_call.1} parent=5 // pred_region
      %s9068 = ssub.s32 %s12, 2
      // Predicated region
      $region53: #{tpu_custom_call.1} parent=51 // pred_check
        %p9069 = pneg %p172
      $region54: #{tpu_custom_call.1} parent=51 // pred_check_branch
        %9071 = sbr.rel (%p9069) target = $region56
      $region55: #{tpu_custom_call.1} parent=51 // pred_region
        %s9072 = smul.u32 32, %s18
        %p9073 = scmp.lt.s32.totalorder %s9072, 63
        %s9074 = scalar_select %p9073, %s9072, 63
        %s9075 = smul.addr %s9074, 8
        %s9076 = scalar_lea.vmem %s6, %s9075
      $region56: #{tpu_custom_call.1} parent=51 // pred_fallthru
        _
    $region52: #{tpu_custom_call.1} parent=5 // pred_fallthru
      _
  $region6: #{tpu_custom_call.1} parent=0 // loop_footer
    %s16 = sadd.s32 1, %s12
  $region7: #{tpu_custom_call.1} parent=0 // loop_footer_branch
    %11 = sbr.rel target = $region3
  $region8: #{tpu_custom_call.1} parent=0 // loop_exit
    _

</llo_original>
